<compile_context>
chip_gen: v7x
topology: tpu7x:2x2x1
jax: 0.10.0
libtpu: 0.0.40
codegen_flags: <defaults>
</compile_context>

<pallas_src>
import functools

import jax
import jax.numpy as jnp
from jax import lax
from jax.experimental import pallas as pl
from jax.experimental.pallas import tpu as pltpu


_BN_EPS = 1e-5
_LANE = 128                      # pad channel axes to a multiple of this
MATMUL_DTYPE = jnp.float32       # set to jnp.bfloat16 on v6e/v7x for the fast
                                 # MXU path (accumulation stays f32)


def _round_up(x, m):
    return (x + m - 1) // m * m


def _pick_row_tile(m, candidates=(512, 256, 128, 64, 32, 16, 8)):
    """Row-tile + padded row count (padding rows are zeros, sliced/ignored)."""
    for c in candidates:
        if m % c == 0:
            return c, m
    return 128, _round_up(m, 128)


# ----------------------------------------------------------------------------
# Pallas kernel 1: fused per-channel sum / sum-of-squares (BN statistics)
# ----------------------------------------------------------------------------

def _stats_kernel(x_ref, s1_ref, s2_ref):
    @pl.when(pl.program_id(0) == 0)
    def _():
        s1_ref[...] = jnp.zeros_like(s1_ref)
        s2_ref[...] = jnp.zeros_like(s2_ref)
    x = x_ref[...]
    s1_ref[...] += jnp.sum(x, axis=0, keepdims=True)
    s2_ref[...] += jnp.sum(x * x, axis=0, keepdims=True)


def channel_sums_pallas(x2d):
    """x2d: (M, C) -> (sum, sum_of_squares), each (1, C)."""
    m, c = x2d.shape
    tm, mp = _pick_row_tile(m)
    if mp != m:
        x2d = jnp.pad(x2d, ((0, mp - m), (0, 0)))     # zero rows: sums unchanged
    return pl.pallas_call(
        _stats_kernel,
        out_shape=(jax.ShapeDtypeStruct((1, c), jnp.float32),
                   jax.ShapeDtypeStruct((1, c), jnp.float32)),
        grid=(mp // tm,),
        in_specs=[pl.BlockSpec((tm, c), lambda i: (i, 0))],
        out_specs=(pl.BlockSpec((1, c), lambda i: (0, 0)),
                   pl.BlockSpec((1, c), lambda i: (0, 0))),
        compiler_params=pltpu.CompilerParams(
            dimension_semantics=("arbitrary",)),
    )(x2d)


def _bn_fold(x4d, gamma_p, beta_p):
    """Training-mode BN folded to per-channel (scale, shift), each (1, C)."""
    n, h, w, c = x4d.shape
    m = n * h * w
    s1, s2 = channel_sums_pallas(x4d.reshape(m, c))
    mean = (s1 / m).reshape(c)
    var = jnp.maximum((s2 / m).reshape(c) - mean * mean, 0.0)   # biased var
    scale = gamma_p / jnp.sqrt(var + _BN_EPS)
    shift = beta_p - mean * scale
    return scale.reshape(1, c), shift.reshape(1, c)


# ----------------------------------------------------------------------------
# Pallas kernel 2: 3x3 conv with fused BN+ReLU prologue, tap accumulation and
#                  fused residual-add epilogue.
# ----------------------------------------------------------------------------

def conv3x3_bn_relu_pallas(x, scale, shift, w9, stride, residual=None):
    """y = conv3x3(relu(x*scale + shift), stride, pad=1) [+ residual].

    x:         (N, H, W, Cp)   raw (pre-BN) activations, channel-padded
    scale/shift: (1, Cp)       folded BN of the conv *input*
    w9:        (9, Cp, Cop)    tap-major conv weight, channel-padded
    residual:  (N, Ho, Wo, Cop) or None
    """
    n, h, w, cp = x.shape
    cop = w9.shape[-1]
    s = stride
    ho = (h + 2 - 3) // s + 1
    wo = (w + 2 - 3) // s + 1

    # Spatial zero-pad, then (for stride>1) phase-decompose so that every tap
    # is a unit-stride shifted window:
    #   xp[s*r + kh, s*c + kw] == phase[kh%s, kw%s][r + kh//s, c + kw//s]
    xp = jnp.pad(x, ((0, 0), (1, 1), (1, 1), (0, 0)))
    phases = {(p, q): xp[:, p::s, q::s, :] for p in range(s) for q in range(s)}

    ref_key_to_idx = {}
    tap_arrays, tap_row_off = [], []
    tap_info = []                      # (ref_idx, col_start, kh, kw)
    for kh in range(3):
        for kw in range(3):
            key = (kh % s, kw % s, kh // s)
            if key not in ref_key_to_idx:
                ref_key_to_idx[key] = len(tap_arrays)
                tap_arrays.append(phases[(kh % s, kw % s)])
                tap_row_off.append(kh // s)
            tap_info.append((ref_key_to_idx[key], kw // s, kh, kw))
    n_tap = len(tap_arrays)            # 3 (stride 1) or 6 (stride 2)

    tn = n                              # whole (small) batch per step
    tco = 256 if cop % 256 == 0 else 128
    grid = (n // tn, ho, cop // tco)    # all axes parallel (taps are in-kernel)
    has_res = residual is not None

    def kernel(*refs):
        scale_ref, shift_ref = refs[0], refs[1]
        tap_refs = refs[2:2 + n_tap]
        w_ref = refs[2 + n_tap]
        res_ref = refs[3 + n_tap] if has_res else None
        o_ref = refs[-1]

        row_id = pl.program_id(1)                  # output row index
        sc = scale_ref[...]
        sh = shift_ref[...]

        acc = jnp.zeros((tn * wo, tco), jnp.float32)
        acts = {}
        wo_idx = lax.broadcasted_iota(jnp.int32, (1, wo, 1), 1)
        for ridx, c0, kh, kw in tap_info:
            if ridx not in acts:
                blk = jnp.squeeze(tap_refs[ridx][...], axis=1)   # (tn, Wph, Cp)
                # fused BN-apply + ReLU prologue (no standalone elementwise pass)
                acts[ridx] = jnp.maximum(blk * sc + sh, 0.0)
            a = acts[ridx][:, c0:c0 + wo, :]                     # (tn, Wo, Cp)
            # Zero contributions sourced from the conv's spatial padding ring:
            # the ring must be zero *after* BN/ReLU.
            i_src = s * row_id + kh
            row_ok = jnp.logical_and(i_src != 0, i_src != h + 1)
            col_src = s * wo_idx + kw
            col_ok = jnp.logical_and(col_src != 0, col_src != w + 1)
            a = jnp.where(jnp.logical_and(col_ok, row_ok), a, 0.0)
            a2 = a.reshape(tn * wo, cp).astype(MATMUL_DTYPE)
            wt = w_ref[kh * 3 + kw].astype(MATMUL_DTYPE)         # (Cp, tco)
            acc += jnp.dot(a2, wt, preferred_element_type=jnp.float32)
        if has_res:
            acc = acc + res_ref[...].reshape(tn * wo, tco)       # fused epilogue
        o_ref[...] = acc.reshape(tn, 1, wo, tco).astype(o_ref.dtype)

    in_specs = [
        pl.BlockSpec((1, cp), lambda b, r, j: (0, 0)),           # scale
        pl.BlockSpec((1, cp), lambda b, r, j: (0, 0)),           # shift
    ]
    for idx, arr in enumerate(tap_arrays):
        wph = arr.shape[2]
        in_specs.append(
            pl.BlockSpec((tn, 1, wph, cp),
                         lambda b, r, j, ro=tap_row_off[idx]: (b, r + ro, 0, 0)))
    in_specs.append(pl.BlockSpec((9, cp, tco), lambda b, r, j: (0, 0, j)))
    inputs = [scale, shift] + tap_arrays + [w9]
    if has_res:
        in_specs.append(pl.BlockSpec((tn, 1, wo, tco),
                                     lambda b, r, j: (b, r, 0, j)))
        inputs.append(residual)

    return pl.pallas_call(
        kernel,
        out_shape=jax.ShapeDtypeStruct((n, ho, wo, cop), jnp.float32),
        grid=grid,
        in_specs=in_specs,
        out_specs=pl.BlockSpec((tn, 1, wo, tco), lambda b, r, j: (b, r, 0, j)),
        compiler_params=pltpu.CompilerParams(
            dimension_semantics=("parallel", "parallel", "parallel")),
    )(*inputs)


# ----------------------------------------------------------------------------
# Pallas kernel 3: 1x1 conv (WRN shortcut) as matmul with fused BN+ReLU prologue
# ----------------------------------------------------------------------------

def _mm_bn_relu_kernel(scale_ref, shift_ref, x_ref, w_ref, o_ref):
    a = jnp.maximum(x_ref[...] * scale_ref[...] + shift_ref[...], 0.0)
    o_ref[...] = jnp.dot(a.astype(MATMUL_DTYPE),
                         w_ref[...].astype(MATMUL_DTYPE),
                         preferred_element_type=jnp.float32)


def matmul_bn_relu_pallas(x2d, scale, shift, wmat):
    """relu(x2d*scale + shift) @ wmat.   x2d: (M, Cp); wmat: (Cp, Cop)."""
    m, cp = x2d.shape
    cop = wmat.shape[1]
    tm, mp = _pick_row_tile(m)
    if mp != m:
        x2d = jnp.pad(x2d, ((0, mp - m), (0, 0)))    # extra rows sliced off below
    tco = 256 if cop % 256 == 0 else 128
    out = pl.pallas_call(
        _mm_bn_relu_kernel,
        out_shape=jax.ShapeDtypeStruct((mp, cop), jnp.float32),
        grid=(mp // tm, cop // tco),
        in_specs=[
            pl.BlockSpec((1, cp), lambda i, j: (0, 0)),
            pl.BlockSpec((1, cp), lambda i, j: (0, 0)),
            pl.BlockSpec((tm, cp), lambda i, j: (i, 0)),
            pl.BlockSpec((cp, tco), lambda i, j: (0, j)),
        ],
        out_specs=pl.BlockSpec((tm, tco), lambda i, j: (i, j)),
        compiler_params=pltpu.CompilerParams(
            dimension_semantics=("parallel", "parallel")),
    )(scale, shift, x2d, wmat)
    return out[:m]


# ----------------------------------------------------------------------------
# BasicBlock / NetworkBlock forward (channel-padded NHWC domain)
# ----------------------------------------------------------------------------

def basic_block_forward(x_p, p, stride):
    equal_in_out = (p["cin"] == p["cout"]) and (stride == 1)

    scale1, shift1 = _bn_fold(x_p, p["bn1_g_p"], p["bn1_b_p"])
    # conv1 with fused bn1+relu prologue (o = relu(bn1(x)) never hits HBM)
    out1 = conv3x3_bn_relu_pallas(x_p, scale1, shift1, p["conv1_w9"], stride)
    scale2, shift2 = _bn_fold(out1, p["bn2_g_p"], p["bn2_b_p"])
    # TODO(synk): dropout skipped (dropRate=0.0, the module default).
    if equal_in_out:
        res = x_p
    else:
        n, h, w, cp = x_p.shape
        xs = x_p[:, ::stride, ::stride, :]
        ho, wo = xs.shape[1], xs.shape[2]
        res = matmul_bn_relu_pallas(xs.reshape(n * ho * wo, cp),
                                    scale1, shift1,
                                    p["short_w_p"]).reshape(n, ho, wo, -1)
    # conv2 with fused bn2+relu prologue and fused residual-add epilogue
    return conv3x3_bn_relu_pallas(out1, scale2, shift2, p["conv2_w9"], 1,
                                  residual=res)


def network_block_forward(x_nchw, layer_params, first_stride):
    # public interface: NCHW (PyTorch); internal: NHWC, channels padded to 128.
    x = jnp.transpose(x_nchw, (0, 2, 3, 1))
    cin = x.shape[-1]
    cp = _round_up(cin, _LANE)
    x = jnp.pad(x, ((0, 0), (0, 0), (0, 0), (0, cp - cin)))
    for i, p in enumerate(layer_params):
        x = basic_block_forward(x, p, first_stride if i == 0 else 1)
    x = x[..., :layer_params[-1]["cout"]]
    return jnp.transpose(x, (0, 3, 1, 2))


# ----------------------------------------------------------------------------
# Parameter construction + kernel-side preparation (padding / tap reshapes)
# ----------------------------------------------------------------------------

def make_network_block_params(key, nb_layers, in_planes, out_planes, stride):
    layer_params = []
    for i in range(nb_layers):
        cin = in_planes if i == 0 else out_planes
        cout = out_planes
        s = stride if i == 0 else 1
        key, k1, k2, k3, k4, k5, k6 = jax.random.split(key, 7)
        p = {
            "bn1_g": 1.0 + 0.1 * jax.random.normal(k1, (cin,), jnp.float32),
            "bn1_b": 0.1 * jax.random.normal(k2, (cin,), jnp.float32),
            "conv1_w": jax.random.normal(k3, (cout, cin, 3, 3), jnp.float32)
                       * (2.0 / (9 * cin)) ** 0.5,
            "bn2_g": 1.0 + 0.1 * jax.random.normal(k4, (cout,), jnp.float32),
            "bn2_b": 0.1 * jax.random.normal(k5, (cout,), jnp.float32),
            "conv2_w": jax.random.normal(k6, (cout, cout, 3, 3), jnp.float32)
                       * (2.0 / (9 * cout)) ** 0.5,
        }
        if not ((cin == cout) and (s == 1)):
            key, ks = jax.random.split(key)
            p["short_w"] = (jax.random.normal(ks, (cout, cin, 1, 1), jnp.float32)
                            * (2.0 / cin) ** 0.5)
        layer_params.append(p)
    return layer_params


def _pad_vec(v, cpad):
    return jnp.pad(v, (0, cpad - v.shape[0]))


def _conv3x3_to_tap_matrix(w_oihw, cin_p, cout_p):
    o, i, _, _ = w_oihw.shape
    w9 = jnp.transpose(w_oihw, (2, 3, 1, 0)).reshape(9, i, o)   # (kh*3+kw, I, O)
    return jnp.pad(w9, ((0, 0), (0, cin_p - i), (0, cout_p - o)))


def prepare_block_params(raw):
    cin = raw["bn1_g"].shape[0]
    cout = raw["conv1_w"].shape[0]
    cin_p, cout_p = _round_up(cin, _LANE), _round_up(cout, _LANE)
    p = {
        "cin": cin, "cout": cout,
        "bn1_g_p": _pad_vec(raw["bn1_g"], cin_p),
        "bn1_b_p": _pad_vec(raw["bn1_b"], cin_p),
        "conv1_w9": _conv3x3_to_tap_matrix(raw["conv1_w"], cin_p, cout_p),
        "bn2_g_p": _pad_vec(raw["bn2_g"], cout_p),
        "bn2_b_p": _pad_vec(raw["bn2_b"], cout_p),
        "conv2_w9": _conv3x3_to_tap_matrix(raw["conv2_w"], cout_p, cout_p),
    }
    if "short_w" in raw:
        ws = jnp.transpose(raw["short_w"][:, :, 0, 0], (1, 0))   # (I, O)
        p["short_w_p"] = jnp.pad(ws, ((0, cin_p - cin), (0, cout_p - cout)))
    return p


# ----------------------------------------------------------------------------
# Pure-JAX reference (lax.conv, HIGHEST precision) for correctness checking.
# Note: BN uses training-mode batch statistics with biased variance (matches
# the PyTorch module in train()); eval-mode running stats are not modeled.
# ----------------------------------------------------------------------------

def _ref_conv(x, w_oihw, stride, pad):
    return jax.lax.conv_general_dilated(
        x, jnp.transpose(w_oihw, (2, 3, 1, 0)),
        window_strides=(stride, stride), padding=((pad, pad), (pad, pad)),
        dimension_numbers=("NHWC", "HWIO", "NHWC"),
        precision=jax.lax.Precision.HIGHEST)


def _ref_bn_relu(x, gamma, beta):
    mean = jnp.mean(x, axis=(0, 1, 2))
    var = jnp.mean(jnp.square(x - mean), axis=(0, 1, 2))
    scale = gamma / jnp.sqrt(var + _BN_EPS)
    shift = beta - mean * scale
    return jnp.maximum(x * scale + shift, 0.0)


def _ref_basic_block(x, p, stride):
    cin = x.shape[-1]
    cout = p["conv1_w"].shape[0]
    equal = (cin == cout) and (stride == 1)
    o = _ref_bn_relu(x, p["bn1_g"], p["bn1_b"])
    out = _ref_conv(o, p["conv1_w"], stride, 1)
    out = _ref_bn_relu(out, p["bn2_g"], p["bn2_b"])
    out = _ref_conv(out, p["conv2_w"], 1, 1)
    res = x if equal else _ref_conv(o, p["short_w"], stride, 0)
    return out + res


def _ref_network_block(x_nchw, layer_params, first_stride):
    x = jnp.transpose(x_nchw, (0, 2, 3, 1))
    for i, p in enumerate(layer_params):
        x = _ref_basic_block(x, p, first_stride if i == 0 else 1)
    return jnp.transpose(x, (0, 3, 1, 2))


# ----------------------------------------------------------------------------
# Main
# ----------------------------------------------------------------------------

if __name__ == "__main__":
    # NetworkBlock(nb_layers=2, in_planes=4, out_planes=8, block=BasicBlock,
    #              stride=2, dropRate=0.0)
    nb_layers, in_planes, out_planes, stride = 2, 4, 8, 2

    key = jax.random.PRNGKey(0)
    key, kx = jax.random.split(key)
    x = jax.random.normal(kx, (2, in_planes, 16, 16), jnp.float32)   # NCHW

    raw_params = make_network_block_params(key, nb_layers, in_planes,
                                           out_planes, stride)
    kparams = [prepare_block_params(p) for p in raw_params]

    fwd = jax.jit(functools.partial(network_block_forward,
                                    layer_params=kparams,
                                    first_stride=stride))
    y = fwd(x)
    jax.block_until_ready(y)

    y_ref = _ref_network_block(x, raw_params, stride)
    assert y.shape == y_ref.shape == (2, out_planes, 8, 8), y.shape
    max_err = float(jnp.max(jnp.abs(y - y_ref)))
    assert jnp.allclose(y, y_ref, atol=3e-3, rtol=3e-3), max_err

    print("KERNEL_OK")
</pallas_src>

<mosaic_0001>
module attributes {stable_mosaic.version = 11 : i64} {
  func.func @_stats_kernel(%arg0: i32, %arg1: memref<512x128xf32, #tpu.memory_space<vmem>>, %arg2: memref<1x128xf32, #tpu.memory_space<vmem>>, %arg3: memref<1x128xf32, #tpu.memory_space<vmem>>) attributes {dimension_semantics = [#tpu.dimension_semantics<arbitrary>], iteration_bounds = array<i64: 1>, scalar_prefetch = 0 : i64, scratch_operands = 0 : i64, tpu.core_type = #tpu.core_type<tc>, window_params = [{transform_indices = @transform_0, window_bounds = array<i64: 512, 128>}, {pipeline_mode = #tpu.pipeline_mode<synchronous>, transform_indices = @transform_1, window_bounds = array<i64: 1, 128>}, {pipeline_mode = #tpu.pipeline_mode<synchronous>, transform_indices = @transform_2, window_bounds = array<i64: 1, 128>}]} {
    %c0_i32 = arith.constant 0 : i32
    %0 = arith.cmpi eq, %arg0, %c0_i32 : i32
    %1 = arith.extui %0 : i1 to i32
    %c0_i32_0 = arith.constant 0 : i32
    %2 = arith.cmpi ne, %1, %c0_i32_0 : i32
    scf.if %2 {
      %cst_11 = arith.constant 0.000000e+00 : f32
      %15 = vector.broadcast %cst_11 : f32 to vector<1x128xf32>
      %c0_12 = arith.constant 0 : index
      %c0_13 = arith.constant 0 : index
      %16 = vector.load %arg2[%c0_12, %c0_13] : memref<1x128xf32, #tpu.memory_space<vmem>>, vector<1x128xf32>
      tpu.vector_store %arg2[%c0_12, %c0_13], %15 {strides = array<i32>} : memref<1x128xf32, #tpu.memory_space<vmem>>, vector<1x128xf32>,
      %cst_14 = arith.constant 0.000000e+00 : f32
      %17 = vector.broadcast %cst_14 : f32 to vector<1x128xf32>
      %c0_15 = arith.constant 0 : index
      %c0_16 = arith.constant 0 : index
      %18 = vector.load %arg3[%c0_15, %c0_16] : memref<1x128xf32, #tpu.memory_space<vmem>>, vector<1x128xf32>
      tpu.vector_store %arg3[%c0_15, %c0_16], %17 {strides = array<i32>} : memref<1x128xf32, #tpu.memory_space<vmem>>, vector<1x128xf32>,
    } else {
    }
    %c0 = arith.constant 0 : index
    %c0_1 = arith.constant 0 : index
    %3 = vector.load %arg1[%c0, %c0_1] : memref<512x128xf32, #tpu.memory_space<vmem>>, vector<512x128xf32>
    %c0_2 = arith.constant 0 : index
    %c0_3 = arith.constant 0 : index
    %4 = vector.load %arg2[%c0_2, %c0_3] : memref<1x128xf32, #tpu.memory_space<vmem>>, vector<1x128xf32>
    %cst = arith.constant dense<0.000000e+00> : vector<128xf32>
    %5 = vector.multi_reduction <add>, %3, %cst [0] : vector<512x128xf32> to vector<128xf32>
    %6 = vector.shape_cast %5 : vector<128xf32> to vector<1x128xf32>
    %7 = arith.addf %4, %6 : vector<1x128xf32>
    %c0_4 = arith.constant 0 : index
    %c0_5 = arith.constant 0 : index
    %8 = vector.load %arg2[%c0_4, %c0_5] : memref<1x128xf32, #tpu.memory_space<vmem>>, vector<1x128xf32>
    tpu.vector_store %arg2[%c0_4, %c0_5], %7 {strides = array<i32>} : memref<1x128xf32, #tpu.memory_space<vmem>>, vector<1x128xf32>,
    %c0_6 = arith.constant 0 : index
    %c0_7 = arith.constant 0 : index
    %9 = vector.load %arg3[%c0_6, %c0_7] : memref<1x128xf32, #tpu.memory_space<vmem>>, vector<1x128xf32>
    %10 = arith.mulf %3, %3 : vector<512x128xf32>
    %cst_8 = arith.constant dense<0.000000e+00> : vector<128xf32>
    %11 = vector.multi_reduction <add>, %10, %cst_8 [0] : vector<512x128xf32> to vector<128xf32>
    %12 = vector.shape_cast %11 : vector<128xf32> to vector<1x128xf32>
    %13 = arith.addf %9, %12 : vector<1x128xf32>
    %c0_9 = arith.constant 0 : index
    %c0_10 = arith.constant 0 : index
    %14 = vector.load %arg3[%c0_9, %c0_10] : memref<1x128xf32, #tpu.memory_space<vmem>>, vector<1x128xf32>
    tpu.vector_store %arg3[%c0_9, %c0_10], %13 {strides = array<i32>} : memref<1x128xf32, #tpu.memory_space<vmem>>, vector<1x128xf32>,
    return
  }
  func.func @transform_0(%arg0: i32) -> (i32, i32) {
    %c0_i32 = arith.constant 0 : i32
    %c0_i32_0 = arith.constant 0 : i32
    return %arg0, %c0_i32 : i32, i32
  }
  func.func @transform_1(%arg0: i32) -> (i32, i32) {
    %c0_i32 = arith.constant 0 : i32
    %c0_i32_0 = arith.constant 0 : i32
    %c0_i32_1 = arith.constant 0 : i32
    return %c0_i32, %c0_i32_0 : i32, i32
  }
  func.func @transform_2(%arg0: i32) -> (i32, i32) {
    %c0_i32 = arith.constant 0 : i32
    %c0_i32_0 = arith.constant 0 : i32
    %c0_i32_1 = arith.constant 0 : i32
    return %c0_i32, %c0_i32_0 : i32, i32
  }
}

module attributes {stable_mosaic.version = 11 : i64} {
  func.func @_mm_bn_relu_kernel(%arg0: i32, %arg1: i32, %arg2: memref<1x128xf32, #tpu.memory_space<vmem>>, %arg3: memref<1x128xf32, #tpu.memory_space<vmem>>, %arg4: memref<128x128xf32, #tpu.memory_space<vmem>>, %arg5: memref<128x128xf32, #tpu.memory_space<vmem>>, %arg6: memref<128x128xf32, #tpu.memory_space<vmem>>) attributes {dimension_semantics = [#tpu.dimension_semantics<parallel>, #tpu.dimension_semantics<parallel>], iteration_bounds = array<i64: 1, 1>, scalar_prefetch = 0 : i64, scratch_operands = 0 : i64, tpu.core_type = #tpu.core_type<tc>, window_params = [{pipeline_mode = #tpu.pipeline_mode<synchronous>, transform_indices = @transform_0, window_bounds = array<i64: 1, 128>}, {pipeline_mode = #tpu.pipeline_mode<synchronous>, transform_indices = @transform_1, window_bounds = array<i64: 1, 128>}, {transform_indices = @transform_2, window_bounds = array<i64: 128, 128>}, {transform_indices = @transform_3, window_bounds = array<i64: 128, 128>}, {transform_indices = @transform_4, window_bounds = array<i64: 128, 128>}]} {
    %c0 = arith.constant 0 : index
    %c0_0 = arith.constant 0 : index
    %0 = vector.load %arg4[%c0, %c0_0] : memref<128x128xf32, #tpu.memory_space<vmem>>, vector<128x128xf32>
    %c0_1 = arith.constant 0 : index
    %c0_2 = arith.constant 0 : index
    %1 = vector.load %arg2[%c0_1, %c0_2] : memref<1x128xf32, #tpu.memory_space<vmem>>, vector<1x128xf32>
    %2 = vector.broadcast %1 : vector<1x128xf32> to vector<128x128xf32>
    %3 = arith.mulf %0, %2 : vector<128x128xf32>
    %c0_3 = arith.constant 0 : index
    %c0_4 = arith.constant 0 : index
    %4 = vector.load %arg3[%c0_3, %c0_4] : memref<1x128xf32, #tpu.memory_space<vmem>>, vector<1x128xf32>
    %5 = vector.broadcast %4 : vector<1x128xf32> to vector<128x128xf32>
    %6 = arith.addf %3, %5 : vector<128x128xf32>
    %cst = arith.constant 0.000000e+00 : f32
    %7 = vector.broadcast %cst : f32 to vector<128x128xf32>
    %8 = arith.maximumf %6, %7 : vector<128x128xf32>
    %c0_5 = arith.constant 0 : index
    %c0_6 = arith.constant 0 : index
    %9 = vector.load %arg5[%c0_5, %c0_6] : memref<128x128xf32, #tpu.memory_space<vmem>>, vector<128x128xf32>
    %cst_7 = arith.constant dense<0.000000e+00> : vector<128x128xf32>
    %10 = tpu.matmul %8, %9, %cst_7 {dimension_numbers = #tpu.dot_dimension_numbers<[1], [0], [0], [1], [0, 0, 1, 1], [], []>} : vector<128x128xf32>, vector<128x128xf32>, vector<128x128xf32> -> vector<128x128xf32>
    %c0_8 = arith.constant 0 : index
    %c0_9 = arith.constant 0 : index
    %11 = vector.load %arg6[%c0_8, %c0_9] : memref<128x128xf32, #tpu.memory_space<vmem>>, vector<128x128xf32>
    tpu.vector_store %arg6[%c0_8, %c0_9], %10 {strides = array<i32>} : memref<128x128xf32, #tpu.memory_space<vmem>>, vector<128x128xf32>,
    return
  }
  func.func @transform_0(%arg0: i32, %arg1: i32) -> (i32, i32) {
    %c0_i32 = arith.constant 0 : i32
    %c0_i32_0 = arith.constant 0 : i32
    %c0_i32_1 = arith.constant 0 : i32
    return %c0_i32, %c0_i32_0 : i32, i32
  }
  func.func @transform_1(%arg0: i32, %arg1: i32) -> (i32, i32) {
    %c0_i32 = arith.constant 0 : i32
    %c0_i32_0 = arith.constant 0 : i32
    %c0_i32_1 = arith.constant 0 : i32
    return %c0_i32, %c0_i32_0 : i32, i32
  }
  func.func @transform_2(%arg0: i32, %arg1: i32) -> (i32, i32) {
    %c0_i32 = arith.constant 0 : i32
    %c0_i32_0 = arith.constant 0 : i32
    return %arg0, %c0_i32 : i32, i32
  }
  func.func @transform_3(%arg0: i32, %arg1: i32) -> (i32, i32) {
    %c0_i32 = arith.constant 0 : i32
    %c0_i32_0 = arith.constant 0 : i32
    return %c0_i32, %arg1 : i32, i32
  }
  func.func @transform_4(%arg0: i32, %arg1: i32) -> (i32, i32) {
    %c0_i32 = arith.constant 0 : i32
    return %arg0, %arg1 : i32, i32
  }
}

module attributes {stable_mosaic.version = 11 : i64} {
  func.func @_stats_kernel(%arg0: i32, %arg1: memref<128x128xf32, #tpu.memory_space<vmem>>, %arg2: memref<1x128xf32, #tpu.memory_space<vmem>>, %arg3: memref<1x128xf32, #tpu.memory_space<vmem>>) attributes {dimension_semantics = [#tpu.dimension_semantics<arbitrary>], iteration_bounds = array<i64: 1>, scalar_prefetch = 0 : i64, scratch_operands = 0 : i64, tpu.core_type = #tpu.core_type<tc>, window_params = [{transform_indices = @transform_0, window_bounds = array<i64: 128, 128>}, {pipeline_mode = #tpu.pipeline_mode<synchronous>, transform_indices = @transform_1, window_bounds = array<i64: 1, 128>}, {pipeline_mode = #tpu.pipeline_mode<synchronous>, transform_indices = @transform_2, window_bounds = array<i64: 1, 128>}]} {
    %c0_i32 = arith.constant 0 : i32
    %0 = arith.cmpi eq, %arg0, %c0_i32 : i32
    %1 = arith.extui %0 : i1 to i32
    %c0_i32_0 = arith.constant 0 : i32
    %2 = arith.cmpi ne, %1, %c0_i32_0 : i32
    scf.if %2 {
      %cst_11 = arith.constant 0.000000e+00 : f32
      %15 = vector.broadcast %cst_11 : f32 to vector<1x128xf32>
      %c0_12 = arith.constant 0 : index
      %c0_13 = arith.constant 0 : index
      %16 = vector.load %arg2[%c0_12, %c0_13] : memref<1x128xf32, #tpu.memory_space<vmem>>, vector<1x128xf32>
      tpu.vector_store %arg2[%c0_12, %c0_13], %15 {strides = array<i32>} : memref<1x128xf32, #tpu.memory_space<vmem>>, vector<1x128xf32>,
      %cst_14 = arith.constant 0.000000e+00 : f32
      %17 = vector.broadcast %cst_14 : f32 to vector<1x128xf32>
      %c0_15 = arith.constant 0 : index
      %c0_16 = arith.constant 0 : index
      %18 = vector.load %arg3[%c0_15, %c0_16] : memref<1x128xf32, #tpu.memory_space<vmem>>, vector<1x128xf32>
      tpu.vector_store %arg3[%c0_15, %c0_16], %17 {strides = array<i32>} : memref<1x128xf32, #tpu.memory_space<vmem>>, vector<1x128xf32>,
    } else {
    }
    %c0 = arith.constant 0 : index
    %c0_1 = arith.constant 0 : index
    %3 = vector.load %arg1[%c0, %c0_1] : memref<128x128xf32, #tpu.memory_space<vmem>>, vector<128x128xf32>
    %c0_2 = arith.constant 0 : index
    %c0_3 = arith.constant 0 : index
    %4 = vector.load %arg2[%c0_2, %c0_3] : memref<1x128xf32, #tpu.memory_space<vmem>>, vector<1x128xf32>
    %cst = arith.constant dense<0.000000e+00> : vector<128xf32>
    %5 = vector.multi_reduction <add>, %3, %cst [0] : vector<128x128xf32> to vector<128xf32>
    %6 = vector.shape_cast %5 : vector<128xf32> to vector<1x128xf32>
    %7 = arith.addf %4, %6 : vector<1x128xf32>
    %c0_4 = arith.constant 0 : index
    %c0_5 = arith.constant 0 : index
    %8 = vector.load %arg2[%c0_4, %c0_5] : memref<1x128xf32, #tpu.memory_space<vmem>>, vector<1x128xf32>
    tpu.vector_store %arg2[%c0_4, %c0_5], %7 {strides = array<i32>} : memref<1x128xf32, #tpu.memory_space<vmem>>, vector<1x128xf32>,
    %c0_6 = arith.constant 0 : index
    %c0_7 = arith.constant 0 : index
    %9 = vector.load %arg3[%c0_6, %c0_7] : memref<1x128xf32, #tpu.memory_space<vmem>>, vector<1x128xf32>
    %10 = arith.mulf %3, %3 : vector<128x128xf32>
    %cst_8 = arith.constant dense<0.000000e+00> : vector<128xf32>
    %11 = vector.multi_reduction <add>, %10, %cst_8 [0] : vector<128x128xf32> to vector<128xf32>
    %12 = vector.shape_cast %11 : vector<128xf32> to vector<1x128xf32>
    %13 = arith.addf %9, %12 : vector<1x128xf32>
    %c0_9 = arith.constant 0 : index
    %c0_10 = arith.constant 0 : index
    %14 = vector.load %arg3[%c0_9, %c0_10] : memref<1x128xf32, #tpu.memory_space<vmem>>, vector<1x128xf32>
    tpu.vector_store %arg3[%c0_9, %c0_10], %13 {strides = array<i32>} : memref<1x128xf32, #tpu.memory_space<vmem>>, vector<1x128xf32>,
    return
  }
  func.func @transform_0(%arg0: i32) -> (i32, i32) {
    %c0_i32 = arith.constant 0 : i32
    %c0_i32_0 = arith.constant 0 : i32
    return %arg0, %c0_i32 : i32, i32
  }
  func.func @transform_1(%arg0: i32) -> (i32, i32) {
    %c0_i32 = arith.constant 0 : i32
    %c0_i32_0 = arith.constant 0 : i32
    %c0_i32_1 = arith.constant 0 : i32
    return %c0_i32, %c0_i32_0 : i32, i32
  }
  func.func @transform_2(%arg0: i32) -> (i32, i32) {
    %c0_i32 = arith.constant 0 : i32
    %c0_i32_0 = arith.constant 0 : i32
    %c0_i32_1 = arith.constant 0 : i32
    return %c0_i32, %c0_i32_0 : i32, i32
  }
}

module attributes {stable_mosaic.version = 11 : i64} {
  func.func @kernel(%arg0: i32, %arg1: i32, %arg2: i32, %arg3: memref<1x128xf32, #tpu.memory_space<vmem>>, %arg4: memref<1x128xf32, #tpu.memory_space<vmem>>, %arg5: memref<2x1x9x128xf32, #tpu.memory_space<vmem>>, %arg6: memref<2x1x9x128xf32, #tpu.memory_space<vmem>>, %arg7: memref<2x1x9x128xf32, #tpu.memory_space<vmem>>, %arg8: memref<2x1x9x128xf32, #tpu.memory_space<vmem>>, %arg9: memref<2x1x9x128xf32, #tpu.memory_space<vmem>>, %arg10: memref<2x1x9x128xf32, #tpu.memory_space<vmem>>, %arg11: memref<9x128x128xf32, #tpu.memory_space<vmem>>, %arg12: memref<2x1x8x128xf32, #tpu.memory_space<vmem>>) attributes {dimension_semantics = [#tpu.dimension_semantics<parallel>, #tpu.dimension_semantics<parallel>, #tpu.dimension_semantics<parallel>], iteration_bounds = array<i64: 1, 8, 1>, scalar_prefetch = 0 : i64, scratch_operands = 0 : i64, tpu.core_type = #tpu.core_type<tc>, window_params = [{pipeline_mode = #tpu.pipeline_mode<synchronous>, transform_indices = @transform_0, window_bounds = array<i64: 1, 128>}, {pipeline_mode = #tpu.pipeline_mode<synchronous>, transform_indices = @transform_1, window_bounds = array<i64: 1, 128>}, {transform_indices = @transform_2, window_bounds = array<i64: 2, 1, 9, 128>}, {transform_indices = @transform_3, window_bounds = array<i64: 2, 1, 9, 128>}, {transform_indices = @transform_4, window_bounds = array<i64: 2, 1, 9, 128>}, {transform_indices = @transform_5, window_bounds = array<i64: 2, 1, 9, 128>}, {transform_indices = @transform_6, window_bounds = array<i64: 2, 1, 9, 128>}, {transform_indices = @transform_7, window_bounds = array<i64: 2, 1, 9, 128>}, {transform_indices = @transform_8, window_bounds = array<i64: 9, 128, 128>}, {transform_indices = @transform_9, window_bounds = array<i64: 2, 1, 8, 128>}]} {
    %c0 = arith.constant 0 : index
    %c0_0 = arith.constant 0 : index
    %0 = vector.load %arg3[%c0, %c0_0] : memref<1x128xf32, #tpu.memory_space<vmem>>, vector<1x128xf32>
    %c0_1 = arith.constant 0 : index
    %c0_2 = arith.constant 0 : index
    %1 = vector.load %arg4[%c0_1, %c0_2] : memref<1x128xf32, #tpu.memory_space<vmem>>, vector<1x128xf32>
    %cst = arith.constant 0.000000e+00 : f32
    %2 = vector.broadcast %cst : f32 to vector<16x128xf32>
    %3 = tpu.iota {dimensions = array<i32: 1>} : vector<1x8x1xi32>
    %c0_3 = arith.constant 0 : index
    %c0_4 = arith.constant 0 : index
    %c0_5 = arith.constant 0 : index
    %c0_6 = arith.constant 0 : index
    %4 = vector.load %arg5[%c0_3, %c0_4, %c0_5, %c0_6] : memref<2x1x9x128xf32, #tpu.memory_space<vmem>>, vector<2x1x9x128xf32>
    %5 = vector.shape_cast %4 : vector<2x1x9x128xf32> to vector<2x9x128xf32>
    %6 = vector.shape_cast %0 : vector<1x128xf32> to vector<1x1x128xf32>
    %7 = vector.broadcast %6 : vector<1x1x128xf32> to vector<2x9x128xf32>
    %8 = arith.mulf %5, %7 : vector<2x9x128xf32>
    %9 = vector.shape_cast %1 : vector<1x128xf32> to vector<1x1x128xf32>
    %10 = vector.broadcast %9 : vector<1x1x128xf32> to vector<2x9x128xf32>
    %11 = arith.addf %8, %10 : vector<2x9x128xf32>
    %cst_7 = arith.constant 0.000000e+00 : f32
    %12 = vector.broadcast %cst_7 : f32 to vector<2x9x128xf32>
    %13 = arith.maximumf %11, %12 : vector<2x9x128xf32>
    %14 = vector.extract_strided_slice %13 {offsets = [0, 0, 0], sizes = [2, 8, 128], strides = [1, 1, 1]} : vector<2x9x128xf32> to vector<2x8x128xf32>
    %c2_i32 = arith.constant 2 : i32
    %15 = arith.muli %c2_i32, %arg1 : i32
    %c0_i32 = arith.constant 0 : i32
    %16 = arith.addi %15, %c0_i32 : i32
    %c0_i32_8 = arith.constant 0 : i32
    %17 = arith.cmpi ne, %16, %c0_i32_8 : i32
    %c17_i32 = arith.constant 17 : i32
    %18 = arith.cmpi ne, %16, %c17_i32 : i32
    %19 = arith.andi %17, %18 : i1
    %c2_i32_9 = arith.constant 2 : i32
    %20 = vector.broadcast %c2_i32_9 : i32 to vector<1x8x1xi32>
    %21 = arith.muli %20, %3 : vector<1x8x1xi32>
    %c0_i32_10 = arith.constant 0 : i32
    %22 = vector.broadcast %c0_i32_10 : i32 to vector<1x8x1xi32>
    %23 = arith.addi %21, %22 : vector<1x8x1xi32>
    %c0_i32_11 = arith.constant 0 : i32
    %24 = vector.broadcast %c0_i32_11 : i32 to vector<1x8x1xi32>
    %25 = arith.cmpi ne, %23, %24 : vector<1x8x1xi32>
    %c17_i32_12 = arith.constant 17 : i32
    %26 = vector.broadcast %c17_i32_12 : i32 to vector<1x8x1xi32>
    %27 = arith.cmpi ne, %23, %26 : vector<1x8x1xi32>
    %28 = arith.andi %25, %27 : vector<1x8x1xi1>
    %29 = vector.broadcast %19 : i1 to vector<1x8x1xi1>
    %30 = arith.andi %28, %29 : vector<1x8x1xi1>
    %cst_13 = arith.constant 0.000000e+00 : f32
    %31 = vector.shape_cast %30 : vector<1x8x1xi1> to vector<1x8x1xi1>
    %32 = vector.broadcast %31 : vector<1x8x1xi1> to vector<2x8x128xi1>
    %33 = vector.broadcast %cst_13 : f32 to vector<2x8x128xf32>
    %34 = arith.select %32, %14, %33 : vector<2x8x128xi1>, vector<2x8x128xf32>
    %35 = vector.shape_cast %34 : vector<2x8x128xf32> to vector<16x128xf32>
    %c0_14 = arith.constant 0 : index
    %c0_15 = arith.constant 0 : index
    %c0_16 = arith.constant 0 : index
    %36 = vector.load %arg11[%c0_14, %c0_15, %c0_16] : memref<9x128x128xf32, #tpu.memory_space<vmem>>, vector<1x128x128xf32>
    %37 = vector.shape_cast %36 : vector<1x128x128xf32> to vector<128x128xf32>
    %cst_17 = arith.constant dense<0.000000e+00> : vector<16x128xf32>
    %38 = tpu.matmul %35, %37, %cst_17 {dimension_numbers = #tpu.dot_dimension_numbers<[1], [0], [0], [1], [0, 0, 1, 1], [], []>} : vector<16x128xf32>, vector<128x128xf32>, vector<16x128xf32> -> vector<16x128xf32>
    %39 = arith.addf %2, %38 : vector<16x128xf32>
    %c0_18 = arith.constant 0 : index
    %c0_19 = arith.constant 0 : index
    %c0_20 = arith.constant 0 : index
    %c0_21 = arith.constant 0 : index
    %40 = vector.load %arg6[%c0_18, %c0_19, %c0_20, %c0_21] : memref<2x1x9x128xf32, #tpu.memory_space<vmem>>, vector<2x1x9x128xf32>
    %41 = vector.shape_cast %40 : vector<2x1x9x128xf32> to vector<2x9x128xf32>
    %42 = vector.shape_cast %0 : vector<1x128xf32> to vector<1x1x128xf32>
    %43 = vector.broadcast %42 : vector<1x1x128xf32> to vector<2x9x128xf32>
    %44 = arith.mulf %41, %43 : vector<2x9x128xf32>
    %45 = vector.shape_cast %1 : vector<1x128xf32> to vector<1x1x128xf32>
    %46 = vector.broadcast %45 : vector<1x1x128xf32> to vector<2x9x128xf32>
    %47 = arith.addf %44, %46 : vector<2x9x128xf32>
    %cst_22 = arith.constant 0.000000e+00 : f32
    %48 = vector.broadcast %cst_22 : f32 to vector<2x9x128xf32>
    %49 = arith.maximumf %47, %48 : vector<2x9x128xf32>
    %50 = vector.extract_strided_slice %49 {offsets = [0, 0, 0], sizes = [2, 8, 128], strides = [1, 1, 1]} : vector<2x9x128xf32> to vector<2x8x128xf32>
    %c2_i32_23 = arith.constant 2 : i32
    %51 = arith.muli %c2_i32_23, %arg1 : i32
    %c0_i32_24 = arith.constant 0 : i32
    %52 = arith.addi %51, %c0_i32_24 : i32
    %c0_i32_25 = arith.constant 0 : i32
    %53 = arith.cmpi ne, %52, %c0_i32_25 : i32
    %c17_i32_26 = arith.constant 17 : i32
    %54 = arith.cmpi ne, %52, %c17_i32_26 : i32
    %55 = arith.andi %53, %54 : i1
    %c2_i32_27 = arith.constant 2 : i32
    %56 = vector.broadcast %c2_i32_27 : i32 to vector<1x8x1xi32>
    %57 = arith.muli %56, %3 : vector<1x8x1xi32>
    %c1_i32 = arith.constant 1 : i32
    %58 = vector.broadcast %c1_i32 : i32 to vector<1x8x1xi32>
    %59 = arith.addi %57, %58 : vector<1x8x1xi32>
    %c0_i32_28 = arith.constant 0 : i32
    %60 = vector.broadcast %c0_i32_28 : i32 to vector<1x8x1xi32>
    %61 = arith.cmpi ne, %59, %60 : vector<1x8x1xi32>
    %c17_i32_29 = arith.constant 17 : i32
    %62 = vector.broadcast %c17_i32_29 : i32 to vector<1x8x1xi32>
    %63 = arith.cmpi ne, %59, %62 : vector<1x8x1xi32>
    %64 = arith.andi %61, %63 : vector<1x8x1xi1>
    %65 = vector.broadcast %55 : i1 to vector<1x8x1xi1>
    %66 = arith.andi %64, %65 : vector<1x8x1xi1>
    %cst_30 = arith.constant 0.000000e+00 : f32
    %67 = vector.shape_cast %66 : vector<1x8x1xi1> to vector<1x8x1xi1>
    %68 = vector.broadcast %67 : vector<1x8x1xi1> to vector<2x8x128xi1>
    %69 = vector.broadcast %cst_30 : f32 to vector<2x8x128xf32>
    %70 = arith.select %68, %50, %69 : vector<2x8x128xi1>, vector<2x8x128xf32>
    %71 = vector.shape_cast %70 : vector<2x8x128xf32> to vector<16x128xf32>
    %c1 = arith.constant 1 : index
    %c0_31 = arith.constant 0 : index
    %c0_32 = arith.constant 0 : index
    %72 = vector.load %arg11[%c1, %c0_31, %c0_32] : memref<9x128x128xf32, #tpu.memory_space<vmem>>, vector<1x128x128xf32>
    %73 = vector.shape_cast %72 : vector<1x128x128xf32> to vector<128x128xf32>
    %cst_33 = arith.constant dense<0.000000e+00> : vector<16x128xf32>
    %74 = tpu.matmul %71, %73, %cst_33 {dimension_numbers = #tpu.dot_dimension_numbers<[1], [0], [0], [1], [0, 0, 1, 1], [], []>} : vector<16x128xf32>, vector<128x128xf32>, vector<16x128xf32> -> vector<16x128xf32>
    %75 = arith.addf %39, %74 : vector<16x128xf32>
    %76 = vector.extract_strided_slice %13 {offsets = [0, 1, 0], sizes = [2, 8, 128], strides = [1, 1, 1]} : vector<2x9x128xf32> to vector<2x8x128xf32>
    %c2_i32_34 = arith.constant 2 : i32
    %77 = arith.muli %c2_i32_34, %arg1 : i32
    %c0_i32_35 = arith.constant 0 : i32
    %78 = arith.addi %77, %c0_i32_35 : i32
    %c0_i32_36 = arith.constant 0 : i32
    %79 = arith.cmpi ne, %78, %c0_i32_36 : i32
    %c17_i32_37 = arith.constant 17 : i32
    %80 = arith.cmpi ne, %78, %c17_i32_37 : i32
    %81 = arith.andi %79, %80 : i1
    %c2_i32_38 = arith.constant 2 : i32
    %82 = vector.broadcast %c2_i32_38 : i32 to vector<1x8x1xi32>
    %83 = arith.muli %82, %3 : vector<1x8x1xi32>
    %c2_i32_39 = arith.constant 2 : i32
    %84 = vector.broadcast %c2_i32_39 : i32 to vector<1x8x1xi32>
    %85 = arith.addi %83, %84 : vector<1x8x1xi32>
    %c0_i32_40 = arith.constant 0 : i32
    %86 = vector.broadcast %c0_i32_40 : i32 to vector<1x8x1xi32>
    %87 = arith.cmpi ne, %85, %86 : vector<1x8x1xi32>
    %c17_i32_41 = arith.constant 17 : i32
    %88 = vector.broadcast %c17_i32_41 : i32 to vector<1x8x1xi32>
    %89 = arith.cmpi ne, %85, %88 : vector<1x8x1xi32>
    %90 = arith.andi %87, %89 : vector<1x8x1xi1>
    %91 = vector.broadcast %81 : i1 to vector<1x8x1xi1>
    %92 = arith.andi %90, %91 : vector<1x8x1xi1>
    %cst_42 = arith.constant 0.000000e+00 : f32
    %93 = vector.shape_cast %92 : vector<1x8x1xi1> to vector<1x8x1xi1>
    %94 = vector.broadcast %93 : vector<1x8x1xi1> to vector<2x8x128xi1>
    %95 = vector.broadcast %cst_42 : f32 to vector<2x8x128xf32>
    %96 = arith.select %94, %76, %95 : vector<2x8x128xi1>, vector<2x8x128xf32>
    %97 = vector.shape_cast %96 : vector<2x8x128xf32> to vector<16x128xf32>
    %c2 = arith.constant 2 : index
    %c0_43 = arith.constant 0 : index
    %c0_44 = arith.constant 0 : index
    %98 = vector.load %arg11[%c2, %c0_43, %c0_44] : memref<9x128x128xf32, #tpu.memory_space<vmem>>, vector<1x128x128xf32>
    %99 = vector.shape_cast %98 : vector<1x128x128xf32> to vector<128x128xf32>
    %cst_45 = arith.constant dense<0.000000e+00> : vector<16x128xf32>
    %100 = tpu.matmul %97, %99, %cst_45 {dimension_numbers = #tpu.dot_dimension_numbers<[1], [0], [0], [1], [0, 0, 1, 1], [], []>} : vector<16x128xf32>, vector<128x128xf32>, vector<16x128xf32> -> vector<16x128xf32>
    %101 = arith.addf %75, %100 : vector<16x128xf32>
    %c0_46 = arith.constant 0 : index
    %c0_47 = arith.constant 0 : index
    %c0_48 = arith.constant 0 : index
    %c0_49 = arith.constant 0 : index
    %102 = vector.load %arg7[%c0_46, %c0_47, %c0_48, %c0_49] : memref<2x1x9x128xf32, #tpu.memory_space<vmem>>, vector<2x1x9x128xf32>
    %103 = vector.shape_cast %102 : vector<2x1x9x128xf32> to vector<2x9x128xf32>
    %104 = vector.shape_cast %0 : vector<1x128xf32> to vector<1x1x128xf32>
    %105 = vector.broadcast %104 : vector<1x1x128xf32> to vector<2x9x128xf32>
    %106 = arith.mulf %103, %105 : vector<2x9x128xf32>
    %107 = vector.shape_cast %1 : vector<1x128xf32> to vector<1x1x128xf32>
    %108 = vector.broadcast %107 : vector<1x1x128xf32> to vector<2x9x128xf32>
    %109 = arith.addf %106, %108 : vector<2x9x128xf32>
    %cst_50 = arith.constant 0.000000e+00 : f32
    %110 = vector.broadcast %cst_50 : f32 to vector<2x9x128xf32>
    %111 = arith.maximumf %109, %110 : vector<2x9x128xf32>
    %112 = vector.extract_strided_slice %111 {offsets = [0, 0, 0], sizes = [2, 8, 128], strides = [1, 1, 1]} : vector<2x9x128xf32> to vector<2x8x128xf32>
    %c2_i32_51 = arith.constant 2 : i32
    %113 = arith.muli %c2_i32_51, %arg1 : i32
    %c1_i32_52 = arith.constant 1 : i32
    %114 = arith.addi %113, %c1_i32_52 : i32
    %c0_i32_53 = arith.constant 0 : i32
    %115 = arith.cmpi ne, %114, %c0_i32_53 : i32
    %c17_i32_54 = arith.constant 17 : i32
    %116 = arith.cmpi ne, %114, %c17_i32_54 : i32
    %117 = arith.andi %115, %116 : i1
    %c2_i32_55 = arith.constant 2 : i32
    %118 = vector.broadcast %c2_i32_55 : i32 to vector<1x8x1xi32>
    %119 = arith.muli %118, %3 : vector<1x8x1xi32>
    %c0_i32_56 = arith.constant 0 : i32
    %120 = vector.broadcast %c0_i32_56 : i32 to vector<1x8x1xi32>
    %121 = arith.addi %119, %120 : vector<1x8x1xi32>
    %c0_i32_57 = arith.constant 0 : i32
    %122 = vector.broadcast %c0_i32_57 : i32 to vector<1x8x1xi32>
    %123 = arith.cmpi ne, %121, %122 : vector<1x8x1xi32>
    %c17_i32_58 = arith.constant 17 : i32
    %124 = vector.broadcast %c17_i32_58 : i32 to vector<1x8x1xi32>
    %125 = arith.cmpi ne, %121, %124 : vector<1x8x1xi32>
    %126 = arith.andi %123, %125 : vector<1x8x1xi1>
    %127 = vector.broadcast %117 : i1 to vector<1x8x1xi1>
    %128 = arith.andi %126, %127 : vector<1x8x1xi1>
    %cst_59 = arith.constant 0.000000e+00 : f32
    %129 = vector.shape_cast %128 : vector<1x8x1xi1> to vector<1x8x1xi1>
    %130 = vector.broadcast %129 : vector<1x8x1xi1> to vector<2x8x128xi1>
    %131 = vector.broadcast %cst_59 : f32 to vector<2x8x128xf32>
    %132 = arith.select %130, %112, %131 : vector<2x8x128xi1>, vector<2x8x128xf32>
    %133 = vector.shape_cast %132 : vector<2x8x128xf32> to vector<16x128xf32>
    %c3 = arith.constant 3 : index
    %c0_60 = arith.constant 0 : index
    %c0_61 = arith.constant 0 : index
    %134 = vector.load %arg11[%c3, %c0_60, %c0_61] : memref<9x128x128xf32, #tpu.memory_space<vmem>>, vector<1x128x128xf32>
    %135 = vector.shape_cast %134 : vector<1x128x128xf32> to vector<128x128xf32>
    %cst_62 = arith.constant dense<0.000000e+00> : vector<16x128xf32>
    %136 = tpu.matmul %133, %135, %cst_62 {dimension_numbers = #tpu.dot_dimension_numbers<[1], [0], [0], [1], [0, 0, 1, 1], [], []>} : vector<16x128xf32>, vector<128x128xf32>, vector<16x128xf32> -> vector<16x128xf32>
    %137 = arith.addf %101, %136 : vector<16x128xf32>
    %c0_63 = arith.constant 0 : index
    %c0_64 = arith.constant 0 : index
    %c0_65 = arith.constant 0 : index
    %c0_66 = arith.constant 0 : index
    %138 = vector.load %arg8[%c0_63, %c0_64, %c0_65, %c0_66] : memref<2x1x9x128xf32, #tpu.memory_space<vmem>>, vector<2x1x9x128xf32>
    %139 = vector.shape_cast %138 : vector<2x1x9x128xf32> to vector<2x9x128xf32>
    %140 = vector.shape_cast %0 : vector<1x128xf32> to vector<1x1x128xf32>
    %141 = vector.broadcast %140 : vector<1x1x128xf32> to vector<2x9x128xf32>
    %142 = arith.mulf %139, %141 : vector<2x9x128xf32>
    %143 = vector.shape_cast %1 : vector<1x128xf32> to vector<1x1x128xf32>
    %144 = vector.broadcast %143 : vector<1x1x128xf32> to vector<2x9x128xf32>
    %145 = arith.addf %142, %144 : vector<2x9x128xf32>
    %cst_67 = arith.constant 0.000000e+00 : f32
    %146 = vector.broadcast %cst_67 : f32 to vector<2x9x128xf32>
    %147 = arith.maximumf %145, %146 : vector<2x9x128xf32>
    %148 = vector.extract_strided_slice %147 {offsets = [0, 0, 0], sizes = [2, 8, 128], strides = [1, 1, 1]} : vector<2x9x128xf32> to vector<2x8x128xf32>
    %c2_i32_68 = arith.constant 2 : i32
    %149 = arith.muli %c2_i32_68, %arg1 : i32
    %c1_i32_69 = arith.constant 1 : i32
    %150 = arith.addi %149, %c1_i32_69 : i32
    %c0_i32_70 = arith.constant 0 : i32
    %151 = arith.cmpi ne, %150, %c0_i32_70 : i32
    %c17_i32_71 = arith.constant 17 : i32
    %152 = arith.cmpi ne, %150, %c17_i32_71 : i32
    %153 = arith.andi %151, %152 : i1
    %c2_i32_72 = arith.constant 2 : i32
    %154 = vector.broadcast %c2_i32_72 : i32 to vector<1x8x1xi32>
    %155 = arith.muli %154, %3 : vector<1x8x1xi32>
    %c1_i32_73 = arith.constant 1 : i32
    %156 = vector.broadcast %c1_i32_73 : i32 to vector<1x8x1xi32>
    %157 = arith.addi %155, %156 : vector<1x8x1xi32>
    %c0_i32_74 = arith.constant 0 : i32
    %158 = vector.broadcast %c0_i32_74 : i32 to vector<1x8x1xi32>
    %159 = arith.cmpi ne, %157, %158 : vector<1x8x1xi32>
    %c17_i32_75 = arith.constant 17 : i32
    %160 = vector.broadcast %c17_i32_75 : i32 to vector<1x8x1xi32>
    %161 = arith.cmpi ne, %157, %160 : vector<1x8x1xi32>
    %162 = arith.andi %159, %161 : vector<1x8x1xi1>
    %163 = vector.broadcast %153 : i1 to vector<1x8x1xi1>
    %164 = arith.andi %162, %163 : vector<1x8x1xi1>
    %cst_76 = arith.constant 0.000000e+00 : f32
    %165 = vector.shape_cast %164 : vector<1x8x1xi1> to vector<1x8x1xi1>
    %166 = vector.broadcast %165 : vector<1x8x1xi1> to vector<2x8x128xi1>
    %167 = vector.broadcast %cst_76 : f32 to vector<2x8x128xf32>
    %168 = arith.select %166, %148, %167 : vector<2x8x128xi1>, vector<2x8x128xf32>
    %169 = vector.shape_cast %168 : vector<2x8x128xf32> to vector<16x128xf32>
    %c4 = arith.constant 4 : index
    %c0_77 = arith.constant 0 : index
    %c0_78 = arith.constant 0 : index
    %170 = vector.load %arg11[%c4, %c0_77, %c0_78] : memref<9x128x128xf32, #tpu.memory_space<vmem>>, vector<1x128x128xf32>
    %171 = vector.shape_cast %170 : vector<1x128x128xf32> to vector<128x128xf32>
    %cst_79 = arith.constant dense<0.000000e+00> : vector<16x128xf32>
    %172 = tpu.matmul %169, %171, %cst_79 {dimension_numbers = #tpu.dot_dimension_numbers<[1], [0], [0], [1], [0, 0, 1, 1], [], []>} : vector<16x128xf32>, vector<128x128xf32>, vector<16x128xf32> -> vector<16x128xf32>
    %173 = arith.addf %137, %172 : vector<16x128xf32>
    %174 = vector.extract_strided_slice %111 {offsets = [0, 1, 0], sizes = [2, 8, 128], strides = [1, 1, 1]} : vector<2x9x128xf32> to vector<2x8x128xf32>
    %c2_i32_80 = arith.constant 2 : i32
    %175 = arith.muli %c2_i32_80, %arg1 : i32
    %c1_i32_81 = arith.constant 1 : i32
    %176 = arith.addi %175, %c1_i32_81 : i32
    %c0_i32_82 = arith.constant 0 : i32
    %177 = arith.cmpi ne, %176, %c0_i32_82 : i32
    %c17_i32_83 = arith.constant 17 : i32
    %178 = arith.cmpi ne, %176, %c17_i32_83 : i32
    %179 = arith.andi %177, %178 : i1
    %c2_i32_84 = arith.constant 2 : i32
    %180 = vector.broadcast %c2_i32_84 : i32 to vector<1x8x1xi32>
    %181 = arith.muli %180, %3 : vector<1x8x1xi32>
    %c2_i32_85 = arith.constant 2 : i32
    %182 = vector.broadcast %c2_i32_85 : i32 to vector<1x8x1xi32>
    %183 = arith.addi %181, %182 : vector<1x8x1xi32>
    %c0_i32_86 = arith.constant 0 : i32
    %184 = vector.broadcast %c0_i32_86 : i32 to vector<1x8x1xi32>
    %185 = arith.cmpi ne, %183, %184 : vector<1x8x1xi32>
    %c17_i32_87 = arith.constant 17 : i32
    %186 = vector.broadcast %c17_i32_87 : i32 to vector<1x8x1xi32>
    %187 = arith.cmpi ne, %183, %186 : vector<1x8x1xi32>
    %188 = arith.andi %185, %187 : vector<1x8x1xi1>
    %189 = vector.broadcast %179 : i1 to vector<1x8x1xi1>
    %190 = arith.andi %188, %189 : vector<1x8x1xi1>
    %cst_88 = arith.constant 0.000000e+00 : f32
    %191 = vector.shape_cast %190 : vector<1x8x1xi1> to vector<1x8x1xi1>
    %192 = vector.broadcast %191 : vector<1x8x1xi1> to vector<2x8x128xi1>
    %193 = vector.broadcast %cst_88 : f32 to vector<2x8x128xf32>
    %194 = arith.select %192, %174, %193 : vector<2x8x128xi1>, vector<2x8x128xf32>
    %195 = vector.shape_cast %194 : vector<2x8x128xf32> to vector<16x128xf32>
    %c5 = arith.constant 5 : index
    %c0_89 = arith.constant 0 : index
    %c0_90 = arith.constant 0 : index
    %196 = vector.load %arg11[%c5, %c0_89, %c0_90] : memref<9x128x128xf32, #tpu.memory_space<vmem>>, vector<1x128x128xf32>
    %197 = vector.shape_cast %196 : vector<1x128x128xf32> to vector<128x128xf32>
    %cst_91 = arith.constant dense<0.000000e+00> : vector<16x128xf32>
    %198 = tpu.matmul %195, %197, %cst_91 {dimension_numbers = #tpu.dot_dimension_numbers<[1], [0], [0], [1], [0, 0, 1, 1], [], []>} : vector<16x128xf32>, vector<128x128xf32>, vector<16x128xf32> -> vector<16x128xf32>
    %199 = arith.addf %173, %198 : vector<16x128xf32>
    %c0_92 = arith.constant 0 : index
    %c0_93 = arith.constant 0 : index
    %c0_94 = arith.constant 0 : index
    %c0_95 = arith.constant 0 : index
    %200 = vector.load %arg9[%c0_92, %c0_93, %c0_94, %c0_95] : memref<2x1x9x128xf32, #tpu.memory_space<vmem>>, vector<2x1x9x128xf32>
    %201 = vector.shape_cast %200 : vector<2x1x9x128xf32> to vector<2x9x128xf32>
    %202 = vector.shape_cast %0 : vector<1x128xf32> to vector<1x1x128xf32>
    %203 = vector.broadcast %202 : vector<1x1x128xf32> to vector<2x9x128xf32>
    %204 = arith.mulf %201, %203 : vector<2x9x128xf32>
    %205 = vector.shape_cast %1 : vector<1x128xf32> to vector<1x1x128xf32>
    %206 = vector.broadcast %205 : vector<1x1x128xf32> to vector<2x9x128xf32>
    %207 = arith.addf %204, %206 : vector<2x9x128xf32>
    %cst_96 = arith.constant 0.000000e+00 : f32
    %208 = vector.broadcast %cst_96 : f32 to vector<2x9x128xf32>
    %209 = arith.maximumf %207, %208 : vector<2x9x128xf32>
    %210 = vector.extract_strided_slice %209 {offsets = [0, 0, 0], sizes = [2, 8, 128], strides = [1, 1, 1]} : vector<2x9x128xf32> to vector<2x8x128xf32>
    %c2_i32_97 = arith.constant 2 : i32
    %211 = arith.muli %c2_i32_97, %arg1 : i32
    %c2_i32_98 = arith.constant 2 : i32
    %212 = arith.addi %211, %c2_i32_98 : i32
    %c0_i32_99 = arith.constant 0 : i32
    %213 = arith.cmpi ne, %212, %c0_i32_99 : i32
    %c17_i32_100 = arith.constant 17 : i32
    %214 = arith.cmpi ne, %212, %c17_i32_100 : i32
    %215 = arith.andi %213, %214 : i1
    %c2_i32_101 = arith.constant 2 : i32
    %216 = vector.broadcast %c2_i32_101 : i32 to vector<1x8x1xi32>
    %217 = arith.muli %216, %3 : vector<1x8x1xi32>
    %c0_i32_102 = arith.constant 0 : i32
    %218 = vector.broadcast %c0_i32_102 : i32 to vector<1x8x1xi32>
    %219 = arith.addi %217, %218 : vector<1x8x1xi32>
    %c0_i32_103 = arith.constant 0 : i32
    %220 = vector.broadcast %c0_i32_103 : i32 to vector<1x8x1xi32>
    %221 = arith.cmpi ne, %219, %220 : vector<1x8x1xi32>
    %c17_i32_104 = arith.constant 17 : i32
    %222 = vector.broadcast %c17_i32_104 : i32 to vector<1x8x1xi32>
    %223 = arith.cmpi ne, %219, %222 : vector<1x8x1xi32>
    %224 = arith.andi %221, %223 : vector<1x8x1xi1>
    %225 = vector.broadcast %215 : i1 to vector<1x8x1xi1>
    %226 = arith.andi %224, %225 : vector<1x8x1xi1>
    %cst_105 = arith.constant 0.000000e+00 : f32
    %227 = vector.shape_cast %226 : vector<1x8x1xi1> to vector<1x8x1xi1>
    %228 = vector.broadcast %227 : vector<1x8x1xi1> to vector<2x8x128xi1>
    %229 = vector.broadcast %cst_105 : f32 to vector<2x8x128xf32>
    %230 = arith.select %228, %210, %229 : vector<2x8x128xi1>, vector<2x8x128xf32>
    %231 = vector.shape_cast %230 : vector<2x8x128xf32> to vector<16x128xf32>
    %c6 = arith.constant 6 : index
    %c0_106 = arith.constant 0 : index
    %c0_107 = arith.constant 0 : index
    %232 = vector.load %arg11[%c6, %c0_106, %c0_107] : memref<9x128x128xf32, #tpu.memory_space<vmem>>, vector<1x128x128xf32>
    %233 = vector.shape_cast %232 : vector<1x128x128xf32> to vector<128x128xf32>
    %cst_108 = arith.constant dense<0.000000e+00> : vector<16x128xf32>
    %234 = tpu.matmul %231, %233, %cst_108 {dimension_numbers = #tpu.dot_dimension_numbers<[1], [0], [0], [1], [0, 0, 1, 1], [], []>} : vector<16x128xf32>, vector<128x128xf32>, vector<16x128xf32> -> vector<16x128xf32>
    %235 = arith.addf %199, %234 : vector<16x128xf32>
    %c0_109 = arith.constant 0 : index
    %c0_110 = arith.constant 0 : index
    %c0_111 = arith.constant 0 : index
    %c0_112 = arith.constant 0 : index
    %236 = vector.load %arg10[%c0_109, %c0_110, %c0_111, %c0_112] : memref<2x1x9x128xf32, #tpu.memory_space<vmem>>, vector<2x1x9x128xf32>
    %237 = vector.shape_cast %236 : vector<2x1x9x128xf32> to vector<2x9x128xf32>
    %238 = vector.shape_cast %0 : vector<1x128xf32> to vector<1x1x128xf32>
    %239 = vector.broadcast %238 : vector<1x1x128xf32> to vector<2x9x128xf32>
    %240 = arith.mulf %237, %239 : vector<2x9x128xf32>
    %241 = vector.shape_cast %1 : vector<1x128xf32> to vector<1x1x128xf32>
    %242 = vector.broadcast %241 : vector<1x1x128xf32> to vector<2x9x128xf32>
    %243 = arith.addf %240, %242 : vector<2x9x128xf32>
    %cst_113 = arith.constant 0.000000e+00 : f32
    %244 = vector.broadcast %cst_113 : f32 to vector<2x9x128xf32>
    %245 = arith.maximumf %243, %244 : vector<2x9x128xf32>
    %246 = vector.extract_strided_slice %245 {offsets = [0, 0, 0], sizes = [2, 8, 128], strides = [1, 1, 1]} : vector<2x9x128xf32> to vector<2x8x128xf32>
    %c2_i32_114 = arith.constant 2 : i32
    %247 = arith.muli %c2_i32_114, %arg1 : i32
    %c2_i32_115 = arith.constant 2 : i32
    %248 = arith.addi %247, %c2_i32_115 : i32
    %c0_i32_116 = arith.constant 0 : i32
    %249 = arith.cmpi ne, %248, %c0_i32_116 : i32
    %c17_i32_117 = arith.constant 17 : i32
    %250 = arith.cmpi ne, %248, %c17_i32_117 : i32
    %251 = arith.andi %249, %250 : i1
    %c2_i32_118 = arith.constant 2 : i32
    %252 = vector.broadcast %c2_i32_118 : i32 to vector<1x8x1xi32>
    %253 = arith.muli %252, %3 : vector<1x8x1xi32>
    %c1_i32_119 = arith.constant 1 : i32
    %254 = vector.broadcast %c1_i32_119 : i32 to vector<1x8x1xi32>
    %255 = arith.addi %253, %254 : vector<1x8x1xi32>
    %c0_i32_120 = arith.constant 0 : i32
    %256 = vector.broadcast %c0_i32_120 : i32 to vector<1x8x1xi32>
    %257 = arith.cmpi ne, %255, %256 : vector<1x8x1xi32>
    %c17_i32_121 = arith.constant 17 : i32
    %258 = vector.broadcast %c17_i32_121 : i32 to vector<1x8x1xi32>
    %259 = arith.cmpi ne, %255, %258 : vector<1x8x1xi32>
    %260 = arith.andi %257, %259 : vector<1x8x1xi1>
    %261 = vector.broadcast %251 : i1 to vector<1x8x1xi1>
    %262 = arith.andi %260, %261 : vector<1x8x1xi1>
    %cst_122 = arith.constant 0.000000e+00 : f32
    %263 = vector.shape_cast %262 : vector<1x8x1xi1> to vector<1x8x1xi1>
    %264 = vector.broadcast %263 : vector<1x8x1xi1> to vector<2x8x128xi1>
    %265 = vector.broadcast %cst_122 : f32 to vector<2x8x128xf32>
    %266 = arith.select %264, %246, %265 : vector<2x8x128xi1>, vector<2x8x128xf32>
    %267 = vector.shape_cast %266 : vector<2x8x128xf32> to vector<16x128xf32>
    %c7 = arith.constant 7 : index
    %c0_123 = arith.constant 0 : index
    %c0_124 = arith.constant 0 : index
    %268 = vector.load %arg11[%c7, %c0_123, %c0_124] : memref<9x128x128xf32, #tpu.memory_space<vmem>>, vector<1x128x128xf32>
    %269 = vector.shape_cast %268 : vector<1x128x128xf32> to vector<128x128xf32>
    %cst_125 = arith.constant dense<0.000000e+00> : vector<16x128xf32>
    %270 = tpu.matmul %267, %269, %cst_125 {dimension_numbers = #tpu.dot_dimension_numbers<[1], [0], [0], [1], [0, 0, 1, 1], [], []>} : vector<16x128xf32>, vector<128x128xf32>, vector<16x128xf32> -> vector<16x128xf32>
    %271 = arith.addf %235, %270 : vector<16x128xf32>
    %272 = vector.extract_strided_slice %209 {offsets = [0, 1, 0], sizes = [2, 8, 128], strides = [1, 1, 1]} : vector<2x9x128xf32> to vector<2x8x128xf32>
    %c2_i32_126 = arith.constant 2 : i32
    %273 = arith.muli %c2_i32_126, %arg1 : i32
    %c2_i32_127 = arith.constant 2 : i32
    %274 = arith.addi %273, %c2_i32_127 : i32
    %c0_i32_128 = arith.constant 0 : i32
    %275 = arith.cmpi ne, %274, %c0_i32_128 : i32
    %c17_i32_129 = arith.constant 17 : i32
    %276 = arith.cmpi ne, %274, %c17_i32_129 : i32
    %277 = arith.andi %275, %276 : i1
    %c2_i32_130 = arith.constant 2 : i32
    %278 = vector.broadcast %c2_i32_130 : i32 to vector<1x8x1xi32>
    %279 = arith.muli %278, %3 : vector<1x8x1xi32>
    %c2_i32_131 = arith.constant 2 : i32
    %280 = vector.broadcast %c2_i32_131 : i32 to vector<1x8x1xi32>
    %281 = arith.addi %279, %280 : vector<1x8x1xi32>
    %c0_i32_132 = arith.constant 0 : i32
    %282 = vector.broadcast %c0_i32_132 : i32 to vector<1x8x1xi32>
    %283 = arith.cmpi ne, %281, %282 : vector<1x8x1xi32>
    %c17_i32_133 = arith.constant 17 : i32
    %284 = vector.broadcast %c17_i32_133 : i32 to vector<1x8x1xi32>
    %285 = arith.cmpi ne, %281, %284 : vector<1x8x1xi32>
    %286 = arith.andi %283, %285 : vector<1x8x1xi1>
    %287 = vector.broadcast %277 : i1 to vector<1x8x1xi1>
    %288 = arith.andi %286, %287 : vector<1x8x1xi1>
    %cst_134 = arith.constant 0.000000e+00 : f32
    %289 = vector.shape_cast %288 : vector<1x8x1xi1> to vector<1x8x1xi1>
    %290 = vector.broadcast %289 : vector<1x8x1xi1> to vector<2x8x128xi1>
    %291 = vector.broadcast %cst_134 : f32 to vector<2x8x128xf32>
    %292 = arith.select %290, %272, %291 : vector<2x8x128xi1>, vector<2x8x128xf32>
    %293 = vector.shape_cast %292 : vector<2x8x128xf32> to vector<16x128xf32>
    %c8 = arith.constant 8 : index
    %c0_135 = arith.constant 0 : index
    %c0_136 = arith.constant 0 : index
    %294 = vector.load %arg11[%c8, %c0_135, %c0_136] : memref<9x128x128xf32, #tpu.memory_space<vmem>>, vector<1x128x128xf32>
    %295 = vector.shape_cast %294 : vector<1x128x128xf32> to vector<128x128xf32>
    %cst_137 = arith.constant dense<0.000000e+00> : vector<16x128xf32>
    %296 = tpu.matmul %293, %295, %cst_137 {dimension_numbers = #tpu.dot_dimension_numbers<[1], [0], [0], [1], [0, 0, 1, 1], [], []>} : vector<16x128xf32>, vector<128x128xf32>, vector<16x128xf32> -> vector<16x128xf32>
    %297 = arith.addf %271, %296 : vector<16x128xf32>
    %298 = vector.shape_cast %297 : vector<16x128xf32> to vector<2x1x8x128xf32>
    %c0_138 = arith.constant 0 : index
    %c0_139 = arith.constant 0 : index
    %c0_140 = arith.constant 0 : index
    %c0_141 = arith.constant 0 : index
    %299 = vector.load %arg12[%c0_138, %c0_139, %c0_140, %c0_141] : memref<2x1x8x128xf32, #tpu.memory_space<vmem>>, vector<2x1x8x128xf32>
    tpu.vector_store %arg12[%c0_138, %c0_139, %c0_140, %c0_141], %298 {strides = array<i32>} : memref<2x1x8x128xf32, #tpu.memory_space<vmem>>, vector<2x1x8x128xf32>,
    return
  }
  func.func @transform_0(%arg0: i32, %arg1: i32, %arg2: i32) -> (i32, i32) {
    %c0_i32 = arith.constant 0 : i32
    %c0_i32_0 = arith.constant 0 : i32
    %c0_i32_1 = arith.constant 0 : i32
    return %c0_i32, %c0_i32_0 : i32, i32
  }
  func.func @transform_1(%arg0: i32, %arg1: i32, %arg2: i32) -> (i32, i32) {
    %c0_i32 = arith.constant 0 : i32
    %c0_i32_0 = arith.constant 0 : i32
    %c0_i32_1 = arith.constant 0 : i32
    return %c0_i32, %c0_i32_0 : i32, i32
  }
  func.func @transform_2(%arg0: i32, %arg1: i32, %arg2: i32) -> (i32, i32, i32, i32) {
    %c0_i32 = arith.constant 0 : i32
    %0 = arith.addi %arg1, %c0_i32 : i32
    %c0_i32_0 = arith.constant 0 : i32
    %c0_i32_1 = arith.constant 0 : i32
    %c0_i32_2 = arith.constant 0 : i32
    return %arg0, %0, %c0_i32_0, %c0_i32_1 : i32, i32, i32, i32
  }
  func.func @transform_3(%arg0: i32, %arg1: i32, %arg2: i32) -> (i32, i32, i32, i32) {
    %c0_i32 = arith.constant 0 : i32
    %0 = arith.addi %arg1, %c0_i32 : i32
    %c0_i32_0 = arith.constant 0 : i32
    %c0_i32_1 = arith.constant 0 : i32
    %c0_i32_2 = arith.constant 0 : i32
    return %arg0, %0, %c0_i32_0, %c0_i32_1 : i32, i32, i32, i32
  }
  func.func @transform_4(%arg0: i32, %arg1: i32, %arg2: i32) -> (i32, i32, i32, i32) {
    %c0_i32 = arith.constant 0 : i32
    %0 = arith.addi %arg1, %c0_i32 : i32
    %c0_i32_0 = arith.constant 0 : i32
    %c0_i32_1 = arith.constant 0 : i32
    %c0_i32_2 = arith.constant 0 : i32
    return %arg0, %0, %c0_i32_0, %c0_i32_1 : i32, i32, i32, i32
  }
  func.func @transform_5(%arg0: i32, %arg1: i32, %arg2: i32) -> (i32, i32, i32, i32) {
    %c0_i32 = arith.constant 0 : i32
    %0 = arith.addi %arg1, %c0_i32 : i32
    %c0_i32_0 = arith.constant 0 : i32
    %c0_i32_1 = arith.constant 0 : i32
    %c0_i32_2 = arith.constant 0 : i32
    return %arg0, %0, %c0_i32_0, %c0_i32_1 : i32, i32, i32, i32
  }
  func.func @transform_6(%arg0: i32, %arg1: i32, %arg2: i32) -> (i32, i32, i32, i32) {
    %c1_i32 = arith.constant 1 : i32
    %0 = arith.addi %arg1, %c1_i32 : i32
    %c0_i32 = arith.constant 0 : i32
    %c0_i32_0 = arith.constant 0 : i32
    %c0_i32_1 = arith.constant 0 : i32
    return %arg0, %0, %c0_i32, %c0_i32_0 : i32, i32, i32, i32
  }
  func.func @transform_7(%arg0: i32, %arg1: i32, %arg2: i32) -> (i32, i32, i32, i32) {
    %c1_i32 = arith.constant 1 : i32
    %0 = arith.addi %arg1, %c1_i32 : i32
    %c0_i32 = arith.constant 0 : i32
    %c0_i32_0 = arith.constant 0 : i32
    %c0_i32_1 = arith.constant 0 : i32
    return %arg0, %0, %c0_i32, %c0_i32_0 : i32, i32, i32, i32
  }
  func.func @transform_8(%arg0: i32, %arg1: i32, %arg2: i32) -> (i32, i32, i32) {
    %c0_i32 = arith.constant 0 : i32
    %c0_i32_0 = arith.constant 0 : i32
    %c0_i32_1 = arith.constant 0 : i32
    return %c0_i32, %c0_i32_0, %arg2 : i32, i32, i32
  }
  func.func @transform_9(%arg0: i32, %arg1: i32, %arg2: i32) -> (i32, i32, i32, i32) {
    %c0_i32 = arith.constant 0 : i32
    %c0_i32_0 = arith.constant 0 : i32
    return %arg0, %arg1, %c0_i32, %arg2 : i32, i32, i32, i32
  }
}

module attributes {stable_mosaic.version = 11 : i64} {
  func.func @kernel(%arg0: i32, %arg1: i32, %arg2: i32, %arg3: memref<1x128xf32, #tpu.memory_space<vmem>>, %arg4: memref<1x128xf32, #tpu.memory_space<vmem>>, %arg5: memref<2x1x10x128xf32, #tpu.memory_space<vmem>>, %arg6: memref<2x1x10x128xf32, #tpu.memory_space<vmem>>, %arg7: memref<2x1x10x128xf32, #tpu.memory_space<vmem>>, %arg8: memref<9x128x128xf32, #tpu.memory_space<vmem>>, %arg9: memref<2x1x8x128xf32, #tpu.memory_space<vmem>>, %arg10: memref<2x1x8x128xf32, #tpu.memory_space<vmem>>) attributes {dimension_semantics = [#tpu.dimension_semantics<parallel>, #tpu.dimension_semantics<parallel>, #tpu.dimension_semantics<parallel>], iteration_bounds = array<i64: 1, 8, 1>, scalar_prefetch = 0 : i64, scratch_operands = 0 : i64, tpu.core_type = #tpu.core_type<tc>, window_params = [{pipeline_mode = #tpu.pipeline_mode<synchronous>, transform_indices = @transform_0, window_bounds = array<i64: 1, 128>}, {pipeline_mode = #tpu.pipeline_mode<synchronous>, transform_indices = @transform_1, window_bounds = array<i64: 1, 128>}, {transform_indices = @transform_2, window_bounds = array<i64: 2, 1, 10, 128>}, {transform_indices = @transform_3, window_bounds = array<i64: 2, 1, 10, 128>}, {transform_indices = @transform_4, window_bounds = array<i64: 2, 1, 10, 128>}, {transform_indices = @transform_5, window_bounds = array<i64: 9, 128, 128>}, {transform_indices = @transform_6, window_bounds = array<i64: 2, 1, 8, 128>}, {transform_indices = @transform_7, window_bounds = array<i64: 2, 1, 8, 128>}]} {
    %c0 = arith.constant 0 : index
    %c0_0 = arith.constant 0 : index
    %0 = vector.load %arg3[%c0, %c0_0] : memref<1x128xf32, #tpu.memory_space<vmem>>, vector<1x128xf32>
    %c0_1 = arith.constant 0 : index
    %c0_2 = arith.constant 0 : index
    %1 = vector.load %arg4[%c0_1, %c0_2] : memref<1x128xf32, #tpu.memory_space<vmem>>, vector<1x128xf32>
    %cst = arith.constant 0.000000e+00 : f32
    %2 = vector.broadcast %cst : f32 to vector<16x128xf32>
    %3 = tpu.iota {dimensions = array<i32: 1>} : vector<1x8x1xi32>
    %c0_3 = arith.constant 0 : index
    %c0_4 = arith.constant 0 : index
    %c0_5 = arith.constant 0 : index
    %c0_6 = arith.constant 0 : index
    %4 = vector.load %arg5[%c0_3, %c0_4, %c0_5, %c0_6] : memref<2x1x10x128xf32, #tpu.memory_space<vmem>>, vector<2x1x10x128xf32>
    %5 = vector.shape_cast %4 : vector<2x1x10x128xf32> to vector<2x10x128xf32>
    %6 = vector.shape_cast %0 : vector<1x128xf32> to vector<1x1x128xf32>
    %7 = vector.broadcast %6 : vector<1x1x128xf32> to vector<2x10x128xf32>
    %8 = arith.mulf %5, %7 : vector<2x10x128xf32>
    %9 = vector.shape_cast %1 : vector<1x128xf32> to vector<1x1x128xf32>
    %10 = vector.broadcast %9 : vector<1x1x128xf32> to vector<2x10x128xf32>
    %11 = arith.addf %8, %10 : vector<2x10x128xf32>
    %cst_7 = arith.constant 0.000000e+00 : f32
    %12 = vector.broadcast %cst_7 : f32 to vector<2x10x128xf32>
    %13 = arith.maximumf %11, %12 : vector<2x10x128xf32>
    %14 = vector.extract_strided_slice %13 {offsets = [0, 0, 0], sizes = [2, 8, 128], strides = [1, 1, 1]} : vector<2x10x128xf32> to vector<2x8x128xf32>
    %c1_i32 = arith.constant 1 : i32
    %15 = arith.muli %c1_i32, %arg1 : i32
    %c0_i32 = arith.constant 0 : i32
    %16 = arith.addi %15, %c0_i32 : i32
    %c0_i32_8 = arith.constant 0 : i32
    %17 = arith.cmpi ne, %16, %c0_i32_8 : i32
    %c9_i32 = arith.constant 9 : i32
    %18 = arith.cmpi ne, %16, %c9_i32 : i32
    %19 = arith.andi %17, %18 : i1
    %c1_i32_9 = arith.constant 1 : i32
    %20 = vector.broadcast %c1_i32_9 : i32 to vector<1x8x1xi32>
    %21 = arith.muli %20, %3 : vector<1x8x1xi32>
    %c0_i32_10 = arith.constant 0 : i32
    %22 = vector.broadcast %c0_i32_10 : i32 to vector<1x8x1xi32>
    %23 = arith.addi %21, %22 : vector<1x8x1xi32>
    %c0_i32_11 = arith.constant 0 : i32
    %24 = vector.broadcast %c0_i32_11 : i32 to vector<1x8x1xi32>
    %25 = arith.cmpi ne, %23, %24 : vector<1x8x1xi32>
    %c9_i32_12 = arith.constant 9 : i32
    %26 = vector.broadcast %c9_i32_12 : i32 to vector<1x8x1xi32>
    %27 = arith.cmpi ne, %23, %26 : vector<1x8x1xi32>
    %28 = arith.andi %25, %27 : vector<1x8x1xi1>
    %29 = vector.broadcast %19 : i1 to vector<1x8x1xi1>
    %30 = arith.andi %28, %29 : vector<1x8x1xi1>
    %cst_13 = arith.constant 0.000000e+00 : f32
    %31 = vector.shape_cast %30 : vector<1x8x1xi1> to vector<1x8x1xi1>
    %32 = vector.broadcast %31 : vector<1x8x1xi1> to vector<2x8x128xi1>
    %33 = vector.broadcast %cst_13 : f32 to vector<2x8x128xf32>
    %34 = arith.select %32, %14, %33 : vector<2x8x128xi1>, vector<2x8x128xf32>
    %35 = vector.shape_cast %34 : vector<2x8x128xf32> to vector<16x128xf32>
    %c0_14 = arith.constant 0 : index
    %c0_15 = arith.constant 0 : index
    %c0_16 = arith.constant 0 : index
    %36 = vector.load %arg8[%c0_14, %c0_15, %c0_16] : memref<9x128x128xf32, #tpu.memory_space<vmem>>, vector<1x128x128xf32>
    %37 = vector.shape_cast %36 : vector<1x128x128xf32> to vector<128x128xf32>
    %cst_17 = arith.constant dense<0.000000e+00> : vector<16x128xf32>
    %38 = tpu.matmul %35, %37, %cst_17 {dimension_numbers = #tpu.dot_dimension_numbers<[1], [0], [0], [1], [0, 0, 1, 1], [], []>} : vector<16x128xf32>, vector<128x128xf32>, vector<16x128xf32> -> vector<16x128xf32>
    %39 = arith.addf %2, %38 : vector<16x128xf32>
    %40 = vector.extract_strided_slice %13 {offsets = [0, 1, 0], sizes = [2, 8, 128], strides = [1, 1, 1]} : vector<2x10x128xf32> to vector<2x8x128xf32>
    %c1_i32_18 = arith.constant 1 : i32
    %41 = arith.muli %c1_i32_18, %arg1 : i32
    %c0_i32_19 = arith.constant 0 : i32
    %42 = arith.addi %41, %c0_i32_19 : i32
    %c0_i32_20 = arith.constant 0 : i32
    %43 = arith.cmpi ne, %42, %c0_i32_20 : i32
    %c9_i32_21 = arith.constant 9 : i32
    %44 = arith.cmpi ne, %42, %c9_i32_21 : i32
    %45 = arith.andi %43, %44 : i1
    %c1_i32_22 = arith.constant 1 : i32
    %46 = vector.broadcast %c1_i32_22 : i32 to vector<1x8x1xi32>
    %47 = arith.muli %46, %3 : vector<1x8x1xi32>
    %c1_i32_23 = arith.constant 1 : i32
    %48 = vector.broadcast %c1_i32_23 : i32 to vector<1x8x1xi32>
    %49 = arith.addi %47, %48 : vector<1x8x1xi32>
    %c0_i32_24 = arith.constant 0 : i32
    %50 = vector.broadcast %c0_i32_24 : i32 to vector<1x8x1xi32>
    %51 = arith.cmpi ne, %49, %50 : vector<1x8x1xi32>
    %c9_i32_25 = arith.constant 9 : i32
    %52 = vector.broadcast %c9_i32_25 : i32 to vector<1x8x1xi32>
    %53 = arith.cmpi ne, %49, %52 : vector<1x8x1xi32>
    %54 = arith.andi %51, %53 : vector<1x8x1xi1>
    %55 = vector.broadcast %45 : i1 to vector<1x8x1xi1>
    %56 = arith.andi %54, %55 : vector<1x8x1xi1>
    %cst_26 = arith.constant 0.000000e+00 : f32
    %57 = vector.shape_cast %56 : vector<1x8x1xi1> to vector<1x8x1xi1>
    %58 = vector.broadcast %57 : vector<1x8x1xi1> to vector<2x8x128xi1>
    %59 = vector.broadcast %cst_26 : f32 to vector<2x8x128xf32>
    %60 = arith.select %58, %40, %59 : vector<2x8x128xi1>, vector<2x8x128xf32>
    %61 = vector.shape_cast %60 : vector<2x8x128xf32> to vector<16x128xf32>
    %c1 = arith.constant 1 : index
    %c0_27 = arith.constant 0 : index
    %c0_28 = arith.constant 0 : index
    %62 = vector.load %arg8[%c1, %c0_27, %c0_28] : memref<9x128x128xf32, #tpu.memory_space<vmem>>, vector<1x128x128xf32>
    %63 = vector.shape_cast %62 : vector<1x128x128xf32> to vector<128x128xf32>
    %cst_29 = arith.constant dense<0.000000e+00> : vector<16x128xf32>
    %64 = tpu.matmul %61, %63, %cst_29 {dimension_numbers = #tpu.dot_dimension_numbers<[1], [0], [0], [1], [0, 0, 1, 1], [], []>} : vector<16x128xf32>, vector<128x128xf32>, vector<16x128xf32> -> vector<16x128xf32>
    %65 = arith.addf %39, %64 : vector<16x128xf32>
    %66 = vector.extract_strided_slice %13 {offsets = [0, 2, 0], sizes = [2, 8, 128], strides = [1, 1, 1]} : vector<2x10x128xf32> to vector<2x8x128xf32>
    %c1_i32_30 = arith.constant 1 : i32
    %67 = arith.muli %c1_i32_30, %arg1 : i32
    %c0_i32_31 = arith.constant 0 : i32
    %68 = arith.addi %67, %c0_i32_31 : i32
    %c0_i32_32 = arith.constant 0 : i32
    %69 = arith.cmpi ne, %68, %c0_i32_32 : i32
    %c9_i32_33 = arith.constant 9 : i32
    %70 = arith.cmpi ne, %68, %c9_i32_33 : i32
    %71 = arith.andi %69, %70 : i1
    %c1_i32_34 = arith.constant 1 : i32
    %72 = vector.broadcast %c1_i32_34 : i32 to vector<1x8x1xi32>
    %73 = arith.muli %72, %3 : vector<1x8x1xi32>
    %c2_i32 = arith.constant 2 : i32
    %74 = vector.broadcast %c2_i32 : i32 to vector<1x8x1xi32>
    %75 = arith.addi %73, %74 : vector<1x8x1xi32>
    %c0_i32_35 = arith.constant 0 : i32
    %76 = vector.broadcast %c0_i32_35 : i32 to vector<1x8x1xi32>
    %77 = arith.cmpi ne, %75, %76 : vector<1x8x1xi32>
    %c9_i32_36 = arith.constant 9 : i32
    %78 = vector.broadcast %c9_i32_36 : i32 to vector<1x8x1xi32>
    %79 = arith.cmpi ne, %75, %78 : vector<1x8x1xi32>
    %80 = arith.andi %77, %79 : vector<1x8x1xi1>
    %81 = vector.broadcast %71 : i1 to vector<1x8x1xi1>
    %82 = arith.andi %80, %81 : vector<1x8x1xi1>
    %cst_37 = arith.constant 0.000000e+00 : f32
    %83 = vector.shape_cast %82 : vector<1x8x1xi1> to vector<1x8x1xi1>
    %84 = vector.broadcast %83 : vector<1x8x1xi1> to vector<2x8x128xi1>
    %85 = vector.broadcast %cst_37 : f32 to vector<2x8x128xf32>
    %86 = arith.select %84, %66, %85 : vector<2x8x128xi1>, vector<2x8x128xf32>
    %87 = vector.shape_cast %86 : vector<2x8x128xf32> to vector<16x128xf32>
    %c2 = arith.constant 2 : index
    %c0_38 = arith.constant 0 : index
    %c0_39 = arith.constant 0 : index
    %88 = vector.load %arg8[%c2, %c0_38, %c0_39] : memref<9x128x128xf32, #tpu.memory_space<vmem>>, vector<1x128x128xf32>
    %89 = vector.shape_cast %88 : vector<1x128x128xf32> to vector<128x128xf32>
    %cst_40 = arith.constant dense<0.000000e+00> : vector<16x128xf32>
    %90 = tpu.matmul %87, %89, %cst_40 {dimension_numbers = #tpu.dot_dimension_numbers<[1], [0], [0], [1], [0, 0, 1, 1], [], []>} : vector<16x128xf32>, vector<128x128xf32>, vector<16x128xf32> -> vector<16x128xf32>
    %91 = arith.addf %65, %90 : vector<16x128xf32>
    %c0_41 = arith.constant 0 : index
    %c0_42 = arith.constant 0 : index
    %c0_43 = arith.constant 0 : index
    %c0_44 = arith.constant 0 : index
    %92 = vector.load %arg6[%c0_41, %c0_42, %c0_43, %c0_44] : memref<2x1x10x128xf32, #tpu.memory_space<vmem>>, vector<2x1x10x128xf32>
    %93 = vector.shape_cast %92 : vector<2x1x10x128xf32> to vector<2x10x128xf32>
    %94 = vector.shape_cast %0 : vector<1x128xf32> to vector<1x1x128xf32>
    %95 = vector.broadcast %94 : vector<1x1x128xf32> to vector<2x10x128xf32>
    %96 = arith.mulf %93, %95 : vector<2x10x128xf32>
    %97 = vector.shape_cast %1 : vector<1x128xf32> to vector<1x1x128xf32>
    %98 = vector.broadcast %97 : vector<1x1x128xf32> to vector<2x10x128xf32>
    %99 = arith.addf %96, %98 : vector<2x10x128xf32>
    %cst_45 = arith.constant 0.000000e+00 : f32
    %100 = vector.broadcast %cst_45 : f32 to vector<2x10x128xf32>
    %101 = arith.maximumf %99, %100 : vector<2x10x128xf32>
    %102 = vector.extract_strided_slice %101 {offsets = [0, 0, 0], sizes = [2, 8, 128], strides = [1, 1, 1]} : vector<2x10x128xf32> to vector<2x8x128xf32>
    %c1_i32_46 = arith.constant 1 : i32
    %103 = arith.muli %c1_i32_46, %arg1 : i32
    %c1_i32_47 = arith.constant 1 : i32
    %104 = arith.addi %103, %c1_i32_47 : i32
    %c0_i32_48 = arith.constant 0 : i32
    %105 = arith.cmpi ne, %104, %c0_i32_48 : i32
    %c9_i32_49 = arith.constant 9 : i32
    %106 = arith.cmpi ne, %104, %c9_i32_49 : i32
    %107 = arith.andi %105, %106 : i1
    %c1_i32_50 = arith.constant 1 : i32
    %108 = vector.broadcast %c1_i32_50 : i32 to vector<1x8x1xi32>
    %109 = arith.muli %108, %3 : vector<1x8x1xi32>
    %c0_i32_51 = arith.constant 0 : i32
    %110 = vector.broadcast %c0_i32_51 : i32 to vector<1x8x1xi32>
    %111 = arith.addi %109, %110 : vector<1x8x1xi32>
    %c0_i32_52 = arith.constant 0 : i32
    %112 = vector.broadcast %c0_i32_52 : i32 to vector<1x8x1xi32>
    %113 = arith.cmpi ne, %111, %112 : vector<1x8x1xi32>
    %c9_i32_53 = arith.constant 9 : i32
    %114 = vector.broadcast %c9_i32_53 : i32 to vector<1x8x1xi32>
    %115 = arith.cmpi ne, %111, %114 : vector<1x8x1xi32>
    %116 = arith.andi %113, %115 : vector<1x8x1xi1>
    %117 = vector.broadcast %107 : i1 to vector<1x8x1xi1>
    %118 = arith.andi %116, %117 : vector<1x8x1xi1>
    %cst_54 = arith.constant 0.000000e+00 : f32
    %119 = vector.shape_cast %118 : vector<1x8x1xi1> to vector<1x8x1xi1>
    %120 = vector.broadcast %119 : vector<1x8x1xi1> to vector<2x8x128xi1>
    %121 = vector.broadcast %cst_54 : f32 to vector<2x8x128xf32>
    %122 = arith.select %120, %102, %121 : vector<2x8x128xi1>, vector<2x8x128xf32>
    %123 = vector.shape_cast %122 : vector<2x8x128xf32> to vector<16x128xf32>
    %c3 = arith.constant 3 : index
    %c0_55 = arith.constant 0 : index
    %c0_56 = arith.constant 0 : index
    %124 = vector.load %arg8[%c3, %c0_55, %c0_56] : memref<9x128x128xf32, #tpu.memory_space<vmem>>, vector<1x128x128xf32>
    %125 = vector.shape_cast %124 : vector<1x128x128xf32> to vector<128x128xf32>
    %cst_57 = arith.constant dense<0.000000e+00> : vector<16x128xf32>
    %126 = tpu.matmul %123, %125, %cst_57 {dimension_numbers = #tpu.dot_dimension_numbers<[1], [0], [0], [1], [0, 0, 1, 1], [], []>} : vector<16x128xf32>, vector<128x128xf32>, vector<16x128xf32> -> vector<16x128xf32>
    %127 = arith.addf %91, %126 : vector<16x128xf32>
    %128 = vector.extract_strided_slice %101 {offsets = [0, 1, 0], sizes = [2, 8, 128], strides = [1, 1, 1]} : vector<2x10x128xf32> to vector<2x8x128xf32>
    %c1_i32_58 = arith.constant 1 : i32
    %129 = arith.muli %c1_i32_58, %arg1 : i32
    %c1_i32_59 = arith.constant 1 : i32
    %130 = arith.addi %129, %c1_i32_59 : i32
    %c0_i32_60 = arith.constant 0 : i32
    %131 = arith.cmpi ne, %130, %c0_i32_60 : i32
    %c9_i32_61 = arith.constant 9 : i32
    %132 = arith.cmpi ne, %130, %c9_i32_61 : i32
    %133 = arith.andi %131, %132 : i1
    %c1_i32_62 = arith.constant 1 : i32
    %134 = vector.broadcast %c1_i32_62 : i32 to vector<1x8x1xi32>
    %135 = arith.muli %134, %3 : vector<1x8x1xi32>
    %c1_i32_63 = arith.constant 1 : i32
    %136 = vector.broadcast %c1_i32_63 : i32 to vector<1x8x1xi32>
    %137 = arith.addi %135, %136 : vector<1x8x1xi32>
    %c0_i32_64 = arith.constant 0 : i32
    %138 = vector.broadcast %c0_i32_64 : i32 to vector<1x8x1xi32>
    %139 = arith.cmpi ne, %137, %138 : vector<1x8x1xi32>
    %c9_i32_65 = arith.constant 9 : i32
    %140 = vector.broadcast %c9_i32_65 : i32 to vector<1x8x1xi32>
    %141 = arith.cmpi ne, %137, %140 : vector<1x8x1xi32>
    %142 = arith.andi %139, %141 : vector<1x8x1xi1>
    %143 = vector.broadcast %133 : i1 to vector<1x8x1xi1>
    %144 = arith.andi %142, %143 : vector<1x8x1xi1>
    %cst_66 = arith.constant 0.000000e+00 : f32
    %145 = vector.shape_cast %144 : vector<1x8x1xi1> to vector<1x8x1xi1>
    %146 = vector.broadcast %145 : vector<1x8x1xi1> to vector<2x8x128xi1>
    %147 = vector.broadcast %cst_66 : f32 to vector<2x8x128xf32>
    %148 = arith.select %146, %128, %147 : vector<2x8x128xi1>, vector<2x8x128xf32>
    %149 = vector.shape_cast %148 : vector<2x8x128xf32> to vector<16x128xf32>
    %c4 = arith.constant 4 : index
    %c0_67 = arith.constant 0 : index
    %c0_68 = arith.constant 0 : index
    %150 = vector.load %arg8[%c4, %c0_67, %c0_68] : memref<9x128x128xf32, #tpu.memory_space<vmem>>, vector<1x128x128xf32>
    %151 = vector.shape_cast %150 : vector<1x128x128xf32> to vector<128x128xf32>
    %cst_69 = arith.constant dense<0.000000e+00> : vector<16x128xf32>
    %152 = tpu.matmul %149, %151, %cst_69 {dimension_numbers = #tpu.dot_dimension_numbers<[1], [0], [0], [1], [0, 0, 1, 1], [], []>} : vector<16x128xf32>, vector<128x128xf32>, vector<16x128xf32> -> vector<16x128xf32>
    %153 = arith.addf %127, %152 : vector<16x128xf32>
    %154 = vector.extract_strided_slice %101 {offsets = [0, 2, 0], sizes = [2, 8, 128], strides = [1, 1, 1]} : vector<2x10x128xf32> to vector<2x8x128xf32>
    %c1_i32_70 = arith.constant 1 : i32
    %155 = arith.muli %c1_i32_70, %arg1 : i32
    %c1_i32_71 = arith.constant 1 : i32
    %156 = arith.addi %155, %c1_i32_71 : i32
    %c0_i32_72 = arith.constant 0 : i32
    %157 = arith.cmpi ne, %156, %c0_i32_72 : i32
    %c9_i32_73 = arith.constant 9 : i32
    %158 = arith.cmpi ne, %156, %c9_i32_73 : i32
    %159 = arith.andi %157, %158 : i1
    %c1_i32_74 = arith.constant 1 : i32
    %160 = vector.broadcast %c1_i32_74 : i32 to vector<1x8x1xi32>
    %161 = arith.muli %160, %3 : vector<1x8x1xi32>
    %c2_i32_75 = arith.constant 2 : i32
    %162 = vector.broadcast %c2_i32_75 : i32 to vector<1x8x1xi32>
    %163 = arith.addi %161, %162 : vector<1x8x1xi32>
    %c0_i32_76 = arith.constant 0 : i32
    %164 = vector.broadcast %c0_i32_76 : i32 to vector<1x8x1xi32>
    %165 = arith.cmpi ne, %163, %164 : vector<1x8x1xi32>
    %c9_i32_77 = arith.constant 9 : i32
    %166 = vector.broadcast %c9_i32_77 : i32 to vector<1x8x1xi32>
    %167 = arith.cmpi ne, %163, %166 : vector<1x8x1xi32>
    %168 = arith.andi %165, %167 : vector<1x8x1xi1>
    %169 = vector.broadcast %159 : i1 to vector<1x8x1xi1>
    %170 = arith.andi %168, %169 : vector<1x8x1xi1>
    %cst_78 = arith.constant 0.000000e+00 : f32
    %171 = vector.shape_cast %170 : vector<1x8x1xi1> to vector<1x8x1xi1>
    %172 = vector.broadcast %171 : vector<1x8x1xi1> to vector<2x8x128xi1>
    %173 = vector.broadcast %cst_78 : f32 to vector<2x8x128xf32>
    %174 = arith.select %172, %154, %173 : vector<2x8x128xi1>, vector<2x8x128xf32>
    %175 = vector.shape_cast %174 : vector<2x8x128xf32> to vector<16x128xf32>
    %c5 = arith.constant 5 : index
    %c0_79 = arith.constant 0 : index
    %c0_80 = arith.constant 0 : index
    %176 = vector.load %arg8[%c5, %c0_79, %c0_80] : memref<9x128x128xf32, #tpu.memory_space<vmem>>, vector<1x128x128xf32>
    %177 = vector.shape_cast %176 : vector<1x128x128xf32> to vector<128x128xf32>
    %cst_81 = arith.constant dense<0.000000e+00> : vector<16x128xf32>
    %178 = tpu.matmul %175, %177, %cst_81 {dimension_numbers = #tpu.dot_dimension_numbers<[1], [0], [0], [1], [0, 0, 1, 1], [], []>} : vector<16x128xf32>, vector<128x128xf32>, vector<16x128xf32> -> vector<16x128xf32>
    %179 = arith.addf %153, %178 : vector<16x128xf32>
    %c0_82 = arith.constant 0 : index
    %c0_83 = arith.constant 0 : index
    %c0_84 = arith.constant 0 : index
    %c0_85 = arith.constant 0 : index
    %180 = vector.load %arg7[%c0_82, %c0_83, %c0_84, %c0_85] : memref<2x1x10x128xf32, #tpu.memory_space<vmem>>, vector<2x1x10x128xf32>
    %181 = vector.shape_cast %180 : vector<2x1x10x128xf32> to vector<2x10x128xf32>
    %182 = vector.shape_cast %0 : vector<1x128xf32> to vector<1x1x128xf32>
    %183 = vector.broadcast %182 : vector<1x1x128xf32> to vector<2x10x128xf32>
    %184 = arith.mulf %181, %183 : vector<2x10x128xf32>
    %185 = vector.shape_cast %1 : vector<1x128xf32> to vector<1x1x128xf32>
    %186 = vector.broadcast %185 : vector<1x1x128xf32> to vector<2x10x128xf32>
    %187 = arith.addf %184, %186 : vector<2x10x128xf32>
    %cst_86 = arith.constant 0.000000e+00 : f32
    %188 = vector.broadcast %cst_86 : f32 to vector<2x10x128xf32>
    %189 = arith.maximumf %187, %188 : vector<2x10x128xf32>
    %190 = vector.extract_strided_slice %189 {offsets = [0, 0, 0], sizes = [2, 8, 128], strides = [1, 1, 1]} : vector<2x10x128xf32> to vector<2x8x128xf32>
    %c1_i32_87 = arith.constant 1 : i32
    %191 = arith.muli %c1_i32_87, %arg1 : i32
    %c2_i32_88 = arith.constant 2 : i32
    %192 = arith.addi %191, %c2_i32_88 : i32
    %c0_i32_89 = arith.constant 0 : i32
    %193 = arith.cmpi ne, %192, %c0_i32_89 : i32
    %c9_i32_90 = arith.constant 9 : i32
    %194 = arith.cmpi ne, %192, %c9_i32_90 : i32
    %195 = arith.andi %193, %194 : i1
    %c1_i32_91 = arith.constant 1 : i32
    %196 = vector.broadcast %c1_i32_91 : i32 to vector<1x8x1xi32>
    %197 = arith.muli %196, %3 : vector<1x8x1xi32>
    %c0_i32_92 = arith.constant 0 : i32
    %198 = vector.broadcast %c0_i32_92 : i32 to vector<1x8x1xi32>
    %199 = arith.addi %197, %198 : vector<1x8x1xi32>
    %c0_i32_93 = arith.constant 0 : i32
    %200 = vector.broadcast %c0_i32_93 : i32 to vector<1x8x1xi32>
    %201 = arith.cmpi ne, %199, %200 : vector<1x8x1xi32>
    %c9_i32_94 = arith.constant 9 : i32
    %202 = vector.broadcast %c9_i32_94 : i32 to vector<1x8x1xi32>
    %203 = arith.cmpi ne, %199, %202 : vector<1x8x1xi32>
    %204 = arith.andi %201, %203 : vector<1x8x1xi1>
    %205 = vector.broadcast %195 : i1 to vector<1x8x1xi1>
    %206 = arith.andi %204, %205 : vector<1x8x1xi1>
    %cst_95 = arith.constant 0.000000e+00 : f32
    %207 = vector.shape_cast %206 : vector<1x8x1xi1> to vector<1x8x1xi1>
    %208 = vector.broadcast %207 : vector<1x8x1xi1> to vector<2x8x128xi1>
    %209 = vector.broadcast %cst_95 : f32 to vector<2x8x128xf32>
    %210 = arith.select %208, %190, %209 : vector<2x8x128xi1>, vector<2x8x128xf32>
    %211 = vector.shape_cast %210 : vector<2x8x128xf32> to vector<16x128xf32>
    %c6 = arith.constant 6 : index
    %c0_96 = arith.constant 0 : index
    %c0_97 = arith.constant 0 : index
    %212 = vector.load %arg8[%c6, %c0_96, %c0_97] : memref<9x128x128xf32, #tpu.memory_space<vmem>>, vector<1x128x128xf32>
    %213 = vector.shape_cast %212 : vector<1x128x128xf32> to vector<128x128xf32>
    %cst_98 = arith.constant dense<0.000000e+00> : vector<16x128xf32>
    %214 = tpu.matmul %211, %213, %cst_98 {dimension_numbers = #tpu.dot_dimension_numbers<[1], [0], [0], [1], [0, 0, 1, 1], [], []>} : vector<16x128xf32>, vector<128x128xf32>, vector<16x128xf32> -> vector<16x128xf32>
    %215 = arith.addf %179, %214 : vector<16x128xf32>
    %216 = vector.extract_strided_slice %189 {offsets = [0, 1, 0], sizes = [2, 8, 128], strides = [1, 1, 1]} : vector<2x10x128xf32> to vector<2x8x128xf32>
    %c1_i32_99 = arith.constant 1 : i32
    %217 = arith.muli %c1_i32_99, %arg1 : i32
    %c2_i32_100 = arith.constant 2 : i32
    %218 = arith.addi %217, %c2_i32_100 : i32
    %c0_i32_101 = arith.constant 0 : i32
    %219 = arith.cmpi ne, %218, %c0_i32_101 : i32
    %c9_i32_102 = arith.constant 9 : i32
    %220 = arith.cmpi ne, %218, %c9_i32_102 : i32
    %221 = arith.andi %219, %220 : i1
    %c1_i32_103 = arith.constant 1 : i32
    %222 = vector.broadcast %c1_i32_103 : i32 to vector<1x8x1xi32>
    %223 = arith.muli %222, %3 : vector<1x8x1xi32>
    %c1_i32_104 = arith.constant 1 : i32
    %224 = vector.broadcast %c1_i32_104 : i32 to vector<1x8x1xi32>
    %225 = arith.addi %223, %224 : vector<1x8x1xi32>
    %c0_i32_105 = arith.constant 0 : i32
    %226 = vector.broadcast %c0_i32_105 : i32 to vector<1x8x1xi32>
    %227 = arith.cmpi ne, %225, %226 : vector<1x8x1xi32>
    %c9_i32_106 = arith.constant 9 : i32
    %228 = vector.broadcast %c9_i32_106 : i32 to vector<1x8x1xi32>
    %229 = arith.cmpi ne, %225, %228 : vector<1x8x1xi32>
    %230 = arith.andi %227, %229 : vector<1x8x1xi1>
    %231 = vector.broadcast %221 : i1 to vector<1x8x1xi1>
    %232 = arith.andi %230, %231 : vector<1x8x1xi1>
    %cst_107 = arith.constant 0.000000e+00 : f32
    %233 = vector.shape_cast %232 : vector<1x8x1xi1> to vector<1x8x1xi1>
    %234 = vector.broadcast %233 : vector<1x8x1xi1> to vector<2x8x128xi1>
    %235 = vector.broadcast %cst_107 : f32 to vector<2x8x128xf32>
    %236 = arith.select %234, %216, %235 : vector<2x8x128xi1>, vector<2x8x128xf32>
    %237 = vector.shape_cast %236 : vector<2x8x128xf32> to vector<16x128xf32>
    %c7 = arith.constant 7 : index
    %c0_108 = arith.constant 0 : index
    %c0_109 = arith.constant 0 : index
    %238 = vector.load %arg8[%c7, %c0_108, %c0_109] : memref<9x128x128xf32, #tpu.memory_space<vmem>>, vector<1x128x128xf32>
    %239 = vector.shape_cast %238 : vector<1x128x128xf32> to vector<128x128xf32>
    %cst_110 = arith.constant dense<0.000000e+00> : vector<16x128xf32>
    %240 = tpu.matmul %237, %239, %cst_110 {dimension_numbers = #tpu.dot_dimension_numbers<[1], [0], [0], [1], [0, 0, 1, 1], [], []>} : vector<16x128xf32>, vector<128x128xf32>, vector<16x128xf32> -> vector<16x128xf32>
    %241 = arith.addf %215, %240 : vector<16x128xf32>
    %242 = vector.extract_strided_slice %189 {offsets = [0, 2, 0], sizes = [2, 8, 128], strides = [1, 1, 1]} : vector<2x10x128xf32> to vector<2x8x128xf32>
    %c1_i32_111 = arith.constant 1 : i32
    %243 = arith.muli %c1_i32_111, %arg1 : i32
    %c2_i32_112 = arith.constant 2 : i32
    %244 = arith.addi %243, %c2_i32_112 : i32
    %c0_i32_113 = arith.constant 0 : i32
    %245 = arith.cmpi ne, %244, %c0_i32_113 : i32
    %c9_i32_114 = arith.constant 9 : i32
    %246 = arith.cmpi ne, %244, %c9_i32_114 : i32
    %247 = arith.andi %245, %246 : i1
    %c1_i32_115 = arith.constant 1 : i32
    %248 = vector.broadcast %c1_i32_115 : i32 to vector<1x8x1xi32>
    %249 = arith.muli %248, %3 : vector<1x8x1xi32>
    %c2_i32_116 = arith.constant 2 : i32
    %250 = vector.broadcast %c2_i32_116 : i32 to vector<1x8x1xi32>
    %251 = arith.addi %249, %250 : vector<1x8x1xi32>
    %c0_i32_117 = arith.constant 0 : i32
    %252 = vector.broadcast %c0_i32_117 : i32 to vector<1x8x1xi32>
    %253 = arith.cmpi ne, %251, %252 : vector<1x8x1xi32>
    %c9_i32_118 = arith.constant 9 : i32
    %254 = vector.broadcast %c9_i32_118 : i32 to vector<1x8x1xi32>
    %255 = arith.cmpi ne, %251, %254 : vector<1x8x1xi32>
    %256 = arith.andi %253, %255 : vector<1x8x1xi1>
    %257 = vector.broadcast %247 : i1 to vector<1x8x1xi1>
    %258 = arith.andi %256, %257 : vector<1x8x1xi1>
    %cst_119 = arith.constant 0.000000e+00 : f32
    %259 = vector.shape_cast %258 : vector<1x8x1xi1> to vector<1x8x1xi1>
    %260 = vector.broadcast %259 : vector<1x8x1xi1> to vector<2x8x128xi1>
    %261 = vector.broadcast %cst_119 : f32 to vector<2x8x128xf32>
    %262 = arith.select %260, %242, %261 : vector<2x8x128xi1>, vector<2x8x128xf32>
    %263 = vector.shape_cast %262 : vector<2x8x128xf32> to vector<16x128xf32>
    %c8 = arith.constant 8 : index
    %c0_120 = arith.constant 0 : index
    %c0_121 = arith.constant 0 : index
    %264 = vector.load %arg8[%c8, %c0_120, %c0_121] : memref<9x128x128xf32, #tpu.memory_space<vmem>>, vector<1x128x128xf32>
    %265 = vector.shape_cast %264 : vector<1x128x128xf32> to vector<128x128xf32>
    %cst_122 = arith.constant dense<0.000000e+00> : vector<16x128xf32>
    %266 = tpu.matmul %263, %265, %cst_122 {dimension_numbers = #tpu.dot_dimension_numbers<[1], [0], [0], [1], [0, 0, 1, 1], [], []>} : vector<16x128xf32>, vector<128x128xf32>, vector<16x128xf32> -> vector<16x128xf32>
    %267 = arith.addf %241, %266 : vector<16x128xf32>
    %c0_123 = arith.constant 0 : index
    %c0_124 = arith.constant 0 : index
    %c0_125 = arith.constant 0 : index
    %c0_126 = arith.constant 0 : index
    %268 = vector.load %arg9[%c0_123, %c0_124, %c0_125, %c0_126] : memref<2x1x8x128xf32, #tpu.memory_space<vmem>>, vector<2x1x8x128xf32>
    %269 = vector.shape_cast %268 : vector<2x1x8x128xf32> to vector<16x128xf32>
    %270 = arith.addf %267, %269 : vector<16x128xf32>
    %271 = vector.shape_cast %270 : vector<16x128xf32> to vector<2x1x8x128xf32>
    %c0_127 = arith.constant 0 : index
    %c0_128 = arith.constant 0 : index
    %c0_129 = arith.constant 0 : index
    %c0_130 = arith.constant 0 : index
    %272 = vector.load %arg10[%c0_127, %c0_128, %c0_129, %c0_130] : memref<2x1x8x128xf32, #tpu.memory_space<vmem>>, vector<2x1x8x128xf32>
    tpu.vector_store %arg10[%c0_127, %c0_128, %c0_129, %c0_130], %271 {strides = array<i32>} : memref<2x1x8x128xf32, #tpu.memory_space<vmem>>, vector<2x1x8x128xf32>,
    return
  }
  func.func @transform_0(%arg0: i32, %arg1: i32, %arg2: i32) -> (i32, i32) {
    %c0_i32 = arith.constant 0 : i32
    %c0_i32_0 = arith.constant 0 : i32
    %c0_i32_1 = arith.constant 0 : i32
    return %c0_i32, %c0_i32_0 : i32, i32
  }
  func.func @transform_1(%arg0: i32, %arg1: i32, %arg2: i32) -> (i32, i32) {
    %c0_i32 = arith.constant 0 : i32
    %c0_i32_0 = arith.constant 0 : i32
    %c0_i32_1 = arith.constant 0 : i32
    return %c0_i32, %c0_i32_0 : i32, i32
  }
  func.func @transform_2(%arg0: i32, %arg1: i32, %arg2: i32) -> (i32, i32, i32, i32) {
    %c0_i32 = arith.constant 0 : i32
    %0 = arith.addi %arg1, %c0_i32 : i32
    %c0_i32_0 = arith.constant 0 : i32
    %c0_i32_1 = arith.constant 0 : i32
    %c0_i32_2 = arith.constant 0 : i32
    return %arg0, %0, %c0_i32_0, %c0_i32_1 : i32, i32, i32, i32
  }
  func.func @transform_3(%arg0: i32, %arg1: i32, %arg2: i32) -> (i32, i32, i32, i32) {
    %c1_i32 = arith.constant 1 : i32
    %0 = arith.addi %arg1, %c1_i32 : i32
    %c0_i32 = arith.constant 0 : i32
    %c0_i32_0 = arith.constant 0 : i32
    %c0_i32_1 = arith.constant 0 : i32
    return %arg0, %0, %c0_i32, %c0_i32_0 : i32, i32, i32, i32
  }
  func.func @transform_4(%arg0: i32, %arg1: i32, %arg2: i32) -> (i32, i32, i32, i32) {
    %c2_i32 = arith.constant 2 : i32
    %0 = arith.addi %arg1, %c2_i32 : i32
    %c0_i32 = arith.constant 0 : i32
    %c0_i32_0 = arith.constant 0 : i32
    %c0_i32_1 = arith.constant 0 : i32
    return %arg0, %0, %c0_i32, %c0_i32_0 : i32, i32, i32, i32
  }
  func.func @transform_5(%arg0: i32, %arg1: i32, %arg2: i32) -> (i32, i32, i32) {
    %c0_i32 = arith.constant 0 : i32
    %c0_i32_0 = arith.constant 0 : i32
    %c0_i32_1 = arith.constant 0 : i32
    return %c0_i32, %c0_i32_0, %arg2 : i32, i32, i32
  }
  func.func @transform_6(%arg0: i32, %arg1: i32, %arg2: i32) -> (i32, i32, i32, i32) {
    %c0_i32 = arith.constant 0 : i32
    %c0_i32_0 = arith.constant 0 : i32
    return %arg0, %arg1, %c0_i32, %arg2 : i32, i32, i32, i32
  }
  func.func @transform_7(%arg0: i32, %arg1: i32, %arg2: i32) -> (i32, i32, i32, i32) {
    %c0_i32 = arith.constant 0 : i32
    %c0_i32_0 = arith.constant 0 : i32
    return %arg0, %arg1, %c0_i32, %arg2 : i32, i32, i32, i32
  }
}

module attributes {stable_mosaic.version = 11 : i64} {
  func.func @kernel(%arg0: i32, %arg1: i32, %arg2: i32, %arg3: memref<1x128xf32, #tpu.memory_space<vmem>>, %arg4: memref<1x128xf32, #tpu.memory_space<vmem>>, %arg5: memref<2x1x10x128xf32, #tpu.memory_space<vmem>>, %arg6: memref<2x1x10x128xf32, #tpu.memory_space<vmem>>, %arg7: memref<2x1x10x128xf32, #tpu.memory_space<vmem>>, %arg8: memref<9x128x128xf32, #tpu.memory_space<vmem>>, %arg9: memref<2x1x8x128xf32, #tpu.memory_space<vmem>>) attributes {dimension_semantics = [#tpu.dimension_semantics<parallel>, #tpu.dimension_semantics<parallel>, #tpu.dimension_semantics<parallel>], iteration_bounds = array<i64: 1, 8, 1>, scalar_prefetch = 0 : i64, scratch_operands = 0 : i64, tpu.core_type = #tpu.core_type<tc>, window_params = [{pipeline_mode = #tpu.pipeline_mode<synchronous>, transform_indices = @transform_0, window_bounds = array<i64: 1, 128>}, {pipeline_mode = #tpu.pipeline_mode<synchronous>, transform_indices = @transform_1, window_bounds = array<i64: 1, 128>}, {transform_indices = @transform_2, window_bounds = array<i64: 2, 1, 10, 128>}, {transform_indices = @transform_3, window_bounds = array<i64: 2, 1, 10, 128>}, {transform_indices = @transform_4, window_bounds = array<i64: 2, 1, 10, 128>}, {transform_indices = @transform_5, window_bounds = array<i64: 9, 128, 128>}, {transform_indices = @transform_6, window_bounds = array<i64: 2, 1, 8, 128>}]} {
    %c0 = arith.constant 0 : index
    %c0_0 = arith.constant 0 : index
    %0 = vector.load %arg3[%c0, %c0_0] : memref<1x128xf32, #tpu.memory_space<vmem>>, vector<1x128xf32>
    %c0_1 = arith.constant 0 : index
    %c0_2 = arith.constant 0 : index
    %1 = vector.load %arg4[%c0_1, %c0_2] : memref<1x128xf32, #tpu.memory_space<vmem>>, vector<1x128xf32>
    %cst = arith.constant 0.000000e+00 : f32
    %2 = vector.broadcast %cst : f32 to vector<16x128xf32>
    %3 = tpu.iota {dimensions = array<i32: 1>} : vector<1x8x1xi32>
    %c0_3 = arith.constant 0 : index
    %c0_4 = arith.constant 0 : index
    %c0_5 = arith.constant 0 : index
    %c0_6 = arith.constant 0 : index
    %4 = vector.load %arg5[%c0_3, %c0_4, %c0_5, %c0_6] : memref<2x1x10x128xf32, #tpu.memory_space<vmem>>, vector<2x1x10x128xf32>
    %5 = vector.shape_cast %4 : vector<2x1x10x128xf32> to vector<2x10x128xf32>
    %6 = vector.shape_cast %0 : vector<1x128xf32> to vector<1x1x128xf32>
    %7 = vector.broadcast %6 : vector<1x1x128xf32> to vector<2x10x128xf32>
    %8 = arith.mulf %5, %7 : vector<2x10x128xf32>
    %9 = vector.shape_cast %1 : vector<1x128xf32> to vector<1x1x128xf32>
    %10 = vector.broadcast %9 : vector<1x1x128xf32> to vector<2x10x128xf32>
    %11 = arith.addf %8, %10 : vector<2x10x128xf32>
    %cst_7 = arith.constant 0.000000e+00 : f32
    %12 = vector.broadcast %cst_7 : f32 to vector<2x10x128xf32>
    %13 = arith.maximumf %11, %12 : vector<2x10x128xf32>
    %14 = vector.extract_strided_slice %13 {offsets = [0, 0, 0], sizes = [2, 8, 128], strides = [1, 1, 1]} : vector<2x10x128xf32> to vector<2x8x128xf32>
    %c1_i32 = arith.constant 1 : i32
    %15 = arith.muli %c1_i32, %arg1 : i32
    %c0_i32 = arith.constant 0 : i32
    %16 = arith.addi %15, %c0_i32 : i32
    %c0_i32_8 = arith.constant 0 : i32
    %17 = arith.cmpi ne, %16, %c0_i32_8 : i32
    %c9_i32 = arith.constant 9 : i32
    %18 = arith.cmpi ne, %16, %c9_i32 : i32
    %19 = arith.andi %17, %18 : i1
    %c1_i32_9 = arith.constant 1 : i32
    %20 = vector.broadcast %c1_i32_9 : i32 to vector<1x8x1xi32>
    %21 = arith.muli %20, %3 : vector<1x8x1xi32>
    %c0_i32_10 = arith.constant 0 : i32
    %22 = vector.broadcast %c0_i32_10 : i32 to vector<1x8x1xi32>
    %23 = arith.addi %21, %22 : vector<1x8x1xi32>
    %c0_i32_11 = arith.constant 0 : i32
    %24 = vector.broadcast %c0_i32_11 : i32 to vector<1x8x1xi32>
    %25 = arith.cmpi ne, %23, %24 : vector<1x8x1xi32>
    %c9_i32_12 = arith.constant 9 : i32
    %26 = vector.broadcast %c9_i32_12 : i32 to vector<1x8x1xi32>
    %27 = arith.cmpi ne, %23, %26 : vector<1x8x1xi32>
    %28 = arith.andi %25, %27 : vector<1x8x1xi1>
    %29 = vector.broadcast %19 : i1 to vector<1x8x1xi1>
    %30 = arith.andi %28, %29 : vector<1x8x1xi1>
    %cst_13 = arith.constant 0.000000e+00 : f32
    %31 = vector.shape_cast %30 : vector<1x8x1xi1> to vector<1x8x1xi1>
    %32 = vector.broadcast %31 : vector<1x8x1xi1> to vector<2x8x128xi1>
    %33 = vector.broadcast %cst_13 : f32 to vector<2x8x128xf32>
    %34 = arith.select %32, %14, %33 : vector<2x8x128xi1>, vector<2x8x128xf32>
    %35 = vector.shape_cast %34 : vector<2x8x128xf32> to vector<16x128xf32>
    %c0_14 = arith.constant 0 : index
    %c0_15 = arith.constant 0 : index
    %c0_16 = arith.constant 0 : index
    %36 = vector.load %arg8[%c0_14, %c0_15, %c0_16] : memref<9x128x128xf32, #tpu.memory_space<vmem>>, vector<1x128x128xf32>
    %37 = vector.shape_cast %36 : vector<1x128x128xf32> to vector<128x128xf32>
    %cst_17 = arith.constant dense<0.000000e+00> : vector<16x128xf32>
    %38 = tpu.matmul %35, %37, %cst_17 {dimension_numbers = #tpu.dot_dimension_numbers<[1], [0], [0], [1], [0, 0, 1, 1], [], []>} : vector<16x128xf32>, vector<128x128xf32>, vector<16x128xf32> -> vector<16x128xf32>
    %39 = arith.addf %2, %38 : vector<16x128xf32>
    %40 = vector.extract_strided_slice %13 {offsets = [0, 1, 0], sizes = [2, 8, 128], strides = [1, 1, 1]} : vector<2x10x128xf32> to vector<2x8x128xf32>
    %c1_i32_18 = arith.constant 1 : i32
    %41 = arith.muli %c1_i32_18, %arg1 : i32
    %c0_i32_19 = arith.constant 0 : i32
    %42 = arith.addi %41, %c0_i32_19 : i32
    %c0_i32_20 = arith.constant 0 : i32
    %43 = arith.cmpi ne, %42, %c0_i32_20 : i32
    %c9_i32_21 = arith.constant 9 : i32
    %44 = arith.cmpi ne, %42, %c9_i32_21 : i32
    %45 = arith.andi %43, %44 : i1
    %c1_i32_22 = arith.constant 1 : i32
    %46 = vector.broadcast %c1_i32_22 : i32 to vector<1x8x1xi32>
    %47 = arith.muli %46, %3 : vector<1x8x1xi32>
    %c1_i32_23 = arith.constant 1 : i32
    %48 = vector.broadcast %c1_i32_23 : i32 to vector<1x8x1xi32>
    %49 = arith.addi %47, %48 : vector<1x8x1xi32>
    %c0_i32_24 = arith.constant 0 : i32
    %50 = vector.broadcast %c0_i32_24 : i32 to vector<1x8x1xi32>
    %51 = arith.cmpi ne, %49, %50 : vector<1x8x1xi32>
    %c9_i32_25 = arith.constant 9 : i32
    %52 = vector.broadcast %c9_i32_25 : i32 to vector<1x8x1xi32>
    %53 = arith.cmpi ne, %49, %52 : vector<1x8x1xi32>
    %54 = arith.andi %51, %53 : vector<1x8x1xi1>
    %55 = vector.broadcast %45 : i1 to vector<1x8x1xi1>
    %56 = arith.andi %54, %55 : vector<1x8x1xi1>
    %cst_26 = arith.constant 0.000000e+00 : f32
    %57 = vector.shape_cast %56 : vector<1x8x1xi1> to vector<1x8x1xi1>
    %58 = vector.broadcast %57 : vector<1x8x1xi1> to vector<2x8x128xi1>
    %59 = vector.broadcast %cst_26 : f32 to vector<2x8x128xf32>
    %60 = arith.select %58, %40, %59 : vector<2x8x128xi1>, vector<2x8x128xf32>
    %61 = vector.shape_cast %60 : vector<2x8x128xf32> to vector<16x128xf32>
    %c1 = arith.constant 1 : index
    %c0_27 = arith.constant 0 : index
    %c0_28 = arith.constant 0 : index
    %62 = vector.load %arg8[%c1, %c0_27, %c0_28] : memref<9x128x128xf32, #tpu.memory_space<vmem>>, vector<1x128x128xf32>
    %63 = vector.shape_cast %62 : vector<1x128x128xf32> to vector<128x128xf32>
    %cst_29 = arith.constant dense<0.000000e+00> : vector<16x128xf32>
    %64 = tpu.matmul %61, %63, %cst_29 {dimension_numbers = #tpu.dot_dimension_numbers<[1], [0], [0], [1], [0, 0, 1, 1], [], []>} : vector<16x128xf32>, vector<128x128xf32>, vector<16x128xf32> -> vector<16x128xf32>
    %65 = arith.addf %39, %64 : vector<16x128xf32>
    %66 = vector.extract_strided_slice %13 {offsets = [0, 2, 0], sizes = [2, 8, 128], strides = [1, 1, 1]} : vector<2x10x128xf32> to vector<2x8x128xf32>
    %c1_i32_30 = arith.constant 1 : i32
    %67 = arith.muli %c1_i32_30, %arg1 : i32
    %c0_i32_31 = arith.constant 0 : i32
    %68 = arith.addi %67, %c0_i32_31 : i32
    %c0_i32_32 = arith.constant 0 : i32
    %69 = arith.cmpi ne, %68, %c0_i32_32 : i32
    %c9_i32_33 = arith.constant 9 : i32
    %70 = arith.cmpi ne, %68, %c9_i32_33 : i32
    %71 = arith.andi %69, %70 : i1
    %c1_i32_34 = arith.constant 1 : i32
    %72 = vector.broadcast %c1_i32_34 : i32 to vector<1x8x1xi32>
    %73 = arith.muli %72, %3 : vector<1x8x1xi32>
    %c2_i32 = arith.constant 2 : i32
    %74 = vector.broadcast %c2_i32 : i32 to vector<1x8x1xi32>
    %75 = arith.addi %73, %74 : vector<1x8x1xi32>
    %c0_i32_35 = arith.constant 0 : i32
    %76 = vector.broadcast %c0_i32_35 : i32 to vector<1x8x1xi32>
    %77 = arith.cmpi ne, %75, %76 : vector<1x8x1xi32>
    %c9_i32_36 = arith.constant 9 : i32
    %78 = vector.broadcast %c9_i32_36 : i32 to vector<1x8x1xi32>
    %79 = arith.cmpi ne, %75, %78 : vector<1x8x1xi32>
    %80 = arith.andi %77, %79 : vector<1x8x1xi1>
    %81 = vector.broadcast %71 : i1 to vector<1x8x1xi1>
    %82 = arith.andi %80, %81 : vector<1x8x1xi1>
    %cst_37 = arith.constant 0.000000e+00 : f32
    %83 = vector.shape_cast %82 : vector<1x8x1xi1> to vector<1x8x1xi1>
    %84 = vector.broadcast %83 : vector<1x8x1xi1> to vector<2x8x128xi1>
    %85 = vector.broadcast %cst_37 : f32 to vector<2x8x128xf32>
    %86 = arith.select %84, %66, %85 : vector<2x8x128xi1>, vector<2x8x128xf32>
    %87 = vector.shape_cast %86 : vector<2x8x128xf32> to vector<16x128xf32>
    %c2 = arith.constant 2 : index
    %c0_38 = arith.constant 0 : index
    %c0_39 = arith.constant 0 : index
    %88 = vector.load %arg8[%c2, %c0_38, %c0_39] : memref<9x128x128xf32, #tpu.memory_space<vmem>>, vector<1x128x128xf32>
    %89 = vector.shape_cast %88 : vector<1x128x128xf32> to vector<128x128xf32>
    %cst_40 = arith.constant dense<0.000000e+00> : vector<16x128xf32>
    %90 = tpu.matmul %87, %89, %cst_40 {dimension_numbers = #tpu.dot_dimension_numbers<[1], [0], [0], [1], [0, 0, 1, 1], [], []>} : vector<16x128xf32>, vector<128x128xf32>, vector<16x128xf32> -> vector<16x128xf32>
    %91 = arith.addf %65, %90 : vector<16x128xf32>
    %c0_41 = arith.constant 0 : index
    %c0_42 = arith.constant 0 : index
    %c0_43 = arith.constant 0 : index
    %c0_44 = arith.constant 0 : index
    %92 = vector.load %arg6[%c0_41, %c0_42, %c0_43, %c0_44] : memref<2x1x10x128xf32, #tpu.memory_space<vmem>>, vector<2x1x10x128xf32>
    %93 = vector.shape_cast %92 : vector<2x1x10x128xf32> to vector<2x10x128xf32>
    %94 = vector.shape_cast %0 : vector<1x128xf32> to vector<1x1x128xf32>
    %95 = vector.broadcast %94 : vector<1x1x128xf32> to vector<2x10x128xf32>
    %96 = arith.mulf %93, %95 : vector<2x10x128xf32>
    %97 = vector.shape_cast %1 : vector<1x128xf32> to vector<1x1x128xf32>
    %98 = vector.broadcast %97 : vector<1x1x128xf32> to vector<2x10x128xf32>
    %99 = arith.addf %96, %98 : vector<2x10x128xf32>
    %cst_45 = arith.constant 0.000000e+00 : f32
    %100 = vector.broadcast %cst_45 : f32 to vector<2x10x128xf32>
    %101 = arith.maximumf %99, %100 : vector<2x10x128xf32>
    %102 = vector.extract_strided_slice %101 {offsets = [0, 0, 0], sizes = [2, 8, 128], strides = [1, 1, 1]} : vector<2x10x128xf32> to vector<2x8x128xf32>
    %c1_i32_46 = arith.constant 1 : i32
    %103 = arith.muli %c1_i32_46, %arg1 : i32
    %c1_i32_47 = arith.constant 1 : i32
    %104 = arith.addi %103, %c1_i32_47 : i32
    %c0_i32_48 = arith.constant 0 : i32
    %105 = arith.cmpi ne, %104, %c0_i32_48 : i32
    %c9_i32_49 = arith.constant 9 : i32
    %106 = arith.cmpi ne, %104, %c9_i32_49 : i32
    %107 = arith.andi %105, %106 : i1
    %c1_i32_50 = arith.constant 1 : i32
    %108 = vector.broadcast %c1_i32_50 : i32 to vector<1x8x1xi32>
    %109 = arith.muli %108, %3 : vector<1x8x1xi32>
    %c0_i32_51 = arith.constant 0 : i32
    %110 = vector.broadcast %c0_i32_51 : i32 to vector<1x8x1xi32>
    %111 = arith.addi %109, %110 : vector<1x8x1xi32>
    %c0_i32_52 = arith.constant 0 : i32
    %112 = vector.broadcast %c0_i32_52 : i32 to vector<1x8x1xi32>
    %113 = arith.cmpi ne, %111, %112 : vector<1x8x1xi32>
    %c9_i32_53 = arith.constant 9 : i32
    %114 = vector.broadcast %c9_i32_53 : i32 to vector<1x8x1xi32>
    %115 = arith.cmpi ne, %111, %114 : vector<1x8x1xi32>
    %116 = arith.andi %113, %115 : vector<1x8x1xi1>
    %117 = vector.broadcast %107 : i1 to vector<1x8x1xi1>
    %118 = arith.andi %116, %117 : vector<1x8x1xi1>
    %cst_54 = arith.constant 0.000000e+00 : f32
    %119 = vector.shape_cast %118 : vector<1x8x1xi1> to vector<1x8x1xi1>
    %120 = vector.broadcast %119 : vector<1x8x1xi1> to vector<2x8x128xi1>
    %121 = vector.broadcast %cst_54 : f32 to vector<2x8x128xf32>
    %122 = arith.select %120, %102, %121 : vector<2x8x128xi1>, vector<2x8x128xf32>
    %123 = vector.shape_cast %122 : vector<2x8x128xf32> to vector<16x128xf32>
    %c3 = arith.constant 3 : index
    %c0_55 = arith.constant 0 : index
    %c0_56 = arith.constant 0 : index
    %124 = vector.load %arg8[%c3, %c0_55, %c0_56] : memref<9x128x128xf32, #tpu.memory_space<vmem>>, vector<1x128x128xf32>
    %125 = vector.shape_cast %124 : vector<1x128x128xf32> to vector<128x128xf32>
    %cst_57 = arith.constant dense<0.000000e+00> : vector<16x128xf32>
    %126 = tpu.matmul %123, %125, %cst_57 {dimension_numbers = #tpu.dot_dimension_numbers<[1], [0], [0], [1], [0, 0, 1, 1], [], []>} : vector<16x128xf32>, vector<128x128xf32>, vector<16x128xf32> -> vector<16x128xf32>
    %127 = arith.addf %91, %126 : vector<16x128xf32>
    %128 = vector.extract_strided_slice %101 {offsets = [0, 1, 0], sizes = [2, 8, 128], strides = [1, 1, 1]} : vector<2x10x128xf32> to vector<2x8x128xf32>
    %c1_i32_58 = arith.constant 1 : i32
    %129 = arith.muli %c1_i32_58, %arg1 : i32
    %c1_i32_59 = arith.constant 1 : i32
    %130 = arith.addi %129, %c1_i32_59 : i32
    %c0_i32_60 = arith.constant 0 : i32
    %131 = arith.cmpi ne, %130, %c0_i32_60 : i32
    %c9_i32_61 = arith.constant 9 : i32
    %132 = arith.cmpi ne, %130, %c9_i32_61 : i32
    %133 = arith.andi %131, %132 : i1
    %c1_i32_62 = arith.constant 1 : i32
    %134 = vector.broadcast %c1_i32_62 : i32 to vector<1x8x1xi32>
    %135 = arith.muli %134, %3 : vector<1x8x1xi32>
    %c1_i32_63 = arith.constant 1 : i32
    %136 = vector.broadcast %c1_i32_63 : i32 to vector<1x8x1xi32>
    %137 = arith.addi %135, %136 : vector<1x8x1xi32>
    %c0_i32_64 = arith.constant 0 : i32
    %138 = vector.broadcast %c0_i32_64 : i32 to vector<1x8x1xi32>
    %139 = arith.cmpi ne, %137, %138 : vector<1x8x1xi32>
    %c9_i32_65 = arith.constant 9 : i32
    %140 = vector.broadcast %c9_i32_65 : i32 to vector<1x8x1xi32>
    %141 = arith.cmpi ne, %137, %140 : vector<1x8x1xi32>
    %142 = arith.andi %139, %141 : vector<1x8x1xi1>
    %143 = vector.broadcast %133 : i1 to vector<1x8x1xi1>
    %144 = arith.andi %142, %143 : vector<1x8x1xi1>
    %cst_66 = arith.constant 0.000000e+00 : f32
    %145 = vector.shape_cast %144 : vector<1x8x1xi1> to vector<1x8x1xi1>
    %146 = vector.broadcast %145 : vector<1x8x1xi1> to vector<2x8x128xi1>
    %147 = vector.broadcast %cst_66 : f32 to vector<2x8x128xf32>
    %148 = arith.select %146, %128, %147 : vector<2x8x128xi1>, vector<2x8x128xf32>
    %149 = vector.shape_cast %148 : vector<2x8x128xf32> to vector<16x128xf32>
    %c4 = arith.constant 4 : index
    %c0_67 = arith.constant 0 : index
    %c0_68 = arith.constant 0 : index
    %150 = vector.load %arg8[%c4, %c0_67, %c0_68] : memref<9x128x128xf32, #tpu.memory_space<vmem>>, vector<1x128x128xf32>
    %151 = vector.shape_cast %150 : vector<1x128x128xf32> to vector<128x128xf32>
    %cst_69 = arith.constant dense<0.000000e+00> : vector<16x128xf32>
    %152 = tpu.matmul %149, %151, %cst_69 {dimension_numbers = #tpu.dot_dimension_numbers<[1], [0], [0], [1], [0, 0, 1, 1], [], []>} : vector<16x128xf32>, vector<128x128xf32>, vector<16x128xf32> -> vector<16x128xf32>
    %153 = arith.addf %127, %152 : vector<16x128xf32>
    %154 = vector.extract_strided_slice %101 {offsets = [0, 2, 0], sizes = [2, 8, 128], strides = [1, 1, 1]} : vector<2x10x128xf32> to vector<2x8x128xf32>
    %c1_i32_70 = arith.constant 1 : i32
    %155 = arith.muli %c1_i32_70, %arg1 : i32
    %c1_i32_71 = arith.constant 1 : i32
    %156 = arith.addi %155, %c1_i32_71 : i32
    %c0_i32_72 = arith.constant 0 : i32
    %157 = arith.cmpi ne, %156, %c0_i32_72 : i32
    %c9_i32_73 = arith.constant 9 : i32
    %158 = arith.cmpi ne, %156, %c9_i32_73 : i32
    %159 = arith.andi %157, %158 : i1
    %c1_i32_74 = arith.constant 1 : i32
    %160 = vector.broadcast %c1_i32_74 : i32 to vector<1x8x1xi32>
    %161 = arith.muli %160, %3 : vector<1x8x1xi32>
    %c2_i32_75 = arith.constant 2 : i32
    %162 = vector.broadcast %c2_i32_75 : i32 to vector<1x8x1xi32>
    %163 = arith.addi %161, %162 : vector<1x8x1xi32>
    %c0_i32_76 = arith.constant 0 : i32
    %164 = vector.broadcast %c0_i32_76 : i32 to vector<1x8x1xi32>
    %165 = arith.cmpi ne, %163, %164 : vector<1x8x1xi32>
    %c9_i32_77 = arith.constant 9 : i32
    %166 = vector.broadcast %c9_i32_77 : i32 to vector<1x8x1xi32>
    %167 = arith.cmpi ne, %163, %166 : vector<1x8x1xi32>
    %168 = arith.andi %165, %167 : vector<1x8x1xi1>
    %169 = vector.broadcast %159 : i1 to vector<1x8x1xi1>
    %170 = arith.andi %168, %169 : vector<1x8x1xi1>
    %cst_78 = arith.constant 0.000000e+00 : f32
    %171 = vector.shape_cast %170 : vector<1x8x1xi1> to vector<1x8x1xi1>
    %172 = vector.broadcast %171 : vector<1x8x1xi1> to vector<2x8x128xi1>
    %173 = vector.broadcast %cst_78 : f32 to vector<2x8x128xf32>
    %174 = arith.select %172, %154, %173 : vector<2x8x128xi1>, vector<2x8x128xf32>
    %175 = vector.shape_cast %174 : vector<2x8x128xf32> to vector<16x128xf32>
    %c5 = arith.constant 5 : index
    %c0_79 = arith.constant 0 : index
    %c0_80 = arith.constant 0 : index
    %176 = vector.load %arg8[%c5, %c0_79, %c0_80] : memref<9x128x128xf32, #tpu.memory_space<vmem>>, vector<1x128x128xf32>
    %177 = vector.shape_cast %176 : vector<1x128x128xf32> to vector<128x128xf32>
    %cst_81 = arith.constant dense<0.000000e+00> : vector<16x128xf32>
    %178 = tpu.matmul %175, %177, %cst_81 {dimension_numbers = #tpu.dot_dimension_numbers<[1], [0], [0], [1], [0, 0, 1, 1], [], []>} : vector<16x128xf32>, vector<128x128xf32>, vector<16x128xf32> -> vector<16x128xf32>
    %179 = arith.addf %153, %178 : vector<16x128xf32>
    %c0_82 = arith.constant 0 : index
    %c0_83 = arith.constant 0 : index
    %c0_84 = arith.constant 0 : index
    %c0_85 = arith.constant 0 : index
    %180 = vector.load %arg7[%c0_82, %c0_83, %c0_84, %c0_85] : memref<2x1x10x128xf32, #tpu.memory_space<vmem>>, vector<2x1x10x128xf32>
    %181 = vector.shape_cast %180 : vector<2x1x10x128xf32> to vector<2x10x128xf32>
    %182 = vector.shape_cast %0 : vector<1x128xf32> to vector<1x1x128xf32>
    %183 = vector.broadcast %182 : vector<1x1x128xf32> to vector<2x10x128xf32>
    %184 = arith.mulf %181, %183 : vector<2x10x128xf32>
    %185 = vector.shape_cast %1 : vector<1x128xf32> to vector<1x1x128xf32>
    %186 = vector.broadcast %185 : vector<1x1x128xf32> to vector<2x10x128xf32>
    %187 = arith.addf %184, %186 : vector<2x10x128xf32>
    %cst_86 = arith.constant 0.000000e+00 : f32
    %188 = vector.broadcast %cst_86 : f32 to vector<2x10x128xf32>
    %189 = arith.maximumf %187, %188 : vector<2x10x128xf32>
    %190 = vector.extract_strided_slice %189 {offsets = [0, 0, 0], sizes = [2, 8, 128], strides = [1, 1, 1]} : vector<2x10x128xf32> to vector<2x8x128xf32>
    %c1_i32_87 = arith.constant 1 : i32
    %191 = arith.muli %c1_i32_87, %arg1 : i32
    %c2_i32_88 = arith.constant 2 : i32
    %192 = arith.addi %191, %c2_i32_88 : i32
    %c0_i32_89 = arith.constant 0 : i32
    %193 = arith.cmpi ne, %192, %c0_i32_89 : i32
    %c9_i32_90 = arith.constant 9 : i32
    %194 = arith.cmpi ne, %192, %c9_i32_90 : i32
    %195 = arith.andi %193, %194 : i1
    %c1_i32_91 = arith.constant 1 : i32
    %196 = vector.broadcast %c1_i32_91 : i32 to vector<1x8x1xi32>
    %197 = arith.muli %196, %3 : vector<1x8x1xi32>
    %c0_i32_92 = arith.constant 0 : i32
    %198 = vector.broadcast %c0_i32_92 : i32 to vector<1x8x1xi32>
    %199 = arith.addi %197, %198 : vector<1x8x1xi32>
    %c0_i32_93 = arith.constant 0 : i32
    %200 = vector.broadcast %c0_i32_93 : i32 to vector<1x8x1xi32>
    %201 = arith.cmpi ne, %199, %200 : vector<1x8x1xi32>
    %c9_i32_94 = arith.constant 9 : i32
    %202 = vector.broadcast %c9_i32_94 : i32 to vector<1x8x1xi32>
    %203 = arith.cmpi ne, %199, %202 : vector<1x8x1xi32>
    %204 = arith.andi %201, %203 : vector<1x8x1xi1>
    %205 = vector.broadcast %195 : i1 to vector<1x8x1xi1>
    %206 = arith.andi %204, %205 : vector<1x8x1xi1>
    %cst_95 = arith.constant 0.000000e+00 : f32
    %207 = vector.shape_cast %206 : vector<1x8x1xi1> to vector<1x8x1xi1>
    %208 = vector.broadcast %207 : vector<1x8x1xi1> to vector<2x8x128xi1>
    %209 = vector.broadcast %cst_95 : f32 to vector<2x8x128xf32>
    %210 = arith.select %208, %190, %209 : vector<2x8x128xi1>, vector<2x8x128xf32>
    %211 = vector.shape_cast %210 : vector<2x8x128xf32> to vector<16x128xf32>
    %c6 = arith.constant 6 : index
    %c0_96 = arith.constant 0 : index
    %c0_97 = arith.constant 0 : index
    %212 = vector.load %arg8[%c6, %c0_96, %c0_97] : memref<9x128x128xf32, #tpu.memory_space<vmem>>, vector<1x128x128xf32>
    %213 = vector.shape_cast %212 : vector<1x128x128xf32> to vector<128x128xf32>
    %cst_98 = arith.constant dense<0.000000e+00> : vector<16x128xf32>
    %214 = tpu.matmul %211, %213, %cst_98 {dimension_numbers = #tpu.dot_dimension_numbers<[1], [0], [0], [1], [0, 0, 1, 1], [], []>} : vector<16x128xf32>, vector<128x128xf32>, vector<16x128xf32> -> vector<16x128xf32>
    %215 = arith.addf %179, %214 : vector<16x128xf32>
    %216 = vector.extract_strided_slice %189 {offsets = [0, 1, 0], sizes = [2, 8, 128], strides = [1, 1, 1]} : vector<2x10x128xf32> to vector<2x8x128xf32>
    %c1_i32_99 = arith.constant 1 : i32
    %217 = arith.muli %c1_i32_99, %arg1 : i32
    %c2_i32_100 = arith.constant 2 : i32
    %218 = arith.addi %217, %c2_i32_100 : i32
    %c0_i32_101 = arith.constant 0 : i32
    %219 = arith.cmpi ne, %218, %c0_i32_101 : i32
    %c9_i32_102 = arith.constant 9 : i32
    %220 = arith.cmpi ne, %218, %c9_i32_102 : i32
    %221 = arith.andi %219, %220 : i1
    %c1_i32_103 = arith.constant 1 : i32
    %222 = vector.broadcast %c1_i32_103 : i32 to vector<1x8x1xi32>
    %223 = arith.muli %222, %3 : vector<1x8x1xi32>
    %c1_i32_104 = arith.constant 1 : i32
    %224 = vector.broadcast %c1_i32_104 : i32 to vector<1x8x1xi32>
    %225 = arith.addi %223, %224 : vector<1x8x1xi32>
    %c0_i32_105 = arith.constant 0 : i32
    %226 = vector.broadcast %c0_i32_105 : i32 to vector<1x8x1xi32>
    %227 = arith.cmpi ne, %225, %226 : vector<1x8x1xi32>
    %c9_i32_106 = arith.constant 9 : i32
    %228 = vector.broadcast %c9_i32_106 : i32 to vector<1x8x1xi32>
    %229 = arith.cmpi ne, %225, %228 : vector<1x8x1xi32>
    %230 = arith.andi %227, %229 : vector<1x8x1xi1>
    %231 = vector.broadcast %221 : i1 to vector<1x8x1xi1>
    %232 = arith.andi %230, %231 : vector<1x8x1xi1>
    %cst_107 = arith.constant 0.000000e+00 : f32
    %233 = vector.shape_cast %232 : vector<1x8x1xi1> to vector<1x8x1xi1>
    %234 = vector.broadcast %233 : vector<1x8x1xi1> to vector<2x8x128xi1>
    %235 = vector.broadcast %cst_107 : f32 to vector<2x8x128xf32>
    %236 = arith.select %234, %216, %235 : vector<2x8x128xi1>, vector<2x8x128xf32>
    %237 = vector.shape_cast %236 : vector<2x8x128xf32> to vector<16x128xf32>
    %c7 = arith.constant 7 : index
    %c0_108 = arith.constant 0 : index
    %c0_109 = arith.constant 0 : index
    %238 = vector.load %arg8[%c7, %c0_108, %c0_109] : memref<9x128x128xf32, #tpu.memory_space<vmem>>, vector<1x128x128xf32>
    %239 = vector.shape_cast %238 : vector<1x128x128xf32> to vector<128x128xf32>
    %cst_110 = arith.constant dense<0.000000e+00> : vector<16x128xf32>
    %240 = tpu.matmul %237, %239, %cst_110 {dimension_numbers = #tpu.dot_dimension_numbers<[1], [0], [0], [1], [0, 0, 1, 1], [], []>} : vector<16x128xf32>, vector<128x128xf32>, vector<16x128xf32> -> vector<16x128xf32>
    %241 = arith.addf %215, %240 : vector<16x128xf32>
    %242 = vector.extract_strided_slice %189 {offsets = [0, 2, 0], sizes = [2, 8, 128], strides = [1, 1, 1]} : vector<2x10x128xf32> to vector<2x8x128xf32>
    %c1_i32_111 = arith.constant 1 : i32
    %243 = arith.muli %c1_i32_111, %arg1 : i32
    %c2_i32_112 = arith.constant 2 : i32
    %244 = arith.addi %243, %c2_i32_112 : i32
    %c0_i32_113 = arith.constant 0 : i32
    %245 = arith.cmpi ne, %244, %c0_i32_113 : i32
    %c9_i32_114 = arith.constant 9 : i32
    %246 = arith.cmpi ne, %244, %c9_i32_114 : i32
    %247 = arith.andi %245, %246 : i1
    %c1_i32_115 = arith.constant 1 : i32
    %248 = vector.broadcast %c1_i32_115 : i32 to vector<1x8x1xi32>
    %249 = arith.muli %248, %3 : vector<1x8x1xi32>
    %c2_i32_116 = arith.constant 2 : i32
    %250 = vector.broadcast %c2_i32_116 : i32 to vector<1x8x1xi32>
    %251 = arith.addi %249, %250 : vector<1x8x1xi32>
    %c0_i32_117 = arith.constant 0 : i32
    %252 = vector.broadcast %c0_i32_117 : i32 to vector<1x8x1xi32>
    %253 = arith.cmpi ne, %251, %252 : vector<1x8x1xi32>
    %c9_i32_118 = arith.constant 9 : i32
    %254 = vector.broadcast %c9_i32_118 : i32 to vector<1x8x1xi32>
    %255 = arith.cmpi ne, %251, %254 : vector<1x8x1xi32>
    %256 = arith.andi %253, %255 : vector<1x8x1xi1>
    %257 = vector.broadcast %247 : i1 to vector<1x8x1xi1>
    %258 = arith.andi %256, %257 : vector<1x8x1xi1>
    %cst_119 = arith.constant 0.000000e+00 : f32
    %259 = vector.shape_cast %258 : vector<1x8x1xi1> to vector<1x8x1xi1>
    %260 = vector.broadcast %259 : vector<1x8x1xi1> to vector<2x8x128xi1>
    %261 = vector.broadcast %cst_119 : f32 to vector<2x8x128xf32>
    %262 = arith.select %260, %242, %261 : vector<2x8x128xi1>, vector<2x8x128xf32>
    %263 = vector.shape_cast %262 : vector<2x8x128xf32> to vector<16x128xf32>
    %c8 = arith.constant 8 : index
    %c0_120 = arith.constant 0 : index
    %c0_121 = arith.constant 0 : index
    %264 = vector.load %arg8[%c8, %c0_120, %c0_121] : memref<9x128x128xf32, #tpu.memory_space<vmem>>, vector<1x128x128xf32>
    %265 = vector.shape_cast %264 : vector<1x128x128xf32> to vector<128x128xf32>
    %cst_122 = arith.constant dense<0.000000e+00> : vector<16x128xf32>
    %266 = tpu.matmul %263, %265, %cst_122 {dimension_numbers = #tpu.dot_dimension_numbers<[1], [0], [0], [1], [0, 0, 1, 1], [], []>} : vector<16x128xf32>, vector<128x128xf32>, vector<16x128xf32> -> vector<16x128xf32>
    %267 = arith.addf %241, %266 : vector<16x128xf32>
    %268 = vector.shape_cast %267 : vector<16x128xf32> to vector<2x1x8x128xf32>
    %c0_123 = arith.constant 0 : index
    %c0_124 = arith.constant 0 : index
    %c0_125 = arith.constant 0 : index
    %c0_126 = arith.constant 0 : index
    %269 = vector.load %arg9[%c0_123, %c0_124, %c0_125, %c0_126] : memref<2x1x8x128xf32, #tpu.memory_space<vmem>>, vector<2x1x8x128xf32>
    tpu.vector_store %arg9[%c0_123, %c0_124, %c0_125, %c0_126], %268 {strides = array<i32>} : memref<2x1x8x128xf32, #tpu.memory_space<vmem>>, vector<2x1x8x128xf32>,
    return
  }
  func.func @transform_0(%arg0: i32, %arg1: i32, %arg2: i32) -> (i32, i32) {
    %c0_i32 = arith.constant 0 : i32
    %c0_i32_0 = arith.constant 0 : i32
    %c0_i32_1 = arith.constant 0 : i32
    return %c0_i32, %c0_i32_0 : i32, i32
  }
  func.func @transform_1(%arg0: i32, %arg1: i32, %arg2: i32) -> (i32, i32) {
    %c0_i32 = arith.constant 0 : i32
    %c0_i32_0 = arith.constant 0 : i32
    %c0_i32_1 = arith.constant 0 : i32
    return %c0_i32, %c0_i32_0 : i32, i32
  }
  func.func @transform_2(%arg0: i32, %arg1: i32, %arg2: i32) -> (i32, i32, i32, i32) {
    %c0_i32 = arith.constant 0 : i32
    %0 = arith.addi %arg1, %c0_i32 : i32
    %c0_i32_0 = arith.constant 0 : i32
    %c0_i32_1 = arith.constant 0 : i32
    %c0_i32_2 = arith.constant 0 : i32
    return %arg0, %0, %c0_i32_0, %c0_i32_1 : i32, i32, i32, i32
  }
  func.func @transform_3(%arg0: i32, %arg1: i32, %arg2: i32) -> (i32, i32, i32, i32) {
    %c1_i32 = arith.constant 1 : i32
    %0 = arith.addi %arg1, %c1_i32 : i32
    %c0_i32 = arith.constant 0 : i32
    %c0_i32_0 = arith.constant 0 : i32
    %c0_i32_1 = arith.constant 0 : i32
    return %arg0, %0, %c0_i32, %c0_i32_0 : i32, i32, i32, i32
  }
  func.func @transform_4(%arg0: i32, %arg1: i32, %arg2: i32) -> (i32, i32, i32, i32) {
    %c2_i32 = arith.constant 2 : i32
    %0 = arith.addi %arg1, %c2_i32 : i32
    %c0_i32 = arith.constant 0 : i32
    %c0_i32_0 = arith.constant 0 : i32
    %c0_i32_1 = arith.constant 0 : i32
    return %arg0, %0, %c0_i32, %c0_i32_0 : i32, i32, i32, i32
  }
  func.func @transform_5(%arg0: i32, %arg1: i32, %arg2: i32) -> (i32, i32, i32) {
    %c0_i32 = arith.constant 0 : i32
    %c0_i32_0 = arith.constant 0 : i32
    %c0_i32_1 = arith.constant 0 : i32
    return %c0_i32, %c0_i32_0, %arg2 : i32, i32, i32
  }
  func.func @transform_6(%arg0: i32, %arg1: i32, %arg2: i32) -> (i32, i32, i32, i32) {
    %c0_i32 = arith.constant 0 : i32
    %c0_i32_0 = arith.constant 0 : i32
    return %arg0, %arg1, %c0_i32, %arg2 : i32, i32, i32, i32
  }
}

</mosaic_0001>

<llo_original>
// kernel: network_block_forward.9
$region0: #{network_block_forward.9}
  #allocation0 [shape = 'u32[]', space=smem, size = 0x4, offset = 0x4, fixed_abs, tag = 'smem constant byte address 0x4 - core index']
  #allocation1 [shape = 'u32[144,128]{1,0:T(1,128)}', space=vmem, size = 0x12000, scoped, tag = 'internal scratch']
  %s0 = inlined_call_operand.vmem [shape: f32[512,128], index: 0, kind: input, shape index: {}]
  %s1 = inlined_call_operand.vmem [shape: f32[1,128], index: 1, kind: output, shape index: {0}]
  %s2 = inlined_call_operand.vmem [shape: f32[1,128], index: 2, kind: output, shape index: {1}]
  %3 = xla_tuple %s1, %s2
  %s4 = sld [smem:[#allocation0]]
  $region26: #{network_block_forward.9} parent=0
    _
  %s6 = ssub.s32 1, %s4
  %s7 = scalar_select 0, %s6, %s4
  // Predicated region
  $region2: #{network_block_forward.9} parent=0 // pred_check
    _
  $region3: #{network_block_forward.9} parent=0 // pred_check_branch
    %9 = sbr.rel (0) target = $region5
  $region4: #{network_block_forward.9} parent=0 // pred_region
    _
  $region5: #{network_block_forward.9} parent=0 // pred_fallthru
    _
  %p10 = scmp.eq.s32.totalorder 0, 0
  // Predicated region
  $region6: #{network_block_forward.9} parent=0 // pred_check
    %p11 = pneg %p10
  $region7: #{network_block_forward.9} parent=0 // pred_check_branch
    %13 = sbr.rel (%p11) target = $region9
  $region8: #{network_block_forward.9} parent=0 // pred_region
    %14 = vst [vmem:[%s1] sm:$0x1] 0.0
    %15 = vst [vmem:[%s2] sm:$0x1] 0.0
  $region9: #{network_block_forward.9} parent=0 // pred_fallthru
    _
  %v16 = vld [vmem:[%s0] sm:$0xff]
  %v17 = vld [vmem:[%s0 + $0x8] sm:$0xff]
  %v18 = vld [vmem:[%s0 + $0x10] sm:$0xff]
  %v19 = vld [vmem:[%s0 + $0x18] sm:$0xff]
  %v20 = vld [vmem:[%s0 + $0x20] sm:$0xff]
  %v21 = vld [vmem:[%s0 + $0x28] sm:$0xff]
  %v22 = vld [vmem:[%s0 + $0x30] sm:$0xff]
  %v23 = vld [vmem:[%s0 + $0x38] sm:$0xff]
  %v24 = vld [vmem:[%s0 + $0x40] sm:$0xff]
  %v25 = vld [vmem:[%s0 + $0x48] sm:$0xff]
  %v26 = vld [vmem:[%s0 + $0x50] sm:$0xff]
  %v27 = vld [vmem:[%s0 + $0x58] sm:$0xff]
  %v28 = vld [vmem:[%s0 + $0x60] sm:$0xff]
  %v29 = vld [vmem:[%s0 + $0x68] sm:$0xff]
  %v30 = vld [vmem:[%s0 + $0x70] sm:$0xff]
  %v31 = vld [vmem:[%s0 + $0x78] sm:$0xff]
  %v32 = vld [vmem:[%s0 + $0x80] sm:$0xff]
  %v33 = vld [vmem:[%s0 + $0x88] sm:$0xff]
  %v34 = vld [vmem:[%s0 + $0x90] sm:$0xff]
  %v35 = vld [vmem:[%s0 + $0x98] sm:$0xff]
  %v36 = vld [vmem:[%s0 + $0xa0] sm:$0xff]
  %v37 = vld [vmem:[%s0 + $0xa8] sm:$0xff]
  %v38 = vld [vmem:[%s0 + $0xb0] sm:$0xff]
  %v39 = vld [vmem:[%s0 + $0xb8] sm:$0xff]
  %v40 = vld [vmem:[%s0 + $0xc0] sm:$0xff]
  %v41 = vld [vmem:[%s0 + $0xc8] sm:$0xff]
  %v42 = vld [vmem:[%s0 + $0xd0] sm:$0xff]
  %v43 = vld [vmem:[%s0 + $0xd8] sm:$0xff]
  %v44 = vld [vmem:[%s0 + $0xe0] sm:$0xff]
  %v45 = vld [vmem:[%s0 + $0xe8] sm:$0xff]
  %v46 = vld [vmem:[%s0 + $0xf0] sm:$0xff]
  %v47 = vld [vmem:[%s0 + $0xf8] sm:$0xff]
  %v48 = vld [vmem:[%s0 + $0x100] sm:$0xff]
  %v49 = vld [vmem:[%s0 + $0x108] sm:$0xff]
  %v50 = vld [vmem:[%s0 + $0x110] sm:$0xff]
  %v51 = vld [vmem:[%s0 + $0x118] sm:$0xff]
  %v52 = vld [vmem:[%s0 + $0x120] sm:$0xff]
  %v53 = vld [vmem:[%s0 + $0x128] sm:$0xff]
  %v54 = vld [vmem:[%s0 + $0x130] sm:$0xff]
  %v55 = vld [vmem:[%s0 + $0x138] sm:$0xff]
  %v56 = vld [vmem:[%s0 + $0x140] sm:$0xff]
  %v57 = vld [vmem:[%s0 + $0x148] sm:$0xff]
  %v58 = vld [vmem:[%s0 + $0x150] sm:$0xff]
  %v59 = vld [vmem:[%s0 + $0x158] sm:$0xff]
  %v60 = vld [vmem:[%s0 + $0x160] sm:$0xff]
  %v61 = vld [vmem:[%s0 + $0x168] sm:$0xff]
  %v62 = vld [vmem:[%s0 + $0x170] sm:$0xff]
  %v63 = vld [vmem:[%s0 + $0x178] sm:$0xff]
  %v64 = vld [vmem:[%s0 + $0x180] sm:$0xff]
  %v65 = vld [vmem:[%s0 + $0x188] sm:$0xff]
  %v66 = vld [vmem:[%s0 + $0x190] sm:$0xff]
  %v67 = vld [vmem:[%s0 + $0x198] sm:$0xff]
  %v68 = vld [vmem:[%s0 + $0x1a0] sm:$0xff]
  %v69 = vld [vmem:[%s0 + $0x1a8] sm:$0xff]
  %v70 = vld [vmem:[%s0 + $0x1b0] sm:$0xff]
  %v71 = vld [vmem:[%s0 + $0x1b8] sm:$0xff]
  %v72 = vld [vmem:[%s0 + $0x1c0] sm:$0xff]
  %v73 = vld [vmem:[%s0 + $0x1c8] sm:$0xff]
  %v74 = vld [vmem:[%s0 + $0x1d0] sm:$0xff]
  %v75 = vld [vmem:[%s0 + $0x1d8] sm:$0xff]
  %v76 = vld [vmem:[%s0 + $0x1e0] sm:$0xff]
  %v77 = vld [vmem:[%s0 + $0x1e8] sm:$0xff]
  %v78 = vld [vmem:[%s0 + $0x1f0] sm:$0xff]
  %v79 = vld [vmem:[%s0 + $0x1f8] sm:$0xff]
  %v80 = vld [vmem:[%s1] sm:$0x1]
  %v81 = vadd.f32 %v16, %v17
  %v82 = vadd.f32 %v81, %v18
  %v83 = vadd.f32 %v82, %v19
  %v84 = vadd.f32 %v83, %v20
  %v85 = vadd.f32 %v84, %v21
  %v86 = vadd.f32 %v85, %v22
  %v87 = vadd.f32 %v86, %v23
  %v88 = vadd.f32 %v87, %v24
  %v89 = vadd.f32 %v88, %v25
  %v90 = vadd.f32 %v89, %v26
  %v91 = vadd.f32 %v90, %v27
  %v92 = vadd.f32 %v91, %v28
  %v93 = vadd.f32 %v92, %v29
  %v94 = vadd.f32 %v93, %v30
  %v95 = vadd.f32 %v94, %v31
  %v96 = vadd.f32 %v95, %v32
  %v97 = vadd.f32 %v96, %v33
  %v98 = vadd.f32 %v97, %v34
  %v99 = vadd.f32 %v98, %v35
  %v100 = vadd.f32 %v99, %v36
  %v101 = vadd.f32 %v100, %v37
  %v102 = vadd.f32 %v101, %v38
  %v103 = vadd.f32 %v102, %v39
  %v104 = vadd.f32 %v103, %v40
  %v105 = vadd.f32 %v104, %v41
  %v106 = vadd.f32 %v105, %v42
  %v107 = vadd.f32 %v106, %v43
  %v108 = vadd.f32 %v107, %v44
  %v109 = vadd.f32 %v108, %v45
  %v110 = vadd.f32 %v109, %v46
  %v111 = vadd.f32 %v110, %v47
  %v112 = vadd.f32 %v111, %v48
  %v113 = vadd.f32 %v112, %v49
  %v114 = vadd.f32 %v113, %v50
  %v115 = vadd.f32 %v114, %v51
  %v116 = vadd.f32 %v115, %v52
  %v117 = vadd.f32 %v116, %v53
  %v118 = vadd.f32 %v117, %v54
  %v119 = vadd.f32 %v118, %v55
  %v120 = vadd.f32 %v119, %v56
  %v121 = vadd.f32 %v120, %v57
  %v122 = vadd.f32 %v121, %v58
  %v123 = vadd.f32 %v122, %v59
  %v124 = vadd.f32 %v123, %v60
  %v125 = vadd.f32 %v124, %v61
  %v126 = vadd.f32 %v125, %v62
  %v127 = vadd.f32 %v126, %v63
  %v128 = vadd.f32 %v127, %v64
  %v129 = vadd.f32 %v128, %v65
  %v130 = vadd.f32 %v129, %v66
  %v131 = vadd.f32 %v130, %v67
  %v132 = vadd.f32 %v131, %v68
  %v133 = vadd.f32 %v132, %v69
  %v134 = vadd.f32 %v133, %v70
  %v135 = vadd.f32 %v134, %v71
  %v136 = vadd.f32 %v135, %v72
  %v137 = vadd.f32 %v136, %v73
  %v138 = vadd.f32 %v137, %v74
  %v139 = vadd.f32 %v138, %v75
  %v140 = vadd.f32 %v139, %v76
  %v141 = vadd.f32 %v140, %v77
  %v142 = vadd.f32 %v141, %v78
  %v143 = vadd.f32 %v142, %v79
  %v144 = vrot.slane %v143, 4
  %v145 = vadd.f32 %v143, %v144
  %v146 = vrot.slane %v145, 2
  %v147 = vadd.f32 %v145, %v146
  %v148 = vrot.slane %v147, 1
  %v149 = vadd.f32 %v147, %v148
  %v150 = vadd.f32 %v80, %v149
  %151 = vst [vmem:[%s1] sm:$0x1] %v150
  %v152 = vld [vmem:[%s2] sm:$0x1]
  %v153 = vmul.f32 %v16, %v16
  %v154 = vmul.f32 %v17, %v17
  %v155 = vmul.f32 %v18, %v18
  %v156 = vmul.f32 %v19, %v19
  %v157 = vmul.f32 %v20, %v20
  %v158 = vmul.f32 %v21, %v21
  %v159 = vmul.f32 %v22, %v22
  %v160 = vmul.f32 %v23, %v23
  %v161 = vmul.f32 %v24, %v24
  %v162 = vmul.f32 %v25, %v25
  %v163 = vmul.f32 %v26, %v26
  %v164 = vmul.f32 %v27, %v27
  %v165 = vmul.f32 %v28, %v28
  %v166 = vmul.f32 %v29, %v29
  %v167 = vmul.f32 %v30, %v30
  %v168 = vmul.f32 %v31, %v31
  %v169 = vmul.f32 %v32, %v32
  %v170 = vmul.f32 %v33, %v33
  %v171 = vmul.f32 %v34, %v34
  %v172 = vmul.f32 %v35, %v35
  %v173 = vmul.f32 %v36, %v36
  %v174 = vmul.f32 %v37, %v37
  %v175 = vmul.f32 %v38, %v38
  %v176 = vmul.f32 %v39, %v39
  %v177 = vmul.f32 %v40, %v40
  %v178 = vmul.f32 %v41, %v41
  %v179 = vmul.f32 %v42, %v42
  %v180 = vmul.f32 %v43, %v43
  %v181 = vmul.f32 %v44, %v44
  %v182 = vmul.f32 %v45, %v45
  %v183 = vmul.f32 %v46, %v46
  %v184 = vmul.f32 %v47, %v47
  %v185 = vmul.f32 %v48, %v48
  %v186 = vmul.f32 %v49, %v49
  %v187 = vmul.f32 %v50, %v50
  %v188 = vmul.f32 %v51, %v51
  %v189 = vmul.f32 %v52, %v52
  %v190 = vmul.f32 %v53, %v53
  %v191 = vmul.f32 %v54, %v54
  %v192 = vmul.f32 %v55, %v55
  %v193 = vmul.f32 %v56, %v56
  %v194 = vmul.f32 %v57, %v57
  %v195 = vmul.f32 %v58, %v58
  %v196 = vmul.f32 %v59, %v59
  %v197 = vmul.f32 %v60, %v60
  %v198 = vmul.f32 %v61, %v61
  %v199 = vmul.f32 %v62, %v62
  %v200 = vmul.f32 %v63, %v63
  %v201 = vmul.f32 %v64, %v64
  %v202 = vmul.f32 %v65, %v65
  %v203 = vmul.f32 %v66, %v66
  %v204 = vmul.f32 %v67, %v67
  %v205 = vmul.f32 %v68, %v68
  %v206 = vmul.f32 %v69, %v69
  %v207 = vmul.f32 %v70, %v70
  %v208 = vmul.f32 %v71, %v71
  %v209 = vmul.f32 %v72, %v72
  %v210 = vmul.f32 %v73, %v73
  %v211 = vmul.f32 %v74, %v74
  %v212 = vmul.f32 %v75, %v75
  %v213 = vmul.f32 %v76, %v76
  %v214 = vmul.f32 %v77, %v77
  %v215 = vmul.f32 %v78, %v78
  %v216 = vmul.f32 %v79, %v79
  %v217 = vadd.f32 %v153, %v154
  %v218 = vadd.f32 %v217, %v155
  %v219 = vadd.f32 %v218, %v156
  %v220 = vadd.f32 %v219, %v157
  %v221 = vadd.f32 %v220, %v158
  %v222 = vadd.f32 %v221, %v159
  %v223 = vadd.f32 %v222, %v160
  %v224 = vadd.f32 %v223, %v161
  %v225 = vadd.f32 %v224, %v162
  %v226 = vadd.f32 %v225, %v163
  %v227 = vadd.f32 %v226, %v164
  %v228 = vadd.f32 %v227, %v165
  %v229 = vadd.f32 %v228, %v166
  %v230 = vadd.f32 %v229, %v167
  %v231 = vadd.f32 %v230, %v168
  %v232 = vadd.f32 %v231, %v169
  %v233 = vadd.f32 %v232, %v170
  %v234 = vadd.f32 %v233, %v171
  %v235 = vadd.f32 %v234, %v172
  %v236 = vadd.f32 %v235, %v173
  %v237 = vadd.f32 %v236, %v174
  %v238 = vadd.f32 %v237, %v175
  %v239 = vadd.f32 %v238, %v176
  %v240 = vadd.f32 %v239, %v177
  %v241 = vadd.f32 %v240, %v178
  %v242 = vadd.f32 %v241, %v179
  %v243 = vadd.f32 %v242, %v180
  %v244 = vadd.f32 %v243, %v181
  %v245 = vadd.f32 %v244, %v182
  %v246 = vadd.f32 %v245, %v183
  %v247 = vadd.f32 %v246, %v184
  %v248 = vadd.f32 %v247, %v185
  %v249 = vadd.f32 %v248, %v186
  %v250 = vadd.f32 %v249, %v187
  %v251 = vadd.f32 %v250, %v188
  %v252 = vadd.f32 %v251, %v189
  %v253 = vadd.f32 %v252, %v190
  %v254 = vadd.f32 %v253, %v191
  %v255 = vadd.f32 %v254, %v192
  %v256 = vadd.f32 %v255, %v193
  %v257 = vadd.f32 %v256, %v194
  %v258 = vadd.f32 %v257, %v195
  %v259 = vadd.f32 %v258, %v196
  %v260 = vadd.f32 %v259, %v197
  %v261 = vadd.f32 %v260, %v198
  %v262 = vadd.f32 %v261, %v199
  %v263 = vadd.f32 %v262, %v200
  %v264 = vadd.f32 %v263, %v201
  %v265 = vadd.f32 %v264, %v202
  %v266 = vadd.f32 %v265, %v203
  %v267 = vadd.f32 %v266, %v204
  %v268 = vadd.f32 %v267, %v205
  %v269 = vadd.f32 %v268, %v206
  %v270 = vadd.f32 %v269, %v207
  %v271 = vadd.f32 %v270, %v208
  %v272 = vadd.f32 %v271, %v209
  %v273 = vadd.f32 %v272, %v210
  %v274 = vadd.f32 %v273, %v211
  %v275 = vadd.f32 %v274, %v212
  %v276 = vadd.f32 %v275, %v213
  %v277 = vadd.f32 %v276, %v214
  %v278 = vadd.f32 %v277, %v215
  %v279 = vadd.f32 %v278, %v216
  %v280 = vrot.slane %v279, 4
  %v281 = vadd.f32 %v279, %v280
  %v282 = vrot.slane %v281, 2
  %v283 = vadd.f32 %v281, %v282
  %v284 = vrot.slane %v283, 1
  %v285 = vadd.f32 %v283, %v284
  %v286 = vadd.f32 %v152, %v285
  %287 = vst [vmem:[%s2] sm:$0x1] %v286
  // Predicated region
  $region10: #{network_block_forward.9} parent=0 // pred_check
    _
  $region11: #{network_block_forward.9} parent=0 // pred_check_branch
    %289 = sbr.rel (0) target = $region13
  $region12: #{network_block_forward.9} parent=0 // pred_region
    _
  $region13: #{network_block_forward.9} parent=0 // pred_fallthru
    _
  // Predicated region
  $region14: #{network_block_forward.9} parent=0 // pred_check
    _
  $region15: #{network_block_forward.9} parent=0 // pred_check_branch
    %291 = sbr.rel (0) target = $region17
  $region16: #{network_block_forward.9} parent=0 // pred_region
    _
  $region17: #{network_block_forward.9} parent=0 // pred_fallthru
    _
  // Predicated region
  $region18: #{network_block_forward.9} parent=0 // pred_check
    _
  $region19: #{network_block_forward.9} parent=0 // pred_check_branch
    %293 = sbr.rel (0) target = $region21
  $region20: #{network_block_forward.9} parent=0 // pred_region
    _
  $region21: #{network_block_forward.9} parent=0 // pred_fallthru
    _
  // Predicated region
  $region22: #{network_block_forward.9} parent=0 // pred_check
    _
  $region23: #{network_block_forward.9} parent=0 // pred_check_branch
    %295 = sbr.rel (0) target = $region25
  $region24: #{network_block_forward.9} parent=0 // pred_region
    _
  $region25: #{network_block_forward.9} parent=0 // pred_fallthru
    _

// kernel: network_block_forward.12
$region0: #{network_block_forward.12}
  #allocation0 [shape = 'u32[]', space=smem, size = 0x4, offset = 0x4, fixed_abs, tag = 'smem constant byte address 0x4 - core index']
  #allocation1 [shape = 'u32[144,128]{1,0:T(1,128)}', space=vmem, size = 0x12000, scoped, tag = 'internal scratch']
  %s0 = inlined_call_operand.vmem [shape: f32[1,128], index: 0, kind: input, shape index: {}]
  %s1 = inlined_call_operand.vmem [shape: f32[1,128], index: 1, kind: input, shape index: {}]
  %s2 = inlined_call_operand.vmem [shape: f32[128,128], index: 2, kind: input, shape index: {}]
  %s3 = inlined_call_operand.vmem [shape: f32[128,128], index: 3, kind: input, shape index: {}]
  %s4 = inlined_call_operand.vmem [shape: f32[128,128], index: 4, kind: output, shape index: {}]
  %s5 = sld [smem:[#allocation0]]
  $region26: #{network_block_forward.12} parent=0
    _
  %s7 = ssub.s32 1, %s5
  %s8 = scalar_select 0, %s7, %s5
  // Predicated region
  $region2: #{network_block_forward.12} parent=0 // pred_check
    _
  $region3: #{network_block_forward.12} parent=0 // pred_check_branch
    %10 = sbr.rel (0) target = $region5
  $region4: #{network_block_forward.12} parent=0 // pred_region
    _
  $region5: #{network_block_forward.12} parent=0 // pred_fallthru
    _
  // Predicated region
  $region6: #{network_block_forward.12} parent=0 // pred_check
    _
  $region7: #{network_block_forward.12} parent=0 // pred_check_branch
    %12 = sbr.rel (0) target = $region9
  $region8: #{network_block_forward.12} parent=0 // pred_region
    _
  $region9: #{network_block_forward.12} parent=0 // pred_fallthru
    _
  // Predicated region
  $region10: #{network_block_forward.12} parent=0 // pred_check
    _
  $region11: #{network_block_forward.12} parent=0 // pred_check_branch
    %14 = sbr.rel (0) target = $region13
  $region12: #{network_block_forward.12} parent=0 // pred_region
    _
  $region13: #{network_block_forward.12} parent=0 // pred_fallthru
    _
  // Predicated region
  $region14: #{network_block_forward.12} parent=0 // pred_check
    _
  $region15: #{network_block_forward.12} parent=0 // pred_check_branch
    %16 = sbr.rel (0) target = $region17
  $region16: #{network_block_forward.12} parent=0 // pred_region
    _
  $region17: #{network_block_forward.12} parent=0 // pred_fallthru
    _
  %v17 = vld [vmem:[%s2] sm:$0xff]
  %v18 = vld [vmem:[%s2 + $0x8] sm:$0xff]
  %v19 = vld [vmem:[%s2 + $0x10] sm:$0xff]
  %v20 = vld [vmem:[%s2 + $0x18] sm:$0xff]
  %v21 = vld [vmem:[%s2 + $0x20] sm:$0xff]
  %v22 = vld [vmem:[%s2 + $0x28] sm:$0xff]
  %v23 = vld [vmem:[%s2 + $0x30] sm:$0xff]
  %v24 = vld [vmem:[%s2 + $0x38] sm:$0xff]
  %v25 = vld [vmem:[%s2 + $0x40] sm:$0xff]
  %v26 = vld [vmem:[%s2 + $0x48] sm:$0xff]
  %v27 = vld [vmem:[%s2 + $0x50] sm:$0xff]
  %v28 = vld [vmem:[%s2 + $0x58] sm:$0xff]
  %v29 = vld [vmem:[%s2 + $0x60] sm:$0xff]
  %v30 = vld [vmem:[%s2 + $0x68] sm:$0xff]
  %v31 = vld [vmem:[%s2 + $0x70] sm:$0xff]
  %v32 = vld [vmem:[%s2 + $0x78] sm:$0xff]
  %v33 = vld [vmem:[%s0] sm:$0x1]
  %v35 = vlaneseq
  %v36 = vshrl.u32 %v35, 7
  %v37 = vsub.s32 0, %v36
  %v38 = vrot.slane %v33, %v37
  %v40 = vmul.f32 %v17, %v38
  %v41 = vmul.f32 %v18, %v38
  %v42 = vmul.f32 %v19, %v38
  %v43 = vmul.f32 %v20, %v38
  %v44 = vmul.f32 %v21, %v38
  %v45 = vmul.f32 %v22, %v38
  %v46 = vmul.f32 %v23, %v38
  %v47 = vmul.f32 %v24, %v38
  %v48 = vmul.f32 %v25, %v38
  %v49 = vmul.f32 %v26, %v38
  %v50 = vmul.f32 %v27, %v38
  %v51 = vmul.f32 %v28, %v38
  %v52 = vmul.f32 %v29, %v38
  %v53 = vmul.f32 %v30, %v38
  %v54 = vmul.f32 %v31, %v38
  %v55 = vmul.f32 %v32, %v38
  %v56 = vld [vmem:[%s1] sm:$0x1]
  %v58 = vlaneseq
  %v59 = vshrl.u32 %v58, 7
  %v60 = vsub.s32 0, %v59
  %v61 = vrot.slane %v56, %v60
  %v63 = vadd.f32 %v40, %v61
  %v64 = vadd.f32 %v41, %v61
  %v65 = vadd.f32 %v42, %v61
  %v66 = vadd.f32 %v43, %v61
  %v67 = vadd.f32 %v44, %v61
  %v68 = vadd.f32 %v45, %v61
  %v69 = vadd.f32 %v46, %v61
  %v70 = vadd.f32 %v47, %v61
  %v71 = vadd.f32 %v48, %v61
  %v72 = vadd.f32 %v49, %v61
  %v73 = vadd.f32 %v50, %v61
  %v74 = vadd.f32 %v51, %v61
  %v75 = vadd.f32 %v52, %v61
  %v76 = vadd.f32 %v53, %v61
  %v77 = vadd.f32 %v54, %v61
  %v78 = vadd.f32 %v55, %v61
  %v79 = vmax.f32 %v63, 0.0
  %v80 = vmax.f32 %v64, 0.0
  %v81 = vmax.f32 %v65, 0.0
  %v82 = vmax.f32 %v66, 0.0
  %v83 = vmax.f32 %v67, 0.0
  %v84 = vmax.f32 %v68, 0.0
  %v85 = vmax.f32 %v69, 0.0
  %v86 = vmax.f32 %v70, 0.0
  %v87 = vmax.f32 %v71, 0.0
  %v88 = vmax.f32 %v72, 0.0
  %v89 = vmax.f32 %v73, 0.0
  %v90 = vmax.f32 %v74, 0.0
  %v91 = vmax.f32 %v75, 0.0
  %v92 = vmax.f32 %v76, 0.0
  %v93 = vmax.f32 %v77, 0.0
  %v94 = vmax.f32 %v78, 0.0
  %v95 = vld [vmem:[%s3] sm:$0xff]
  %v96 = vld [vmem:[%s3 + $0x8] sm:$0xff]
  %v97 = vld [vmem:[%s3 + $0x10] sm:$0xff]
  %v98 = vld [vmem:[%s3 + $0x18] sm:$0xff]
  %v99 = vld [vmem:[%s3 + $0x20] sm:$0xff]
  %v100 = vld [vmem:[%s3 + $0x28] sm:$0xff]
  %v101 = vld [vmem:[%s3 + $0x30] sm:$0xff]
  %v102 = vld [vmem:[%s3 + $0x38] sm:$0xff]
  %v103 = vld [vmem:[%s3 + $0x40] sm:$0xff]
  %v104 = vld [vmem:[%s3 + $0x48] sm:$0xff]
  %v105 = vld [vmem:[%s3 + $0x50] sm:$0xff]
  %v106 = vld [vmem:[%s3 + $0x58] sm:$0xff]
  %v107 = vld [vmem:[%s3 + $0x60] sm:$0xff]
  %v108 = vld [vmem:[%s3 + $0x68] sm:$0xff]
  %v109 = vld [vmem:[%s3 + $0x70] sm:$0xff]
  %v110 = vld [vmem:[%s3 + $0x78] sm:$0xff]
  %111 = vmatprep.subr.mxu0 0.0
  %112 = vmatpush1.msra.mxu0 %v95
  %113 = vmatprep.subr.mxu0 0.0
  %114 = vmatpush1.msra.mxu0 %v96
  %115 = vmatprep.subr.mxu0 0.0
  %116 = vmatpush1.msra.mxu0 %v97
  %117 = vmatprep.subr.mxu0 0.0
  %118 = vmatpush1.msra.mxu0 %v98
  %119 = vmatprep.subr.mxu0 0.0
  %120 = vmatpush1.msra.mxu0 %v99
  %121 = vmatprep.subr.mxu0 0.0
  %122 = vmatpush1.msra.mxu0 %v100
  %123 = vmatprep.subr.mxu0 0.0
  %124 = vmatpush1.msra.mxu0 %v101
  %125 = vmatprep.subr.mxu0 0.0
  %126 = vmatpush1.msra.mxu0 %v102
  %127 = vmatprep.subr.mxu0 0.0
  %128 = vmatpush1.msra.mxu0 %v103
  %129 = vmatprep.subr.mxu0 0.0
  %130 = vmatpush1.msra.mxu0 %v104
  %131 = vmatprep.subr.mxu0 0.0
  %132 = vmatpush1.msra.mxu0 %v105
  %133 = vmatprep.subr.mxu0 0.0
  %134 = vmatpush1.msra.mxu0 %v106
  %135 = vmatprep.subr.mxu0 0.0
  %136 = vmatpush1.msra.mxu0 %v107
  %137 = vmatprep.subr.mxu0 0.0
  %138 = vmatpush1.msra.mxu0 %v108
  %139 = vmatprep.subr.mxu0 0.0
  %140 = vmatpush1.msra.mxu0 %v109
  %141 = vmatprep.subr.mxu0 0.0
  %142 = vmatpush1.msra.mxu0 %v110
  %143 = vmatprep.subr.mxu0 0.0
  %144 = vmatpush1.msra.mxu0 0.0
  %145 = vmatprep.subr.mxu0 0.0
  %146 = vmatpush1.msra.mxu0 0.0
  %147 = vmatprep.subr.mxu0 0.0
  %148 = vmatpush1.msra.mxu0 0.0
  %149 = vmatprep.subr.mxu0 0.0
  %150 = vmatpush1.msra.mxu0 0.0
  %151 = vmatprep.subr.mxu0 0.0
  %152 = vmatpush1.msra.mxu0 0.0
  %153 = vmatprep.subr.mxu0 0.0
  %154 = vmatpush1.msra.mxu0 0.0
  %155 = vmatprep.subr.mxu0 0.0
  %156 = vmatpush1.msra.mxu0 0.0
  %157 = vmatprep.subr.mxu0 0.0
  %158 = vmatpush1.msra.mxu0 0.0
  %159 = vmatprep.subr.mxu0 0.0
  %160 = vmatpush1.msra.mxu0 0.0
  %161 = vmatprep.subr.mxu0 0.0
  %162 = vmatpush1.msra.mxu0 0.0
  %163 = vmatprep.subr.mxu0 0.0
  %164 = vmatpush1.msra.mxu0 0.0
  %165 = vmatprep.subr.mxu0 0.0
  %166 = vmatpush1.msra.mxu0 0.0
  %167 = vmatprep.subr.mxu0 0.0
  %168 = vmatpush1.msra.mxu0 0.0
  %169 = vmatprep.subr.mxu0 0.0
  %170 = vmatpush1.msra.mxu0 0.0
  %171 = vmatprep.subr.mxu0 0.0
  %172 = vmatpush1.msra.mxu0 0.0
  %173 = vmatprep.subr.mxu0 0.0
  %174 = vmatpush1.msra.mxu0 0.0
  %175 = vmatprep.mubr.f32.mxu0 0.0
  %176 = vmatmul.mubr.f32.gmra.mrb[0].mxu0 %v79
  %v177 = vpop.f32.mrb[0].mxu0
  %v178 = vadd.f32 0.0, %v177
  %v179 = vpop.f32.mrb[0].mxu0
  %180 = vmatprep.mubr.f32.mxu0 0.0
  %181 = vmatmul.mubr.f32.gmra.mrb[0].mxu0 %v80
  %v182 = vpop.f32.mrb[0].mxu0
  %v183 = vadd.f32 0.0, %v182
  %v184 = vpop.f32.mrb[0].mxu0
  %185 = vmatprep.mubr.f32.mxu0 0.0
  %186 = vmatmul.mubr.f32.gmra.mrb[0].mxu0 %v81
  %v187 = vpop.f32.mrb[0].mxu0
  %v188 = vadd.f32 0.0, %v187
  %v189 = vpop.f32.mrb[0].mxu0
  %190 = vmatprep.mubr.f32.mxu0 0.0
  %191 = vmatmul.mubr.f32.gmra.mrb[0].mxu0 %v82
  %v192 = vpop.f32.mrb[0].mxu0
  %v193 = vadd.f32 0.0, %v192
  %v194 = vpop.f32.mrb[0].mxu0
  %195 = vmatprep.mubr.f32.mxu0 0.0
  %196 = vmatmul.mubr.f32.gmra.mrb[0].mxu0 %v83
  %v197 = vpop.f32.mrb[0].mxu0
  %v198 = vadd.f32 0.0, %v197
  %v199 = vpop.f32.mrb[0].mxu0
  %200 = vmatprep.mubr.f32.mxu0 0.0
  %201 = vmatmul.mubr.f32.gmra.mrb[0].mxu0 %v84
  %v202 = vpop.f32.mrb[0].mxu0
  %v203 = vadd.f32 0.0, %v202
  %v204 = vpop.f32.mrb[0].mxu0
  %205 = vmatprep.mubr.f32.mxu0 0.0
  %206 = vmatmul.mubr.f32.gmra.mrb[0].mxu0 %v85
  %v207 = vpop.f32.mrb[0].mxu0
  %v208 = vadd.f32 0.0, %v207
  %v209 = vpop.f32.mrb[0].mxu0
  %210 = vmatprep.mubr.f32.mxu0 0.0
  %211 = vmatmul.mubr.f32.gmra.mrb[0].mxu0 %v86
  %v212 = vpop.f32.mrb[0].mxu0
  %v213 = vadd.f32 0.0, %v212
  %v214 = vpop.f32.mrb[0].mxu0
  %215 = vmatprep.mubr.f32.mxu0 0.0
  %216 = vmatmul.mubr.f32.gmra.mrb[0].mxu0 %v87
  %v217 = vpop.f32.mrb[0].mxu0
  %v218 = vadd.f32 0.0, %v217
  %v219 = vpop.f32.mrb[0].mxu0
  %220 = vmatprep.mubr.f32.mxu0 0.0
  %221 = vmatmul.mubr.f32.gmra.mrb[0].mxu0 %v88
  %v222 = vpop.f32.mrb[0].mxu0
  %v223 = vadd.f32 0.0, %v222
  %v224 = vpop.f32.mrb[0].mxu0
  %225 = vmatprep.mubr.f32.mxu0 0.0
  %226 = vmatmul.mubr.f32.gmra.mrb[0].mxu0 %v89
  %v227 = vpop.f32.mrb[0].mxu0
  %v228 = vadd.f32 0.0, %v227
  %v229 = vpop.f32.mrb[0].mxu0
  %230 = vmatprep.mubr.f32.mxu0 0.0
  %231 = vmatmul.mubr.f32.gmra.mrb[0].mxu0 %v90
  %v232 = vpop.f32.mrb[0].mxu0
  %v233 = vadd.f32 0.0, %v232
  %v234 = vpop.f32.mrb[0].mxu0
  %235 = vmatprep.mubr.f32.mxu0 0.0
  %236 = vmatmul.mubr.f32.gmra.mrb[0].mxu0 %v91
  %v237 = vpop.f32.mrb[0].mxu0
  %v238 = vadd.f32 0.0, %v237
  %v239 = vpop.f32.mrb[0].mxu0
  %240 = vmatprep.mubr.f32.mxu0 0.0
  %241 = vmatmul.mubr.f32.gmra.mrb[0].mxu0 %v92
  %v242 = vpop.f32.mrb[0].mxu0
  %v243 = vadd.f32 0.0, %v242
  %v244 = vpop.f32.mrb[0].mxu0
  %245 = vmatprep.mubr.f32.mxu0 0.0
  %246 = vmatmul.mubr.f32.gmra.mrb[0].mxu0 %v93
  %v247 = vpop.f32.mrb[0].mxu0
  %v248 = vadd.f32 0.0, %v247
  %v249 = vpop.f32.mrb[0].mxu0
  %250 = vmatprep.mubr.f32.mxu0 0.0
  %251 = vmatmul.mubr.f32.gmra.mrb[0].mxu0 %v94
  %v252 = vpop.f32.mrb[0].mxu0
  %v253 = vadd.f32 0.0, %v252
  %v254 = vpop.f32.mrb[0].mxu0
  %255 = vdwg.mxu0
  %256 = vst [vmem:[%s4] sm:$0xff] %v178
  %257 = vst [vmem:[%s4 + $0x8] sm:$0xff] %v183
  %258 = vst [vmem:[%s4 + $0x10] sm:$0xff] %v188
  %259 = vst [vmem:[%s4 + $0x18] sm:$0xff] %v193
  %260 = vst [vmem:[%s4 + $0x20] sm:$0xff] %v198
  %261 = vst [vmem:[%s4 + $0x28] sm:$0xff] %v203
  %262 = vst [vmem:[%s4 + $0x30] sm:$0xff] %v208
  %263 = vst [vmem:[%s4 + $0x38] sm:$0xff] %v213
  %264 = vst [vmem:[%s4 + $0x40] sm:$0xff] %v218
  %265 = vst [vmem:[%s4 + $0x48] sm:$0xff] %v223
  %266 = vst [vmem:[%s4 + $0x50] sm:$0xff] %v228
  %267 = vst [vmem:[%s4 + $0x58] sm:$0xff] %v233
  %268 = vst [vmem:[%s4 + $0x60] sm:$0xff] %v238
  %269 = vst [vmem:[%s4 + $0x68] sm:$0xff] %v243
  %270 = vst [vmem:[%s4 + $0x70] sm:$0xff] %v248
  %271 = vst [vmem:[%s4 + $0x78] sm:$0xff] %v253
  // Predicated region
  $region18: #{network_block_forward.12} parent=0 // pred_check
    _
  $region19: #{network_block_forward.12} parent=0 // pred_check_branch
    %273 = sbr.rel (0) target = $region21
  $region20: #{network_block_forward.12} parent=0 // pred_region
    _
  $region21: #{network_block_forward.12} parent=0 // pred_fallthru
    _
  // Predicated region
  $region22: #{network_block_forward.12} parent=0 // pred_check
    _
  $region23: #{network_block_forward.12} parent=0 // pred_check_branch
    %275 = sbr.rel (0) target = $region25
  $region24: #{network_block_forward.12} parent=0 // pred_region
    _
  $region25: #{network_block_forward.12} parent=0 // pred_fallthru
    _

// kernel: network_block_forward.11
$region0: #{network_block_forward.11}
  #allocation0 [shape = 'u32[]', space=smem, size = 0x4, offset = 0x4, fixed_abs, tag = 'smem constant byte address 0x4 - core index']
  #allocation1 [shape = 'u32[144,128]{1,0:T(1,128)}', space=vmem, size = 0x12000, scoped, tag = 'internal scratch']
  %s0 = inlined_call_operand.vmem [shape: f32[128,128], index: 0, kind: input, shape index: {}]
  %s1 = inlined_call_operand.vmem [shape: f32[1,128], index: 1, kind: output, shape index: {0}]
  %s2 = inlined_call_operand.vmem [shape: f32[1,128], index: 2, kind: output, shape index: {1}]
  %3 = xla_tuple %s1, %s2
  %s4 = sld [smem:[#allocation0]]
  $region26: #{network_block_forward.11} parent=0
    _
  %s6 = ssub.s32 1, %s4
  %s7 = scalar_select 0, %s6, %s4
  // Predicated region
  $region2: #{network_block_forward.11} parent=0 // pred_check
    _
  $region3: #{network_block_forward.11} parent=0 // pred_check_branch
    %9 = sbr.rel (0) target = $region5
  $region4: #{network_block_forward.11} parent=0 // pred_region
    _
  $region5: #{network_block_forward.11} parent=0 // pred_fallthru
    _
  %p10 = scmp.eq.s32.totalorder 0, 0
  // Predicated region
  $region6: #{network_block_forward.11} parent=0 // pred_check
    %p11 = pneg %p10
  $region7: #{network_block_forward.11} parent=0 // pred_check_branch
    %13 = sbr.rel (%p11) target = $region9
  $region8: #{network_block_forward.11} parent=0 // pred_region
    %14 = vst [vmem:[%s1] sm:$0x1] 0.0
    %15 = vst [vmem:[%s2] sm:$0x1] 0.0
  $region9: #{network_block_forward.11} parent=0 // pred_fallthru
    _
  %v16 = vld [vmem:[%s0] sm:$0xff]
  %v17 = vld [vmem:[%s0 + $0x8] sm:$0xff]
  %v18 = vld [vmem:[%s0 + $0x10] sm:$0xff]
  %v19 = vld [vmem:[%s0 + $0x18] sm:$0xff]
  %v20 = vld [vmem:[%s0 + $0x20] sm:$0xff]
  %v21 = vld [vmem:[%s0 + $0x28] sm:$0xff]
  %v22 = vld [vmem:[%s0 + $0x30] sm:$0xff]
  %v23 = vld [vmem:[%s0 + $0x38] sm:$0xff]
  %v24 = vld [vmem:[%s0 + $0x40] sm:$0xff]
  %v25 = vld [vmem:[%s0 + $0x48] sm:$0xff]
  %v26 = vld [vmem:[%s0 + $0x50] sm:$0xff]
  %v27 = vld [vmem:[%s0 + $0x58] sm:$0xff]
  %v28 = vld [vmem:[%s0 + $0x60] sm:$0xff]
  %v29 = vld [vmem:[%s0 + $0x68] sm:$0xff]
  %v30 = vld [vmem:[%s0 + $0x70] sm:$0xff]
  %v31 = vld [vmem:[%s0 + $0x78] sm:$0xff]
  %v32 = vld [vmem:[%s1] sm:$0x1]
  %v33 = vadd.f32 %v16, %v17
  %v34 = vadd.f32 %v33, %v18
  %v35 = vadd.f32 %v34, %v19
  %v36 = vadd.f32 %v35, %v20
  %v37 = vadd.f32 %v36, %v21
  %v38 = vadd.f32 %v37, %v22
  %v39 = vadd.f32 %v38, %v23
  %v40 = vadd.f32 %v39, %v24
  %v41 = vadd.f32 %v40, %v25
  %v42 = vadd.f32 %v41, %v26
  %v43 = vadd.f32 %v42, %v27
  %v44 = vadd.f32 %v43, %v28
  %v45 = vadd.f32 %v44, %v29
  %v46 = vadd.f32 %v45, %v30
  %v47 = vadd.f32 %v46, %v31
  %v48 = vrot.slane %v47, 4
  %v49 = vadd.f32 %v47, %v48
  %v50 = vrot.slane %v49, 2
  %v51 = vadd.f32 %v49, %v50
  %v52 = vrot.slane %v51, 1
  %v53 = vadd.f32 %v51, %v52
  %v54 = vadd.f32 %v32, %v53
  %55 = vst [vmem:[%s1] sm:$0x1] %v54
  %v56 = vld [vmem:[%s2] sm:$0x1]
  %v57 = vmul.f32 %v16, %v16
  %v58 = vmul.f32 %v17, %v17
  %v59 = vmul.f32 %v18, %v18
  %v60 = vmul.f32 %v19, %v19
  %v61 = vmul.f32 %v20, %v20
  %v62 = vmul.f32 %v21, %v21
  %v63 = vmul.f32 %v22, %v22
  %v64 = vmul.f32 %v23, %v23
  %v65 = vmul.f32 %v24, %v24
  %v66 = vmul.f32 %v25, %v25
  %v67 = vmul.f32 %v26, %v26
  %v68 = vmul.f32 %v27, %v27
  %v69 = vmul.f32 %v28, %v28
  %v70 = vmul.f32 %v29, %v29
  %v71 = vmul.f32 %v30, %v30
  %v72 = vmul.f32 %v31, %v31
  %v73 = vadd.f32 %v57, %v58
  %v74 = vadd.f32 %v73, %v59
  %v75 = vadd.f32 %v74, %v60
  %v76 = vadd.f32 %v75, %v61
  %v77 = vadd.f32 %v76, %v62
  %v78 = vadd.f32 %v77, %v63
  %v79 = vadd.f32 %v78, %v64
  %v80 = vadd.f32 %v79, %v65
  %v81 = vadd.f32 %v80, %v66
  %v82 = vadd.f32 %v81, %v67
  %v83 = vadd.f32 %v82, %v68
  %v84 = vadd.f32 %v83, %v69
  %v85 = vadd.f32 %v84, %v70
  %v86 = vadd.f32 %v85, %v71
  %v87 = vadd.f32 %v86, %v72
  %v88 = vrot.slane %v87, 4
  %v89 = vadd.f32 %v87, %v88
  %v90 = vrot.slane %v89, 2
  %v91 = vadd.f32 %v89, %v90
  %v92 = vrot.slane %v91, 1
  %v93 = vadd.f32 %v91, %v92
  %v94 = vadd.f32 %v56, %v93
  %95 = vst [vmem:[%s2] sm:$0x1] %v94
  // Predicated region
  $region10: #{network_block_forward.11} parent=0 // pred_check
    _
  $region11: #{network_block_forward.11} parent=0 // pred_check_branch
    %97 = sbr.rel (0) target = $region13
  $region12: #{network_block_forward.11} parent=0 // pred_region
    _
  $region13: #{network_block_forward.11} parent=0 // pred_fallthru
    _
  // Predicated region
  $region14: #{network_block_forward.11} parent=0 // pred_check
    _
  $region15: #{network_block_forward.11} parent=0 // pred_check_branch
    %99 = sbr.rel (0) target = $region17
  $region16: #{network_block_forward.11} parent=0 // pred_region
    _
  $region17: #{network_block_forward.11} parent=0 // pred_fallthru
    _
  // Predicated region
  $region18: #{network_block_forward.11} parent=0 // pred_check
    _
  $region19: #{network_block_forward.11} parent=0 // pred_check_branch
    %101 = sbr.rel (0) target = $region21
  $region20: #{network_block_forward.11} parent=0 // pred_region
    _
  $region21: #{network_block_forward.11} parent=0 // pred_fallthru
    _
  // Predicated region
  $region22: #{network_block_forward.11} parent=0 // pred_check
    _
  $region23: #{network_block_forward.11} parent=0 // pred_check_branch
    %103 = sbr.rel (0) target = $region25
  $region24: #{network_block_forward.11} parent=0 // pred_region
    _
  $region25: #{network_block_forward.11} parent=0 // pred_fallthru
    _

// kernel: network_block_forward.13
$region0: #{network_block_forward.13}
  #allocation0 [shape = 'u32[]', space=smem, size = 0x4, offset = 0x4, fixed_abs, tag = 'smem constant byte address 0x4 - core index']
  #allocation1 [shape = 'u32[144,128]{1,0:T(1,128)}', space=vmem, size = 0x12000, scoped, tag = 'internal scratch']
  %s0 = inlined_call_operand.vmem [shape: f32[1,128], index: 0, kind: input, shape index: {}]
  %s1 = inlined_call_operand.vmem [shape: f32[1,128], index: 1, kind: input, shape index: {}]
  %s2 = inlined_call_operand.vmem [shape: f32[2,10,10,128], index: 2, kind: input, shape index: {}, may-alias: {2,3,4}]
  %s3 = inlined_call_operand.vmem [shape: f32[2,10,10,128], index: 3, kind: input, shape index: {}, may-alias: {2,3,4}]
  %s4 = inlined_call_operand.vmem [shape: f32[2,10,10,128], index: 4, kind: input, shape index: {}, may-alias: {2,3,4}]
  %s5 = inlined_call_operand.vmem [shape: f32[9,128,128], index: 5, kind: input, shape index: {}]
  %s6 = inlined_call_operand.vmem [shape: f32[2,8,8,128], index: 6, kind: input, shape index: {}]
  %s7 = inlined_call_operand.vmem [shape: f32[2,8,8,128], index: 7, kind: output, shape index: {}]
  %s8 = sld [smem:[#allocation0]]
  $region247: #{network_block_forward.13} parent=0
    _
  %s10 = ssub.s32 1, %s8
  %s11 = scalar_select 0, %s10, %s8
  $region1: #{network_block_forward.13} parent=0
    #allocation2 [shape = 'u8[32768]{0}', space=vmem, size = 0x8000, scoped, tag = 'input window, operand 2']
    #allocation3 [shape = 'u8[32768]{0}', space=vmem, size = 0x8000, scoped, tag = 'input window, operand 3']
    #allocation4 [shape = 'u8[32768]{0}', space=vmem, size = 0x8000, scoped, tag = 'input window, operand 4']
    #allocation5 [shape = 'u8[16384]{0}', space=vmem, size = 0x4000, scoped, tag = 'input window, operand 6']
    #allocation6 [shape = 'u8[16384]{0}', space=vmem, size = 0x4000, scoped, tag = 'output window, operand 0']
    loop: start=0, step=1, limit=10
    $region2: #{network_block_forward.13} parent=1 // loop_pre_header
      _
    $region3: #{network_block_forward.13} parent=1 // loop_header
      %s13 = sphi 0, %s17
      %p14 = scmp.ge.s32.totalorder %s13, 10
      %s20 = sphi 0, %s39
      %s21 = sphi 0, %s35
      %s22 = sphi 0, %s31
      %s23 = sphi 0, %s20
      %s24 = sphi 0, %s21
      %s25 = sphi 0, %s22
      %s26 = sphi 0, %s23
      %s27 = sphi 0, %s24
      %s28 = sphi 0, %s25
      %s40 = sphi 0, %s40
      %s42 = sphi 0, %s40
      %s43 = sphi 0, %s42
      %s57 = sphi 0, %s43
      %s61 = sphi 0, %s61
      %s63 = sphi 0, %s61
      %s64 = sphi 0, %s63
      %s78 = sphi 0, %s64
      %s86 = sphi 0, %s88
      %s89 = sphi 0, %s86
      %s90 = sphi 0, %s89
      %s106 = sphi 0, %s90
      %s116 = sphi 0, %s118
      %s119 = sphi 0, %s116
      %s120 = sphi 0, %s119
      %s136 = sphi 0, %s120
      %s146 = sphi 0, %s148
      %s149 = sphi 0, %s146
      %s150 = sphi 0, %s149
      %s166 = sphi 0, %s150
      %s172 = sphi 0, %s174
      %s175 = sphi 0, %s172
      %s176 = sphi 0, %s175
      %s192 = sphi 0, %s176
      %s202 = sphi 0, %s204
      %s205 = sphi 0, %s202
      %s206 = sphi 0, %s205
      %s222 = sphi 0, %s206
      %s232 = sphi 0, %s234
      %s235 = sphi 0, %s232
      %s236 = sphi 0, %s235
      %s252 = sphi 0, %s236
    $region4: #{network_block_forward.13} parent=1 // loop_header_branch
      %16 = sbr.rel (%p14) target = $region8
    $region5: #{network_block_forward.13} parent=1 // loop_body
      %s18 = ssub.s32 %s13, 1
      %s19 = ssub.s32 %s13, 2
      %s29 = sadd.s32 1, %s22
      %p30 = scmp.ge.s32.totalorder %s29, 1
      %s31 = scalar_select %p30, 0, %s29
      %s32 = sadd.s32 1, %s21
      %s33 = scalar_select %p30, %s32, %s21
      %p34 = scmp.ge.s32.totalorder %s33, 8
      %s35 = scalar_select %p34, 0, %s33
      %s36 = sadd.s32 1, %s20
      %s37 = scalar_select %p34, %s36, %s20
      %p38 = scmp.ge.s32.totalorder %s37, 1
      %s39 = scalar_select %p38, 0, %s37
      %s41 = sadd.s32 %s40, 1
      %p44 = scmp.eq.s32.totalorder %s13, 7
      %p45 = scmp.ne.s32.totalorder %s40, %s42
      %p46 = scmp.eq.s32.totalorder %s13, 0
      %p47 = por %p45, %p46
      %p48 = scmp.ne.s32.totalorder %s40, %s42
      %p49 = scmp.eq.s32.totalorder %s18, 7
      %p50 = por %p48, %p49
      %p51 = scmp.ne.s32.totalorder %s42, %s43
      %p52 = scmp.eq.s32.totalorder %s18, 0
      %p53 = por %p51, %p52
      %p54 = scmp.ne.s32.totalorder %s42, %s43
      %p55 = scmp.eq.s32.totalorder %s19, 7
      %p56 = por %p54, %p55
      %p58 = scmp.ne.s32.totalorder %s43, %s57
      %p59 = scmp.eq.s32.totalorder %s19, 0
      %p60 = por %p58, %p59
      %s62 = sadd.s32 %s61, 1
      %p65 = scmp.eq.s32.totalorder %s13, 7
      %p66 = scmp.ne.s32.totalorder %s61, %s63
      %p67 = scmp.eq.s32.totalorder %s13, 0
      %p68 = por %p66, %p67
      %p69 = scmp.ne.s32.totalorder %s61, %s63
      %p70 = scmp.eq.s32.totalorder %s18, 7
      %p71 = por %p69, %p70
      %p72 = scmp.ne.s32.totalorder %s63, %s64
      %p73 = scmp.eq.s32.totalorder %s18, 0
      %p74 = por %p72, %p73
      %p75 = scmp.ne.s32.totalorder %s63, %s64
      %p76 = scmp.eq.s32.totalorder %s19, 7
      %p77 = por %p75, %p76
      %p79 = scmp.ne.s32.totalorder %s64, %s78
      %p80 = scmp.eq.s32.totalorder %s19, 0
      %p81 = por %p79, %p80
      %s82 = ssub.s32 %s20, %s39
      %s83 = ssub.s32 %s21, %s35
      %s84 = sor.u32 %s82, %s83
      %p85 = scmp.eq.s32.totalorder %s84, 0
      %s87 = sadd.s32 %s86, 1
      %s88 = scalar_select %p85, %s86, %s87
      %p91 = pneg %p85
      %p92 = scmp.eq.s32.totalorder %s13, 7
      %p93 = por %p91, %p92
      %p94 = scmp.ne.s32.totalorder %s86, %s89
      %p95 = scmp.eq.s32.totalorder %s13, 0
      %p96 = por %p94, %p95
      %p97 = scmp.ne.s32.totalorder %s86, %s89
      %p98 = scmp.eq.s32.totalorder %s18, 7
      %p99 = por %p97, %p98
      %p100 = scmp.ne.s32.totalorder %s89, %s90
      %p101 = scmp.eq.s32.totalorder %s18, 0
      %p102 = por %p100, %p101
      %p103 = scmp.ne.s32.totalorder %s89, %s90
      %p104 = scmp.eq.s32.totalorder %s19, 7
      %p105 = por %p103, %p104
      %p107 = scmp.ne.s32.totalorder %s90, %s106
      %p108 = scmp.eq.s32.totalorder %s19, 0
      %p109 = por %p107, %p108
      %s110 = sadd.s32 %s21, 1
      %s111 = sadd.s32 %s35, 1
      %s112 = ssub.s32 %s20, %s39
      %s113 = ssub.s32 %s110, %s111
      %s114 = sor.u32 %s112, %s113
      %p115 = scmp.eq.s32.totalorder %s114, 0
      %s117 = sadd.s32 %s116, 1
      %s118 = scalar_select %p115, %s116, %s117
      %p121 = pneg %p115
      %p122 = scmp.eq.s32.totalorder %s13, 7
      %p123 = por %p121, %p122
      %p124 = scmp.ne.s32.totalorder %s116, %s119
      %p125 = scmp.eq.s32.totalorder %s13, 0
      %p126 = por %p124, %p125
      %p127 = scmp.ne.s32.totalorder %s116, %s119
      %p128 = scmp.eq.s32.totalorder %s18, 7
      %p129 = por %p127, %p128
      %p130 = scmp.ne.s32.totalorder %s119, %s120
      %p131 = scmp.eq.s32.totalorder %s18, 0
      %p132 = por %p130, %p131
      %p133 = scmp.ne.s32.totalorder %s119, %s120
      %p134 = scmp.eq.s32.totalorder %s19, 7
      %p135 = por %p133, %p134
      %p137 = scmp.ne.s32.totalorder %s120, %s136
      %p138 = scmp.eq.s32.totalorder %s19, 0
      %p139 = por %p137, %p138
      %s140 = sadd.s32 %s21, 2
      %s141 = sadd.s32 %s35, 2
      %s142 = ssub.s32 %s20, %s39
      %s143 = ssub.s32 %s140, %s141
      %s144 = sor.u32 %s142, %s143
      %p145 = scmp.eq.s32.totalorder %s144, 0
      %s147 = sadd.s32 %s146, 1
      %s148 = scalar_select %p145, %s146, %s147
      %p151 = pneg %p145
      %p152 = scmp.eq.s32.totalorder %s13, 7
      %p153 = por %p151, %p152
      %p154 = scmp.ne.s32.totalorder %s146, %s149
      %p155 = scmp.eq.s32.totalorder %s13, 0
      %p156 = por %p154, %p155
      %p157 = scmp.ne.s32.totalorder %s146, %s149
      %p158 = scmp.eq.s32.totalorder %s18, 7
      %p159 = por %p157, %p158
      %p160 = scmp.ne.s32.totalorder %s149, %s150
      %p161 = scmp.eq.s32.totalorder %s18, 0
      %p162 = por %p160, %p161
      %p163 = scmp.ne.s32.totalorder %s149, %s150
      %p164 = scmp.eq.s32.totalorder %s19, 7
      %p165 = por %p163, %p164
      %p167 = scmp.ne.s32.totalorder %s150, %s166
      %p168 = scmp.eq.s32.totalorder %s19, 0
      %p169 = por %p167, %p168
      %s170 = ssub.s32 %s22, %s31
      %p171 = scmp.eq.s32.totalorder %s170, 0
      %s173 = sadd.s32 %s172, 1
      %s174 = scalar_select %p171, %s172, %s173
      %p177 = pneg %p171
      %p178 = scmp.eq.s32.totalorder %s13, 7
      %p179 = por %p177, %p178
      %p180 = scmp.ne.s32.totalorder %s172, %s175
      %p181 = scmp.eq.s32.totalorder %s13, 0
      %p182 = por %p180, %p181
      %p183 = scmp.ne.s32.totalorder %s172, %s175
      %p184 = scmp.eq.s32.totalorder %s18, 7
      %p185 = por %p183, %p184
      %p186 = scmp.ne.s32.totalorder %s175, %s176
      %p187 = scmp.eq.s32.totalorder %s18, 0
      %p188 = por %p186, %p187
      %p189 = scmp.ne.s32.totalorder %s175, %s176
      %p190 = scmp.eq.s32.totalorder %s19, 7
      %p191 = por %p189, %p190
      %p193 = scmp.ne.s32.totalorder %s176, %s192
      %p194 = scmp.eq.s32.totalorder %s19, 0
      %p195 = por %p193, %p194
      %s196 = ssub.s32 %s20, %s39
      %s197 = ssub.s32 %s21, %s35
      %s198 = sor.u32 %s196, %s197
      %s199 = ssub.s32 %s22, %s31
      %s200 = sor.u32 %s198, %s199
      %p201 = scmp.eq.s32.totalorder %s200, 0
      %s203 = sadd.s32 %s202, 1
      %s204 = scalar_select %p201, %s202, %s203
      %p207 = pneg %p201
      %p208 = scmp.eq.s32.totalorder %s13, 7
      %p209 = por %p207, %p208
      %p210 = scmp.ne.s32.totalorder %s202, %s205
      %p211 = scmp.eq.s32.totalorder %s13, 0
      %p212 = por %p210, %p211
      %p213 = scmp.ne.s32.totalorder %s202, %s205
      %p214 = scmp.eq.s32.totalorder %s18, 7
      %p215 = por %p213, %p214
      %p216 = scmp.ne.s32.totalorder %s205, %s206
      %p217 = scmp.eq.s32.totalorder %s18, 0
      %p218 = por %p216, %p217
      %p219 = scmp.ne.s32.totalorder %s205, %s206
      %p220 = scmp.eq.s32.totalorder %s19, 7
      %p221 = por %p219, %p220
      %p223 = scmp.ne.s32.totalorder %s206, %s222
      %p224 = scmp.eq.s32.totalorder %s19, 0
      %p225 = por %p223, %p224
      %s226 = ssub.s32 %s20, %s39
      %s227 = ssub.s32 %s21, %s35
      %s228 = sor.u32 %s226, %s227
      %s229 = ssub.s32 %s22, %s31
      %s230 = sor.u32 %s228, %s229
      %p231 = scmp.eq.s32.totalorder %s230, 0
      %s233 = sadd.s32 %s232, 1
      %s234 = scalar_select %p231, %s232, %s233
      %p237 = pneg %p231
      %p238 = scmp.eq.s32.totalorder %s13, 7
      %p239 = por %p237, %p238
      %p240 = scmp.ne.s32.totalorder %s232, %s235
      %p241 = scmp.eq.s32.totalorder %s13, 0
      %p242 = por %p240, %p241
      %p243 = scmp.ne.s32.totalorder %s232, %s235
      %p244 = scmp.eq.s32.totalorder %s18, 7
      %p245 = por %p243, %p244
      %p246 = scmp.ne.s32.totalorder %s235, %s236
      %p247 = scmp.eq.s32.totalorder %s18, 0
      %p248 = por %p246, %p247
      %p249 = scmp.ne.s32.totalorder %s235, %s236
      %p250 = scmp.eq.s32.totalorder %s19, 7
      %p251 = por %p249, %p250
      %p253 = scmp.ne.s32.totalorder %s236, %s252
      %p254 = scmp.eq.s32.totalorder %s19, 0
      %p255 = por %p253, %p254
      %p256 = scmp.le.s32.totalorder 1, %s13
      %p257 = scmp.lt.s32.totalorder %s13, 9
      %p258 = pnand %p256, %p257
      %p259 = pneg %p258
      // Predicated region
      $region9: #{network_block_forward.13} parent=5 // pred_check
        _
      $region10: #{network_block_forward.13} parent=5 // pred_check_branch
        %261 = sbr.rel (%p258) target = $region12
      $region11: #{network_block_forward.13} parent=5 // pred_region
        %s262 = ssub.s32 %s13, 1
        // Predicated region
        $region13: #{network_block_forward.13} parent=11 // pred_check
          %p263 = pneg %p53
        $region14: #{network_block_forward.13} parent=11 // pred_check_branch
          %265 = sbr.rel (%p263) target = $region16
        $region15: #{network_block_forward.13} parent=11 // pred_region
          _
        $region16: #{network_block_forward.13} parent=11 // pred_fallthru
          _
        // Predicated region
        $region17: #{network_block_forward.13} parent=11 // pred_check
          %p266 = pneg %p74
        $region18: #{network_block_forward.13} parent=11 // pred_check_branch
          %268 = sbr.rel (%p266) target = $region20
        $region19: #{network_block_forward.13} parent=11 // pred_region
          _
        $region20: #{network_block_forward.13} parent=11 // pred_fallthru
          _
        // Predicated region
        $region21: #{network_block_forward.13} parent=11 // pred_check
          %p269 = pneg %p188
        $region22: #{network_block_forward.13} parent=11 // pred_check_branch
          %271 = sbr.rel (%p269) target = $region24
        $region23: #{network_block_forward.13} parent=11 // pred_region
          %p272 = scmp.lt.s32.totalorder %s25, 0
          %s273 = scalar_select %p272, %s25, 0
          %s274 = smul.addr %s273, 8
          %s275 = scalar_lea.vmem %s5, %s274
        $region24: #{network_block_forward.13} parent=11 // pred_fallthru
          _
      $region12: #{network_block_forward.13} parent=5 // pred_fallthru
        _
      %p276 = scmp.lt.s32.totalorder %s13, 8
      // Predicated region
      $region25: #{network_block_forward.13} parent=5 // pred_check
        %p277 = pneg %p276
      $region26: #{network_block_forward.13} parent=5 // pred_check_branch
        %279 = sbr.rel (%p277) target = $region28
      $region27: #{network_block_forward.13} parent=5 // pred_region
        // Predicated region
        $region29: #{network_block_forward.13} parent=27 // pred_check
          %p280 = pneg %p96
        $region30: #{network_block_forward.13} parent=27 // pred_check_branch
          %282 = sbr.rel (%p280) target = $region32
        $region31: #{network_block_forward.13} parent=27 // pred_region
          %s283 = sand.u32 %s86, 1
          %s284 = sand.u32 %s86, 1
          %s285 = smul.addr %s284, 32
          %s286 = scalar_lea.vmem [#allocation2], %s285
          %s287 = smul.u32 2, %s20
          %s288 = smul.addr %s21, 2
          %s289 = smul.addr %s287, 20
          %s290 = sadd.s32 %s288, %s289
          %s291 = smul.addr %s290, 8
          %s292 = scalar_lea.vmem %s2, %s291
          // Predicated region
          $region33: #{network_block_forward.13} parent=31 // pred_check
            _
          $region34: #{network_block_forward.13} parent=31 // pred_check_branch
            %294 = sbr.rel (0) target = $region36
          $region35: #{network_block_forward.13} parent=31 // pred_region
            // Predicated region
            $region37: #{network_block_forward.13} parent=35 // pred_check
              _
            $region38: #{network_block_forward.13} parent=35 // pred_check_branch
              %296 = sbr.rel (0) target = $region40
            $region39: #{network_block_forward.13} parent=35 // pred_region
              // Predicated region
              $region52: #{network_block_forward.13} parent=39 // pred_check
                _
              $region53: #{network_block_forward.13} parent=39 // pred_check_branch
                %317 = sbr.rel (0) target = $region55
              $region54: #{network_block_forward.13} parent=39 // pred_region
                loop: start=0, step=1, limit=1
                $region56: #{network_block_forward.13} parent=54 // loop_pre_header
                  _
                $region57: #{network_block_forward.13} parent=54 // loop_header
                  %s319 = sphi 0, %s323
                  %p320 = scmp.ge.s32.totalorder %s319, 1
                  %s324 = sphi %s292, %s292
                  %s325 = sphi %s286, %s286
                $region58: #{network_block_forward.13} parent=54 // loop_header_branch
                  %322 = sbr.rel (%p320) target = $region62
                $region59: #{network_block_forward.13} parent=54 // loop_body
                  %v326 = vld [vmem:[%s324] sm:$0xff]
                  %327 = vst [vmem:[%s325] sm:$0xff] %v326
                  %v328 = vld [vmem:[%s324 + $0x8] sm:$0xff]
                  %329 = vst [vmem:[%s325 + $0x8] sm:$0xff] %v328
                  %v330 = vld [vmem:[%s324 + $0xa0] sm:$0xff]
                  %331 = vst [vmem:[%s325 + $0x10] sm:$0xff] %v330
                  %v332 = vld [vmem:[%s324 + $0xa8] sm:$0xff]
                  %333 = vst [vmem:[%s325 + $0x18] sm:$0xff] %v332
                $region60: #{network_block_forward.13} parent=54 // loop_footer
                  %s323 = sadd.s32 1, %s319
                $region61: #{network_block_forward.13} parent=54 // loop_footer_branch
                  %318 = sbr.rel target = $region57
                $region62: #{network_block_forward.13} parent=54 // loop_exit
                  _
              $region55: #{network_block_forward.13} parent=39 // pred_fallthru
                _
              // Predicated region
              $region63: #{network_block_forward.13} parent=39 // pred_check
                _
              $region64: #{network_block_forward.13} parent=39 // pred_check_branch
                %335 = sbr.rel target = $region66
              $region65: #{network_block_forward.13} parent=39 // pred_region
                _
              $region66: #{network_block_forward.13} parent=39 // pred_fallthru
                _
            $region40: #{network_block_forward.13} parent=35 // pred_fallthru
              _
            // Predicated region
            $region41: #{network_block_forward.13} parent=35 // pred_check
              _
            $region42: #{network_block_forward.13} parent=35 // pred_check_branch
              %298 = sbr.rel target = $region44
            $region43: #{network_block_forward.13} parent=35 // pred_region
              loop: start=0, step=1, limit=1
              $region45: #{network_block_forward.13} parent=43 // loop_pre_header
                _
              $region46: #{network_block_forward.13} parent=43 // loop_header
                %s301 = sphi 0, %s305
                %p302 = scmp.ge.s32.totalorder %s301, 1
                %s306 = sphi %s292, %s292
                %s307 = sphi %s286, %s286
              $region47: #{network_block_forward.13} parent=43 // loop_header_branch
                %304 = sbr.rel (%p302) target = $region51
              $region48: #{network_block_forward.13} parent=43 // loop_body
                %v308 = vld [vmem:[%s306] sm:$0xff]
                %309 = vst [vmem:[%s307] sm:$0xff] %v308
                %v310 = vld [vmem:[%s306 + $0x8] sm:$0xff]
                %311 = vst [vmem:[%s307 + $0x8] sm:$0xff] %v310
                %v312 = vld [vmem:[%s306 + $0xa0] sm:$0xff]
                %313 = vst [vmem:[%s307 + $0x10] sm:$0xff] %v312
                %v314 = vld [vmem:[%s306 + $0xa8] sm:$0xff]
                %315 = vst [vmem:[%s307 + $0x18] sm:$0xff] %v314
              $region49: #{network_block_forward.13} parent=43 // loop_footer
                %s305 = sadd.s32 1, %s301
              $region50: #{network_block_forward.13} parent=43 // loop_footer_branch
                %300 = sbr.rel target = $region46
              $region51: #{network_block_forward.13} parent=43 // loop_exit
                _
            $region44: #{network_block_forward.13} parent=35 // pred_fallthru
              _
          $region36: #{network_block_forward.13} parent=31 // pred_fallthru
            _
          %336 = vnop
        $region32: #{network_block_forward.13} parent=27 // pred_fallthru
          _
        // Predicated region
        $region67: #{network_block_forward.13} parent=27 // pred_check
          %p337 = pneg %p126
        $region68: #{network_block_forward.13} parent=27 // pred_check_branch
          %339 = sbr.rel (%p337) target = $region70
        $region69: #{network_block_forward.13} parent=27 // pred_region
          %s340 = sand.u32 %s116, 1
          %s341 = sand.u32 %s116, 1
          %s342 = smul.addr %s341, 32
          %s343 = scalar_lea.vmem [#allocation3], %s342
          %s344 = sadd.s32 %s21, 1
          %s345 = smul.u32 2, %s20
          %s346 = smul.addr %s344, 2
          %s347 = smul.addr %s345, 20
          %s348 = sadd.s32 %s346, %s347
          %s349 = smul.addr %s348, 8
          %s350 = scalar_lea.vmem %s3, %s349
          // Predicated region
          $region71: #{network_block_forward.13} parent=69 // pred_check
            _
          $region72: #{network_block_forward.13} parent=69 // pred_check_branch
            %352 = sbr.rel (0) target = $region74
          $region73: #{network_block_forward.13} parent=69 // pred_region
            // Predicated region
            $region75: #{network_block_forward.13} parent=73 // pred_check
              _
            $region76: #{network_block_forward.13} parent=73 // pred_check_branch
              %354 = sbr.rel (0) target = $region78
            $region77: #{network_block_forward.13} parent=73 // pred_region
              // Predicated region
              $region90: #{network_block_forward.13} parent=77 // pred_check
                _
              $region91: #{network_block_forward.13} parent=77 // pred_check_branch
                %375 = sbr.rel (0) target = $region93
              $region92: #{network_block_forward.13} parent=77 // pred_region
                loop: start=0, step=1, limit=1
                $region94: #{network_block_forward.13} parent=92 // loop_pre_header
                  _
                $region95: #{network_block_forward.13} parent=92 // loop_header
                  %s377 = sphi 0, %s381
                  %p378 = scmp.ge.s32.totalorder %s377, 1
                  %s382 = sphi %s350, %s350
                  %s383 = sphi %s343, %s343
                $region96: #{network_block_forward.13} parent=92 // loop_header_branch
                  %380 = sbr.rel (%p378) target = $region100
                $region97: #{network_block_forward.13} parent=92 // loop_body
                  %v384 = vld [vmem:[%s382] sm:$0xff]
                  %385 = vst [vmem:[%s383] sm:$0xff] %v384
                  %v386 = vld [vmem:[%s382 + $0x8] sm:$0xff]
                  %387 = vst [vmem:[%s383 + $0x8] sm:$0xff] %v386
                  %v388 = vld [vmem:[%s382 + $0xa0] sm:$0xff]
                  %389 = vst [vmem:[%s383 + $0x10] sm:$0xff] %v388
                  %v390 = vld [vmem:[%s382 + $0xa8] sm:$0xff]
                  %391 = vst [vmem:[%s383 + $0x18] sm:$0xff] %v390
                $region98: #{network_block_forward.13} parent=92 // loop_footer
                  %s381 = sadd.s32 1, %s377
                $region99: #{network_block_forward.13} parent=92 // loop_footer_branch
                  %376 = sbr.rel target = $region95
                $region100: #{network_block_forward.13} parent=92 // loop_exit
                  _
              $region93: #{network_block_forward.13} parent=77 // pred_fallthru
                _
              // Predicated region
              $region101: #{network_block_forward.13} parent=77 // pred_check
                _
              $region102: #{network_block_forward.13} parent=77 // pred_check_branch
                %393 = sbr.rel target = $region104
              $region103: #{network_block_forward.13} parent=77 // pred_region
                _
              $region104: #{network_block_forward.13} parent=77 // pred_fallthru
                _
            $region78: #{network_block_forward.13} parent=73 // pred_fallthru
              _
            // Predicated region
            $region79: #{network_block_forward.13} parent=73 // pred_check
              _
            $region80: #{network_block_forward.13} parent=73 // pred_check_branch
              %356 = sbr.rel target = $region82
            $region81: #{network_block_forward.13} parent=73 // pred_region
              loop: start=0, step=1, limit=1
              $region83: #{network_block_forward.13} parent=81 // loop_pre_header
                _
              $region84: #{network_block_forward.13} parent=81 // loop_header
                %s359 = sphi 0, %s363
                %p360 = scmp.ge.s32.totalorder %s359, 1
                %s364 = sphi %s350, %s350
                %s365 = sphi %s343, %s343
              $region85: #{network_block_forward.13} parent=81 // loop_header_branch
                %362 = sbr.rel (%p360) target = $region89
              $region86: #{network_block_forward.13} parent=81 // loop_body
                %v366 = vld [vmem:[%s364] sm:$0xff]
                %367 = vst [vmem:[%s365] sm:$0xff] %v366
                %v368 = vld [vmem:[%s364 + $0x8] sm:$0xff]
                %369 = vst [vmem:[%s365 + $0x8] sm:$0xff] %v368
                %v370 = vld [vmem:[%s364 + $0xa0] sm:$0xff]
                %371 = vst [vmem:[%s365 + $0x10] sm:$0xff] %v370
                %v372 = vld [vmem:[%s364 + $0xa8] sm:$0xff]
                %373 = vst [vmem:[%s365 + $0x18] sm:$0xff] %v372
              $region87: #{network_block_forward.13} parent=81 // loop_footer
                %s363 = sadd.s32 1, %s359
              $region88: #{network_block_forward.13} parent=81 // loop_footer_branch
                %358 = sbr.rel target = $region84
              $region89: #{network_block_forward.13} parent=81 // loop_exit
                _
            $region82: #{network_block_forward.13} parent=73 // pred_fallthru
              _
          $region74: #{network_block_forward.13} parent=69 // pred_fallthru
            _
          %394 = vnop
        $region70: #{network_block_forward.13} parent=27 // pred_fallthru
          _
        // Predicated region
        $region105: #{network_block_forward.13} parent=27 // pred_check
          %p395 = pneg %p156
        $region106: #{network_block_forward.13} parent=27 // pred_check_branch
          %397 = sbr.rel (%p395) target = $region108
        $region107: #{network_block_forward.13} parent=27 // pred_region
          %s398 = sand.u32 %s146, 1
          %s399 = sand.u32 %s146, 1
          %s400 = smul.addr %s399, 32
          %s401 = scalar_lea.vmem [#allocation4], %s400
          %s402 = sadd.s32 %s21, 2
          %s403 = smul.u32 2, %s20
          %s404 = smul.addr %s402, 2
          %s405 = smul.addr %s403, 20
          %s406 = sadd.s32 %s404, %s405
          %s407 = smul.addr %s406, 8
          %s408 = scalar_lea.vmem %s4, %s407
          // Predicated region
          $region109: #{network_block_forward.13} parent=107 // pred_check
            _
          $region110: #{network_block_forward.13} parent=107 // pred_check_branch
            %410 = sbr.rel (0) target = $region112
          $region111: #{network_block_forward.13} parent=107 // pred_region
            // Predicated region
            $region113: #{network_block_forward.13} parent=111 // pred_check
              _
            $region114: #{network_block_forward.13} parent=111 // pred_check_branch
              %412 = sbr.rel (0) target = $region116
            $region115: #{network_block_forward.13} parent=111 // pred_region
              // Predicated region
              $region128: #{network_block_forward.13} parent=115 // pred_check
                _
              $region129: #{network_block_forward.13} parent=115 // pred_check_branch
                %433 = sbr.rel (0) target = $region131
              $region130: #{network_block_forward.13} parent=115 // pred_region
                loop: start=0, step=1, limit=1
                $region132: #{network_block_forward.13} parent=130 // loop_pre_header
                  _
                $region133: #{network_block_forward.13} parent=130 // loop_header
                  %s435 = sphi 0, %s439
                  %p436 = scmp.ge.s32.totalorder %s435, 1
                  %s440 = sphi %s408, %s408
                  %s441 = sphi %s401, %s401
                $region134: #{network_block_forward.13} parent=130 // loop_header_branch
                  %438 = sbr.rel (%p436) target = $region138
                $region135: #{network_block_forward.13} parent=130 // loop_body
                  %v442 = vld [vmem:[%s440] sm:$0xff]
                  %443 = vst [vmem:[%s441] sm:$0xff] %v442
                  %v444 = vld [vmem:[%s440 + $0x8] sm:$0xff]
                  %445 = vst [vmem:[%s441 + $0x8] sm:$0xff] %v444
                  %v446 = vld [vmem:[%s440 + $0xa0] sm:$0xff]
                  %447 = vst [vmem:[%s441 + $0x10] sm:$0xff] %v446
                  %v448 = vld [vmem:[%s440 + $0xa8] sm:$0xff]
                  %449 = vst [vmem:[%s441 + $0x18] sm:$0xff] %v448
                $region136: #{network_block_forward.13} parent=130 // loop_footer
                  %s439 = sadd.s32 1, %s435
                $region137: #{network_block_forward.13} parent=130 // loop_footer_branch
                  %434 = sbr.rel target = $region133
                $region138: #{network_block_forward.13} parent=130 // loop_exit
                  _
              $region131: #{network_block_forward.13} parent=115 // pred_fallthru
                _
              // Predicated region
              $region139: #{network_block_forward.13} parent=115 // pred_check
                _
              $region140: #{network_block_forward.13} parent=115 // pred_check_branch
                %451 = sbr.rel target = $region142
              $region141: #{network_block_forward.13} parent=115 // pred_region
                _
              $region142: #{network_block_forward.13} parent=115 // pred_fallthru
                _
            $region116: #{network_block_forward.13} parent=111 // pred_fallthru
              _
            // Predicated region
            $region117: #{network_block_forward.13} parent=111 // pred_check
              _
            $region118: #{network_block_forward.13} parent=111 // pred_check_branch
              %414 = sbr.rel target = $region120
            $region119: #{network_block_forward.13} parent=111 // pred_region
              loop: start=0, step=1, limit=1
              $region121: #{network_block_forward.13} parent=119 // loop_pre_header
                _
              $region122: #{network_block_forward.13} parent=119 // loop_header
                %s417 = sphi 0, %s421
                %p418 = scmp.ge.s32.totalorder %s417, 1
                %s422 = sphi %s408, %s408
                %s423 = sphi %s401, %s401
              $region123: #{network_block_forward.13} parent=119 // loop_header_branch
                %420 = sbr.rel (%p418) target = $region127
              $region124: #{network_block_forward.13} parent=119 // loop_body
                %v424 = vld [vmem:[%s422] sm:$0xff]
                %425 = vst [vmem:[%s423] sm:$0xff] %v424
                %v426 = vld [vmem:[%s422 + $0x8] sm:$0xff]
                %427 = vst [vmem:[%s423 + $0x8] sm:$0xff] %v426
                %v428 = vld [vmem:[%s422 + $0xa0] sm:$0xff]
                %429 = vst [vmem:[%s423 + $0x10] sm:$0xff] %v428
                %v430 = vld [vmem:[%s422 + $0xa8] sm:$0xff]
                %431 = vst [vmem:[%s423 + $0x18] sm:$0xff] %v430
              $region125: #{network_block_forward.13} parent=119 // loop_footer
                %s421 = sadd.s32 1, %s417
              $region126: #{network_block_forward.13} parent=119 // loop_footer_branch
                %416 = sbr.rel target = $region122
              $region127: #{network_block_forward.13} parent=119 // loop_exit
                _
            $region120: #{network_block_forward.13} parent=111 // pred_fallthru
              _
          $region112: #{network_block_forward.13} parent=107 // pred_fallthru
            _
          %452 = vnop
        $region108: #{network_block_forward.13} parent=27 // pred_fallthru
          _
        // Predicated region
        $region143: #{network_block_forward.13} parent=27 // pred_check
          %p453 = pneg %p212
        $region144: #{network_block_forward.13} parent=27 // pred_check_branch
          %455 = sbr.rel (%p453) target = $region146
        $region145: #{network_block_forward.13} parent=27 // pred_region
          %s456 = sand.u32 %s202, 1
          %s457 = sand.u32 %s202, 1
          %s458 = smul.addr %s457, 16
          %s459 = scalar_lea.vmem [#allocation5], %s458
          %s460 = smul.u32 2, %s20
          %s461 = sadd.s32 %s22, %s21
          %s462 = smul.addr %s460, 8
          %s463 = sadd.s32 %s461, %s462
          %s464 = smul.addr %s463, 8
          %s465 = scalar_lea.vmem %s6, %s464
          // Predicated region
          $region147: #{network_block_forward.13} parent=145 // pred_check
            _
          $region148: #{network_block_forward.13} parent=145 // pred_check_branch
            %467 = sbr.rel (0) target = $region150
          $region149: #{network_block_forward.13} parent=145 // pred_region
            // Predicated region
            $region151: #{network_block_forward.13} parent=149 // pred_check
              _
            $region152: #{network_block_forward.13} parent=149 // pred_check_branch
              %469 = sbr.rel (0) target = $region154
            $region153: #{network_block_forward.13} parent=149 // pred_region
              // Predicated region
              $region166: #{network_block_forward.13} parent=153 // pred_check
                _
              $region167: #{network_block_forward.13} parent=153 // pred_check_branch
                %486 = sbr.rel (0) target = $region169
              $region168: #{network_block_forward.13} parent=153 // pred_region
                loop: start=0, step=1, limit=1
                $region170: #{network_block_forward.13} parent=168 // loop_pre_header
                  _
                $region171: #{network_block_forward.13} parent=168 // loop_header
                  %s488 = sphi 0, %s492
                  %p489 = scmp.ge.s32.totalorder %s488, 1
                  %s493 = sphi %s465, %s465
                  %s494 = sphi %s459, %s459
                $region172: #{network_block_forward.13} parent=168 // loop_header_branch
                  %491 = sbr.rel (%p489) target = $region176
                $region173: #{network_block_forward.13} parent=168 // loop_body
                  %v495 = vld [vmem:[%s493] sm:$0xff]
                  %496 = vst [vmem:[%s494] sm:$0xff] %v495
                  %v497 = vld [vmem:[%s493 + $0x40] sm:$0xff]
                  %498 = vst [vmem:[%s494 + $0x8] sm:$0xff] %v497
                $region174: #{network_block_forward.13} parent=168 // loop_footer
                  %s492 = sadd.s32 1, %s488
                $region175: #{network_block_forward.13} parent=168 // loop_footer_branch
                  %487 = sbr.rel target = $region171
                $region176: #{network_block_forward.13} parent=168 // loop_exit
                  _
              $region169: #{network_block_forward.13} parent=153 // pred_fallthru
                _
              // Predicated region
              $region177: #{network_block_forward.13} parent=153 // pred_check
                _
              $region178: #{network_block_forward.13} parent=153 // pred_check_branch
                %500 = sbr.rel target = $region180
              $region179: #{network_block_forward.13} parent=153 // pred_region
                _
              $region180: #{network_block_forward.13} parent=153 // pred_fallthru
                _
            $region154: #{network_block_forward.13} parent=149 // pred_fallthru
              _
            // Predicated region
            $region155: #{network_block_forward.13} parent=149 // pred_check
              _
            $region156: #{network_block_forward.13} parent=149 // pred_check_branch
              %471 = sbr.rel target = $region158
            $region157: #{network_block_forward.13} parent=149 // pred_region
              loop: start=0, step=1, limit=1
              $region159: #{network_block_forward.13} parent=157 // loop_pre_header
                _
              $region160: #{network_block_forward.13} parent=157 // loop_header
                %s474 = sphi 0, %s478
                %p475 = scmp.ge.s32.totalorder %s474, 1
                %s479 = sphi %s465, %s465
                %s480 = sphi %s459, %s459
              $region161: #{network_block_forward.13} parent=157 // loop_header_branch
                %477 = sbr.rel (%p475) target = $region165
              $region162: #{network_block_forward.13} parent=157 // loop_body
                %v481 = vld [vmem:[%s479] sm:$0xff]
                %482 = vst [vmem:[%s480] sm:$0xff] %v481
                %v483 = vld [vmem:[%s479 + $0x40] sm:$0xff]
                %484 = vst [vmem:[%s480 + $0x8] sm:$0xff] %v483
              $region163: #{network_block_forward.13} parent=157 // loop_footer
                %s478 = sadd.s32 1, %s474
              $region164: #{network_block_forward.13} parent=157 // loop_footer_branch
                %473 = sbr.rel target = $region160
              $region165: #{network_block_forward.13} parent=157 // loop_exit
                _
            $region158: #{network_block_forward.13} parent=149 // pred_fallthru
              _
          $region150: #{network_block_forward.13} parent=145 // pred_fallthru
            _
          %501 = vnop
        $region146: #{network_block_forward.13} parent=27 // pred_fallthru
          _
      $region28: #{network_block_forward.13} parent=5 // pred_fallthru
        _
      %p502 = scmp.le.s32.totalorder 1, %s13
      %p503 = scmp.lt.s32.totalorder %s13, 9
      %p504 = pnand %p502, %p503
      %p505 = pneg %p504
      // Predicated region
      $region181: #{network_block_forward.13} parent=5 // pred_check
        _
      $region182: #{network_block_forward.13} parent=5 // pred_check_branch
        %507 = sbr.rel (%p504) target = $region184
      $region183: #{network_block_forward.13} parent=5 // pred_region
        %s508 = ssub.s32 %s13, 1
        %s509 = sand.u32 %s89, 1
        %s510 = sand.u32 %s89, 1
        %s511 = smul.addr %s510, 32
        %s512 = scalar_lea.vmem [#allocation2], %s511
        // Predicated region
        $region185: #{network_block_forward.13} parent=183 // pred_check
          %p513 = pneg %p102
        $region186: #{network_block_forward.13} parent=183 // pred_check_branch
          %515 = sbr.rel (%p513) target = $region188
        $region187: #{network_block_forward.13} parent=183 // pred_region
          _
        $region188: #{network_block_forward.13} parent=183 // pred_fallthru
          _
        %s516 = sand.u32 %s119, 1
        %s517 = sand.u32 %s119, 1
        %s518 = smul.addr %s517, 32
        %s519 = scalar_lea.vmem [#allocation3], %s518
        // Predicated region
        $region189: #{network_block_forward.13} parent=183 // pred_check
          %p520 = pneg %p132
        $region190: #{network_block_forward.13} parent=183 // pred_check_branch
          %522 = sbr.rel (%p520) target = $region192
        $region191: #{network_block_forward.13} parent=183 // pred_region
          _
        $region192: #{network_block_forward.13} parent=183 // pred_fallthru
          _
        %s523 = sand.u32 %s149, 1
        %s524 = sand.u32 %s149, 1
        %s525 = smul.addr %s524, 32
        %s526 = scalar_lea.vmem [#allocation4], %s525
        // Predicated region
        $region193: #{network_block_forward.13} parent=183 // pred_check
          %p527 = pneg %p162
        $region194: #{network_block_forward.13} parent=183 // pred_check_branch
          %529 = sbr.rel (%p527) target = $region196
        $region195: #{network_block_forward.13} parent=183 // pred_region
          _
        $region196: #{network_block_forward.13} parent=183 // pred_fallthru
          _
        %s530 = sand.u32 %s205, 1
        %s531 = sand.u32 %s205, 1
        %s532 = smul.addr %s531, 16
        %s533 = scalar_lea.vmem [#allocation5], %s532
        // Predicated region
        $region197: #{network_block_forward.13} parent=183 // pred_check
          %p534 = pneg %p218
        $region198: #{network_block_forward.13} parent=183 // pred_check_branch
          %536 = sbr.rel (%p534) target = $region200
        $region199: #{network_block_forward.13} parent=183 // pred_region
          _
        $region200: #{network_block_forward.13} parent=183 // pred_fallthru
          _
        %p537 = pneg %p53
        %p538 = pneg %p50
        %p539 = pneg %p74
        %p540 = pneg %p71
        %s541 = sand.u32 %s89, 1
        %s542 = sand.u32 %s89, 1
        %s543 = smul.addr %s542, 32
        %s544 = scalar_lea.vmem [#allocation2], %s543
        %p545 = pneg %p102
        %p546 = pneg %p99
        %s547 = sand.u32 %s119, 1
        %s548 = sand.u32 %s119, 1
        %s549 = smul.addr %s548, 32
        %s550 = scalar_lea.vmem [#allocation3], %s549
        %p551 = pneg %p132
        %p552 = pneg %p129
        %s553 = sand.u32 %s149, 1
        %s554 = sand.u32 %s149, 1
        %s555 = smul.addr %s554, 32
        %s556 = scalar_lea.vmem [#allocation4], %s555
        %p557 = pneg %p162
        %p558 = pneg %p159
        %p559 = scmp.lt.s32.totalorder %s25, 0
        %s560 = scalar_select %p559, %s25, 0
        %s561 = smul.addr %s560, 8
        %s562 = scalar_lea.vmem %s5, %s561
        %p563 = pneg %p188
        %p564 = pneg %p185
        %s565 = sand.u32 %s205, 1
        %s566 = sand.u32 %s205, 1
        %s567 = smul.addr %s566, 16
        %s568 = scalar_lea.vmem [#allocation5], %s567
        %p569 = pneg %p218
        %p570 = pneg %p215
        %p571 = pneg %p248
        %p572 = pneg %p245
        %s573 = sand.u32 %s235, 1
        %s574 = sand.u32 %s235, 1
        %s575 = smul.addr %s574, 16
        %s576 = scalar_lea.vmem [#allocation6], %s575
        %s577 = smul.u32 2, %s23
        %s578 = sadd.s32 %s24, 1
        %s579 = smul.u32 2, %s23
        %s580 = sadd.s32 %s24, 2
        %s581 = smul.u32 2, %s23
        %p582 = scmp.lt.s32.totalorder %s25, 0
        %s583 = scalar_select %p582, %s25, 0
        %s584 = smul.addr %s583, 8
        %s585 = scalar_lea.vmem %s5, %s584
        %s586 = smul.u32 2, %s23
        %s587 = smul.u32 2, %s23
        %v588 = vld [vmem:[%s0] sm:$0x1]
        %v589 = vld [vmem:[%s1] sm:$0x1]
        %v590 = vlaneseq
        %v591 = vshrl.u32 %v590, 7
        %v592 = vld [vmem:[%s512] sm:$0xff]
        %v593 = vld [vmem:[%s512 + $0x8] sm:$0x3]
        %v594 = vld [vmem:[%s512 + $0x10] sm:$0xff]
        %v595 = vld [vmem:[%s512 + $0x18] sm:$0x3]
        %v597 = vlaneseq
        %v598 = vshrl.u32 %v597, 7
        %v599 = vsub.s32 0, %v598
        %v600 = vrot.slane %v588, %v599
        %v602 = vmul.f32 %v592, %v600
        %v603 = vmul.f32 %v593, %v600
        %v604 = vmul.f32 %v594, %v600
        %v605 = vmul.f32 %v595, %v600
        %v607 = vlaneseq
        %v608 = vshrl.u32 %v607, 7
        %v609 = vsub.s32 0, %v608
        %v610 = vrot.slane %v589, %v609
        %v612 = vadd.f32 %v602, %v610
        %v613 = vadd.f32 %v603, %v610
        %v614 = vadd.f32 %v604, %v610
        %v615 = vadd.f32 %v605, %v610
        %v616 = vmax.f32 %v612, 0.0
        %v617 = vmax.f32 %v613, 0.0
        %v618 = vmax.f32 %v614, 0.0
        %v619 = vmax.f32 %v615, 0.0
        %p620 = scmp.ne.s32.totalorder %s24, 0
        %p621 = scmp.ne.s32.totalorder %s24, 9
        %p622 = pnand %p620, %p621
        %p623 = pneg %p622
        %vm624 = vcmp.ne.s32.totalorder %v591, 0
        %vm625 = vcmp.ne.s32.totalorder %v591, 9
        %vm626 = vmand %vm624, %vm625
        %s627 = scalar_select %p623, 1, 0
        %v628 = vstv %s627
        %vm629 = vcmp.eq.s32.totalorder %v628, 1
        %vm630 = vmand %vm626, %vm629
        %v631 = vsel %vm630, 1, 0
        %vm632 = vcmp.eq.s32.totalorder %v631, 1
        %v633 = vsel %vm632, %v616, 0.0
        %v634 = vsel %vm632, %v618, 0.0
        %v635 = vld [vmem:[%s585] sm:$0xff]
        %v636 = vld [vmem:[%s585 + $0x8] sm:$0xff]
        %v637 = vld [vmem:[%s585 + $0x10] sm:$0xff]
        %v638 = vld [vmem:[%s585 + $0x18] sm:$0xff]
        %v639 = vld [vmem:[%s585 + $0x20] sm:$0xff]
        %v640 = vld [vmem:[%s585 + $0x28] sm:$0xff]
        %v641 = vld [vmem:[%s585 + $0x30] sm:$0xff]
        %v642 = vld [vmem:[%s585 + $0x38] sm:$0xff]
        %v643 = vld [vmem:[%s585 + $0x40] sm:$0xff]
        %v644 = vld [vmem:[%s585 + $0x48] sm:$0xff]
        %v645 = vld [vmem:[%s585 + $0x50] sm:$0xff]
        %v646 = vld [vmem:[%s585 + $0x58] sm:$0xff]
        %v647 = vld [vmem:[%s585 + $0x60] sm:$0xff]
        %v648 = vld [vmem:[%s585 + $0x68] sm:$0xff]
        %v649 = vld [vmem:[%s585 + $0x70] sm:$0xff]
        %v650 = vld [vmem:[%s585 + $0x78] sm:$0xff]
        %v651 = vadd.s32 %v591, 1
        %vm652 = vcmp.ne.s32.totalorder %v651, 0
        %vm653 = vcmp.ne.s32.totalorder %v651, 9
        %vm654 = vmand %vm652, %vm653
        %vm655 = vmand %vm654, %vm629
        %v656 = vsel %vm655, 1, 0
        %vm657 = vcmp.eq.s32.totalorder %v656, 1
        %vm662 = vcmask 1046528
        %v663 = vrot.slane %v616, 1
        %v664 = vrot.slane %v617, 1
        %v665 = vsel %vm662, %v663, %v664
        %v666 = vrot.slane %v618, 1
        %v667 = vrot.slane %v619, 1
        %v668 = vsel %vm662, %v666, %v667
        %v671 = vsel %vm657, %v665, 0.0
        %v672 = vsel %vm657, %v668, 0.0
        %s673 = scalar_lea.vmem %s585, 128
        %v674 = vld [vmem:[%s673] sm:$0xff]
        %v675 = vld [vmem:[%s673 + $0x8] sm:$0xff]
        %v676 = vld [vmem:[%s673 + $0x10] sm:$0xff]
        %v677 = vld [vmem:[%s673 + $0x18] sm:$0xff]
        %v678 = vld [vmem:[%s673 + $0x20] sm:$0xff]
        %v679 = vld [vmem:[%s673 + $0x28] sm:$0xff]
        %v680 = vld [vmem:[%s673 + $0x30] sm:$0xff]
        %v681 = vld [vmem:[%s673 + $0x38] sm:$0xff]
        %v682 = vld [vmem:[%s673 + $0x40] sm:$0xff]
        %v683 = vld [vmem:[%s673 + $0x48] sm:$0xff]
        %v684 = vld [vmem:[%s673 + $0x50] sm:$0xff]
        %v685 = vld [vmem:[%s673 + $0x58] sm:$0xff]
        %v686 = vld [vmem:[%s673 + $0x60] sm:$0xff]
        %v687 = vld [vmem:[%s673 + $0x68] sm:$0xff]
        %v688 = vld [vmem:[%s673 + $0x70] sm:$0xff]
        %v689 = vld [vmem:[%s673 + $0x78] sm:$0xff]
        %690 = vmatprep.subr.mxu0 0.0
        %691 = vmatpush1.msra.mxu0 %v674
        %692 = vmatprep.subr.mxu0 0.0
        %693 = vmatpush1.msra.mxu0 %v675
        %694 = vmatprep.subr.mxu0 0.0
        %695 = vmatpush1.msra.mxu0 %v676
        %696 = vmatprep.subr.mxu0 0.0
        %697 = vmatpush1.msra.mxu0 %v677
        %698 = vmatprep.subr.mxu0 0.0
        %699 = vmatpush1.msra.mxu0 %v678
        %700 = vmatprep.subr.mxu0 0.0
        %701 = vmatpush1.msra.mxu0 %v679
        %702 = vmatprep.subr.mxu0 0.0
        %703 = vmatpush1.msra.mxu0 %v680
        %704 = vmatprep.subr.mxu0 0.0
        %705 = vmatpush1.msra.mxu0 %v681
        %706 = vmatprep.subr.mxu0 0.0
        %707 = vmatpush1.msra.mxu0 %v682
        %708 = vmatprep.subr.mxu0 0.0
        %709 = vmatpush1.msra.mxu0 %v683
        %710 = vmatprep.subr.mxu0 0.0
        %711 = vmatpush1.msra.mxu0 %v684
        %712 = vmatprep.subr.mxu0 0.0
        %713 = vmatpush1.msra.mxu0 %v685
        %714 = vmatprep.subr.mxu0 0.0
        %715 = vmatpush1.msra.mxu0 %v686
        %716 = vmatprep.subr.mxu0 0.0
        %717 = vmatpush1.msra.mxu0 %v687
        %718 = vmatprep.subr.mxu0 0.0
        %719 = vmatpush1.msra.mxu0 %v688
        %720 = vmatprep.subr.mxu0 0.0
        %721 = vmatpush1.msra.mxu0 %v689
        %722 = vmatprep.subr.mxu0 0.0
        %723 = vmatpush1.msra.mxu0 0.0
        %724 = vmatprep.subr.mxu0 0.0
        %725 = vmatpush1.msra.mxu0 0.0
        %726 = vmatprep.subr.mxu0 0.0
        %727 = vmatpush1.msra.mxu0 0.0
        %728 = vmatprep.subr.mxu0 0.0
        %729 = vmatpush1.msra.mxu0 0.0
        %730 = vmatprep.subr.mxu0 0.0
        %731 = vmatpush1.msra.mxu0 0.0
        %732 = vmatprep.subr.mxu0 0.0
        %733 = vmatpush1.msra.mxu0 0.0
        %734 = vmatprep.subr.mxu0 0.0
        %735 = vmatpush1.msra.mxu0 0.0
        %736 = vmatprep.subr.mxu0 0.0
        %737 = vmatpush1.msra.mxu0 0.0
        %738 = vmatprep.subr.mxu0 0.0
        %739 = vmatpush1.msra.mxu0 0.0
        %740 = vmatprep.subr.mxu0 0.0
        %741 = vmatpush1.msra.mxu0 0.0
        %742 = vmatprep.subr.mxu0 0.0
        %743 = vmatpush1.msra.mxu0 0.0
        %744 = vmatprep.subr.mxu0 0.0
        %745 = vmatpush1.msra.mxu0 0.0
        %746 = vmatprep.subr.mxu0 0.0
        %747 = vmatpush1.msra.mxu0 0.0
        %748 = vmatprep.subr.mxu0 0.0
        %749 = vmatpush1.msra.mxu0 0.0
        %750 = vmatprep.subr.mxu0 0.0
        %751 = vmatpush1.msra.mxu0 0.0
        %752 = vmatprep.subr.mxu0 0.0
        %753 = vmatpush1.msra.mxu0 0.0
        %754 = vmatprep.mubr.f32.mxu0 0.0
        %755 = vmatmul.mubr.f32.gmra.mrb[0].mxu0 %v671
        %v756 = vpop.f32.mrb[0].mxu0
        %v757 = vadd.f32 0.0, %v756
        %v758 = vpop.f32.mrb[0].mxu0
        %759 = vmatprep.mubr.f32.mxu0 0.0
        %760 = vmatmul.mubr.f32.gmra.mrb[0].mxu0 %v672
        %v761 = vpop.f32.mrb[0].mxu0
        %v762 = vadd.f32 0.0, %v761
        %v763 = vpop.f32.mrb[0].mxu0
        %764 = vdwg.mxu0
        %765 = vmatprep.subr.mxu0 0.0
        %766 = vmatpush1.msra.mxu0 %v635
        %767 = vmatprep.subr.mxu0 0.0
        %768 = vmatpush1.msra.mxu0 %v636
        %769 = vmatprep.subr.mxu0 0.0
        %770 = vmatpush1.msra.mxu0 %v637
        %771 = vmatprep.subr.mxu0 0.0
        %772 = vmatpush1.msra.mxu0 %v638
        %773 = vmatprep.subr.mxu0 0.0
        %774 = vmatpush1.msra.mxu0 %v639
        %775 = vmatprep.subr.mxu0 0.0
        %776 = vmatpush1.msra.mxu0 %v640
        %777 = vmatprep.subr.mxu0 0.0
        %778 = vmatpush1.msra.mxu0 %v641
        %779 = vmatprep.subr.mxu0 0.0
        %780 = vmatpush1.msra.mxu0 %v642
        %781 = vmatprep.subr.mxu0 0.0
        %782 = vmatpush1.msra.mxu0 %v643
        %783 = vmatprep.subr.mxu0 0.0
        %784 = vmatpush1.msra.mxu0 %v644
        %785 = vmatprep.subr.mxu0 0.0
        %786 = vmatpush1.msra.mxu0 %v645
        %787 = vmatprep.subr.mxu0 0.0
        %788 = vmatpush1.msra.mxu0 %v646
        %789 = vmatprep.subr.mxu0 0.0
        %790 = vmatpush1.msra.mxu0 %v647
        %791 = vmatprep.subr.mxu0 0.0
        %792 = vmatpush1.msra.mxu0 %v648
        %793 = vmatprep.subr.mxu0 0.0
        %794 = vmatpush1.msra.mxu0 %v649
        %795 = vmatprep.subr.mxu0 0.0
        %796 = vmatpush1.msra.mxu0 %v650
        %797 = vmatprep.subr.mxu0 0.0
        %798 = vmatpush1.msra.mxu0 0.0
        %799 = vmatprep.subr.mxu0 0.0
        %800 = vmatpush1.msra.mxu0 0.0
        %801 = vmatprep.subr.mxu0 0.0
        %802 = vmatpush1.msra.mxu0 0.0
        %803 = vmatprep.subr.mxu0 0.0
        %804 = vmatpush1.msra.mxu0 0.0
        %805 = vmatprep.subr.mxu0 0.0
        %806 = vmatpush1.msra.mxu0 0.0
        %807 = vmatprep.subr.mxu0 0.0
        %808 = vmatpush1.msra.mxu0 0.0
        %809 = vmatprep.subr.mxu0 0.0
        %810 = vmatpush1.msra.mxu0 0.0
        %811 = vmatprep.subr.mxu0 0.0
        %812 = vmatpush1.msra.mxu0 0.0
        %813 = vmatprep.subr.mxu0 0.0
        %814 = vmatpush1.msra.mxu0 0.0
        %815 = vmatprep.subr.mxu0 0.0
        %816 = vmatpush1.msra.mxu0 0.0
        %817 = vmatprep.subr.mxu0 0.0
        %818 = vmatpush1.msra.mxu0 0.0
        %819 = vmatprep.subr.mxu0 0.0
        %820 = vmatpush1.msra.mxu0 0.0
        %821 = vmatprep.subr.mxu0 0.0
        %822 = vmatpush1.msra.mxu0 0.0
        %823 = vmatprep.subr.mxu0 0.0
        %824 = vmatpush1.msra.mxu0 0.0
        %825 = vmatprep.subr.mxu0 0.0
        %826 = vmatpush1.msra.mxu0 0.0
        %827 = vmatprep.subr.mxu0 0.0
        %828 = vmatpush1.msra.mxu0 0.0
        %829 = vmatprep.mubr.f32.mxu0 0.0
        %830 = vmatmul.mubr.f32.gmra.mrb[0].mxu0 %v633
        %v831 = vpop.f32.mrb[0].mxu0
        %v832 = vadd.f32 %v757, %v831
        %v833 = vpop.f32.mrb[0].mxu0
        %834 = vmatprep.mubr.f32.mxu0 0.0
        %835 = vmatmul.mubr.f32.gmra.mrb[0].mxu0 %v634
        %v836 = vpop.f32.mrb[0].mxu0
        %v837 = vadd.f32 %v762, %v836
        %v838 = vpop.f32.mrb[0].mxu0
        %839 = vdwg.mxu0
        %v840 = vadd.s32 %v591, 2
        %vm841 = vcmp.ne.s32.totalorder %v840, 0
        %vm842 = vcmp.ne.s32.totalorder %v840, 9
        %vm843 = vmand %vm841, %vm842
        %vm844 = vmand %vm843, %vm629
        %v845 = vsel %vm844, 1, 0
        %vm846 = vcmp.eq.s32.totalorder %v845, 1
        %vm847 = vcmask 1045504
        %v848 = vrot.slane %v616, 2
        %v849 = vrot.slane %v617, 2
        %v850 = vsel %vm847, %v848, %v849
        %v851 = vrot.slane %v618, 2
        %v852 = vrot.slane %v619, 2
        %v853 = vsel %vm847, %v851, %v852
        %v856 = vsel %vm846, %v850, 0.0
        %v857 = vsel %vm846, %v853, 0.0
        %s858 = scalar_lea.vmem %s585, 256
        %v859 = vld [vmem:[%s858] sm:$0xff]
        %v860 = vld [vmem:[%s858 + $0x8] sm:$0xff]
        %v861 = vld [vmem:[%s858 + $0x10] sm:$0xff]
        %v862 = vld [vmem:[%s858 + $0x18] sm:$0xff]
        %v863 = vld [vmem:[%s858 + $0x20] sm:$0xff]
        %v864 = vld [vmem:[%s858 + $0x28] sm:$0xff]
        %v865 = vld [vmem:[%s858 + $0x30] sm:$0xff]
        %v866 = vld [vmem:[%s858 + $0x38] sm:$0xff]
        %v867 = vld [vmem:[%s858 + $0x40] sm:$0xff]
        %v868 = vld [vmem:[%s858 + $0x48] sm:$0xff]
        %v869 = vld [vmem:[%s858 + $0x50] sm:$0xff]
        %v870 = vld [vmem:[%s858 + $0x58] sm:$0xff]
        %v871 = vld [vmem:[%s858 + $0x60] sm:$0xff]
        %v872 = vld [vmem:[%s858 + $0x68] sm:$0xff]
        %v873 = vld [vmem:[%s858 + $0x70] sm:$0xff]
        %v874 = vld [vmem:[%s858 + $0x78] sm:$0xff]
        %875 = vmatprep.subr.mxu0 0.0
        %876 = vmatpush1.msra.mxu0 %v859
        %877 = vmatprep.subr.mxu0 0.0
        %878 = vmatpush1.msra.mxu0 %v860
        %879 = vmatprep.subr.mxu0 0.0
        %880 = vmatpush1.msra.mxu0 %v861
        %881 = vmatprep.subr.mxu0 0.0
        %882 = vmatpush1.msra.mxu0 %v862
        %883 = vmatprep.subr.mxu0 0.0
        %884 = vmatpush1.msra.mxu0 %v863
        %885 = vmatprep.subr.mxu0 0.0
        %886 = vmatpush1.msra.mxu0 %v864
        %887 = vmatprep.subr.mxu0 0.0
        %888 = vmatpush1.msra.mxu0 %v865
        %889 = vmatprep.subr.mxu0 0.0
        %890 = vmatpush1.msra.mxu0 %v866
        %891 = vmatprep.subr.mxu0 0.0
        %892 = vmatpush1.msra.mxu0 %v867
        %893 = vmatprep.subr.mxu0 0.0
        %894 = vmatpush1.msra.mxu0 %v868
        %895 = vmatprep.subr.mxu0 0.0
        %896 = vmatpush1.msra.mxu0 %v869
        %897 = vmatprep.subr.mxu0 0.0
        %898 = vmatpush1.msra.mxu0 %v870
        %899 = vmatprep.subr.mxu0 0.0
        %900 = vmatpush1.msra.mxu0 %v871
        %901 = vmatprep.subr.mxu0 0.0
        %902 = vmatpush1.msra.mxu0 %v872
        %903 = vmatprep.subr.mxu0 0.0
        %904 = vmatpush1.msra.mxu0 %v873
        %905 = vmatprep.subr.mxu0 0.0
        %906 = vmatpush1.msra.mxu0 %v874
        %907 = vmatprep.subr.mxu0 0.0
        %908 = vmatpush1.msra.mxu0 0.0
        %909 = vmatprep.subr.mxu0 0.0
        %910 = vmatpush1.msra.mxu0 0.0
        %911 = vmatprep.subr.mxu0 0.0
        %912 = vmatpush1.msra.mxu0 0.0
        %913 = vmatprep.subr.mxu0 0.0
        %914 = vmatpush1.msra.mxu0 0.0
        %915 = vmatprep.subr.mxu0 0.0
        %916 = vmatpush1.msra.mxu0 0.0
        %917 = vmatprep.subr.mxu0 0.0
        %918 = vmatpush1.msra.mxu0 0.0
        %919 = vmatprep.subr.mxu0 0.0
        %920 = vmatpush1.msra.mxu0 0.0
        %921 = vmatprep.subr.mxu0 0.0
        %922 = vmatpush1.msra.mxu0 0.0
        %923 = vmatprep.subr.mxu0 0.0
        %924 = vmatpush1.msra.mxu0 0.0
        %925 = vmatprep.subr.mxu0 0.0
        %926 = vmatpush1.msra.mxu0 0.0
        %927 = vmatprep.subr.mxu0 0.0
        %928 = vmatpush1.msra.mxu0 0.0
        %929 = vmatprep.subr.mxu0 0.0
        %930 = vmatpush1.msra.mxu0 0.0
        %931 = vmatprep.subr.mxu0 0.0
        %932 = vmatpush1.msra.mxu0 0.0
        %933 = vmatprep.subr.mxu0 0.0
        %934 = vmatpush1.msra.mxu0 0.0
        %935 = vmatprep.subr.mxu0 0.0
        %936 = vmatpush1.msra.mxu0 0.0
        %937 = vmatprep.subr.mxu0 0.0
        %938 = vmatpush1.msra.mxu0 0.0
        %939 = vmatprep.mubr.f32.mxu0 0.0
        %940 = vmatmul.mubr.f32.gmra.mrb[0].mxu0 %v856
        %v941 = vpop.f32.mrb[0].mxu0
        %v942 = vadd.f32 0.0, %v941
        %v943 = vpop.f32.mrb[0].mxu0
        %944 = vmatprep.mubr.f32.mxu0 0.0
        %945 = vmatmul.mubr.f32.gmra.mrb[0].mxu0 %v857
        %v946 = vpop.f32.mrb[0].mxu0
        %v947 = vadd.f32 0.0, %v946
        %v948 = vpop.f32.mrb[0].mxu0
        %949 = vdwg.mxu0
        %v950 = vadd.f32 %v832, %v942
        %v951 = vadd.f32 %v837, %v947
        %v952 = vld [vmem:[%s519] sm:$0xff]
        %v953 = vld [vmem:[%s519 + $0x8] sm:$0x3]
        %v954 = vld [vmem:[%s519 + $0x10] sm:$0xff]
        %v955 = vld [vmem:[%s519 + $0x18] sm:$0x3]
        %v956 = vmul.f32 %v952, %v600
        %v957 = vmul.f32 %v953, %v600
        %v958 = vmul.f32 %v954, %v600
        %v959 = vmul.f32 %v955, %v600
        %v960 = vadd.f32 %v956, %v610
        %v961 = vadd.f32 %v957, %v610
        %v962 = vadd.f32 %v958, %v610
        %v963 = vadd.f32 %v959, %v610
        %v964 = vmax.f32 %v960, 0.0
        %v965 = vmax.f32 %v961, 0.0
        %v966 = vmax.f32 %v962, 0.0
        %v967 = vmax.f32 %v963, 0.0
        %s968 = sadd.s32 %s24, 1
        %p969 = scmp.ne.s32.totalorder %s968, 0
        %p970 = scmp.ne.s32.totalorder %s968, 9
        %p971 = pnand %p969, %p970
        %p972 = pneg %p971
        %s973 = scalar_select %p972, 1, 0
        %v974 = vstv %s973
        %vm975 = vcmp.eq.s32.totalorder %v974, 1
        %vm976 = vmand %vm626, %vm975
        %v977 = vsel %vm976, 1, 0
        %vm978 = vcmp.eq.s32.totalorder %v977, 1
        %v979 = vsel %vm978, %v964, 0.0
        %v980 = vsel %vm978, %v966, 0.0
        %s981 = scalar_lea.vmem %s585, 384
        %v982 = vld [vmem:[%s981] sm:$0xff]
        %v983 = vld [vmem:[%s981 + $0x8] sm:$0xff]
        %v984 = vld [vmem:[%s981 + $0x10] sm:$0xff]
        %v985 = vld [vmem:[%s981 + $0x18] sm:$0xff]
        %v986 = vld [vmem:[%s981 + $0x20] sm:$0xff]
        %v987 = vld [vmem:[%s981 + $0x28] sm:$0xff]
        %v988 = vld [vmem:[%s981 + $0x30] sm:$0xff]
        %v989 = vld [vmem:[%s981 + $0x38] sm:$0xff]
        %v990 = vld [vmem:[%s981 + $0x40] sm:$0xff]
        %v991 = vld [vmem:[%s981 + $0x48] sm:$0xff]
        %v992 = vld [vmem:[%s981 + $0x50] sm:$0xff]
        %v993 = vld [vmem:[%s981 + $0x58] sm:$0xff]
        %v994 = vld [vmem:[%s981 + $0x60] sm:$0xff]
        %v995 = vld [vmem:[%s981 + $0x68] sm:$0xff]
        %v996 = vld [vmem:[%s981 + $0x70] sm:$0xff]
        %v997 = vld [vmem:[%s981 + $0x78] sm:$0xff]
        %998 = vmatprep.subr.mxu0 0.0
        %999 = vmatpush1.msra.mxu0 %v982
        %1000 = vmatprep.subr.mxu0 0.0
        %1001 = vmatpush1.msra.mxu0 %v983
        %1002 = vmatprep.subr.mxu0 0.0
        %1003 = vmatpush1.msra.mxu0 %v984
        %1004 = vmatprep.subr.mxu0 0.0
        %1005 = vmatpush1.msra.mxu0 %v985
        %1006 = vmatprep.subr.mxu0 0.0
        %1007 = vmatpush1.msra.mxu0 %v986
        %1008 = vmatprep.subr.mxu0 0.0
        %1009 = vmatpush1.msra.mxu0 %v987
        %1010 = vmatprep.subr.mxu0 0.0
        %1011 = vmatpush1.msra.mxu0 %v988
        %1012 = vmatprep.subr.mxu0 0.0
        %1013 = vmatpush1.msra.mxu0 %v989
        %1014 = vmatprep.subr.mxu0 0.0
        %1015 = vmatpush1.msra.mxu0 %v990
        %1016 = vmatprep.subr.mxu0 0.0
        %1017 = vmatpush1.msra.mxu0 %v991
        %1018 = vmatprep.subr.mxu0 0.0
        %1019 = vmatpush1.msra.mxu0 %v992
        %1020 = vmatprep.subr.mxu0 0.0
        %1021 = vmatpush1.msra.mxu0 %v993
        %1022 = vmatprep.subr.mxu0 0.0
        %1023 = vmatpush1.msra.mxu0 %v994
        %1024 = vmatprep.subr.mxu0 0.0
        %1025 = vmatpush1.msra.mxu0 %v995
        %1026 = vmatprep.subr.mxu0 0.0
        %1027 = vmatpush1.msra.mxu0 %v996
        %1028 = vmatprep.subr.mxu0 0.0
        %1029 = vmatpush1.msra.mxu0 %v997
        %1030 = vmatprep.subr.mxu0 0.0
        %1031 = vmatpush1.msra.mxu0 0.0
        %1032 = vmatprep.subr.mxu0 0.0
        %1033 = vmatpush1.msra.mxu0 0.0
        %1034 = vmatprep.subr.mxu0 0.0
        %1035 = vmatpush1.msra.mxu0 0.0
        %1036 = vmatprep.subr.mxu0 0.0
        %1037 = vmatpush1.msra.mxu0 0.0
        %1038 = vmatprep.subr.mxu0 0.0
        %1039 = vmatpush1.msra.mxu0 0.0
        %1040 = vmatprep.subr.mxu0 0.0
        %1041 = vmatpush1.msra.mxu0 0.0
        %1042 = vmatprep.subr.mxu0 0.0
        %1043 = vmatpush1.msra.mxu0 0.0
        %1044 = vmatprep.subr.mxu0 0.0
        %1045 = vmatpush1.msra.mxu0 0.0
        %1046 = vmatprep.subr.mxu0 0.0
        %1047 = vmatpush1.msra.mxu0 0.0
        %1048 = vmatprep.subr.mxu0 0.0
        %1049 = vmatpush1.msra.mxu0 0.0
        %1050 = vmatprep.subr.mxu0 0.0
        %1051 = vmatpush1.msra.mxu0 0.0
        %1052 = vmatprep.subr.mxu0 0.0
        %1053 = vmatpush1.msra.mxu0 0.0
        %1054 = vmatprep.subr.mxu0 0.0
        %1055 = vmatpush1.msra.mxu0 0.0
        %1056 = vmatprep.subr.mxu0 0.0
        %1057 = vmatpush1.msra.mxu0 0.0
        %1058 = vmatprep.subr.mxu0 0.0
        %1059 = vmatpush1.msra.mxu0 0.0
        %1060 = vmatprep.subr.mxu0 0.0
        %1061 = vmatpush1.msra.mxu0 0.0
        %1062 = vmatprep.mubr.f32.mxu0 0.0
        %1063 = vmatmul.mubr.f32.gmra.mrb[0].mxu0 %v979
        %v1064 = vpop.f32.mrb[0].mxu0
        %v1065 = vadd.f32 0.0, %v1064
        %v1066 = vpop.f32.mrb[0].mxu0
        %1067 = vmatprep.mubr.f32.mxu0 0.0
        %1068 = vmatmul.mubr.f32.gmra.mrb[0].mxu0 %v980
        %v1069 = vpop.f32.mrb[0].mxu0
        %v1070 = vadd.f32 0.0, %v1069
        %v1071 = vpop.f32.mrb[0].mxu0
        %1072 = vdwg.mxu0
        %v1073 = vadd.f32 %v950, %v1065
        %v1074 = vadd.f32 %v951, %v1070
        %vm1075 = vmand %vm654, %vm975
        %v1076 = vsel %vm1075, 1, 0
        %vm1077 = vcmp.eq.s32.totalorder %v1076, 1
        %v1082 = vrot.slane %v964, 1
        %v1083 = vrot.slane %v965, 1
        %v1084 = vsel %vm662, %v1082, %v1083
        %v1085 = vrot.slane %v966, 1
        %v1086 = vrot.slane %v967, 1
        %v1087 = vsel %vm662, %v1085, %v1086
        %v1090 = vsel %vm1077, %v1084, 0.0
        %v1091 = vsel %vm1077, %v1087, 0.0
        %s1092 = scalar_lea.vmem %s585, 512
        %v1093 = vld [vmem:[%s1092] sm:$0xff]
        %v1094 = vld [vmem:[%s1092 + $0x8] sm:$0xff]
        %v1095 = vld [vmem:[%s1092 + $0x10] sm:$0xff]
        %v1096 = vld [vmem:[%s1092 + $0x18] sm:$0xff]
        %v1097 = vld [vmem:[%s1092 + $0x20] sm:$0xff]
        %v1098 = vld [vmem:[%s1092 + $0x28] sm:$0xff]
        %v1099 = vld [vmem:[%s1092 + $0x30] sm:$0xff]
        %v1100 = vld [vmem:[%s1092 + $0x38] sm:$0xff]
        %v1101 = vld [vmem:[%s1092 + $0x40] sm:$0xff]
        %v1102 = vld [vmem:[%s1092 + $0x48] sm:$0xff]
        %v1103 = vld [vmem:[%s1092 + $0x50] sm:$0xff]
        %v1104 = vld [vmem:[%s1092 + $0x58] sm:$0xff]
        %v1105 = vld [vmem:[%s1092 + $0x60] sm:$0xff]
        %v1106 = vld [vmem:[%s1092 + $0x68] sm:$0xff]
        %v1107 = vld [vmem:[%s1092 + $0x70] sm:$0xff]
        %v1108 = vld [vmem:[%s1092 + $0x78] sm:$0xff]
        %1109 = vmatprep.subr.mxu0 0.0
        %1110 = vmatpush1.msra.mxu0 %v1093
        %1111 = vmatprep.subr.mxu0 0.0
        %1112 = vmatpush1.msra.mxu0 %v1094
        %1113 = vmatprep.subr.mxu0 0.0
        %1114 = vmatpush1.msra.mxu0 %v1095
        %1115 = vmatprep.subr.mxu0 0.0
        %1116 = vmatpush1.msra.mxu0 %v1096
        %1117 = vmatprep.subr.mxu0 0.0
        %1118 = vmatpush1.msra.mxu0 %v1097
        %1119 = vmatprep.subr.mxu0 0.0
        %1120 = vmatpush1.msra.mxu0 %v1098
        %1121 = vmatprep.subr.mxu0 0.0
        %1122 = vmatpush1.msra.mxu0 %v1099
        %1123 = vmatprep.subr.mxu0 0.0
        %1124 = vmatpush1.msra.mxu0 %v1100
        %1125 = vmatprep.subr.mxu0 0.0
        %1126 = vmatpush1.msra.mxu0 %v1101
        %1127 = vmatprep.subr.mxu0 0.0
        %1128 = vmatpush1.msra.mxu0 %v1102
        %1129 = vmatprep.subr.mxu0 0.0
        %1130 = vmatpush1.msra.mxu0 %v1103
        %1131 = vmatprep.subr.mxu0 0.0
        %1132 = vmatpush1.msra.mxu0 %v1104
        %1133 = vmatprep.subr.mxu0 0.0
        %1134 = vmatpush1.msra.mxu0 %v1105
        %1135 = vmatprep.subr.mxu0 0.0
        %1136 = vmatpush1.msra.mxu0 %v1106
        %1137 = vmatprep.subr.mxu0 0.0
        %1138 = vmatpush1.msra.mxu0 %v1107
        %1139 = vmatprep.subr.mxu0 0.0
        %1140 = vmatpush1.msra.mxu0 %v1108
        %1141 = vmatprep.subr.mxu0 0.0
        %1142 = vmatpush1.msra.mxu0 0.0
        %1143 = vmatprep.subr.mxu0 0.0
        %1144 = vmatpush1.msra.mxu0 0.0
        %1145 = vmatprep.subr.mxu0 0.0
        %1146 = vmatpush1.msra.mxu0 0.0
        %1147 = vmatprep.subr.mxu0 0.0
        %1148 = vmatpush1.msra.mxu0 0.0
        %1149 = vmatprep.subr.mxu0 0.0
        %1150 = vmatpush1.msra.mxu0 0.0
        %1151 = vmatprep.subr.mxu0 0.0
        %1152 = vmatpush1.msra.mxu0 0.0
        %1153 = vmatprep.subr.mxu0 0.0
        %1154 = vmatpush1.msra.mxu0 0.0
        %1155 = vmatprep.subr.mxu0 0.0
        %1156 = vmatpush1.msra.mxu0 0.0
        %1157 = vmatprep.subr.mxu0 0.0
        %1158 = vmatpush1.msra.mxu0 0.0
        %1159 = vmatprep.subr.mxu0 0.0
        %1160 = vmatpush1.msra.mxu0 0.0
        %1161 = vmatprep.subr.mxu0 0.0
        %1162 = vmatpush1.msra.mxu0 0.0
        %1163 = vmatprep.subr.mxu0 0.0
        %1164 = vmatpush1.msra.mxu0 0.0
        %1165 = vmatprep.subr.mxu0 0.0
        %1166 = vmatpush1.msra.mxu0 0.0
        %1167 = vmatprep.subr.mxu0 0.0
        %1168 = vmatpush1.msra.mxu0 0.0
        %1169 = vmatprep.subr.mxu0 0.0
        %1170 = vmatpush1.msra.mxu0 0.0
        %1171 = vmatprep.subr.mxu0 0.0
        %1172 = vmatpush1.msra.mxu0 0.0
        %1173 = vmatprep.mubr.f32.mxu0 0.0
        %1174 = vmatmul.mubr.f32.gmra.mrb[0].mxu0 %v1090
        %v1175 = vpop.f32.mrb[0].mxu0
        %v1176 = vadd.f32 0.0, %v1175
        %v1177 = vpop.f32.mrb[0].mxu0
        %1178 = vmatprep.mubr.f32.mxu0 0.0
        %1179 = vmatmul.mubr.f32.gmra.mrb[0].mxu0 %v1091
        %v1180 = vpop.f32.mrb[0].mxu0
        %v1181 = vadd.f32 0.0, %v1180
        %v1182 = vpop.f32.mrb[0].mxu0
        %1183 = vdwg.mxu0
        %v1184 = vadd.f32 %v1073, %v1176
        %v1185 = vadd.f32 %v1074, %v1181
        %vm1186 = vmand %vm843, %vm975
        %v1187 = vsel %vm1186, 1, 0
        %vm1188 = vcmp.eq.s32.totalorder %v1187, 1
        %v1189 = vrot.slane %v964, 2
        %v1190 = vrot.slane %v965, 2
        %v1191 = vsel %vm847, %v1189, %v1190
        %v1192 = vrot.slane %v966, 2
        %v1193 = vrot.slane %v967, 2
        %v1194 = vsel %vm847, %v1192, %v1193
        %v1197 = vsel %vm1188, %v1191, 0.0
        %v1198 = vsel %vm1188, %v1194, 0.0
        %s1199 = scalar_lea.vmem %s585, 640
        %v1200 = vld [vmem:[%s1199] sm:$0xff]
        %v1201 = vld [vmem:[%s1199 + $0x8] sm:$0xff]
        %v1202 = vld [vmem:[%s1199 + $0x10] sm:$0xff]
        %v1203 = vld [vmem:[%s1199 + $0x18] sm:$0xff]
        %v1204 = vld [vmem:[%s1199 + $0x20] sm:$0xff]
        %v1205 = vld [vmem:[%s1199 + $0x28] sm:$0xff]
        %v1206 = vld [vmem:[%s1199 + $0x30] sm:$0xff]
        %v1207 = vld [vmem:[%s1199 + $0x38] sm:$0xff]
        %v1208 = vld [vmem:[%s1199 + $0x40] sm:$0xff]
        %v1209 = vld [vmem:[%s1199 + $0x48] sm:$0xff]
        %v1210 = vld [vmem:[%s1199 + $0x50] sm:$0xff]
        %v1211 = vld [vmem:[%s1199 + $0x58] sm:$0xff]
        %v1212 = vld [vmem:[%s1199 + $0x60] sm:$0xff]
        %v1213 = vld [vmem:[%s1199 + $0x68] sm:$0xff]
        %v1214 = vld [vmem:[%s1199 + $0x70] sm:$0xff]
        %v1215 = vld [vmem:[%s1199 + $0x78] sm:$0xff]
        %1216 = vmatprep.subr.mxu0 0.0
        %1217 = vmatpush1.msra.mxu0 %v1200
        %1218 = vmatprep.subr.mxu0 0.0
        %1219 = vmatpush1.msra.mxu0 %v1201
        %1220 = vmatprep.subr.mxu0 0.0
        %1221 = vmatpush1.msra.mxu0 %v1202
        %1222 = vmatprep.subr.mxu0 0.0
        %1223 = vmatpush1.msra.mxu0 %v1203
        %1224 = vmatprep.subr.mxu0 0.0
        %1225 = vmatpush1.msra.mxu0 %v1204
        %1226 = vmatprep.subr.mxu0 0.0
        %1227 = vmatpush1.msra.mxu0 %v1205
        %1228 = vmatprep.subr.mxu0 0.0
        %1229 = vmatpush1.msra.mxu0 %v1206
        %1230 = vmatprep.subr.mxu0 0.0
        %1231 = vmatpush1.msra.mxu0 %v1207
        %1232 = vmatprep.subr.mxu0 0.0
        %1233 = vmatpush1.msra.mxu0 %v1208
        %1234 = vmatprep.subr.mxu0 0.0
        %1235 = vmatpush1.msra.mxu0 %v1209
        %1236 = vmatprep.subr.mxu0 0.0
        %1237 = vmatpush1.msra.mxu0 %v1210
        %1238 = vmatprep.subr.mxu0 0.0
        %1239 = vmatpush1.msra.mxu0 %v1211
        %1240 = vmatprep.subr.mxu0 0.0
        %1241 = vmatpush1.msra.mxu0 %v1212
        %1242 = vmatprep.subr.mxu0 0.0
        %1243 = vmatpush1.msra.mxu0 %v1213
        %1244 = vmatprep.subr.mxu0 0.0
        %1245 = vmatpush1.msra.mxu0 %v1214
        %1246 = vmatprep.subr.mxu0 0.0
        %1247 = vmatpush1.msra.mxu0 %v1215
        %1248 = vmatprep.subr.mxu0 0.0
        %1249 = vmatpush1.msra.mxu0 0.0
        %1250 = vmatprep.subr.mxu0 0.0
        %1251 = vmatpush1.msra.mxu0 0.0
        %1252 = vmatprep.subr.mxu0 0.0
        %1253 = vmatpush1.msra.mxu0 0.0
        %1254 = vmatprep.subr.mxu0 0.0
        %1255 = vmatpush1.msra.mxu0 0.0
        %1256 = vmatprep.subr.mxu0 0.0
        %1257 = vmatpush1.msra.mxu0 0.0
        %1258 = vmatprep.subr.mxu0 0.0
        %1259 = vmatpush1.msra.mxu0 0.0
        %1260 = vmatprep.subr.mxu0 0.0
        %1261 = vmatpush1.msra.mxu0 0.0
        %1262 = vmatprep.subr.mxu0 0.0
        %1263 = vmatpush1.msra.mxu0 0.0
        %1264 = vmatprep.subr.mxu0 0.0
        %1265 = vmatpush1.msra.mxu0 0.0
        %1266 = vmatprep.subr.mxu0 0.0
        %1267 = vmatpush1.msra.mxu0 0.0
        %1268 = vmatprep.subr.mxu0 0.0
        %1269 = vmatpush1.msra.mxu0 0.0
        %1270 = vmatprep.subr.mxu0 0.0
        %1271 = vmatpush1.msra.mxu0 0.0
        %1272 = vmatprep.subr.mxu0 0.0
        %1273 = vmatpush1.msra.mxu0 0.0
        %1274 = vmatprep.subr.mxu0 0.0
        %1275 = vmatpush1.msra.mxu0 0.0
        %1276 = vmatprep.subr.mxu0 0.0
        %1277 = vmatpush1.msra.mxu0 0.0
        %1278 = vmatprep.subr.mxu0 0.0
        %1279 = vmatpush1.msra.mxu0 0.0
        %1280 = vmatprep.mubr.f32.mxu0 0.0
        %1281 = vmatmul.mubr.f32.gmra.mrb[0].mxu0 %v1197
        %v1282 = vpop.f32.mrb[0].mxu0
        %v1283 = vadd.f32 0.0, %v1282
        %v1284 = vpop.f32.mrb[0].mxu0
        %1285 = vmatprep.mubr.f32.mxu0 0.0
        %1286 = vmatmul.mubr.f32.gmra.mrb[0].mxu0 %v1198
        %v1287 = vpop.f32.mrb[0].mxu0
        %v1288 = vadd.f32 0.0, %v1287
        %v1289 = vpop.f32.mrb[0].mxu0
        %1290 = vdwg.mxu0
        %v1291 = vadd.f32 %v1184, %v1283
        %v1292 = vadd.f32 %v1185, %v1288
        %v1293 = vld [vmem:[%s526] sm:$0xff]
        %v1294 = vld [vmem:[%s526 + $0x8] sm:$0x3]
        %v1295 = vld [vmem:[%s526 + $0x10] sm:$0xff]
        %v1296 = vld [vmem:[%s526 + $0x18] sm:$0x3]
        %v1297 = vmul.f32 %v1293, %v600
        %v1298 = vmul.f32 %v1294, %v600
        %v1299 = vmul.f32 %v1295, %v600
        %v1300 = vmul.f32 %v1296, %v600
        %v1301 = vadd.f32 %v1297, %v610
        %v1302 = vadd.f32 %v1298, %v610
        %v1303 = vadd.f32 %v1299, %v610
        %v1304 = vadd.f32 %v1300, %v610
        %v1305 = vmax.f32 %v1301, 0.0
        %v1306 = vmax.f32 %v1302, 0.0
        %v1307 = vmax.f32 %v1303, 0.0
        %v1308 = vmax.f32 %v1304, 0.0
        %s1309 = sadd.s32 %s24, 2
        %p1310 = scmp.ne.s32.totalorder %s1309, 0
        %p1311 = scmp.ne.s32.totalorder %s1309, 9
        %p1312 = pnand %p1310, %p1311
        %p1313 = pneg %p1312
        %s1314 = scalar_select %p1313, 1, 0
        %v1315 = vstv %s1314
        %vm1316 = vcmp.eq.s32.totalorder %v1315, 1
        %vm1317 = vmand %vm626, %vm1316
        %v1318 = vsel %vm1317, 1, 0
        %vm1319 = vcmp.eq.s32.totalorder %v1318, 1
        %v1320 = vsel %vm1319, %v1305, 0.0
        %v1321 = vsel %vm1319, %v1307, 0.0
        %s1322 = scalar_lea.vmem %s585, 768
        %v1323 = vld [vmem:[%s1322] sm:$0xff]
        %v1324 = vld [vmem:[%s1322 + $0x8] sm:$0xff]
        %v1325 = vld [vmem:[%s1322 + $0x10] sm:$0xff]
        %v1326 = vld [vmem:[%s1322 + $0x18] sm:$0xff]
        %v1327 = vld [vmem:[%s1322 + $0x20] sm:$0xff]
        %v1328 = vld [vmem:[%s1322 + $0x28] sm:$0xff]
        %v1329 = vld [vmem:[%s1322 + $0x30] sm:$0xff]
        %v1330 = vld [vmem:[%s1322 + $0x38] sm:$0xff]
        %v1331 = vld [vmem:[%s1322 + $0x40] sm:$0xff]
        %v1332 = vld [vmem:[%s1322 + $0x48] sm:$0xff]
        %v1333 = vld [vmem:[%s1322 + $0x50] sm:$0xff]
        %v1334 = vld [vmem:[%s1322 + $0x58] sm:$0xff]
        %v1335 = vld [vmem:[%s1322 + $0x60] sm:$0xff]
        %v1336 = vld [vmem:[%s1322 + $0x68] sm:$0xff]
        %v1337 = vld [vmem:[%s1322 + $0x70] sm:$0xff]
        %v1338 = vld [vmem:[%s1322 + $0x78] sm:$0xff]
        %1339 = vmatprep.subr.mxu0 0.0
        %1340 = vmatpush1.msra.mxu0 %v1323
        %1341 = vmatprep.subr.mxu0 0.0
        %1342 = vmatpush1.msra.mxu0 %v1324
        %1343 = vmatprep.subr.mxu0 0.0
        %1344 = vmatpush1.msra.mxu0 %v1325
        %1345 = vmatprep.subr.mxu0 0.0
        %1346 = vmatpush1.msra.mxu0 %v1326
        %1347 = vmatprep.subr.mxu0 0.0
        %1348 = vmatpush1.msra.mxu0 %v1327
        %1349 = vmatprep.subr.mxu0 0.0
        %1350 = vmatpush1.msra.mxu0 %v1328
        %1351 = vmatprep.subr.mxu0 0.0
        %1352 = vmatpush1.msra.mxu0 %v1329
        %1353 = vmatprep.subr.mxu0 0.0
        %1354 = vmatpush1.msra.mxu0 %v1330
        %1355 = vmatprep.subr.mxu0 0.0
        %1356 = vmatpush1.msra.mxu0 %v1331
        %1357 = vmatprep.subr.mxu0 0.0
        %1358 = vmatpush1.msra.mxu0 %v1332
        %1359 = vmatprep.subr.mxu0 0.0
        %1360 = vmatpush1.msra.mxu0 %v1333
        %1361 = vmatprep.subr.mxu0 0.0
        %1362 = vmatpush1.msra.mxu0 %v1334
        %1363 = vmatprep.subr.mxu0 0.0
        %1364 = vmatpush1.msra.mxu0 %v1335
        %1365 = vmatprep.subr.mxu0 0.0
        %1366 = vmatpush1.msra.mxu0 %v1336
        %1367 = vmatprep.subr.mxu0 0.0
        %1368 = vmatpush1.msra.mxu0 %v1337
        %1369 = vmatprep.subr.mxu0 0.0
        %1370 = vmatpush1.msra.mxu0 %v1338
        %1371 = vmatprep.subr.mxu0 0.0
        %1372 = vmatpush1.msra.mxu0 0.0
        %1373 = vmatprep.subr.mxu0 0.0
        %1374 = vmatpush1.msra.mxu0 0.0
        %1375 = vmatprep.subr.mxu0 0.0
        %1376 = vmatpush1.msra.mxu0 0.0
        %1377 = vmatprep.subr.mxu0 0.0
        %1378 = vmatpush1.msra.mxu0 0.0
        %1379 = vmatprep.subr.mxu0 0.0
        %1380 = vmatpush1.msra.mxu0 0.0
        %1381 = vmatprep.subr.mxu0 0.0
        %1382 = vmatpush1.msra.mxu0 0.0
        %1383 = vmatprep.subr.mxu0 0.0
        %1384 = vmatpush1.msra.mxu0 0.0
        %1385 = vmatprep.subr.mxu0 0.0
        %1386 = vmatpush1.msra.mxu0 0.0
        %1387 = vmatprep.subr.mxu0 0.0
        %1388 = vmatpush1.msra.mxu0 0.0
        %1389 = vmatprep.subr.mxu0 0.0
        %1390 = vmatpush1.msra.mxu0 0.0
        %1391 = vmatprep.subr.mxu0 0.0
        %1392 = vmatpush1.msra.mxu0 0.0
        %1393 = vmatprep.subr.mxu0 0.0
        %1394 = vmatpush1.msra.mxu0 0.0
        %1395 = vmatprep.subr.mxu0 0.0
        %1396 = vmatpush1.msra.mxu0 0.0
        %1397 = vmatprep.subr.mxu0 0.0
        %1398 = vmatpush1.msra.mxu0 0.0
        %1399 = vmatprep.subr.mxu0 0.0
        %1400 = vmatpush1.msra.mxu0 0.0
        %1401 = vmatprep.subr.mxu0 0.0
        %1402 = vmatpush1.msra.mxu0 0.0
        %1403 = vmatprep.mubr.f32.mxu0 0.0
        %1404 = vmatmul.mubr.f32.gmra.mrb[0].mxu0 %v1320
        %v1405 = vpop.f32.mrb[0].mxu0
        %v1406 = vadd.f32 0.0, %v1405
        %v1407 = vpop.f32.mrb[0].mxu0
        %1408 = vmatprep.mubr.f32.mxu0 0.0
        %1409 = vmatmul.mubr.f32.gmra.mrb[0].mxu0 %v1321
        %v1410 = vpop.f32.mrb[0].mxu0
        %v1411 = vadd.f32 0.0, %v1410
        %v1412 = vpop.f32.mrb[0].mxu0
        %1413 = vdwg.mxu0
        %v1414 = vadd.f32 %v1291, %v1406
        %v1415 = vadd.f32 %v1292, %v1411
        %vm1416 = vmand %vm654, %vm1316
        %v1417 = vsel %vm1416, 1, 0
        %vm1418 = vcmp.eq.s32.totalorder %v1417, 1
        %v1423 = vrot.slane %v1305, 1
        %v1424 = vrot.slane %v1306, 1
        %v1425 = vsel %vm662, %v1423, %v1424
        %v1426 = vrot.slane %v1307, 1
        %v1427 = vrot.slane %v1308, 1
        %v1428 = vsel %vm662, %v1426, %v1427
        %v1431 = vsel %vm1418, %v1425, 0.0
        %v1432 = vsel %vm1418, %v1428, 0.0
        %s1433 = scalar_lea.vmem %s585, 896
        %v1434 = vld [vmem:[%s1433] sm:$0xff]
        %v1435 = vld [vmem:[%s1433 + $0x8] sm:$0xff]
        %v1436 = vld [vmem:[%s1433 + $0x10] sm:$0xff]
        %v1437 = vld [vmem:[%s1433 + $0x18] sm:$0xff]
        %v1438 = vld [vmem:[%s1433 + $0x20] sm:$0xff]
        %v1439 = vld [vmem:[%s1433 + $0x28] sm:$0xff]
        %v1440 = vld [vmem:[%s1433 + $0x30] sm:$0xff]
        %v1441 = vld [vmem:[%s1433 + $0x38] sm:$0xff]
        %v1442 = vld [vmem:[%s1433 + $0x40] sm:$0xff]
        %v1443 = vld [vmem:[%s1433 + $0x48] sm:$0xff]
        %v1444 = vld [vmem:[%s1433 + $0x50] sm:$0xff]
        %v1445 = vld [vmem:[%s1433 + $0x58] sm:$0xff]
        %v1446 = vld [vmem:[%s1433 + $0x60] sm:$0xff]
        %v1447 = vld [vmem:[%s1433 + $0x68] sm:$0xff]
        %v1448 = vld [vmem:[%s1433 + $0x70] sm:$0xff]
        %v1449 = vld [vmem:[%s1433 + $0x78] sm:$0xff]
        %1450 = vmatprep.subr.mxu0 0.0
        %1451 = vmatpush1.msra.mxu0 %v1434
        %1452 = vmatprep.subr.mxu0 0.0
        %1453 = vmatpush1.msra.mxu0 %v1435
        %1454 = vmatprep.subr.mxu0 0.0
        %1455 = vmatpush1.msra.mxu0 %v1436
        %1456 = vmatprep.subr.mxu0 0.0
        %1457 = vmatpush1.msra.mxu0 %v1437
        %1458 = vmatprep.subr.mxu0 0.0
        %1459 = vmatpush1.msra.mxu0 %v1438
        %1460 = vmatprep.subr.mxu0 0.0
        %1461 = vmatpush1.msra.mxu0 %v1439
        %1462 = vmatprep.subr.mxu0 0.0
        %1463 = vmatpush1.msra.mxu0 %v1440
        %1464 = vmatprep.subr.mxu0 0.0
        %1465 = vmatpush1.msra.mxu0 %v1441
        %1466 = vmatprep.subr.mxu0 0.0
        %1467 = vmatpush1.msra.mxu0 %v1442
        %1468 = vmatprep.subr.mxu0 0.0
        %1469 = vmatpush1.msra.mxu0 %v1443
        %1470 = vmatprep.subr.mxu0 0.0
        %1471 = vmatpush1.msra.mxu0 %v1444
        %1472 = vmatprep.subr.mxu0 0.0
        %1473 = vmatpush1.msra.mxu0 %v1445
        %1474 = vmatprep.subr.mxu0 0.0
        %1475 = vmatpush1.msra.mxu0 %v1446
        %1476 = vmatprep.subr.mxu0 0.0
        %1477 = vmatpush1.msra.mxu0 %v1447
        %1478 = vmatprep.subr.mxu0 0.0
        %1479 = vmatpush1.msra.mxu0 %v1448
        %1480 = vmatprep.subr.mxu0 0.0
        %1481 = vmatpush1.msra.mxu0 %v1449
        %1482 = vmatprep.subr.mxu0 0.0
        %1483 = vmatpush1.msra.mxu0 0.0
        %1484 = vmatprep.subr.mxu0 0.0
        %1485 = vmatpush1.msra.mxu0 0.0
        %1486 = vmatprep.subr.mxu0 0.0
        %1487 = vmatpush1.msra.mxu0 0.0
        %1488 = vmatprep.subr.mxu0 0.0
        %1489 = vmatpush1.msra.mxu0 0.0
        %1490 = vmatprep.subr.mxu0 0.0
        %1491 = vmatpush1.msra.mxu0 0.0
        %1492 = vmatprep.subr.mxu0 0.0
        %1493 = vmatpush1.msra.mxu0 0.0
        %1494 = vmatprep.subr.mxu0 0.0
        %1495 = vmatpush1.msra.mxu0 0.0
        %1496 = vmatprep.subr.mxu0 0.0
        %1497 = vmatpush1.msra.mxu0 0.0
        %1498 = vmatprep.subr.mxu0 0.0
        %1499 = vmatpush1.msra.mxu0 0.0
        %1500 = vmatprep.subr.mxu0 0.0
        %1501 = vmatpush1.msra.mxu0 0.0
        %1502 = vmatprep.subr.mxu0 0.0
        %1503 = vmatpush1.msra.mxu0 0.0
        %1504 = vmatprep.subr.mxu0 0.0
        %1505 = vmatpush1.msra.mxu0 0.0
        %1506 = vmatprep.subr.mxu0 0.0
        %1507 = vmatpush1.msra.mxu0 0.0
        %1508 = vmatprep.subr.mxu0 0.0
        %1509 = vmatpush1.msra.mxu0 0.0
        %1510 = vmatprep.subr.mxu0 0.0
        %1511 = vmatpush1.msra.mxu0 0.0
        %1512 = vmatprep.subr.mxu0 0.0
        %1513 = vmatpush1.msra.mxu0 0.0
        %1514 = vmatprep.mubr.f32.mxu0 0.0
        %1515 = vmatmul.mubr.f32.gmra.mrb[0].mxu0 %v1431
        %v1516 = vpop.f32.mrb[0].mxu0
        %v1517 = vadd.f32 0.0, %v1516
        %v1518 = vpop.f32.mrb[0].mxu0
        %1519 = vmatprep.mubr.f32.mxu0 0.0
        %1520 = vmatmul.mubr.f32.gmra.mrb[0].mxu0 %v1432
        %v1521 = vpop.f32.mrb[0].mxu0
        %v1522 = vadd.f32 0.0, %v1521
        %v1523 = vpop.f32.mrb[0].mxu0
        %1524 = vdwg.mxu0
        %v1525 = vadd.f32 %v1414, %v1517
        %v1526 = vadd.f32 %v1415, %v1522
        %vm1527 = vmand %vm843, %vm1316
        %v1528 = vsel %vm1527, 1, 0
        %vm1529 = vcmp.eq.s32.totalorder %v1528, 1
        %v1530 = vrot.slane %v1305, 2
        %v1531 = vrot.slane %v1306, 2
        %v1532 = vsel %vm847, %v1530, %v1531
        %v1533 = vrot.slane %v1307, 2
        %v1534 = vrot.slane %v1308, 2
        %v1535 = vsel %vm847, %v1533, %v1534
        %v1538 = vsel %vm1529, %v1532, 0.0
        %v1539 = vsel %vm1529, %v1535, 0.0
        %s1540 = scalar_lea.vmem %s585, 1024
        %v1541 = vld [vmem:[%s1540] sm:$0xff]
        %v1542 = vld [vmem:[%s1540 + $0x8] sm:$0xff]
        %v1543 = vld [vmem:[%s1540 + $0x10] sm:$0xff]
        %v1544 = vld [vmem:[%s1540 + $0x18] sm:$0xff]
        %v1545 = vld [vmem:[%s1540 + $0x20] sm:$0xff]
        %v1546 = vld [vmem:[%s1540 + $0x28] sm:$0xff]
        %v1547 = vld [vmem:[%s1540 + $0x30] sm:$0xff]
        %v1548 = vld [vmem:[%s1540 + $0x38] sm:$0xff]
        %v1549 = vld [vmem:[%s1540 + $0x40] sm:$0xff]
        %v1550 = vld [vmem:[%s1540 + $0x48] sm:$0xff]
        %v1551 = vld [vmem:[%s1540 + $0x50] sm:$0xff]
        %v1552 = vld [vmem:[%s1540 + $0x58] sm:$0xff]
        %v1553 = vld [vmem:[%s1540 + $0x60] sm:$0xff]
        %v1554 = vld [vmem:[%s1540 + $0x68] sm:$0xff]
        %v1555 = vld [vmem:[%s1540 + $0x70] sm:$0xff]
        %v1556 = vld [vmem:[%s1540 + $0x78] sm:$0xff]
        %1557 = vmatprep.subr.mxu0 0.0
        %1558 = vmatpush1.msra.mxu0 %v1541
        %1559 = vmatprep.subr.mxu0 0.0
        %1560 = vmatpush1.msra.mxu0 %v1542
        %1561 = vmatprep.subr.mxu0 0.0
        %1562 = vmatpush1.msra.mxu0 %v1543
        %1563 = vmatprep.subr.mxu0 0.0
        %1564 = vmatpush1.msra.mxu0 %v1544
        %1565 = vmatprep.subr.mxu0 0.0
        %1566 = vmatpush1.msra.mxu0 %v1545
        %1567 = vmatprep.subr.mxu0 0.0
        %1568 = vmatpush1.msra.mxu0 %v1546
        %1569 = vmatprep.subr.mxu0 0.0
        %1570 = vmatpush1.msra.mxu0 %v1547
        %1571 = vmatprep.subr.mxu0 0.0
        %1572 = vmatpush1.msra.mxu0 %v1548
        %1573 = vmatprep.subr.mxu0 0.0
        %1574 = vmatpush1.msra.mxu0 %v1549
        %1575 = vmatprep.subr.mxu0 0.0
        %1576 = vmatpush1.msra.mxu0 %v1550
        %1577 = vmatprep.subr.mxu0 0.0
        %1578 = vmatpush1.msra.mxu0 %v1551
        %1579 = vmatprep.subr.mxu0 0.0
        %1580 = vmatpush1.msra.mxu0 %v1552
        %1581 = vmatprep.subr.mxu0 0.0
        %1582 = vmatpush1.msra.mxu0 %v1553
        %1583 = vmatprep.subr.mxu0 0.0
        %1584 = vmatpush1.msra.mxu0 %v1554
        %1585 = vmatprep.subr.mxu0 0.0
        %1586 = vmatpush1.msra.mxu0 %v1555
        %1587 = vmatprep.subr.mxu0 0.0
        %1588 = vmatpush1.msra.mxu0 %v1556
        %1589 = vmatprep.subr.mxu0 0.0
        %1590 = vmatpush1.msra.mxu0 0.0
        %1591 = vmatprep.subr.mxu0 0.0
        %1592 = vmatpush1.msra.mxu0 0.0
        %1593 = vmatprep.subr.mxu0 0.0
        %1594 = vmatpush1.msra.mxu0 0.0
        %1595 = vmatprep.subr.mxu0 0.0
        %1596 = vmatpush1.msra.mxu0 0.0
        %1597 = vmatprep.subr.mxu0 0.0
        %1598 = vmatpush1.msra.mxu0 0.0
        %1599 = vmatprep.subr.mxu0 0.0
        %1600 = vmatpush1.msra.mxu0 0.0
        %1601 = vmatprep.subr.mxu0 0.0
        %1602 = vmatpush1.msra.mxu0 0.0
        %1603 = vmatprep.subr.mxu0 0.0
        %1604 = vmatpush1.msra.mxu0 0.0
        %1605 = vmatprep.subr.mxu0 0.0
        %1606 = vmatpush1.msra.mxu0 0.0
        %1607 = vmatprep.subr.mxu0 0.0
        %1608 = vmatpush1.msra.mxu0 0.0
        %1609 = vmatprep.subr.mxu0 0.0
        %1610 = vmatpush1.msra.mxu0 0.0
        %1611 = vmatprep.subr.mxu0 0.0
        %1612 = vmatpush1.msra.mxu0 0.0
        %1613 = vmatprep.subr.mxu0 0.0
        %1614 = vmatpush1.msra.mxu0 0.0
        %1615 = vmatprep.subr.mxu0 0.0
        %1616 = vmatpush1.msra.mxu0 0.0
        %1617 = vmatprep.subr.mxu0 0.0
        %1618 = vmatpush1.msra.mxu0 0.0
        %1619 = vmatprep.subr.mxu0 0.0
        %1620 = vmatpush1.msra.mxu0 0.0
        %1621 = vmatprep.mubr.f32.mxu0 0.0
        %1622 = vmatmul.mubr.f32.gmra.mrb[0].mxu0 %v1538
        %v1623 = vpop.f32.mrb[0].mxu0
        %v1624 = vadd.f32 0.0, %v1623
        %v1625 = vpop.f32.mrb[0].mxu0
        %1626 = vmatprep.mubr.f32.mxu0 0.0
        %1627 = vmatmul.mubr.f32.gmra.mrb[0].mxu0 %v1539
        %v1628 = vpop.f32.mrb[0].mxu0
        %v1629 = vadd.f32 0.0, %v1628
        %v1630 = vpop.f32.mrb[0].mxu0
        %1631 = vdwg.mxu0
        %v1632 = vadd.f32 %v1525, %v1624
        %v1633 = vadd.f32 %v1526, %v1629
        %v1634 = vld [vmem:[%s533] sm:$0xff]
        %v1635 = vld [vmem:[%s533 + $0x8] sm:$0xff]
        %v1636 = vadd.f32 %v1632, %v1634
        %v1637 = vadd.f32 %v1633, %v1635
        %1638 = vst [vmem:[%s576] sm:$0xff] %v1636
        %1639 = vst [vmem:[%s576 + $0x8] sm:$0xff] %v1637
        %s1640 = sand.u32 %s235, 1
        %s1641 = sand.u32 %s235, 1
        %s1642 = smul.addr %s1641, 16
        %s1643 = scalar_lea.vmem [#allocation6], %s1642
        // Predicated region
        $region201: #{network_block_forward.13} parent=183 // pred_check
          %p1644 = pneg %p245
        $region202: #{network_block_forward.13} parent=183 // pred_check_branch
          %1646 = sbr.rel (%p1644) target = $region204
        $region203: #{network_block_forward.13} parent=183 // pred_region
          %s1647 = smul.u32 2, %s23
          %s1648 = sadd.s32 %s25, %s24
          %s1649 = smul.addr %s1647, 8
          %s1650 = sadd.s32 %s1648, %s1649
          %s1651 = smul.addr %s1650, 8
          %s1652 = scalar_lea.vmem %s7, %s1651
          // Predicated region
          $region205: #{network_block_forward.13} parent=203 // pred_check
            _
          $region206: #{network_block_forward.13} parent=203 // pred_check_branch
            %1654 = sbr.rel (0) target = $region208
          $region207: #{network_block_forward.13} parent=203 // pred_region
            // Predicated region
            $region209: #{network_block_forward.13} parent=207 // pred_check
              _
            $region210: #{network_block_forward.13} parent=207 // pred_check_branch
              %1656 = sbr.rel (0) target = $region212
            $region211: #{network_block_forward.13} parent=207 // pred_region
              // Predicated region
              $region224: #{network_block_forward.13} parent=211 // pred_check
                _
              $region225: #{network_block_forward.13} parent=211 // pred_check_branch
                %1673 = sbr.rel (0) target = $region227
              $region226: #{network_block_forward.13} parent=211 // pred_region
                loop: start=0, step=1, limit=1
                $region228: #{network_block_forward.13} parent=226 // loop_pre_header
                  _
                $region229: #{network_block_forward.13} parent=226 // loop_header
                  %s1675 = sphi 0, %s1679
                  %p1676 = scmp.ge.s32.totalorder %s1675, 1
                  %s1680 = sphi %s1643, %s1643
                  %s1681 = sphi %s1652, %s1652
                $region230: #{network_block_forward.13} parent=226 // loop_header_branch
                  %1678 = sbr.rel (%p1676) target = $region234
                $region231: #{network_block_forward.13} parent=226 // loop_body
                  %v1682 = vld [vmem:[%s1680] sm:$0xff]
                  %1683 = vst [vmem:[%s1681] sm:$0xff] %v1682
                  %v1684 = vld [vmem:[%s1680 + $0x8] sm:$0xff]
                  %1685 = vst [vmem:[%s1681 + $0x40] sm:$0xff] %v1684
                $region232: #{network_block_forward.13} parent=226 // loop_footer
                  %s1679 = sadd.s32 1, %s1675
                $region233: #{network_block_forward.13} parent=226 // loop_footer_branch
                  %1674 = sbr.rel target = $region229
                $region234: #{network_block_forward.13} parent=226 // loop_exit
                  _
              $region227: #{network_block_forward.13} parent=211 // pred_fallthru
                _
              // Predicated region
              $region235: #{network_block_forward.13} parent=211 // pred_check
                _
              $region236: #{network_block_forward.13} parent=211 // pred_check_branch
                %1687 = sbr.rel target = $region238
              $region237: #{network_block_forward.13} parent=211 // pred_region
                _
              $region238: #{network_block_forward.13} parent=211 // pred_fallthru
                _
            $region212: #{network_block_forward.13} parent=207 // pred_fallthru
              _
            // Predicated region
            $region213: #{network_block_forward.13} parent=207 // pred_check
              _
            $region214: #{network_block_forward.13} parent=207 // pred_check_branch
              %1658 = sbr.rel target = $region216
            $region215: #{network_block_forward.13} parent=207 // pred_region
              loop: start=0, step=1, limit=1
              $region217: #{network_block_forward.13} parent=215 // loop_pre_header
                _
              $region218: #{network_block_forward.13} parent=215 // loop_header
                %s1661 = sphi 0, %s1665
                %p1662 = scmp.ge.s32.totalorder %s1661, 1
                %s1666 = sphi %s1643, %s1643
                %s1667 = sphi %s1652, %s1652
              $region219: #{network_block_forward.13} parent=215 // loop_header_branch
                %1664 = sbr.rel (%p1662) target = $region223
              $region220: #{network_block_forward.13} parent=215 // loop_body
                %v1668 = vld [vmem:[%s1666] sm:$0xff]
                %1669 = vst [vmem:[%s1667] sm:$0xff] %v1668
                %v1670 = vld [vmem:[%s1666 + $0x8] sm:$0xff]
                %1671 = vst [vmem:[%s1667 + $0x40] sm:$0xff] %v1670
              $region221: #{network_block_forward.13} parent=215 // loop_footer
                %s1665 = sadd.s32 1, %s1661
              $region222: #{network_block_forward.13} parent=215 // loop_footer_branch
                %1660 = sbr.rel target = $region218
              $region223: #{network_block_forward.13} parent=215 // loop_exit
                _
            $region216: #{network_block_forward.13} parent=207 // pred_fallthru
              _
          $region208: #{network_block_forward.13} parent=203 // pred_fallthru
            _
          %1688 = vnop
        $region204: #{network_block_forward.13} parent=183 // pred_fallthru
          _
      $region184: #{network_block_forward.13} parent=5 // pred_fallthru
        _
      %p1689 = scmp.le.s32.totalorder 2, %s13
      // Predicated region
      $region239: #{network_block_forward.13} parent=5 // pred_check
        %p1690 = pneg %p1689
      $region240: #{network_block_forward.13} parent=5 // pred_check_branch
        %1692 = sbr.rel (%p1690) target = $region242
      $region241: #{network_block_forward.13} parent=5 // pred_region
        %s1693 = ssub.s32 %s13, 2
        // Predicated region
        $region243: #{network_block_forward.13} parent=241 // pred_check
          %p1694 = pneg %p251
        $region244: #{network_block_forward.13} parent=241 // pred_check_branch
          %1696 = sbr.rel (%p1694) target = $region246
        $region245: #{network_block_forward.13} parent=241 // pred_region
          %s1697 = sand.u32 %s236, 1
          %s1698 = sand.u32 %s236, 1
          %s1699 = smul.addr %s1698, 16
          %s1700 = scalar_lea.vmem [#allocation6], %s1699
        $region246: #{network_block_forward.13} parent=241 // pred_fallthru
          _
      $region242: #{network_block_forward.13} parent=5 // pred_fallthru
        _
    $region6: #{network_block_forward.13} parent=1 // loop_footer
      %s17 = sadd.s32 1, %s13
    $region7: #{network_block_forward.13} parent=1 // loop_footer_branch
      %12 = sbr.rel target = $region3
    $region8: #{network_block_forward.13} parent=1 // loop_exit
      _

// kernel: network_block_forward.10
$region0: #{network_block_forward.10}
  #allocation0 [shape = 'u32[]', space=smem, size = 0x4, offset = 0x4, fixed_abs, tag = 'smem constant byte address 0x4 - core index']
  #allocation1 [shape = 'u32[144,128]{1,0:T(1,128)}', space=vmem, size = 0x12000, scoped, tag = 'internal scratch']
  %s0 = inlined_call_operand.vmem [shape: f32[1,128], index: 0, kind: input, shape index: {}]
  %s1 = inlined_call_operand.vmem [shape: f32[1,128], index: 1, kind: input, shape index: {}]
  %s2 = inlined_call_operand.vmem [shape: f32[2,9,9,128], index: 2, kind: input, shape index: {}, may-alias: {2,6}]
  %s3 = inlined_call_operand.vmem [shape: f32[2,9,9,128], index: 3, kind: input, shape index: {}, may-alias: {3,7}]
  %s4 = inlined_call_operand.vmem [shape: f32[2,9,9,128], index: 4, kind: input, shape index: {}]
  %s5 = inlined_call_operand.vmem [shape: f32[2,9,9,128], index: 5, kind: input, shape index: {}]
  %s6 = inlined_call_operand.vmem [shape: f32[2,9,9,128], index: 6, kind: input, shape index: {}, may-alias: {2,6}]
  %s7 = inlined_call_operand.vmem [shape: f32[2,9,9,128], index: 7, kind: input, shape index: {}, may-alias: {3,7}]
  %s8 = inlined_call_operand.vmem [shape: f32[9,128,128], index: 8, kind: input, shape index: {}]
  %s9 = inlined_call_operand.vmem [shape: f32[2,8,8,128], index: 9, kind: output, shape index: {}]
  %s10 = sld [smem:[#allocation0]]
  $region331: #{network_block_forward.10} parent=0
    _
  %s12 = ssub.s32 1, %s10
  %s13 = scalar_select 0, %s12, %s10
  $region1: #{network_block_forward.10} parent=0
    #allocation2 [shape = 'u8[32768]{0}', space=vmem, size = 0x8000, scoped, tag = 'input window, operand 2']
    #allocation3 [shape = 'u8[32768]{0}', space=vmem, size = 0x8000, scoped, tag = 'input window, operand 3']
    #allocation4 [shape = 'u8[32768]{0}', space=vmem, size = 0x8000, scoped, tag = 'input window, operand 4']
    #allocation5 [shape = 'u8[32768]{0}', space=vmem, size = 0x8000, scoped, tag = 'input window, operand 5']
    #allocation6 [shape = 'u8[32768]{0}', space=vmem, size = 0x8000, scoped, tag = 'input window, operand 6']
    #allocation7 [shape = 'u8[32768]{0}', space=vmem, size = 0x8000, scoped, tag = 'input window, operand 7']
    #allocation8 [shape = 'u8[16384]{0}', space=vmem, size = 0x4000, scoped, tag = 'output window, operand 0']
    loop: start=0, step=1, limit=10
    $region2: #{network_block_forward.10} parent=1 // loop_pre_header
      _
    $region3: #{network_block_forward.10} parent=1 // loop_header
      %s15 = sphi 0, %s19
      %p16 = scmp.ge.s32.totalorder %s15, 10
      %s22 = sphi 0, %s41
      %s23 = sphi 0, %s37
      %s24 = sphi 0, %s33
      %s25 = sphi 0, %s22
      %s26 = sphi 0, %s23
      %s27 = sphi 0, %s24
      %s28 = sphi 0, %s25
      %s29 = sphi 0, %s26
      %s30 = sphi 0, %s27
      %s42 = sphi 0, %s42
      %s44 = sphi 0, %s42
      %s45 = sphi 0, %s44
      %s59 = sphi 0, %s45
      %s63 = sphi 0, %s63
      %s65 = sphi 0, %s63
      %s66 = sphi 0, %s65
      %s80 = sphi 0, %s66
      %s88 = sphi 0, %s90
      %s91 = sphi 0, %s88
      %s92 = sphi 0, %s91
      %s108 = sphi 0, %s92
      %s116 = sphi 0, %s118
      %s119 = sphi 0, %s116
      %s120 = sphi 0, %s119
      %s136 = sphi 0, %s120
      %s144 = sphi 0, %s146
      %s147 = sphi 0, %s144
      %s148 = sphi 0, %s147
      %s164 = sphi 0, %s148
      %s172 = sphi 0, %s174
      %s175 = sphi 0, %s172
      %s176 = sphi 0, %s175
      %s192 = sphi 0, %s176
      %s202 = sphi 0, %s204
      %s205 = sphi 0, %s202
      %s206 = sphi 0, %s205
      %s222 = sphi 0, %s206
      %s232 = sphi 0, %s234
      %s235 = sphi 0, %s232
      %s236 = sphi 0, %s235
      %s252 = sphi 0, %s236
      %s258 = sphi 0, %s260
      %s261 = sphi 0, %s258
      %s262 = sphi 0, %s261
      %s278 = sphi 0, %s262
      %s288 = sphi 0, %s290
      %s291 = sphi 0, %s288
      %s292 = sphi 0, %s291
      %s308 = sphi 0, %s292
    $region4: #{network_block_forward.10} parent=1 // loop_header_branch
      %18 = sbr.rel (%p16) target = $region8
    $region5: #{network_block_forward.10} parent=1 // loop_body
      %s20 = ssub.s32 %s15, 1
      %s21 = ssub.s32 %s15, 2
      %s31 = sadd.s32 1, %s24
      %p32 = scmp.ge.s32.totalorder %s31, 1
      %s33 = scalar_select %p32, 0, %s31
      %s34 = sadd.s32 1, %s23
      %s35 = scalar_select %p32, %s34, %s23
      %p36 = scmp.ge.s32.totalorder %s35, 8
      %s37 = scalar_select %p36, 0, %s35
      %s38 = sadd.s32 1, %s22
      %s39 = scalar_select %p36, %s38, %s22
      %p40 = scmp.ge.s32.totalorder %s39, 1
      %s41 = scalar_select %p40, 0, %s39
      %s43 = sadd.s32 %s42, 1
      %p46 = scmp.eq.s32.totalorder %s15, 7
      %p47 = scmp.ne.s32.totalorder %s42, %s44
      %p48 = scmp.eq.s32.totalorder %s15, 0
      %p49 = por %p47, %p48
      %p50 = scmp.ne.s32.totalorder %s42, %s44
      %p51 = scmp.eq.s32.totalorder %s20, 7
      %p52 = por %p50, %p51
      %p53 = scmp.ne.s32.totalorder %s44, %s45
      %p54 = scmp.eq.s32.totalorder %s20, 0
      %p55 = por %p53, %p54
      %p56 = scmp.ne.s32.totalorder %s44, %s45
      %p57 = scmp.eq.s32.totalorder %s21, 7
      %p58 = por %p56, %p57
      %p60 = scmp.ne.s32.totalorder %s45, %s59
      %p61 = scmp.eq.s32.totalorder %s21, 0
      %p62 = por %p60, %p61
      %s64 = sadd.s32 %s63, 1
      %p67 = scmp.eq.s32.totalorder %s15, 7
      %p68 = scmp.ne.s32.totalorder %s63, %s65
      %p69 = scmp.eq.s32.totalorder %s15, 0
      %p70 = por %p68, %p69
      %p71 = scmp.ne.s32.totalorder %s63, %s65
      %p72 = scmp.eq.s32.totalorder %s20, 7
      %p73 = por %p71, %p72
      %p74 = scmp.ne.s32.totalorder %s65, %s66
      %p75 = scmp.eq.s32.totalorder %s20, 0
      %p76 = por %p74, %p75
      %p77 = scmp.ne.s32.totalorder %s65, %s66
      %p78 = scmp.eq.s32.totalorder %s21, 7
      %p79 = por %p77, %p78
      %p81 = scmp.ne.s32.totalorder %s66, %s80
      %p82 = scmp.eq.s32.totalorder %s21, 0
      %p83 = por %p81, %p82
      %s84 = ssub.s32 %s22, %s41
      %s85 = ssub.s32 %s23, %s37
      %s86 = sor.u32 %s84, %s85
      %p87 = scmp.eq.s32.totalorder %s86, 0
      %s89 = sadd.s32 %s88, 1
      %s90 = scalar_select %p87, %s88, %s89
      %p93 = pneg %p87
      %p94 = scmp.eq.s32.totalorder %s15, 7
      %p95 = por %p93, %p94
      %p96 = scmp.ne.s32.totalorder %s88, %s91
      %p97 = scmp.eq.s32.totalorder %s15, 0
      %p98 = por %p96, %p97
      %p99 = scmp.ne.s32.totalorder %s88, %s91
      %p100 = scmp.eq.s32.totalorder %s20, 7
      %p101 = por %p99, %p100
      %p102 = scmp.ne.s32.totalorder %s91, %s92
      %p103 = scmp.eq.s32.totalorder %s20, 0
      %p104 = por %p102, %p103
      %p105 = scmp.ne.s32.totalorder %s91, %s92
      %p106 = scmp.eq.s32.totalorder %s21, 7
      %p107 = por %p105, %p106
      %p109 = scmp.ne.s32.totalorder %s92, %s108
      %p110 = scmp.eq.s32.totalorder %s21, 0
      %p111 = por %p109, %p110
      %s112 = ssub.s32 %s22, %s41
      %s113 = ssub.s32 %s23, %s37
      %s114 = sor.u32 %s112, %s113
      %p115 = scmp.eq.s32.totalorder %s114, 0
      %s117 = sadd.s32 %s116, 1
      %s118 = scalar_select %p115, %s116, %s117
      %p121 = pneg %p115
      %p122 = scmp.eq.s32.totalorder %s15, 7
      %p123 = por %p121, %p122
      %p124 = scmp.ne.s32.totalorder %s116, %s119
      %p125 = scmp.eq.s32.totalorder %s15, 0
      %p126 = por %p124, %p125
      %p127 = scmp.ne.s32.totalorder %s116, %s119
      %p128 = scmp.eq.s32.totalorder %s20, 7
      %p129 = por %p127, %p128
      %p130 = scmp.ne.s32.totalorder %s119, %s120
      %p131 = scmp.eq.s32.totalorder %s20, 0
      %p132 = por %p130, %p131
      %p133 = scmp.ne.s32.totalorder %s119, %s120
      %p134 = scmp.eq.s32.totalorder %s21, 7
      %p135 = por %p133, %p134
      %p137 = scmp.ne.s32.totalorder %s120, %s136
      %p138 = scmp.eq.s32.totalorder %s21, 0
      %p139 = por %p137, %p138
      %s140 = ssub.s32 %s22, %s41
      %s141 = ssub.s32 %s23, %s37
      %s142 = sor.u32 %s140, %s141
      %p143 = scmp.eq.s32.totalorder %s142, 0
      %s145 = sadd.s32 %s144, 1
      %s146 = scalar_select %p143, %s144, %s145
      %p149 = pneg %p143
      %p150 = scmp.eq.s32.totalorder %s15, 7
      %p151 = por %p149, %p150
      %p152 = scmp.ne.s32.totalorder %s144, %s147
      %p153 = scmp.eq.s32.totalorder %s15, 0
      %p154 = por %p152, %p153
      %p155 = scmp.ne.s32.totalorder %s144, %s147
      %p156 = scmp.eq.s32.totalorder %s20, 7
      %p157 = por %p155, %p156
      %p158 = scmp.ne.s32.totalorder %s147, %s148
      %p159 = scmp.eq.s32.totalorder %s20, 0
      %p160 = por %p158, %p159
      %p161 = scmp.ne.s32.totalorder %s147, %s148
      %p162 = scmp.eq.s32.totalorder %s21, 7
      %p163 = por %p161, %p162
      %p165 = scmp.ne.s32.totalorder %s148, %s164
      %p166 = scmp.eq.s32.totalorder %s21, 0
      %p167 = por %p165, %p166
      %s168 = ssub.s32 %s22, %s41
      %s169 = ssub.s32 %s23, %s37
      %s170 = sor.u32 %s168, %s169
      %p171 = scmp.eq.s32.totalorder %s170, 0
      %s173 = sadd.s32 %s172, 1
      %s174 = scalar_select %p171, %s172, %s173
      %p177 = pneg %p171
      %p178 = scmp.eq.s32.totalorder %s15, 7
      %p179 = por %p177, %p178
      %p180 = scmp.ne.s32.totalorder %s172, %s175
      %p181 = scmp.eq.s32.totalorder %s15, 0
      %p182 = por %p180, %p181
      %p183 = scmp.ne.s32.totalorder %s172, %s175
      %p184 = scmp.eq.s32.totalorder %s20, 7
      %p185 = por %p183, %p184
      %p186 = scmp.ne.s32.totalorder %s175, %s176
      %p187 = scmp.eq.s32.totalorder %s20, 0
      %p188 = por %p186, %p187
      %p189 = scmp.ne.s32.totalorder %s175, %s176
      %p190 = scmp.eq.s32.totalorder %s21, 7
      %p191 = por %p189, %p190
      %p193 = scmp.ne.s32.totalorder %s176, %s192
      %p194 = scmp.eq.s32.totalorder %s21, 0
      %p195 = por %p193, %p194
      %s196 = sadd.s32 %s23, 1
      %s197 = sadd.s32 %s37, 1
      %s198 = ssub.s32 %s22, %s41
      %s199 = ssub.s32 %s196, %s197
      %s200 = sor.u32 %s198, %s199
      %p201 = scmp.eq.s32.totalorder %s200, 0
      %s203 = sadd.s32 %s202, 1
      %s204 = scalar_select %p201, %s202, %s203
      %p207 = pneg %p201
      %p208 = scmp.eq.s32.totalorder %s15, 7
      %p209 = por %p207, %p208
      %p210 = scmp.ne.s32.totalorder %s202, %s205
      %p211 = scmp.eq.s32.totalorder %s15, 0
      %p212 = por %p210, %p211
      %p213 = scmp.ne.s32.totalorder %s202, %s205
      %p214 = scmp.eq.s32.totalorder %s20, 7
      %p215 = por %p213, %p214
      %p216 = scmp.ne.s32.totalorder %s205, %s206
      %p217 = scmp.eq.s32.totalorder %s20, 0
      %p218 = por %p216, %p217
      %p219 = scmp.ne.s32.totalorder %s205, %s206
      %p220 = scmp.eq.s32.totalorder %s21, 7
      %p221 = por %p219, %p220
      %p223 = scmp.ne.s32.totalorder %s206, %s222
      %p224 = scmp.eq.s32.totalorder %s21, 0
      %p225 = por %p223, %p224
      %s226 = sadd.s32 %s23, 1
      %s227 = sadd.s32 %s37, 1
      %s228 = ssub.s32 %s22, %s41
      %s229 = ssub.s32 %s226, %s227
      %s230 = sor.u32 %s228, %s229
      %p231 = scmp.eq.s32.totalorder %s230, 0
      %s233 = sadd.s32 %s232, 1
      %s234 = scalar_select %p231, %s232, %s233
      %p237 = pneg %p231
      %p238 = scmp.eq.s32.totalorder %s15, 7
      %p239 = por %p237, %p238
      %p240 = scmp.ne.s32.totalorder %s232, %s235
      %p241 = scmp.eq.s32.totalorder %s15, 0
      %p242 = por %p240, %p241
      %p243 = scmp.ne.s32.totalorder %s232, %s235
      %p244 = scmp.eq.s32.totalorder %s20, 7
      %p245 = por %p243, %p244
      %p246 = scmp.ne.s32.totalorder %s235, %s236
      %p247 = scmp.eq.s32.totalorder %s20, 0
      %p248 = por %p246, %p247
      %p249 = scmp.ne.s32.totalorder %s235, %s236
      %p250 = scmp.eq.s32.totalorder %s21, 7
      %p251 = por %p249, %p250
      %p253 = scmp.ne.s32.totalorder %s236, %s252
      %p254 = scmp.eq.s32.totalorder %s21, 0
      %p255 = por %p253, %p254
      %s256 = ssub.s32 %s24, %s33
      %p257 = scmp.eq.s32.totalorder %s256, 0
      %s259 = sadd.s32 %s258, 1
      %s260 = scalar_select %p257, %s258, %s259
      %p263 = pneg %p257
      %p264 = scmp.eq.s32.totalorder %s15, 7
      %p265 = por %p263, %p264
      %p266 = scmp.ne.s32.totalorder %s258, %s261
      %p267 = scmp.eq.s32.totalorder %s15, 0
      %p268 = por %p266, %p267
      %p269 = scmp.ne.s32.totalorder %s258, %s261
      %p270 = scmp.eq.s32.totalorder %s20, 7
      %p271 = por %p269, %p270
      %p272 = scmp.ne.s32.totalorder %s261, %s262
      %p273 = scmp.eq.s32.totalorder %s20, 0
      %p274 = por %p272, %p273
      %p275 = scmp.ne.s32.totalorder %s261, %s262
      %p276 = scmp.eq.s32.totalorder %s21, 7
      %p277 = por %p275, %p276
      %p279 = scmp.ne.s32.totalorder %s262, %s278
      %p280 = scmp.eq.s32.totalorder %s21, 0
      %p281 = por %p279, %p280
      %s282 = ssub.s32 %s22, %s41
      %s283 = ssub.s32 %s23, %s37
      %s284 = sor.u32 %s282, %s283
      %s285 = ssub.s32 %s24, %s33
      %s286 = sor.u32 %s284, %s285
      %p287 = scmp.eq.s32.totalorder %s286, 0
      %s289 = sadd.s32 %s288, 1
      %s290 = scalar_select %p287, %s288, %s289
      %p293 = pneg %p287
      %p294 = scmp.eq.s32.totalorder %s15, 7
      %p295 = por %p293, %p294
      %p296 = scmp.ne.s32.totalorder %s288, %s291
      %p297 = scmp.eq.s32.totalorder %s15, 0
      %p298 = por %p296, %p297
      %p299 = scmp.ne.s32.totalorder %s288, %s291
      %p300 = scmp.eq.s32.totalorder %s20, 7
      %p301 = por %p299, %p300
      %p302 = scmp.ne.s32.totalorder %s291, %s292
      %p303 = scmp.eq.s32.totalorder %s20, 0
      %p304 = por %p302, %p303
      %p305 = scmp.ne.s32.totalorder %s291, %s292
      %p306 = scmp.eq.s32.totalorder %s21, 7
      %p307 = por %p305, %p306
      %p309 = scmp.ne.s32.totalorder %s292, %s308
      %p310 = scmp.eq.s32.totalorder %s21, 0
      %p311 = por %p309, %p310
      %p312 = scmp.le.s32.totalorder 1, %s15
      %p313 = scmp.lt.s32.totalorder %s15, 9
      %p314 = pnand %p312, %p313
      %p315 = pneg %p314
      // Predicated region
      $region9: #{network_block_forward.10} parent=5 // pred_check
        _
      $region10: #{network_block_forward.10} parent=5 // pred_check_branch
        %317 = sbr.rel (%p314) target = $region12
      $region11: #{network_block_forward.10} parent=5 // pred_region
        %s318 = ssub.s32 %s15, 1
        // Predicated region
        $region13: #{network_block_forward.10} parent=11 // pred_check
          %p319 = pneg %p55
        $region14: #{network_block_forward.10} parent=11 // pred_check_branch
          %321 = sbr.rel (%p319) target = $region16
        $region15: #{network_block_forward.10} parent=11 // pred_region
          _
        $region16: #{network_block_forward.10} parent=11 // pred_fallthru
          _
        // Predicated region
        $region17: #{network_block_forward.10} parent=11 // pred_check
          %p322 = pneg %p76
        $region18: #{network_block_forward.10} parent=11 // pred_check_branch
          %324 = sbr.rel (%p322) target = $region20
        $region19: #{network_block_forward.10} parent=11 // pred_region
          _
        $region20: #{network_block_forward.10} parent=11 // pred_fallthru
          _
        // Predicated region
        $region21: #{network_block_forward.10} parent=11 // pred_check
          %p325 = pneg %p274
        $region22: #{network_block_forward.10} parent=11 // pred_check_branch
          %327 = sbr.rel (%p325) target = $region24
        $region23: #{network_block_forward.10} parent=11 // pred_region
          %p328 = scmp.lt.s32.totalorder %s27, 0
          %s329 = scalar_select %p328, %s27, 0
          %s330 = smul.addr %s329, 8
          %s331 = scalar_lea.vmem %s8, %s330
        $region24: #{network_block_forward.10} parent=11 // pred_fallthru
          _
      $region12: #{network_block_forward.10} parent=5 // pred_fallthru
        _
      %p332 = scmp.lt.s32.totalorder %s15, 8
      // Predicated region
      $region25: #{network_block_forward.10} parent=5 // pred_check
        %p333 = pneg %p332
      $region26: #{network_block_forward.10} parent=5 // pred_check_branch
        %335 = sbr.rel (%p333) target = $region28
      $region27: #{network_block_forward.10} parent=5 // pred_region
        // Predicated region
        $region29: #{network_block_forward.10} parent=27 // pred_check
          %p336 = pneg %p98
        $region30: #{network_block_forward.10} parent=27 // pred_check_branch
          %338 = sbr.rel (%p336) target = $region32
        $region31: #{network_block_forward.10} parent=27 // pred_region
          %s339 = sand.u32 %s88, 1
          %s340 = sand.u32 %s88, 1
          %s341 = smul.addr %s340, 32
          %s342 = scalar_lea.vmem [#allocation2], %s341
          %s343 = smul.u32 2, %s22
          %s344 = smul.addr %s23, 2
          %s345 = smul.addr %s343, 18
          %s346 = sadd.s32 %s344, %s345
          %s347 = smul.addr %s346, 8
          %s348 = scalar_lea.vmem %s2, %s347
          // Predicated region
          $region33: #{network_block_forward.10} parent=31 // pred_check
            _
          $region34: #{network_block_forward.10} parent=31 // pred_check_branch
            %350 = sbr.rel (0) target = $region36
          $region35: #{network_block_forward.10} parent=31 // pred_region
            // Predicated region
            $region37: #{network_block_forward.10} parent=35 // pred_check
              _
            $region38: #{network_block_forward.10} parent=35 // pred_check_branch
              %352 = sbr.rel (0) target = $region40
            $region39: #{network_block_forward.10} parent=35 // pred_region
              // Predicated region
              $region52: #{network_block_forward.10} parent=39 // pred_check
                _
              $region53: #{network_block_forward.10} parent=39 // pred_check_branch
                %373 = sbr.rel (0) target = $region55
              $region54: #{network_block_forward.10} parent=39 // pred_region
                loop: start=0, step=1, limit=1
                $region56: #{network_block_forward.10} parent=54 // loop_pre_header
                  _
                $region57: #{network_block_forward.10} parent=54 // loop_header
                  %s375 = sphi 0, %s379
                  %p376 = scmp.ge.s32.totalorder %s375, 1
                  %s380 = sphi %s348, %s348
                  %s381 = sphi %s342, %s342
                $region58: #{network_block_forward.10} parent=54 // loop_header_branch
                  %378 = sbr.rel (%p376) target = $region62
                $region59: #{network_block_forward.10} parent=54 // loop_body
                  %v382 = vld [vmem:[%s380] sm:$0xff]
                  %383 = vst [vmem:[%s381] sm:$0xff] %v382
                  %v384 = vld [vmem:[%s380 + $0x8] sm:$0xff]
                  %385 = vst [vmem:[%s381 + $0x8] sm:$0xff] %v384
                  %v386 = vld [vmem:[%s380 + $0x90] sm:$0xff]
                  %387 = vst [vmem:[%s381 + $0x10] sm:$0xff] %v386
                  %v388 = vld [vmem:[%s380 + $0x98] sm:$0xff]
                  %389 = vst [vmem:[%s381 + $0x18] sm:$0xff] %v388
                $region60: #{network_block_forward.10} parent=54 // loop_footer
                  %s379 = sadd.s32 1, %s375
                $region61: #{network_block_forward.10} parent=54 // loop_footer_branch
                  %374 = sbr.rel target = $region57
                $region62: #{network_block_forward.10} parent=54 // loop_exit
                  _
              $region55: #{network_block_forward.10} parent=39 // pred_fallthru
                _
              // Predicated region
              $region63: #{network_block_forward.10} parent=39 // pred_check
                _
              $region64: #{network_block_forward.10} parent=39 // pred_check_branch
                %391 = sbr.rel target = $region66
              $region65: #{network_block_forward.10} parent=39 // pred_region
                _
              $region66: #{network_block_forward.10} parent=39 // pred_fallthru
                _
            $region40: #{network_block_forward.10} parent=35 // pred_fallthru
              _
            // Predicated region
            $region41: #{network_block_forward.10} parent=35 // pred_check
              _
            $region42: #{network_block_forward.10} parent=35 // pred_check_branch
              %354 = sbr.rel target = $region44
            $region43: #{network_block_forward.10} parent=35 // pred_region
              loop: start=0, step=1, limit=1
              $region45: #{network_block_forward.10} parent=43 // loop_pre_header
                _
              $region46: #{network_block_forward.10} parent=43 // loop_header
                %s357 = sphi 0, %s361
                %p358 = scmp.ge.s32.totalorder %s357, 1
                %s362 = sphi %s348, %s348
                %s363 = sphi %s342, %s342
              $region47: #{network_block_forward.10} parent=43 // loop_header_branch
                %360 = sbr.rel (%p358) target = $region51
              $region48: #{network_block_forward.10} parent=43 // loop_body
                %v364 = vld [vmem:[%s362] sm:$0xff]
                %365 = vst [vmem:[%s363] sm:$0xff] %v364
                %v366 = vld [vmem:[%s362 + $0x8] sm:$0xff]
                %367 = vst [vmem:[%s363 + $0x8] sm:$0xff] %v366
                %v368 = vld [vmem:[%s362 + $0x90] sm:$0xff]
                %369 = vst [vmem:[%s363 + $0x10] sm:$0xff] %v368
                %v370 = vld [vmem:[%s362 + $0x98] sm:$0xff]
                %371 = vst [vmem:[%s363 + $0x18] sm:$0xff] %v370
              $region49: #{network_block_forward.10} parent=43 // loop_footer
                %s361 = sadd.s32 1, %s357
              $region50: #{network_block_forward.10} parent=43 // loop_footer_branch
                %356 = sbr.rel target = $region46
              $region51: #{network_block_forward.10} parent=43 // loop_exit
                _
            $region44: #{network_block_forward.10} parent=35 // pred_fallthru
              _
          $region36: #{network_block_forward.10} parent=31 // pred_fallthru
            _
          %392 = vnop
        $region32: #{network_block_forward.10} parent=27 // pred_fallthru
          _
        // Predicated region
        $region67: #{network_block_forward.10} parent=27 // pred_check
          %p393 = pneg %p126
        $region68: #{network_block_forward.10} parent=27 // pred_check_branch
          %395 = sbr.rel (%p393) target = $region70
        $region69: #{network_block_forward.10} parent=27 // pred_region
          %s396 = sand.u32 %s116, 1
          %s397 = sand.u32 %s116, 1
          %s398 = smul.addr %s397, 32
          %s399 = scalar_lea.vmem [#allocation3], %s398
          %s400 = smul.u32 2, %s22
          %s401 = smul.addr %s23, 2
          %s402 = smul.addr %s400, 18
          %s403 = sadd.s32 %s401, %s402
          %s404 = smul.addr %s403, 8
          %s405 = scalar_lea.vmem %s3, %s404
          // Predicated region
          $region71: #{network_block_forward.10} parent=69 // pred_check
            _
          $region72: #{network_block_forward.10} parent=69 // pred_check_branch
            %407 = sbr.rel (0) target = $region74
          $region73: #{network_block_forward.10} parent=69 // pred_region
            // Predicated region
            $region75: #{network_block_forward.10} parent=73 // pred_check
              _
            $region76: #{network_block_forward.10} parent=73 // pred_check_branch
              %409 = sbr.rel (0) target = $region78
            $region77: #{network_block_forward.10} parent=73 // pred_region
              // Predicated region
              $region90: #{network_block_forward.10} parent=77 // pred_check
                _
              $region91: #{network_block_forward.10} parent=77 // pred_check_branch
                %430 = sbr.rel (0) target = $region93
              $region92: #{network_block_forward.10} parent=77 // pred_region
                loop: start=0, step=1, limit=1
                $region94: #{network_block_forward.10} parent=92 // loop_pre_header
                  _
                $region95: #{network_block_forward.10} parent=92 // loop_header
                  %s432 = sphi 0, %s436
                  %p433 = scmp.ge.s32.totalorder %s432, 1
                  %s437 = sphi %s405, %s405
                  %s438 = sphi %s399, %s399
                $region96: #{network_block_forward.10} parent=92 // loop_header_branch
                  %435 = sbr.rel (%p433) target = $region100
                $region97: #{network_block_forward.10} parent=92 // loop_body
                  %v439 = vld [vmem:[%s437] sm:$0xff]
                  %440 = vst [vmem:[%s438] sm:$0xff] %v439
                  %v441 = vld [vmem:[%s437 + $0x8] sm:$0xff]
                  %442 = vst [vmem:[%s438 + $0x8] sm:$0xff] %v441
                  %v443 = vld [vmem:[%s437 + $0x90] sm:$0xff]
                  %444 = vst [vmem:[%s438 + $0x10] sm:$0xff] %v443
                  %v445 = vld [vmem:[%s437 + $0x98] sm:$0xff]
                  %446 = vst [vmem:[%s438 + $0x18] sm:$0xff] %v445
                $region98: #{network_block_forward.10} parent=92 // loop_footer
                  %s436 = sadd.s32 1, %s432
                $region99: #{network_block_forward.10} parent=92 // loop_footer_branch
                  %431 = sbr.rel target = $region95
                $region100: #{network_block_forward.10} parent=92 // loop_exit
                  _
              $region93: #{network_block_forward.10} parent=77 // pred_fallthru
                _
              // Predicated region
              $region101: #{network_block_forward.10} parent=77 // pred_check
                _
              $region102: #{network_block_forward.10} parent=77 // pred_check_branch
                %448 = sbr.rel target = $region104
              $region103: #{network_block_forward.10} parent=77 // pred_region
                _
              $region104: #{network_block_forward.10} parent=77 // pred_fallthru
                _
            $region78: #{network_block_forward.10} parent=73 // pred_fallthru
              _
            // Predicated region
            $region79: #{network_block_forward.10} parent=73 // pred_check
              _
            $region80: #{network_block_forward.10} parent=73 // pred_check_branch
              %411 = sbr.rel target = $region82
            $region81: #{network_block_forward.10} parent=73 // pred_region
              loop: start=0, step=1, limit=1
              $region83: #{network_block_forward.10} parent=81 // loop_pre_header
                _
              $region84: #{network_block_forward.10} parent=81 // loop_header
                %s414 = sphi 0, %s418
                %p415 = scmp.ge.s32.totalorder %s414, 1
                %s419 = sphi %s405, %s405
                %s420 = sphi %s399, %s399
              $region85: #{network_block_forward.10} parent=81 // loop_header_branch
                %417 = sbr.rel (%p415) target = $region89
              $region86: #{network_block_forward.10} parent=81 // loop_body
                %v421 = vld [vmem:[%s419] sm:$0xff]
                %422 = vst [vmem:[%s420] sm:$0xff] %v421
                %v423 = vld [vmem:[%s419 + $0x8] sm:$0xff]
                %424 = vst [vmem:[%s420 + $0x8] sm:$0xff] %v423
                %v425 = vld [vmem:[%s419 + $0x90] sm:$0xff]
                %426 = vst [vmem:[%s420 + $0x10] sm:$0xff] %v425
                %v427 = vld [vmem:[%s419 + $0x98] sm:$0xff]
                %428 = vst [vmem:[%s420 + $0x18] sm:$0xff] %v427
              $region87: #{network_block_forward.10} parent=81 // loop_footer
                %s418 = sadd.s32 1, %s414
              $region88: #{network_block_forward.10} parent=81 // loop_footer_branch
                %413 = sbr.rel target = $region84
              $region89: #{network_block_forward.10} parent=81 // loop_exit
                _
            $region82: #{network_block_forward.10} parent=73 // pred_fallthru
              _
          $region74: #{network_block_forward.10} parent=69 // pred_fallthru
            _
          %449 = vnop
        $region70: #{network_block_forward.10} parent=27 // pred_fallthru
          _
        // Predicated region
        $region105: #{network_block_forward.10} parent=27 // pred_check
          %p450 = pneg %p154
        $region106: #{network_block_forward.10} parent=27 // pred_check_branch
          %452 = sbr.rel (%p450) target = $region108
        $region107: #{network_block_forward.10} parent=27 // pred_region
          %s453 = sand.u32 %s144, 1
          %s454 = sand.u32 %s144, 1
          %s455 = smul.addr %s454, 32
          %s456 = scalar_lea.vmem [#allocation4], %s455
          %s457 = smul.u32 2, %s22
          %s458 = smul.addr %s23, 2
          %s459 = smul.addr %s457, 18
          %s460 = sadd.s32 %s458, %s459
          %s461 = smul.addr %s460, 8
          %s462 = scalar_lea.vmem %s4, %s461
          // Predicated region
          $region109: #{network_block_forward.10} parent=107 // pred_check
            _
          $region110: #{network_block_forward.10} parent=107 // pred_check_branch
            %464 = sbr.rel (0) target = $region112
          $region111: #{network_block_forward.10} parent=107 // pred_region
            // Predicated region
            $region113: #{network_block_forward.10} parent=111 // pred_check
              _
            $region114: #{network_block_forward.10} parent=111 // pred_check_branch
              %466 = sbr.rel (0) target = $region116
            $region115: #{network_block_forward.10} parent=111 // pred_region
              // Predicated region
              $region128: #{network_block_forward.10} parent=115 // pred_check
                _
              $region129: #{network_block_forward.10} parent=115 // pred_check_branch
                %487 = sbr.rel (0) target = $region131
              $region130: #{network_block_forward.10} parent=115 // pred_region
                loop: start=0, step=1, limit=1
                $region132: #{network_block_forward.10} parent=130 // loop_pre_header
                  _
                $region133: #{network_block_forward.10} parent=130 // loop_header
                  %s489 = sphi 0, %s493
                  %p490 = scmp.ge.s32.totalorder %s489, 1
                  %s494 = sphi %s462, %s462
                  %s495 = sphi %s456, %s456
                $region134: #{network_block_forward.10} parent=130 // loop_header_branch
                  %492 = sbr.rel (%p490) target = $region138
                $region135: #{network_block_forward.10} parent=130 // loop_body
                  %v496 = vld [vmem:[%s494] sm:$0xff]
                  %497 = vst [vmem:[%s495] sm:$0xff] %v496
                  %v498 = vld [vmem:[%s494 + $0x8] sm:$0xff]
                  %499 = vst [vmem:[%s495 + $0x8] sm:$0xff] %v498
                  %v500 = vld [vmem:[%s494 + $0x90] sm:$0xff]
                  %501 = vst [vmem:[%s495 + $0x10] sm:$0xff] %v500
                  %v502 = vld [vmem:[%s494 + $0x98] sm:$0xff]
                  %503 = vst [vmem:[%s495 + $0x18] sm:$0xff] %v502
                $region136: #{network_block_forward.10} parent=130 // loop_footer
                  %s493 = sadd.s32 1, %s489
                $region137: #{network_block_forward.10} parent=130 // loop_footer_branch
                  %488 = sbr.rel target = $region133
                $region138: #{network_block_forward.10} parent=130 // loop_exit
                  _
              $region131: #{network_block_forward.10} parent=115 // pred_fallthru
                _
              // Predicated region
              $region139: #{network_block_forward.10} parent=115 // pred_check
                _
              $region140: #{network_block_forward.10} parent=115 // pred_check_branch
                %505 = sbr.rel target = $region142
              $region141: #{network_block_forward.10} parent=115 // pred_region
                _
              $region142: #{network_block_forward.10} parent=115 // pred_fallthru
                _
            $region116: #{network_block_forward.10} parent=111 // pred_fallthru
              _
            // Predicated region
            $region117: #{network_block_forward.10} parent=111 // pred_check
              _
            $region118: #{network_block_forward.10} parent=111 // pred_check_branch
              %468 = sbr.rel target = $region120
            $region119: #{network_block_forward.10} parent=111 // pred_region
              loop: start=0, step=1, limit=1
              $region121: #{network_block_forward.10} parent=119 // loop_pre_header
                _
              $region122: #{network_block_forward.10} parent=119 // loop_header
                %s471 = sphi 0, %s475
                %p472 = scmp.ge.s32.totalorder %s471, 1
                %s476 = sphi %s462, %s462
                %s477 = sphi %s456, %s456
              $region123: #{network_block_forward.10} parent=119 // loop_header_branch
                %474 = sbr.rel (%p472) target = $region127
              $region124: #{network_block_forward.10} parent=119 // loop_body
                %v478 = vld [vmem:[%s476] sm:$0xff]
                %479 = vst [vmem:[%s477] sm:$0xff] %v478
                %v480 = vld [vmem:[%s476 + $0x8] sm:$0xff]
                %481 = vst [vmem:[%s477 + $0x8] sm:$0xff] %v480
                %v482 = vld [vmem:[%s476 + $0x90] sm:$0xff]
                %483 = vst [vmem:[%s477 + $0x10] sm:$0xff] %v482
                %v484 = vld [vmem:[%s476 + $0x98] sm:$0xff]
                %485 = vst [vmem:[%s477 + $0x18] sm:$0xff] %v484
              $region125: #{network_block_forward.10} parent=119 // loop_footer
                %s475 = sadd.s32 1, %s471
              $region126: #{network_block_forward.10} parent=119 // loop_footer_branch
                %470 = sbr.rel target = $region122
              $region127: #{network_block_forward.10} parent=119 // loop_exit
                _
            $region120: #{network_block_forward.10} parent=111 // pred_fallthru
              _
          $region112: #{network_block_forward.10} parent=107 // pred_fallthru
            _
          %506 = vnop
        $region108: #{network_block_forward.10} parent=27 // pred_fallthru
          _
        // Predicated region
        $region143: #{network_block_forward.10} parent=27 // pred_check
          %p507 = pneg %p182
        $region144: #{network_block_forward.10} parent=27 // pred_check_branch
          %509 = sbr.rel (%p507) target = $region146
        $region145: #{network_block_forward.10} parent=27 // pred_region
          %s510 = sand.u32 %s172, 1
          %s511 = sand.u32 %s172, 1
          %s512 = smul.addr %s511, 32
          %s513 = scalar_lea.vmem [#allocation5], %s512
          %s514 = smul.u32 2, %s22
          %s515 = smul.addr %s23, 2
          %s516 = smul.addr %s514, 18
          %s517 = sadd.s32 %s515, %s516
          %s518 = smul.addr %s517, 8
          %s519 = scalar_lea.vmem %s5, %s518
          // Predicated region
          $region147: #{network_block_forward.10} parent=145 // pred_check
            _
          $region148: #{network_block_forward.10} parent=145 // pred_check_branch
            %521 = sbr.rel (0) target = $region150
          $region149: #{network_block_forward.10} parent=145 // pred_region
            // Predicated region
            $region151: #{network_block_forward.10} parent=149 // pred_check
              _
            $region152: #{network_block_forward.10} parent=149 // pred_check_branch
              %523 = sbr.rel (0) target = $region154
            $region153: #{network_block_forward.10} parent=149 // pred_region
              // Predicated region
              $region166: #{network_block_forward.10} parent=153 // pred_check
                _
              $region167: #{network_block_forward.10} parent=153 // pred_check_branch
                %544 = sbr.rel (0) target = $region169
              $region168: #{network_block_forward.10} parent=153 // pred_region
                loop: start=0, step=1, limit=1
                $region170: #{network_block_forward.10} parent=168 // loop_pre_header
                  _
                $region171: #{network_block_forward.10} parent=168 // loop_header
                  %s546 = sphi 0, %s550
                  %p547 = scmp.ge.s32.totalorder %s546, 1
                  %s551 = sphi %s519, %s519
                  %s552 = sphi %s513, %s513
                $region172: #{network_block_forward.10} parent=168 // loop_header_branch
                  %549 = sbr.rel (%p547) target = $region176
                $region173: #{network_block_forward.10} parent=168 // loop_body
                  %v553 = vld [vmem:[%s551] sm:$0xff]
                  %554 = vst [vmem:[%s552] sm:$0xff] %v553
                  %v555 = vld [vmem:[%s551 + $0x8] sm:$0xff]
                  %556 = vst [vmem:[%s552 + $0x8] sm:$0xff] %v555
                  %v557 = vld [vmem:[%s551 + $0x90] sm:$0xff]
                  %558 = vst [vmem:[%s552 + $0x10] sm:$0xff] %v557
                  %v559 = vld [vmem:[%s551 + $0x98] sm:$0xff]
                  %560 = vst [vmem:[%s552 + $0x18] sm:$0xff] %v559
                $region174: #{network_block_forward.10} parent=168 // loop_footer
                  %s550 = sadd.s32 1, %s546
                $region175: #{network_block_forward.10} parent=168 // loop_footer_branch
                  %545 = sbr.rel target = $region171
                $region176: #{network_block_forward.10} parent=168 // loop_exit
                  _
              $region169: #{network_block_forward.10} parent=153 // pred_fallthru
                _
              // Predicated region
              $region177: #{network_block_forward.10} parent=153 // pred_check
                _
              $region178: #{network_block_forward.10} parent=153 // pred_check_branch
                %562 = sbr.rel target = $region180
              $region179: #{network_block_forward.10} parent=153 // pred_region
                _
              $region180: #{network_block_forward.10} parent=153 // pred_fallthru
                _
            $region154: #{network_block_forward.10} parent=149 // pred_fallthru
              _
            // Predicated region
            $region155: #{network_block_forward.10} parent=149 // pred_check
              _
            $region156: #{network_block_forward.10} parent=149 // pred_check_branch
              %525 = sbr.rel target = $region158
            $region157: #{network_block_forward.10} parent=149 // pred_region
              loop: start=0, step=1, limit=1
              $region159: #{network_block_forward.10} parent=157 // loop_pre_header
                _
              $region160: #{network_block_forward.10} parent=157 // loop_header
                %s528 = sphi 0, %s532
                %p529 = scmp.ge.s32.totalorder %s528, 1
                %s533 = sphi %s519, %s519
                %s534 = sphi %s513, %s513
              $region161: #{network_block_forward.10} parent=157 // loop_header_branch
                %531 = sbr.rel (%p529) target = $region165
              $region162: #{network_block_forward.10} parent=157 // loop_body
                %v535 = vld [vmem:[%s533] sm:$0xff]
                %536 = vst [vmem:[%s534] sm:$0xff] %v535
                %v537 = vld [vmem:[%s533 + $0x8] sm:$0xff]
                %538 = vst [vmem:[%s534 + $0x8] sm:$0xff] %v537
                %v539 = vld [vmem:[%s533 + $0x90] sm:$0xff]
                %540 = vst [vmem:[%s534 + $0x10] sm:$0xff] %v539
                %v541 = vld [vmem:[%s533 + $0x98] sm:$0xff]
                %542 = vst [vmem:[%s534 + $0x18] sm:$0xff] %v541
              $region163: #{network_block_forward.10} parent=157 // loop_footer
                %s532 = sadd.s32 1, %s528
              $region164: #{network_block_forward.10} parent=157 // loop_footer_branch
                %527 = sbr.rel target = $region160
              $region165: #{network_block_forward.10} parent=157 // loop_exit
                _
            $region158: #{network_block_forward.10} parent=149 // pred_fallthru
              _
          $region150: #{network_block_forward.10} parent=145 // pred_fallthru
            _
          %563 = vnop
        $region146: #{network_block_forward.10} parent=27 // pred_fallthru
          _
        // Predicated region
        $region181: #{network_block_forward.10} parent=27 // pred_check
          %p564 = pneg %p212
        $region182: #{network_block_forward.10} parent=27 // pred_check_branch
          %566 = sbr.rel (%p564) target = $region184
        $region183: #{network_block_forward.10} parent=27 // pred_region
          %s567 = sand.u32 %s202, 1
          %s568 = sand.u32 %s202, 1
          %s569 = smul.addr %s568, 32
          %s570 = scalar_lea.vmem [#allocation6], %s569
          %s571 = sadd.s32 %s23, 1
          %s572 = smul.u32 2, %s22
          %s573 = smul.addr %s571, 2
          %s574 = smul.addr %s572, 18
          %s575 = sadd.s32 %s573, %s574
          %s576 = smul.addr %s575, 8
          %s577 = scalar_lea.vmem %s6, %s576
          // Predicated region
          $region185: #{network_block_forward.10} parent=183 // pred_check
            _
          $region186: #{network_block_forward.10} parent=183 // pred_check_branch
            %579 = sbr.rel (0) target = $region188
          $region187: #{network_block_forward.10} parent=183 // pred_region
            // Predicated region
            $region189: #{network_block_forward.10} parent=187 // pred_check
              _
            $region190: #{network_block_forward.10} parent=187 // pred_check_branch
              %581 = sbr.rel (0) target = $region192
            $region191: #{network_block_forward.10} parent=187 // pred_region
              // Predicated region
              $region204: #{network_block_forward.10} parent=191 // pred_check
                _
              $region205: #{network_block_forward.10} parent=191 // pred_check_branch
                %602 = sbr.rel (0) target = $region207
              $region206: #{network_block_forward.10} parent=191 // pred_region
                loop: start=0, step=1, limit=1
                $region208: #{network_block_forward.10} parent=206 // loop_pre_header
                  _
                $region209: #{network_block_forward.10} parent=206 // loop_header
                  %s604 = sphi 0, %s608
                  %p605 = scmp.ge.s32.totalorder %s604, 1
                  %s609 = sphi %s577, %s577
                  %s610 = sphi %s570, %s570
                $region210: #{network_block_forward.10} parent=206 // loop_header_branch
                  %607 = sbr.rel (%p605) target = $region214
                $region211: #{network_block_forward.10} parent=206 // loop_body
                  %v611 = vld [vmem:[%s609] sm:$0xff]
                  %612 = vst [vmem:[%s610] sm:$0xff] %v611
                  %v613 = vld [vmem:[%s609 + $0x8] sm:$0xff]
                  %614 = vst [vmem:[%s610 + $0x8] sm:$0xff] %v613
                  %v615 = vld [vmem:[%s609 + $0x90] sm:$0xff]
                  %616 = vst [vmem:[%s610 + $0x10] sm:$0xff] %v615
                  %v617 = vld [vmem:[%s609 + $0x98] sm:$0xff]
                  %618 = vst [vmem:[%s610 + $0x18] sm:$0xff] %v617
                $region212: #{network_block_forward.10} parent=206 // loop_footer
                  %s608 = sadd.s32 1, %s604
                $region213: #{network_block_forward.10} parent=206 // loop_footer_branch
                  %603 = sbr.rel target = $region209
                $region214: #{network_block_forward.10} parent=206 // loop_exit
                  _
              $region207: #{network_block_forward.10} parent=191 // pred_fallthru
                _
              // Predicated region
              $region215: #{network_block_forward.10} parent=191 // pred_check
                _
              $region216: #{network_block_forward.10} parent=191 // pred_check_branch
                %620 = sbr.rel target = $region218
              $region217: #{network_block_forward.10} parent=191 // pred_region
                _
              $region218: #{network_block_forward.10} parent=191 // pred_fallthru
                _
            $region192: #{network_block_forward.10} parent=187 // pred_fallthru
              _
            // Predicated region
            $region193: #{network_block_forward.10} parent=187 // pred_check
              _
            $region194: #{network_block_forward.10} parent=187 // pred_check_branch
              %583 = sbr.rel target = $region196
            $region195: #{network_block_forward.10} parent=187 // pred_region
              loop: start=0, step=1, limit=1
              $region197: #{network_block_forward.10} parent=195 // loop_pre_header
                _
              $region198: #{network_block_forward.10} parent=195 // loop_header
                %s586 = sphi 0, %s590
                %p587 = scmp.ge.s32.totalorder %s586, 1
                %s591 = sphi %s577, %s577
                %s592 = sphi %s570, %s570
              $region199: #{network_block_forward.10} parent=195 // loop_header_branch
                %589 = sbr.rel (%p587) target = $region203
              $region200: #{network_block_forward.10} parent=195 // loop_body
                %v593 = vld [vmem:[%s591] sm:$0xff]
                %594 = vst [vmem:[%s592] sm:$0xff] %v593
                %v595 = vld [vmem:[%s591 + $0x8] sm:$0xff]
                %596 = vst [vmem:[%s592 + $0x8] sm:$0xff] %v595
                %v597 = vld [vmem:[%s591 + $0x90] sm:$0xff]
                %598 = vst [vmem:[%s592 + $0x10] sm:$0xff] %v597
                %v599 = vld [vmem:[%s591 + $0x98] sm:$0xff]
                %600 = vst [vmem:[%s592 + $0x18] sm:$0xff] %v599
              $region201: #{network_block_forward.10} parent=195 // loop_footer
                %s590 = sadd.s32 1, %s586
              $region202: #{network_block_forward.10} parent=195 // loop_footer_branch
                %585 = sbr.rel target = $region198
              $region203: #{network_block_forward.10} parent=195 // loop_exit
                _
            $region196: #{network_block_forward.10} parent=187 // pred_fallthru
              _
          $region188: #{network_block_forward.10} parent=183 // pred_fallthru
            _
          %621 = vnop
        $region184: #{network_block_forward.10} parent=27 // pred_fallthru
          _
        // Predicated region
        $region219: #{network_block_forward.10} parent=27 // pred_check
          %p622 = pneg %p242
        $region220: #{network_block_forward.10} parent=27 // pred_check_branch
          %624 = sbr.rel (%p622) target = $region222
        $region221: #{network_block_forward.10} parent=27 // pred_region
          %s625 = sand.u32 %s232, 1
          %s626 = sand.u32 %s232, 1
          %s627 = smul.addr %s626, 32
          %s628 = scalar_lea.vmem [#allocation7], %s627
          %s629 = sadd.s32 %s23, 1
          %s630 = smul.u32 2, %s22
          %s631 = smul.addr %s629, 2
          %s632 = smul.addr %s630, 18
          %s633 = sadd.s32 %s631, %s632
          %s634 = smul.addr %s633, 8
          %s635 = scalar_lea.vmem %s7, %s634
          // Predicated region
          $region223: #{network_block_forward.10} parent=221 // pred_check
            _
          $region224: #{network_block_forward.10} parent=221 // pred_check_branch
            %637 = sbr.rel (0) target = $region226
          $region225: #{network_block_forward.10} parent=221 // pred_region
            // Predicated region
            $region227: #{network_block_forward.10} parent=225 // pred_check
              _
            $region228: #{network_block_forward.10} parent=225 // pred_check_branch
              %639 = sbr.rel (0) target = $region230
            $region229: #{network_block_forward.10} parent=225 // pred_region
              // Predicated region
              $region242: #{network_block_forward.10} parent=229 // pred_check
                _
              $region243: #{network_block_forward.10} parent=229 // pred_check_branch
                %660 = sbr.rel (0) target = $region245
              $region244: #{network_block_forward.10} parent=229 // pred_region
                loop: start=0, step=1, limit=1
                $region246: #{network_block_forward.10} parent=244 // loop_pre_header
                  _
                $region247: #{network_block_forward.10} parent=244 // loop_header
                  %s662 = sphi 0, %s666
                  %p663 = scmp.ge.s32.totalorder %s662, 1
                  %s667 = sphi %s635, %s635
                  %s668 = sphi %s628, %s628
                $region248: #{network_block_forward.10} parent=244 // loop_header_branch
                  %665 = sbr.rel (%p663) target = $region252
                $region249: #{network_block_forward.10} parent=244 // loop_body
                  %v669 = vld [vmem:[%s667] sm:$0xff]
                  %670 = vst [vmem:[%s668] sm:$0xff] %v669
                  %v671 = vld [vmem:[%s667 + $0x8] sm:$0xff]
                  %672 = vst [vmem:[%s668 + $0x8] sm:$0xff] %v671
                  %v673 = vld [vmem:[%s667 + $0x90] sm:$0xff]
                  %674 = vst [vmem:[%s668 + $0x10] sm:$0xff] %v673
                  %v675 = vld [vmem:[%s667 + $0x98] sm:$0xff]
                  %676 = vst [vmem:[%s668 + $0x18] sm:$0xff] %v675
                $region250: #{network_block_forward.10} parent=244 // loop_footer
                  %s666 = sadd.s32 1, %s662
                $region251: #{network_block_forward.10} parent=244 // loop_footer_branch
                  %661 = sbr.rel target = $region247
                $region252: #{network_block_forward.10} parent=244 // loop_exit
                  _
              $region245: #{network_block_forward.10} parent=229 // pred_fallthru
                _
              // Predicated region
              $region253: #{network_block_forward.10} parent=229 // pred_check
                _
              $region254: #{network_block_forward.10} parent=229 // pred_check_branch
                %678 = sbr.rel target = $region256
              $region255: #{network_block_forward.10} parent=229 // pred_region
                _
              $region256: #{network_block_forward.10} parent=229 // pred_fallthru
                _
            $region230: #{network_block_forward.10} parent=225 // pred_fallthru
              _
            // Predicated region
            $region231: #{network_block_forward.10} parent=225 // pred_check
              _
            $region232: #{network_block_forward.10} parent=225 // pred_check_branch
              %641 = sbr.rel target = $region234
            $region233: #{network_block_forward.10} parent=225 // pred_region
              loop: start=0, step=1, limit=1
              $region235: #{network_block_forward.10} parent=233 // loop_pre_header
                _
              $region236: #{network_block_forward.10} parent=233 // loop_header
                %s644 = sphi 0, %s648
                %p645 = scmp.ge.s32.totalorder %s644, 1
                %s649 = sphi %s635, %s635
                %s650 = sphi %s628, %s628
              $region237: #{network_block_forward.10} parent=233 // loop_header_branch
                %647 = sbr.rel (%p645) target = $region241
              $region238: #{network_block_forward.10} parent=233 // loop_body
                %v651 = vld [vmem:[%s649] sm:$0xff]
                %652 = vst [vmem:[%s650] sm:$0xff] %v651
                %v653 = vld [vmem:[%s649 + $0x8] sm:$0xff]
                %654 = vst [vmem:[%s650 + $0x8] sm:$0xff] %v653
                %v655 = vld [vmem:[%s649 + $0x90] sm:$0xff]
                %656 = vst [vmem:[%s650 + $0x10] sm:$0xff] %v655
                %v657 = vld [vmem:[%s649 + $0x98] sm:$0xff]
                %658 = vst [vmem:[%s650 + $0x18] sm:$0xff] %v657
              $region239: #{network_block_forward.10} parent=233 // loop_footer
                %s648 = sadd.s32 1, %s644
              $region240: #{network_block_forward.10} parent=233 // loop_footer_branch
                %643 = sbr.rel target = $region236
              $region241: #{network_block_forward.10} parent=233 // loop_exit
                _
            $region234: #{network_block_forward.10} parent=225 // pred_fallthru
              _
          $region226: #{network_block_forward.10} parent=221 // pred_fallthru
            _
          %679 = vnop
        $region222: #{network_block_forward.10} parent=27 // pred_fallthru
          _
      $region28: #{network_block_forward.10} parent=5 // pred_fallthru
        _
      %p680 = scmp.le.s32.totalorder 1, %s15
      %p681 = scmp.lt.s32.totalorder %s15, 9
      %p682 = pnand %p680, %p681
      %p683 = pneg %p682
      // Predicated region
      $region257: #{network_block_forward.10} parent=5 // pred_check
        _
      $region258: #{network_block_forward.10} parent=5 // pred_check_branch
        %685 = sbr.rel (%p682) target = $region260
      $region259: #{network_block_forward.10} parent=5 // pred_region
        %s686 = ssub.s32 %s15, 1
        %s687 = sand.u32 %s91, 1
        %s688 = sand.u32 %s91, 1
        %s689 = smul.addr %s688, 32
        %s690 = scalar_lea.vmem [#allocation2], %s689
        // Predicated region
        $region261: #{network_block_forward.10} parent=259 // pred_check
          %p691 = pneg %p104
        $region262: #{network_block_forward.10} parent=259 // pred_check_branch
          %693 = sbr.rel (%p691) target = $region264
        $region263: #{network_block_forward.10} parent=259 // pred_region
          _
        $region264: #{network_block_forward.10} parent=259 // pred_fallthru
          _
        %s694 = sand.u32 %s119, 1
        %s695 = sand.u32 %s119, 1
        %s696 = smul.addr %s695, 32
        %s697 = scalar_lea.vmem [#allocation3], %s696
        // Predicated region
        $region265: #{network_block_forward.10} parent=259 // pred_check
          %p698 = pneg %p132
        $region266: #{network_block_forward.10} parent=259 // pred_check_branch
          %700 = sbr.rel (%p698) target = $region268
        $region267: #{network_block_forward.10} parent=259 // pred_region
          _
        $region268: #{network_block_forward.10} parent=259 // pred_fallthru
          _
        %s701 = sand.u32 %s147, 1
        %s702 = sand.u32 %s147, 1
        %s703 = smul.addr %s702, 32
        %s704 = scalar_lea.vmem [#allocation4], %s703
        // Predicated region
        $region269: #{network_block_forward.10} parent=259 // pred_check
          %p705 = pneg %p160
        $region270: #{network_block_forward.10} parent=259 // pred_check_branch
          %707 = sbr.rel (%p705) target = $region272
        $region271: #{network_block_forward.10} parent=259 // pred_region
          _
        $region272: #{network_block_forward.10} parent=259 // pred_fallthru
          _
        %s708 = sand.u32 %s175, 1
        %s709 = sand.u32 %s175, 1
        %s710 = smul.addr %s709, 32
        %s711 = scalar_lea.vmem [#allocation5], %s710
        // Predicated region
        $region273: #{network_block_forward.10} parent=259 // pred_check
          %p712 = pneg %p188
        $region274: #{network_block_forward.10} parent=259 // pred_check_branch
          %714 = sbr.rel (%p712) target = $region276
        $region275: #{network_block_forward.10} parent=259 // pred_region
          _
        $region276: #{network_block_forward.10} parent=259 // pred_fallthru
          _
        %s715 = sand.u32 %s205, 1
        %s716 = sand.u32 %s205, 1
        %s717 = smul.addr %s716, 32
        %s718 = scalar_lea.vmem [#allocation6], %s717
        // Predicated region
        $region277: #{network_block_forward.10} parent=259 // pred_check
          %p719 = pneg %p218
        $region278: #{network_block_forward.10} parent=259 // pred_check_branch
          %721 = sbr.rel (%p719) target = $region280
        $region279: #{network_block_forward.10} parent=259 // pred_region
          _
        $region280: #{network_block_forward.10} parent=259 // pred_fallthru
          _
        %s722 = sand.u32 %s235, 1
        %s723 = sand.u32 %s235, 1
        %s724 = smul.addr %s723, 32
        %s725 = scalar_lea.vmem [#allocation7], %s724
        // Predicated region
        $region281: #{network_block_forward.10} parent=259 // pred_check
          %p726 = pneg %p248
        $region282: #{network_block_forward.10} parent=259 // pred_check_branch
          %728 = sbr.rel (%p726) target = $region284
        $region283: #{network_block_forward.10} parent=259 // pred_region
          _
        $region284: #{network_block_forward.10} parent=259 // pred_fallthru
          _
        %p729 = pneg %p55
        %p730 = pneg %p52
        %p731 = pneg %p76
        %p732 = pneg %p73
        %s733 = sand.u32 %s91, 1
        %s734 = sand.u32 %s91, 1
        %s735 = smul.addr %s734, 32
        %s736 = scalar_lea.vmem [#allocation2], %s735
        %p737 = pneg %p104
        %p738 = pneg %p101
        %s739 = sand.u32 %s119, 1
        %s740 = sand.u32 %s119, 1
        %s741 = smul.addr %s740, 32
        %s742 = scalar_lea.vmem [#allocation3], %s741
        %p743 = pneg %p132
        %p744 = pneg %p129
        %s745 = sand.u32 %s147, 1
        %s746 = sand.u32 %s147, 1
        %s747 = smul.addr %s746, 32
        %s748 = scalar_lea.vmem [#allocation4], %s747
        %p749 = pneg %p160
        %p750 = pneg %p157
        %s751 = sand.u32 %s175, 1
        %s752 = sand.u32 %s175, 1
        %s753 = smul.addr %s752, 32
        %s754 = scalar_lea.vmem [#allocation5], %s753
        %p755 = pneg %p188
        %p756 = pneg %p185
        %s757 = sand.u32 %s205, 1
        %s758 = sand.u32 %s205, 1
        %s759 = smul.addr %s758, 32
        %s760 = scalar_lea.vmem [#allocation6], %s759
        %p761 = pneg %p218
        %p762 = pneg %p215
        %s763 = sand.u32 %s235, 1
        %s764 = sand.u32 %s235, 1
        %s765 = smul.addr %s764, 32
        %s766 = scalar_lea.vmem [#allocation7], %s765
        %p767 = pneg %p248
        %p768 = pneg %p245
        %p769 = scmp.lt.s32.totalorder %s27, 0
        %s770 = scalar_select %p769, %s27, 0
        %s771 = smul.addr %s770, 8
        %s772 = scalar_lea.vmem %s8, %s771
        %p773 = pneg %p274
        %p774 = pneg %p271
        %p775 = pneg %p304
        %p776 = pneg %p301
        %s777 = sand.u32 %s291, 1
        %s778 = sand.u32 %s291, 1
        %s779 = smul.addr %s778, 16
        %s780 = scalar_lea.vmem [#allocation8], %s779
        %s781 = smul.u32 2, %s25
        %s782 = smul.u32 2, %s25
        %s783 = smul.u32 2, %s25
        %s784 = smul.u32 2, %s25
        %s785 = sadd.s32 %s26, 1
        %s786 = smul.u32 2, %s25
        %s787 = sadd.s32 %s26, 1
        %s788 = smul.u32 2, %s25
        %p789 = scmp.lt.s32.totalorder %s27, 0
        %s790 = scalar_select %p789, %s27, 0
        %s791 = smul.addr %s790, 8
        %s792 = scalar_lea.vmem %s8, %s791
        %s793 = smul.u32 2, %s25
        %v794 = vld [vmem:[%s0] sm:$0x1]
        %v795 = vld [vmem:[%s1] sm:$0x1]
        %v796 = vlaneseq
        %v797 = vshrl.u32 %v796, 7
        %v798 = vld [vmem:[%s690] sm:$0xff]
        %v799 = vld [vmem:[%s690 + $0x8] sm:$0x1]
        %v800 = vld [vmem:[%s690 + $0x10] sm:$0xff]
        %v801 = vld [vmem:[%s690 + $0x18] sm:$0x1]
        %v803 = vlaneseq
        %v804 = vshrl.u32 %v803, 7
        %v805 = vsub.s32 0, %v804
        %v806 = vrot.slane %v794, %v805
        %v808 = vmul.f32 %v798, %v806
        %v809 = vmul.f32 %v799, %v806
        %v810 = vmul.f32 %v800, %v806
        %v811 = vmul.f32 %v801, %v806
        %v813 = vlaneseq
        %v814 = vshrl.u32 %v813, 7
        %v815 = vsub.s32 0, %v814
        %v816 = vrot.slane %v795, %v815
        %v818 = vadd.f32 %v808, %v816
        %v819 = vadd.f32 %v809, %v816
        %v820 = vadd.f32 %v810, %v816
        %v821 = vadd.f32 %v811, %v816
        %v822 = vmax.f32 %v818, 0.0
        %v823 = vmax.f32 %v819, 0.0
        %v824 = vmax.f32 %v820, 0.0
        %v825 = vmax.f32 %v821, 0.0
        %s826 = smul.u32 %s26, 2
        %p827 = scmp.ne.s32.totalorder %s826, 0
        %p828 = scmp.ne.s32.totalorder %s826, 17
        %p829 = pnand %p827, %p828
        %p830 = pneg %p829
        %v831 = vmul.u32 %v797, 2
        %vm832 = vcmp.ne.s32.totalorder %v831, 0
        %vm833 = vcmp.ne.s32.totalorder %v831, 17
        %vm834 = vmand %vm832, %vm833
        %s835 = scalar_select %p830, 1, 0
        %v836 = vstv %s835
        %vm837 = vcmp.eq.s32.totalorder %v836, 1
        %vm838 = vmand %vm834, %vm837
        %v839 = vsel %vm838, 1, 0
        %vm840 = vcmp.eq.s32.totalorder %v839, 1
        %v841 = vsel %vm840, %v822, 0.0
        %v842 = vsel %vm840, %v824, 0.0
        %v843 = vld [vmem:[%s792] sm:$0xff]
        %v844 = vld [vmem:[%s792 + $0x8] sm:$0xff]
        %v845 = vld [vmem:[%s792 + $0x10] sm:$0xff]
        %v846 = vld [vmem:[%s792 + $0x18] sm:$0xff]
        %v847 = vld [vmem:[%s792 + $0x20] sm:$0xff]
        %v848 = vld [vmem:[%s792 + $0x28] sm:$0xff]
        %v849 = vld [vmem:[%s792 + $0x30] sm:$0xff]
        %v850 = vld [vmem:[%s792 + $0x38] sm:$0xff]
        %v851 = vld [vmem:[%s792 + $0x40] sm:$0xff]
        %v852 = vld [vmem:[%s792 + $0x48] sm:$0xff]
        %v853 = vld [vmem:[%s792 + $0x50] sm:$0xff]
        %v854 = vld [vmem:[%s792 + $0x58] sm:$0xff]
        %v855 = vld [vmem:[%s792 + $0x60] sm:$0xff]
        %v856 = vld [vmem:[%s792 + $0x68] sm:$0xff]
        %v857 = vld [vmem:[%s792 + $0x70] sm:$0xff]
        %v858 = vld [vmem:[%s792 + $0x78] sm:$0xff]
        %v859 = vld [vmem:[%s697] sm:$0xff]
        %v860 = vld [vmem:[%s697 + $0x10] sm:$0xff]
        %v861 = vmul.f32 %v859, %v806
        %v862 = vmul.f32 %v860, %v806
        %v863 = vadd.f32 %v861, %v816
        %v864 = vadd.f32 %v862, %v816
        %v865 = vmax.f32 %v863, 0.0
        %v866 = vmax.f32 %v864, 0.0
        %v867 = vadd.s32 %v831, 1
        %vm868 = vcmp.ne.s32.totalorder %v867, 0
        %vm869 = vcmp.ne.s32.totalorder %v867, 17
        %vm870 = vmand %vm868, %vm869
        %vm871 = vmand %vm870, %vm837
        %v872 = vsel %vm871, 1, 0
        %vm873 = vcmp.eq.s32.totalorder %v872, 1
        %v874 = vsel %vm873, %v865, 0.0
        %v875 = vsel %vm873, %v866, 0.0
        %s876 = scalar_lea.vmem %s792, 128
        %v877 = vld [vmem:[%s876] sm:$0xff]
        %v878 = vld [vmem:[%s876 + $0x8] sm:$0xff]
        %v879 = vld [vmem:[%s876 + $0x10] sm:$0xff]
        %v880 = vld [vmem:[%s876 + $0x18] sm:$0xff]
        %v881 = vld [vmem:[%s876 + $0x20] sm:$0xff]
        %v882 = vld [vmem:[%s876 + $0x28] sm:$0xff]
        %v883 = vld [vmem:[%s876 + $0x30] sm:$0xff]
        %v884 = vld [vmem:[%s876 + $0x38] sm:$0xff]
        %v885 = vld [vmem:[%s876 + $0x40] sm:$0xff]
        %v886 = vld [vmem:[%s876 + $0x48] sm:$0xff]
        %v887 = vld [vmem:[%s876 + $0x50] sm:$0xff]
        %v888 = vld [vmem:[%s876 + $0x58] sm:$0xff]
        %v889 = vld [vmem:[%s876 + $0x60] sm:$0xff]
        %v890 = vld [vmem:[%s876 + $0x68] sm:$0xff]
        %v891 = vld [vmem:[%s876 + $0x70] sm:$0xff]
        %v892 = vld [vmem:[%s876 + $0x78] sm:$0xff]
        %893 = vmatprep.subr.mxu0 0.0
        %894 = vmatpush1.msra.mxu0 %v877
        %895 = vmatprep.subr.mxu0 0.0
        %896 = vmatpush1.msra.mxu0 %v878
        %897 = vmatprep.subr.mxu0 0.0
        %898 = vmatpush1.msra.mxu0 %v879
        %899 = vmatprep.subr.mxu0 0.0
        %900 = vmatpush1.msra.mxu0 %v880
        %901 = vmatprep.subr.mxu0 0.0
        %902 = vmatpush1.msra.mxu0 %v881
        %903 = vmatprep.subr.mxu0 0.0
        %904 = vmatpush1.msra.mxu0 %v882
        %905 = vmatprep.subr.mxu0 0.0
        %906 = vmatpush1.msra.mxu0 %v883
        %907 = vmatprep.subr.mxu0 0.0
        %908 = vmatpush1.msra.mxu0 %v884
        %909 = vmatprep.subr.mxu0 0.0
        %910 = vmatpush1.msra.mxu0 %v885
        %911 = vmatprep.subr.mxu0 0.0
        %912 = vmatpush1.msra.mxu0 %v886
        %913 = vmatprep.subr.mxu0 0.0
        %914 = vmatpush1.msra.mxu0 %v887
        %915 = vmatprep.subr.mxu0 0.0
        %916 = vmatpush1.msra.mxu0 %v888
        %917 = vmatprep.subr.mxu0 0.0
        %918 = vmatpush1.msra.mxu0 %v889
        %919 = vmatprep.subr.mxu0 0.0
        %920 = vmatpush1.msra.mxu0 %v890
        %921 = vmatprep.subr.mxu0 0.0
        %922 = vmatpush1.msra.mxu0 %v891
        %923 = vmatprep.subr.mxu0 0.0
        %924 = vmatpush1.msra.mxu0 %v892
        %925 = vmatprep.subr.mxu0 0.0
        %926 = vmatpush1.msra.mxu0 0.0
        %927 = vmatprep.subr.mxu0 0.0
        %928 = vmatpush1.msra.mxu0 0.0
        %929 = vmatprep.subr.mxu0 0.0
        %930 = vmatpush1.msra.mxu0 0.0
        %931 = vmatprep.subr.mxu0 0.0
        %932 = vmatpush1.msra.mxu0 0.0
        %933 = vmatprep.subr.mxu0 0.0
        %934 = vmatpush1.msra.mxu0 0.0
        %935 = vmatprep.subr.mxu0 0.0
        %936 = vmatpush1.msra.mxu0 0.0
        %937 = vmatprep.subr.mxu0 0.0
        %938 = vmatpush1.msra.mxu0 0.0
        %939 = vmatprep.subr.mxu0 0.0
        %940 = vmatpush1.msra.mxu0 0.0
        %941 = vmatprep.subr.mxu0 0.0
        %942 = vmatpush1.msra.mxu0 0.0
        %943 = vmatprep.subr.mxu0 0.0
        %944 = vmatpush1.msra.mxu0 0.0
        %945 = vmatprep.subr.mxu0 0.0
        %946 = vmatpush1.msra.mxu0 0.0
        %947 = vmatprep.subr.mxu0 0.0
        %948 = vmatpush1.msra.mxu0 0.0
        %949 = vmatprep.subr.mxu0 0.0
        %950 = vmatpush1.msra.mxu0 0.0
        %951 = vmatprep.subr.mxu0 0.0
        %952 = vmatpush1.msra.mxu0 0.0
        %953 = vmatprep.subr.mxu0 0.0
        %954 = vmatpush1.msra.mxu0 0.0
        %955 = vmatprep.subr.mxu0 0.0
        %956 = vmatpush1.msra.mxu0 0.0
        %957 = vmatprep.mubr.f32.mxu0 0.0
        %958 = vmatmul.mubr.f32.gmra.mrb[0].mxu0 %v874
        %v959 = vpop.f32.mrb[0].mxu0
        %v960 = vadd.f32 0.0, %v959
        %v961 = vpop.f32.mrb[0].mxu0
        %962 = vmatprep.mubr.f32.mxu0 0.0
        %963 = vmatmul.mubr.f32.gmra.mrb[0].mxu0 %v875
        %v964 = vpop.f32.mrb[0].mxu0
        %v965 = vadd.f32 0.0, %v964
        %v966 = vpop.f32.mrb[0].mxu0
        %967 = vdwg.mxu0
        %968 = vmatprep.subr.mxu0 0.0
        %969 = vmatpush1.msra.mxu0 %v843
        %970 = vmatprep.subr.mxu0 0.0
        %971 = vmatpush1.msra.mxu0 %v844
        %972 = vmatprep.subr.mxu0 0.0
        %973 = vmatpush1.msra.mxu0 %v845
        %974 = vmatprep.subr.mxu0 0.0
        %975 = vmatpush1.msra.mxu0 %v846
        %976 = vmatprep.subr.mxu0 0.0
        %977 = vmatpush1.msra.mxu0 %v847
        %978 = vmatprep.subr.mxu0 0.0
        %979 = vmatpush1.msra.mxu0 %v848
        %980 = vmatprep.subr.mxu0 0.0
        %981 = vmatpush1.msra.mxu0 %v849
        %982 = vmatprep.subr.mxu0 0.0
        %983 = vmatpush1.msra.mxu0 %v850
        %984 = vmatprep.subr.mxu0 0.0
        %985 = vmatpush1.msra.mxu0 %v851
        %986 = vmatprep.subr.mxu0 0.0
        %987 = vmatpush1.msra.mxu0 %v852
        %988 = vmatprep.subr.mxu0 0.0
        %989 = vmatpush1.msra.mxu0 %v853
        %990 = vmatprep.subr.mxu0 0.0
        %991 = vmatpush1.msra.mxu0 %v854
        %992 = vmatprep.subr.mxu0 0.0
        %993 = vmatpush1.msra.mxu0 %v855
        %994 = vmatprep.subr.mxu0 0.0
        %995 = vmatpush1.msra.mxu0 %v856
        %996 = vmatprep.subr.mxu0 0.0
        %997 = vmatpush1.msra.mxu0 %v857
        %998 = vmatprep.subr.mxu0 0.0
        %999 = vmatpush1.msra.mxu0 %v858
        %1000 = vmatprep.subr.mxu0 0.0
        %1001 = vmatpush1.msra.mxu0 0.0
        %1002 = vmatprep.subr.mxu0 0.0
        %1003 = vmatpush1.msra.mxu0 0.0
        %1004 = vmatprep.subr.mxu0 0.0
        %1005 = vmatpush1.msra.mxu0 0.0
        %1006 = vmatprep.subr.mxu0 0.0
        %1007 = vmatpush1.msra.mxu0 0.0
        %1008 = vmatprep.subr.mxu0 0.0
        %1009 = vmatpush1.msra.mxu0 0.0
        %1010 = vmatprep.subr.mxu0 0.0
        %1011 = vmatpush1.msra.mxu0 0.0
        %1012 = vmatprep.subr.mxu0 0.0
        %1013 = vmatpush1.msra.mxu0 0.0
        %1014 = vmatprep.subr.mxu0 0.0
        %1015 = vmatpush1.msra.mxu0 0.0
        %1016 = vmatprep.subr.mxu0 0.0
        %1017 = vmatpush1.msra.mxu0 0.0
        %1018 = vmatprep.subr.mxu0 0.0
        %1019 = vmatpush1.msra.mxu0 0.0
        %1020 = vmatprep.subr.mxu0 0.0
        %1021 = vmatpush1.msra.mxu0 0.0
        %1022 = vmatprep.subr.mxu0 0.0
        %1023 = vmatpush1.msra.mxu0 0.0
        %1024 = vmatprep.subr.mxu0 0.0
        %1025 = vmatpush1.msra.mxu0 0.0
        %1026 = vmatprep.subr.mxu0 0.0
        %1027 = vmatpush1.msra.mxu0 0.0
        %1028 = vmatprep.subr.mxu0 0.0
        %1029 = vmatpush1.msra.mxu0 0.0
        %1030 = vmatprep.subr.mxu0 0.0
        %1031 = vmatpush1.msra.mxu0 0.0
        %1032 = vmatprep.mubr.f32.mxu0 0.0
        %1033 = vmatmul.mubr.f32.gmra.mrb[0].mxu0 %v841
        %v1034 = vpop.f32.mrb[0].mxu0
        %v1035 = vadd.f32 %v960, %v1034
        %v1036 = vpop.f32.mrb[0].mxu0
        %1037 = vmatprep.mubr.f32.mxu0 0.0
        %1038 = vmatmul.mubr.f32.gmra.mrb[0].mxu0 %v842
        %v1039 = vpop.f32.mrb[0].mxu0
        %v1040 = vadd.f32 %v965, %v1039
        %v1041 = vpop.f32.mrb[0].mxu0
        %1042 = vdwg.mxu0
        %v1043 = vadd.s32 %v831, 2
        %vm1044 = vcmp.ne.s32.totalorder %v1043, 0
        %vm1045 = vcmp.ne.s32.totalorder %v1043, 17
        %vm1046 = vmand %vm1044, %vm1045
        %vm1047 = vmand %vm1046, %vm837
        %v1048 = vsel %vm1047, 1, 0
        %vm1049 = vcmp.eq.s32.totalorder %v1048, 1
        %vm1054 = vcmask 1046528
        %v1055 = vrot.slane %v822, 1
        %v1056 = vrot.slane %v823, 1
        %v1057 = vsel %vm1054, %v1055, %v1056
        %v1058 = vrot.slane %v824, 1
        %v1059 = vrot.slane %v825, 1
        %v1060 = vsel %vm1054, %v1058, %v1059
        %v1063 = vsel %vm1049, %v1057, 0.0
        %v1064 = vsel %vm1049, %v1060, 0.0
        %s1065 = scalar_lea.vmem %s792, 256
        %v1066 = vld [vmem:[%s1065] sm:$0xff]
        %v1067 = vld [vmem:[%s1065 + $0x8] sm:$0xff]
        %v1068 = vld [vmem:[%s1065 + $0x10] sm:$0xff]
        %v1069 = vld [vmem:[%s1065 + $0x18] sm:$0xff]
        %v1070 = vld [vmem:[%s1065 + $0x20] sm:$0xff]
        %v1071 = vld [vmem:[%s1065 + $0x28] sm:$0xff]
        %v1072 = vld [vmem:[%s1065 + $0x30] sm:$0xff]
        %v1073 = vld [vmem:[%s1065 + $0x38] sm:$0xff]
        %v1074 = vld [vmem:[%s1065 + $0x40] sm:$0xff]
        %v1075 = vld [vmem:[%s1065 + $0x48] sm:$0xff]
        %v1076 = vld [vmem:[%s1065 + $0x50] sm:$0xff]
        %v1077 = vld [vmem:[%s1065 + $0x58] sm:$0xff]
        %v1078 = vld [vmem:[%s1065 + $0x60] sm:$0xff]
        %v1079 = vld [vmem:[%s1065 + $0x68] sm:$0xff]
        %v1080 = vld [vmem:[%s1065 + $0x70] sm:$0xff]
        %v1081 = vld [vmem:[%s1065 + $0x78] sm:$0xff]
        %1082 = vmatprep.subr.mxu0 0.0
        %1083 = vmatpush1.msra.mxu0 %v1066
        %1084 = vmatprep.subr.mxu0 0.0
        %1085 = vmatpush1.msra.mxu0 %v1067
        %1086 = vmatprep.subr.mxu0 0.0
        %1087 = vmatpush1.msra.mxu0 %v1068
        %1088 = vmatprep.subr.mxu0 0.0
        %1089 = vmatpush1.msra.mxu0 %v1069
        %1090 = vmatprep.subr.mxu0 0.0
        %1091 = vmatpush1.msra.mxu0 %v1070
        %1092 = vmatprep.subr.mxu0 0.0
        %1093 = vmatpush1.msra.mxu0 %v1071
        %1094 = vmatprep.subr.mxu0 0.0
        %1095 = vmatpush1.msra.mxu0 %v1072
        %1096 = vmatprep.subr.mxu0 0.0
        %1097 = vmatpush1.msra.mxu0 %v1073
        %1098 = vmatprep.subr.mxu0 0.0
        %1099 = vmatpush1.msra.mxu0 %v1074
        %1100 = vmatprep.subr.mxu0 0.0
        %1101 = vmatpush1.msra.mxu0 %v1075
        %1102 = vmatprep.subr.mxu0 0.0
        %1103 = vmatpush1.msra.mxu0 %v1076
        %1104 = vmatprep.subr.mxu0 0.0
        %1105 = vmatpush1.msra.mxu0 %v1077
        %1106 = vmatprep.subr.mxu0 0.0
        %1107 = vmatpush1.msra.mxu0 %v1078
        %1108 = vmatprep.subr.mxu0 0.0
        %1109 = vmatpush1.msra.mxu0 %v1079
        %1110 = vmatprep.subr.mxu0 0.0
        %1111 = vmatpush1.msra.mxu0 %v1080
        %1112 = vmatprep.subr.mxu0 0.0
        %1113 = vmatpush1.msra.mxu0 %v1081
        %1114 = vmatprep.subr.mxu0 0.0
        %1115 = vmatpush1.msra.mxu0 0.0
        %1116 = vmatprep.subr.mxu0 0.0
        %1117 = vmatpush1.msra.mxu0 0.0
        %1118 = vmatprep.subr.mxu0 0.0
        %1119 = vmatpush1.msra.mxu0 0.0
        %1120 = vmatprep.subr.mxu0 0.0
        %1121 = vmatpush1.msra.mxu0 0.0
        %1122 = vmatprep.subr.mxu0 0.0
        %1123 = vmatpush1.msra.mxu0 0.0
        %1124 = vmatprep.subr.mxu0 0.0
        %1125 = vmatpush1.msra.mxu0 0.0
        %1126 = vmatprep.subr.mxu0 0.0
        %1127 = vmatpush1.msra.mxu0 0.0
        %1128 = vmatprep.subr.mxu0 0.0
        %1129 = vmatpush1.msra.mxu0 0.0
        %1130 = vmatprep.subr.mxu0 0.0
        %1131 = vmatpush1.msra.mxu0 0.0
        %1132 = vmatprep.subr.mxu0 0.0
        %1133 = vmatpush1.msra.mxu0 0.0
        %1134 = vmatprep.subr.mxu0 0.0
        %1135 = vmatpush1.msra.mxu0 0.0
        %1136 = vmatprep.subr.mxu0 0.0
        %1137 = vmatpush1.msra.mxu0 0.0
        %1138 = vmatprep.subr.mxu0 0.0
        %1139 = vmatpush1.msra.mxu0 0.0
        %1140 = vmatprep.subr.mxu0 0.0
        %1141 = vmatpush1.msra.mxu0 0.0
        %1142 = vmatprep.subr.mxu0 0.0
        %1143 = vmatpush1.msra.mxu0 0.0
        %1144 = vmatprep.subr.mxu0 0.0
        %1145 = vmatpush1.msra.mxu0 0.0
        %1146 = vmatprep.mubr.f32.mxu0 0.0
        %1147 = vmatmul.mubr.f32.gmra.mrb[0].mxu0 %v1063
        %v1148 = vpop.f32.mrb[0].mxu0
        %v1149 = vadd.f32 0.0, %v1148
        %v1150 = vpop.f32.mrb[0].mxu0
        %1151 = vmatprep.mubr.f32.mxu0 0.0
        %1152 = vmatmul.mubr.f32.gmra.mrb[0].mxu0 %v1064
        %v1153 = vpop.f32.mrb[0].mxu0
        %v1154 = vadd.f32 0.0, %v1153
        %v1155 = vpop.f32.mrb[0].mxu0
        %1156 = vdwg.mxu0
        %v1157 = vadd.f32 %v1035, %v1149
        %v1158 = vadd.f32 %v1040, %v1154
        %v1159 = vld [vmem:[%s704] sm:$0xff]
        %v1160 = vld [vmem:[%s704 + $0x8] sm:$0x1]
        %v1161 = vld [vmem:[%s704 + $0x10] sm:$0xff]
        %v1162 = vld [vmem:[%s704 + $0x18] sm:$0x1]
        %v1163 = vmul.f32 %v1159, %v806
        %v1164 = vmul.f32 %v1160, %v806
        %v1165 = vmul.f32 %v1161, %v806
        %v1166 = vmul.f32 %v1162, %v806
        %v1167 = vadd.f32 %v1163, %v816
        %v1168 = vadd.f32 %v1164, %v816
        %v1169 = vadd.f32 %v1165, %v816
        %v1170 = vadd.f32 %v1166, %v816
        %v1171 = vmax.f32 %v1167, 0.0
        %v1172 = vmax.f32 %v1168, 0.0
        %v1173 = vmax.f32 %v1169, 0.0
        %v1174 = vmax.f32 %v1170, 0.0
        %s1175 = sadd.s32 %s826, 1
        %p1176 = scmp.ne.s32.totalorder %s1175, 0
        %p1177 = scmp.ne.s32.totalorder %s1175, 17
        %p1178 = pnand %p1176, %p1177
        %p1179 = pneg %p1178
        %s1180 = scalar_select %p1179, 1, 0
        %v1181 = vstv %s1180
        %vm1182 = vcmp.eq.s32.totalorder %v1181, 1
        %vm1183 = vmand %vm834, %vm1182
        %v1184 = vsel %vm1183, 1, 0
        %vm1185 = vcmp.eq.s32.totalorder %v1184, 1
        %v1186 = vsel %vm1185, %v1171, 0.0
        %v1187 = vsel %vm1185, %v1173, 0.0
        %s1188 = scalar_lea.vmem %s792, 384
        %v1189 = vld [vmem:[%s1188] sm:$0xff]
        %v1190 = vld [vmem:[%s1188 + $0x8] sm:$0xff]
        %v1191 = vld [vmem:[%s1188 + $0x10] sm:$0xff]
        %v1192 = vld [vmem:[%s1188 + $0x18] sm:$0xff]
        %v1193 = vld [vmem:[%s1188 + $0x20] sm:$0xff]
        %v1194 = vld [vmem:[%s1188 + $0x28] sm:$0xff]
        %v1195 = vld [vmem:[%s1188 + $0x30] sm:$0xff]
        %v1196 = vld [vmem:[%s1188 + $0x38] sm:$0xff]
        %v1197 = vld [vmem:[%s1188 + $0x40] sm:$0xff]
        %v1198 = vld [vmem:[%s1188 + $0x48] sm:$0xff]
        %v1199 = vld [vmem:[%s1188 + $0x50] sm:$0xff]
        %v1200 = vld [vmem:[%s1188 + $0x58] sm:$0xff]
        %v1201 = vld [vmem:[%s1188 + $0x60] sm:$0xff]
        %v1202 = vld [vmem:[%s1188 + $0x68] sm:$0xff]
        %v1203 = vld [vmem:[%s1188 + $0x70] sm:$0xff]
        %v1204 = vld [vmem:[%s1188 + $0x78] sm:$0xff]
        %1205 = vmatprep.subr.mxu0 0.0
        %1206 = vmatpush1.msra.mxu0 %v1189
        %1207 = vmatprep.subr.mxu0 0.0
        %1208 = vmatpush1.msra.mxu0 %v1190
        %1209 = vmatprep.subr.mxu0 0.0
        %1210 = vmatpush1.msra.mxu0 %v1191
        %1211 = vmatprep.subr.mxu0 0.0
        %1212 = vmatpush1.msra.mxu0 %v1192
        %1213 = vmatprep.subr.mxu0 0.0
        %1214 = vmatpush1.msra.mxu0 %v1193
        %1215 = vmatprep.subr.mxu0 0.0
        %1216 = vmatpush1.msra.mxu0 %v1194
        %1217 = vmatprep.subr.mxu0 0.0
        %1218 = vmatpush1.msra.mxu0 %v1195
        %1219 = vmatprep.subr.mxu0 0.0
        %1220 = vmatpush1.msra.mxu0 %v1196
        %1221 = vmatprep.subr.mxu0 0.0
        %1222 = vmatpush1.msra.mxu0 %v1197
        %1223 = vmatprep.subr.mxu0 0.0
        %1224 = vmatpush1.msra.mxu0 %v1198
        %1225 = vmatprep.subr.mxu0 0.0
        %1226 = vmatpush1.msra.mxu0 %v1199
        %1227 = vmatprep.subr.mxu0 0.0
        %1228 = vmatpush1.msra.mxu0 %v1200
        %1229 = vmatprep.subr.mxu0 0.0
        %1230 = vmatpush1.msra.mxu0 %v1201
        %1231 = vmatprep.subr.mxu0 0.0
        %1232 = vmatpush1.msra.mxu0 %v1202
        %1233 = vmatprep.subr.mxu0 0.0
        %1234 = vmatpush1.msra.mxu0 %v1203
        %1235 = vmatprep.subr.mxu0 0.0
        %1236 = vmatpush1.msra.mxu0 %v1204
        %1237 = vmatprep.subr.mxu0 0.0
        %1238 = vmatpush1.msra.mxu0 0.0
        %1239 = vmatprep.subr.mxu0 0.0
        %1240 = vmatpush1.msra.mxu0 0.0
        %1241 = vmatprep.subr.mxu0 0.0
        %1242 = vmatpush1.msra.mxu0 0.0
        %1243 = vmatprep.subr.mxu0 0.0
        %1244 = vmatpush1.msra.mxu0 0.0
        %1245 = vmatprep.subr.mxu0 0.0
        %1246 = vmatpush1.msra.mxu0 0.0
        %1247 = vmatprep.subr.mxu0 0.0
        %1248 = vmatpush1.msra.mxu0 0.0
        %1249 = vmatprep.subr.mxu0 0.0
        %1250 = vmatpush1.msra.mxu0 0.0
        %1251 = vmatprep.subr.mxu0 0.0
        %1252 = vmatpush1.msra.mxu0 0.0
        %1253 = vmatprep.subr.mxu0 0.0
        %1254 = vmatpush1.msra.mxu0 0.0
        %1255 = vmatprep.subr.mxu0 0.0
        %1256 = vmatpush1.msra.mxu0 0.0
        %1257 = vmatprep.subr.mxu0 0.0
        %1258 = vmatpush1.msra.mxu0 0.0
        %1259 = vmatprep.subr.mxu0 0.0
        %1260 = vmatpush1.msra.mxu0 0.0
        %1261 = vmatprep.subr.mxu0 0.0
        %1262 = vmatpush1.msra.mxu0 0.0
        %1263 = vmatprep.subr.mxu0 0.0
        %1264 = vmatpush1.msra.mxu0 0.0
        %1265 = vmatprep.subr.mxu0 0.0
        %1266 = vmatpush1.msra.mxu0 0.0
        %1267 = vmatprep.subr.mxu0 0.0
        %1268 = vmatpush1.msra.mxu0 0.0
        %1269 = vmatprep.mubr.f32.mxu0 0.0
        %1270 = vmatmul.mubr.f32.gmra.mrb[0].mxu0 %v1186
        %v1271 = vpop.f32.mrb[0].mxu0
        %v1272 = vadd.f32 0.0, %v1271
        %v1273 = vpop.f32.mrb[0].mxu0
        %1274 = vmatprep.mubr.f32.mxu0 0.0
        %1275 = vmatmul.mubr.f32.gmra.mrb[0].mxu0 %v1187
        %v1276 = vpop.f32.mrb[0].mxu0
        %v1277 = vadd.f32 0.0, %v1276
        %v1278 = vpop.f32.mrb[0].mxu0
        %1279 = vdwg.mxu0
        %v1280 = vadd.f32 %v1157, %v1272
        %v1281 = vadd.f32 %v1158, %v1277
        %v1282 = vld [vmem:[%s711] sm:$0xff]
        %v1283 = vld [vmem:[%s711 + $0x10] sm:$0xff]
        %v1284 = vmul.f32 %v1282, %v806
        %v1285 = vmul.f32 %v1283, %v806
        %v1286 = vadd.f32 %v1284, %v816
        %v1287 = vadd.f32 %v1285, %v816
        %v1288 = vmax.f32 %v1286, 0.0
        %v1289 = vmax.f32 %v1287, 0.0
        %vm1290 = vmand %vm870, %vm1182
        %v1291 = vsel %vm1290, 1, 0
        %vm1292 = vcmp.eq.s32.totalorder %v1291, 1
        %v1293 = vsel %vm1292, %v1288, 0.0
        %v1294 = vsel %vm1292, %v1289, 0.0
        %s1295 = scalar_lea.vmem %s792, 512
        %v1296 = vld [vmem:[%s1295] sm:$0xff]
        %v1297 = vld [vmem:[%s1295 + $0x8] sm:$0xff]
        %v1298 = vld [vmem:[%s1295 + $0x10] sm:$0xff]
        %v1299 = vld [vmem:[%s1295 + $0x18] sm:$0xff]
        %v1300 = vld [vmem:[%s1295 + $0x20] sm:$0xff]
        %v1301 = vld [vmem:[%s1295 + $0x28] sm:$0xff]
        %v1302 = vld [vmem:[%s1295 + $0x30] sm:$0xff]
        %v1303 = vld [vmem:[%s1295 + $0x38] sm:$0xff]
        %v1304 = vld [vmem:[%s1295 + $0x40] sm:$0xff]
        %v1305 = vld [vmem:[%s1295 + $0x48] sm:$0xff]
        %v1306 = vld [vmem:[%s1295 + $0x50] sm:$0xff]
        %v1307 = vld [vmem:[%s1295 + $0x58] sm:$0xff]
        %v1308 = vld [vmem:[%s1295 + $0x60] sm:$0xff]
        %v1309 = vld [vmem:[%s1295 + $0x68] sm:$0xff]
        %v1310 = vld [vmem:[%s1295 + $0x70] sm:$0xff]
        %v1311 = vld [vmem:[%s1295 + $0x78] sm:$0xff]
        %1312 = vmatprep.subr.mxu0 0.0
        %1313 = vmatpush1.msra.mxu0 %v1296
        %1314 = vmatprep.subr.mxu0 0.0
        %1315 = vmatpush1.msra.mxu0 %v1297
        %1316 = vmatprep.subr.mxu0 0.0
        %1317 = vmatpush1.msra.mxu0 %v1298
        %1318 = vmatprep.subr.mxu0 0.0
        %1319 = vmatpush1.msra.mxu0 %v1299
        %1320 = vmatprep.subr.mxu0 0.0
        %1321 = vmatpush1.msra.mxu0 %v1300
        %1322 = vmatprep.subr.mxu0 0.0
        %1323 = vmatpush1.msra.mxu0 %v1301
        %1324 = vmatprep.subr.mxu0 0.0
        %1325 = vmatpush1.msra.mxu0 %v1302
        %1326 = vmatprep.subr.mxu0 0.0
        %1327 = vmatpush1.msra.mxu0 %v1303
        %1328 = vmatprep.subr.mxu0 0.0
        %1329 = vmatpush1.msra.mxu0 %v1304
        %1330 = vmatprep.subr.mxu0 0.0
        %1331 = vmatpush1.msra.mxu0 %v1305
        %1332 = vmatprep.subr.mxu0 0.0
        %1333 = vmatpush1.msra.mxu0 %v1306
        %1334 = vmatprep.subr.mxu0 0.0
        %1335 = vmatpush1.msra.mxu0 %v1307
        %1336 = vmatprep.subr.mxu0 0.0
        %1337 = vmatpush1.msra.mxu0 %v1308
        %1338 = vmatprep.subr.mxu0 0.0
        %1339 = vmatpush1.msra.mxu0 %v1309
        %1340 = vmatprep.subr.mxu0 0.0
        %1341 = vmatpush1.msra.mxu0 %v1310
        %1342 = vmatprep.subr.mxu0 0.0
        %1343 = vmatpush1.msra.mxu0 %v1311
        %1344 = vmatprep.subr.mxu0 0.0
        %1345 = vmatpush1.msra.mxu0 0.0
        %1346 = vmatprep.subr.mxu0 0.0
        %1347 = vmatpush1.msra.mxu0 0.0
        %1348 = vmatprep.subr.mxu0 0.0
        %1349 = vmatpush1.msra.mxu0 0.0
        %1350 = vmatprep.subr.mxu0 0.0
        %1351 = vmatpush1.msra.mxu0 0.0
        %1352 = vmatprep.subr.mxu0 0.0
        %1353 = vmatpush1.msra.mxu0 0.0
        %1354 = vmatprep.subr.mxu0 0.0
        %1355 = vmatpush1.msra.mxu0 0.0
        %1356 = vmatprep.subr.mxu0 0.0
        %1357 = vmatpush1.msra.mxu0 0.0
        %1358 = vmatprep.subr.mxu0 0.0
        %1359 = vmatpush1.msra.mxu0 0.0
        %1360 = vmatprep.subr.mxu0 0.0
        %1361 = vmatpush1.msra.mxu0 0.0
        %1362 = vmatprep.subr.mxu0 0.0
        %1363 = vmatpush1.msra.mxu0 0.0
        %1364 = vmatprep.subr.mxu0 0.0
        %1365 = vmatpush1.msra.mxu0 0.0
        %1366 = vmatprep.subr.mxu0 0.0
        %1367 = vmatpush1.msra.mxu0 0.0
        %1368 = vmatprep.subr.mxu0 0.0
        %1369 = vmatpush1.msra.mxu0 0.0
        %1370 = vmatprep.subr.mxu0 0.0
        %1371 = vmatpush1.msra.mxu0 0.0
        %1372 = vmatprep.subr.mxu0 0.0
        %1373 = vmatpush1.msra.mxu0 0.0
        %1374 = vmatprep.subr.mxu0 0.0
        %1375 = vmatpush1.msra.mxu0 0.0
        %1376 = vmatprep.mubr.f32.mxu0 0.0
        %1377 = vmatmul.mubr.f32.gmra.mrb[0].mxu0 %v1293
        %v1378 = vpop.f32.mrb[0].mxu0
        %v1379 = vadd.f32 0.0, %v1378
        %v1380 = vpop.f32.mrb[0].mxu0
        %1381 = vmatprep.mubr.f32.mxu0 0.0
        %1382 = vmatmul.mubr.f32.gmra.mrb[0].mxu0 %v1294
        %v1383 = vpop.f32.mrb[0].mxu0
        %v1384 = vadd.f32 0.0, %v1383
        %v1385 = vpop.f32.mrb[0].mxu0
        %1386 = vdwg.mxu0
        %v1387 = vadd.f32 %v1280, %v1379
        %v1388 = vadd.f32 %v1281, %v1384
        %vm1389 = vmand %vm1046, %vm1182
        %v1390 = vsel %vm1389, 1, 0
        %vm1391 = vcmp.eq.s32.totalorder %v1390, 1
        %v1396 = vrot.slane %v1171, 1
        %v1397 = vrot.slane %v1172, 1
        %v1398 = vsel %vm1054, %v1396, %v1397
        %v1399 = vrot.slane %v1173, 1
        %v1400 = vrot.slane %v1174, 1
        %v1401 = vsel %vm1054, %v1399, %v1400
        %v1404 = vsel %vm1391, %v1398, 0.0
        %v1405 = vsel %vm1391, %v1401, 0.0
        %s1406 = scalar_lea.vmem %s792, 640
        %v1407 = vld [vmem:[%s1406] sm:$0xff]
        %v1408 = vld [vmem:[%s1406 + $0x8] sm:$0xff]
        %v1409 = vld [vmem:[%s1406 + $0x10] sm:$0xff]
        %v1410 = vld [vmem:[%s1406 + $0x18] sm:$0xff]
        %v1411 = vld [vmem:[%s1406 + $0x20] sm:$0xff]
        %v1412 = vld [vmem:[%s1406 + $0x28] sm:$0xff]
        %v1413 = vld [vmem:[%s1406 + $0x30] sm:$0xff]
        %v1414 = vld [vmem:[%s1406 + $0x38] sm:$0xff]
        %v1415 = vld [vmem:[%s1406 + $0x40] sm:$0xff]
        %v1416 = vld [vmem:[%s1406 + $0x48] sm:$0xff]
        %v1417 = vld [vmem:[%s1406 + $0x50] sm:$0xff]
        %v1418 = vld [vmem:[%s1406 + $0x58] sm:$0xff]
        %v1419 = vld [vmem:[%s1406 + $0x60] sm:$0xff]
        %v1420 = vld [vmem:[%s1406 + $0x68] sm:$0xff]
        %v1421 = vld [vmem:[%s1406 + $0x70] sm:$0xff]
        %v1422 = vld [vmem:[%s1406 + $0x78] sm:$0xff]
        %1423 = vmatprep.subr.mxu0 0.0
        %1424 = vmatpush1.msra.mxu0 %v1407
        %1425 = vmatprep.subr.mxu0 0.0
        %1426 = vmatpush1.msra.mxu0 %v1408
        %1427 = vmatprep.subr.mxu0 0.0
        %1428 = vmatpush1.msra.mxu0 %v1409
        %1429 = vmatprep.subr.mxu0 0.0
        %1430 = vmatpush1.msra.mxu0 %v1410
        %1431 = vmatprep.subr.mxu0 0.0
        %1432 = vmatpush1.msra.mxu0 %v1411
        %1433 = vmatprep.subr.mxu0 0.0
        %1434 = vmatpush1.msra.mxu0 %v1412
        %1435 = vmatprep.subr.mxu0 0.0
        %1436 = vmatpush1.msra.mxu0 %v1413
        %1437 = vmatprep.subr.mxu0 0.0
        %1438 = vmatpush1.msra.mxu0 %v1414
        %1439 = vmatprep.subr.mxu0 0.0
        %1440 = vmatpush1.msra.mxu0 %v1415
        %1441 = vmatprep.subr.mxu0 0.0
        %1442 = vmatpush1.msra.mxu0 %v1416
        %1443 = vmatprep.subr.mxu0 0.0
        %1444 = vmatpush1.msra.mxu0 %v1417
        %1445 = vmatprep.subr.mxu0 0.0
        %1446 = vmatpush1.msra.mxu0 %v1418
        %1447 = vmatprep.subr.mxu0 0.0
        %1448 = vmatpush1.msra.mxu0 %v1419
        %1449 = vmatprep.subr.mxu0 0.0
        %1450 = vmatpush1.msra.mxu0 %v1420
        %1451 = vmatprep.subr.mxu0 0.0
        %1452 = vmatpush1.msra.mxu0 %v1421
        %1453 = vmatprep.subr.mxu0 0.0
        %1454 = vmatpush1.msra.mxu0 %v1422
        %1455 = vmatprep.subr.mxu0 0.0
        %1456 = vmatpush1.msra.mxu0 0.0
        %1457 = vmatprep.subr.mxu0 0.0
        %1458 = vmatpush1.msra.mxu0 0.0
        %1459 = vmatprep.subr.mxu0 0.0
        %1460 = vmatpush1.msra.mxu0 0.0
        %1461 = vmatprep.subr.mxu0 0.0
        %1462 = vmatpush1.msra.mxu0 0.0
        %1463 = vmatprep.subr.mxu0 0.0
        %1464 = vmatpush1.msra.mxu0 0.0
        %1465 = vmatprep.subr.mxu0 0.0
        %1466 = vmatpush1.msra.mxu0 0.0
        %1467 = vmatprep.subr.mxu0 0.0
        %1468 = vmatpush1.msra.mxu0 0.0
        %1469 = vmatprep.subr.mxu0 0.0
        %1470 = vmatpush1.msra.mxu0 0.0
        %1471 = vmatprep.subr.mxu0 0.0
        %1472 = vmatpush1.msra.mxu0 0.0
        %1473 = vmatprep.subr.mxu0 0.0
        %1474 = vmatpush1.msra.mxu0 0.0
        %1475 = vmatprep.subr.mxu0 0.0
        %1476 = vmatpush1.msra.mxu0 0.0
        %1477 = vmatprep.subr.mxu0 0.0
        %1478 = vmatpush1.msra.mxu0 0.0
        %1479 = vmatprep.subr.mxu0 0.0
        %1480 = vmatpush1.msra.mxu0 0.0
        %1481 = vmatprep.subr.mxu0 0.0
        %1482 = vmatpush1.msra.mxu0 0.0
        %1483 = vmatprep.subr.mxu0 0.0
        %1484 = vmatpush1.msra.mxu0 0.0
        %1485 = vmatprep.subr.mxu0 0.0
        %1486 = vmatpush1.msra.mxu0 0.0
        %1487 = vmatprep.mubr.f32.mxu0 0.0
        %1488 = vmatmul.mubr.f32.gmra.mrb[0].mxu0 %v1404
        %v1489 = vpop.f32.mrb[0].mxu0
        %v1490 = vadd.f32 0.0, %v1489
        %v1491 = vpop.f32.mrb[0].mxu0
        %1492 = vmatprep.mubr.f32.mxu0 0.0
        %1493 = vmatmul.mubr.f32.gmra.mrb[0].mxu0 %v1405
        %v1494 = vpop.f32.mrb[0].mxu0
        %v1495 = vadd.f32 0.0, %v1494
        %v1496 = vpop.f32.mrb[0].mxu0
        %1497 = vdwg.mxu0
        %v1498 = vadd.f32 %v1387, %v1490
        %v1499 = vadd.f32 %v1388, %v1495
        %v1500 = vld [vmem:[%s718] sm:$0xff]
        %v1501 = vld [vmem:[%s718 + $0x8] sm:$0x1]
        %v1502 = vld [vmem:[%s718 + $0x10] sm:$0xff]
        %v1503 = vld [vmem:[%s718 + $0x18] sm:$0x1]
        %v1504 = vmul.f32 %v1500, %v806
        %v1505 = vmul.f32 %v1501, %v806
        %v1506 = vmul.f32 %v1502, %v806
        %v1507 = vmul.f32 %v1503, %v806
        %v1508 = vadd.f32 %v1504, %v816
        %v1509 = vadd.f32 %v1505, %v816
        %v1510 = vadd.f32 %v1506, %v816
        %v1511 = vadd.f32 %v1507, %v816
        %v1512 = vmax.f32 %v1508, 0.0
        %v1513 = vmax.f32 %v1509, 0.0
        %v1514 = vmax.f32 %v1510, 0.0
        %v1515 = vmax.f32 %v1511, 0.0
        %s1516 = sadd.s32 %s826, 2
        %p1517 = scmp.ne.s32.totalorder %s1516, 0
        %p1518 = scmp.ne.s32.totalorder %s1516, 17
        %p1519 = pnand %p1517, %p1518
        %p1520 = pneg %p1519
        %s1521 = scalar_select %p1520, 1, 0
        %v1522 = vstv %s1521
        %vm1523 = vcmp.eq.s32.totalorder %v1522, 1
        %vm1524 = vmand %vm834, %vm1523
        %v1525 = vsel %vm1524, 1, 0
        %vm1526 = vcmp.eq.s32.totalorder %v1525, 1
        %v1527 = vsel %vm1526, %v1512, 0.0
        %v1528 = vsel %vm1526, %v1514, 0.0
        %s1529 = scalar_lea.vmem %s792, 768
        %v1530 = vld [vmem:[%s1529] sm:$0xff]
        %v1531 = vld [vmem:[%s1529 + $0x8] sm:$0xff]
        %v1532 = vld [vmem:[%s1529 + $0x10] sm:$0xff]
        %v1533 = vld [vmem:[%s1529 + $0x18] sm:$0xff]
        %v1534 = vld [vmem:[%s1529 + $0x20] sm:$0xff]
        %v1535 = vld [vmem:[%s1529 + $0x28] sm:$0xff]
        %v1536 = vld [vmem:[%s1529 + $0x30] sm:$0xff]
        %v1537 = vld [vmem:[%s1529 + $0x38] sm:$0xff]
        %v1538 = vld [vmem:[%s1529 + $0x40] sm:$0xff]
        %v1539 = vld [vmem:[%s1529 + $0x48] sm:$0xff]
        %v1540 = vld [vmem:[%s1529 + $0x50] sm:$0xff]
        %v1541 = vld [vmem:[%s1529 + $0x58] sm:$0xff]
        %v1542 = vld [vmem:[%s1529 + $0x60] sm:$0xff]
        %v1543 = vld [vmem:[%s1529 + $0x68] sm:$0xff]
        %v1544 = vld [vmem:[%s1529 + $0x70] sm:$0xff]
        %v1545 = vld [vmem:[%s1529 + $0x78] sm:$0xff]
        %1546 = vmatprep.subr.mxu0 0.0
        %1547 = vmatpush1.msra.mxu0 %v1530
        %1548 = vmatprep.subr.mxu0 0.0
        %1549 = vmatpush1.msra.mxu0 %v1531
        %1550 = vmatprep.subr.mxu0 0.0
        %1551 = vmatpush1.msra.mxu0 %v1532
        %1552 = vmatprep.subr.mxu0 0.0
        %1553 = vmatpush1.msra.mxu0 %v1533
        %1554 = vmatprep.subr.mxu0 0.0
        %1555 = vmatpush1.msra.mxu0 %v1534
        %1556 = vmatprep.subr.mxu0 0.0
        %1557 = vmatpush1.msra.mxu0 %v1535
        %1558 = vmatprep.subr.mxu0 0.0
        %1559 = vmatpush1.msra.mxu0 %v1536
        %1560 = vmatprep.subr.mxu0 0.0
        %1561 = vmatpush1.msra.mxu0 %v1537
        %1562 = vmatprep.subr.mxu0 0.0
        %1563 = vmatpush1.msra.mxu0 %v1538
        %1564 = vmatprep.subr.mxu0 0.0
        %1565 = vmatpush1.msra.mxu0 %v1539
        %1566 = vmatprep.subr.mxu0 0.0
        %1567 = vmatpush1.msra.mxu0 %v1540
        %1568 = vmatprep.subr.mxu0 0.0
        %1569 = vmatpush1.msra.mxu0 %v1541
        %1570 = vmatprep.subr.mxu0 0.0
        %1571 = vmatpush1.msra.mxu0 %v1542
        %1572 = vmatprep.subr.mxu0 0.0
        %1573 = vmatpush1.msra.mxu0 %v1543
        %1574 = vmatprep.subr.mxu0 0.0
        %1575 = vmatpush1.msra.mxu0 %v1544
        %1576 = vmatprep.subr.mxu0 0.0
        %1577 = vmatpush1.msra.mxu0 %v1545
        %1578 = vmatprep.subr.mxu0 0.0
        %1579 = vmatpush1.msra.mxu0 0.0
        %1580 = vmatprep.subr.mxu0 0.0
        %1581 = vmatpush1.msra.mxu0 0.0
        %1582 = vmatprep.subr.mxu0 0.0
        %1583 = vmatpush1.msra.mxu0 0.0
        %1584 = vmatprep.subr.mxu0 0.0
        %1585 = vmatpush1.msra.mxu0 0.0
        %1586 = vmatprep.subr.mxu0 0.0
        %1587 = vmatpush1.msra.mxu0 0.0
        %1588 = vmatprep.subr.mxu0 0.0
        %1589 = vmatpush1.msra.mxu0 0.0
        %1590 = vmatprep.subr.mxu0 0.0
        %1591 = vmatpush1.msra.mxu0 0.0
        %1592 = vmatprep.subr.mxu0 0.0
        %1593 = vmatpush1.msra.mxu0 0.0
        %1594 = vmatprep.subr.mxu0 0.0
        %1595 = vmatpush1.msra.mxu0 0.0
        %1596 = vmatprep.subr.mxu0 0.0
        %1597 = vmatpush1.msra.mxu0 0.0
        %1598 = vmatprep.subr.mxu0 0.0
        %1599 = vmatpush1.msra.mxu0 0.0
        %1600 = vmatprep.subr.mxu0 0.0
        %1601 = vmatpush1.msra.mxu0 0.0
        %1602 = vmatprep.subr.mxu0 0.0
        %1603 = vmatpush1.msra.mxu0 0.0
        %1604 = vmatprep.subr.mxu0 0.0
        %1605 = vmatpush1.msra.mxu0 0.0
        %1606 = vmatprep.subr.mxu0 0.0
        %1607 = vmatpush1.msra.mxu0 0.0
        %1608 = vmatprep.subr.mxu0 0.0
        %1609 = vmatpush1.msra.mxu0 0.0
        %1610 = vmatprep.mubr.f32.mxu0 0.0
        %1611 = vmatmul.mubr.f32.gmra.mrb[0].mxu0 %v1527
        %v1612 = vpop.f32.mrb[0].mxu0
        %v1613 = vadd.f32 0.0, %v1612
        %v1614 = vpop.f32.mrb[0].mxu0
        %1615 = vmatprep.mubr.f32.mxu0 0.0
        %1616 = vmatmul.mubr.f32.gmra.mrb[0].mxu0 %v1528
        %v1617 = vpop.f32.mrb[0].mxu0
        %v1618 = vadd.f32 0.0, %v1617
        %v1619 = vpop.f32.mrb[0].mxu0
        %1620 = vdwg.mxu0
        %v1621 = vadd.f32 %v1498, %v1613
        %v1622 = vadd.f32 %v1499, %v1618
        %v1623 = vld [vmem:[%s725] sm:$0xff]
        %v1624 = vld [vmem:[%s725 + $0x10] sm:$0xff]
        %v1625 = vmul.f32 %v1623, %v806
        %v1626 = vmul.f32 %v1624, %v806
        %v1627 = vadd.f32 %v1625, %v816
        %v1628 = vadd.f32 %v1626, %v816
        %v1629 = vmax.f32 %v1627, 0.0
        %v1630 = vmax.f32 %v1628, 0.0
        %vm1631 = vmand %vm870, %vm1523
        %v1632 = vsel %vm1631, 1, 0
        %vm1633 = vcmp.eq.s32.totalorder %v1632, 1
        %v1634 = vsel %vm1633, %v1629, 0.0
        %v1635 = vsel %vm1633, %v1630, 0.0
        %s1636 = scalar_lea.vmem %s792, 896
        %v1637 = vld [vmem:[%s1636] sm:$0xff]
        %v1638 = vld [vmem:[%s1636 + $0x8] sm:$0xff]
        %v1639 = vld [vmem:[%s1636 + $0x10] sm:$0xff]
        %v1640 = vld [vmem:[%s1636 + $0x18] sm:$0xff]
        %v1641 = vld [vmem:[%s1636 + $0x20] sm:$0xff]
        %v1642 = vld [vmem:[%s1636 + $0x28] sm:$0xff]
        %v1643 = vld [vmem:[%s1636 + $0x30] sm:$0xff]
        %v1644 = vld [vmem:[%s1636 + $0x38] sm:$0xff]
        %v1645 = vld [vmem:[%s1636 + $0x40] sm:$0xff]
        %v1646 = vld [vmem:[%s1636 + $0x48] sm:$0xff]
        %v1647 = vld [vmem:[%s1636 + $0x50] sm:$0xff]
        %v1648 = vld [vmem:[%s1636 + $0x58] sm:$0xff]
        %v1649 = vld [vmem:[%s1636 + $0x60] sm:$0xff]
        %v1650 = vld [vmem:[%s1636 + $0x68] sm:$0xff]
        %v1651 = vld [vmem:[%s1636 + $0x70] sm:$0xff]
        %v1652 = vld [vmem:[%s1636 + $0x78] sm:$0xff]
        %1653 = vmatprep.subr.mxu0 0.0
        %1654 = vmatpush1.msra.mxu0 %v1637
        %1655 = vmatprep.subr.mxu0 0.0
        %1656 = vmatpush1.msra.mxu0 %v1638
        %1657 = vmatprep.subr.mxu0 0.0
        %1658 = vmatpush1.msra.mxu0 %v1639
        %1659 = vmatprep.subr.mxu0 0.0
        %1660 = vmatpush1.msra.mxu0 %v1640
        %1661 = vmatprep.subr.mxu0 0.0
        %1662 = vmatpush1.msra.mxu0 %v1641
        %1663 = vmatprep.subr.mxu0 0.0
        %1664 = vmatpush1.msra.mxu0 %v1642
        %1665 = vmatprep.subr.mxu0 0.0
        %1666 = vmatpush1.msra.mxu0 %v1643
        %1667 = vmatprep.subr.mxu0 0.0
        %1668 = vmatpush1.msra.mxu0 %v1644
        %1669 = vmatprep.subr.mxu0 0.0
        %1670 = vmatpush1.msra.mxu0 %v1645
        %1671 = vmatprep.subr.mxu0 0.0
        %1672 = vmatpush1.msra.mxu0 %v1646
        %1673 = vmatprep.subr.mxu0 0.0
        %1674 = vmatpush1.msra.mxu0 %v1647
        %1675 = vmatprep.subr.mxu0 0.0
        %1676 = vmatpush1.msra.mxu0 %v1648
        %1677 = vmatprep.subr.mxu0 0.0
        %1678 = vmatpush1.msra.mxu0 %v1649
        %1679 = vmatprep.subr.mxu0 0.0
        %1680 = vmatpush1.msra.mxu0 %v1650
        %1681 = vmatprep.subr.mxu0 0.0
        %1682 = vmatpush1.msra.mxu0 %v1651
        %1683 = vmatprep.subr.mxu0 0.0
        %1684 = vmatpush1.msra.mxu0 %v1652
        %1685 = vmatprep.subr.mxu0 0.0
        %1686 = vmatpush1.msra.mxu0 0.0
        %1687 = vmatprep.subr.mxu0 0.0
        %1688 = vmatpush1.msra.mxu0 0.0
        %1689 = vmatprep.subr.mxu0 0.0
        %1690 = vmatpush1.msra.mxu0 0.0
        %1691 = vmatprep.subr.mxu0 0.0
        %1692 = vmatpush1.msra.mxu0 0.0
        %1693 = vmatprep.subr.mxu0 0.0
        %1694 = vmatpush1.msra.mxu0 0.0
        %1695 = vmatprep.subr.mxu0 0.0
        %1696 = vmatpush1.msra.mxu0 0.0
        %1697 = vmatprep.subr.mxu0 0.0
        %1698 = vmatpush1.msra.mxu0 0.0
        %1699 = vmatprep.subr.mxu0 0.0
        %1700 = vmatpush1.msra.mxu0 0.0
        %1701 = vmatprep.subr.mxu0 0.0
        %1702 = vmatpush1.msra.mxu0 0.0
        %1703 = vmatprep.subr.mxu0 0.0
        %1704 = vmatpush1.msra.mxu0 0.0
        %1705 = vmatprep.subr.mxu0 0.0
        %1706 = vmatpush1.msra.mxu0 0.0
        %1707 = vmatprep.subr.mxu0 0.0
        %1708 = vmatpush1.msra.mxu0 0.0
        %1709 = vmatprep.subr.mxu0 0.0
        %1710 = vmatpush1.msra.mxu0 0.0
        %1711 = vmatprep.subr.mxu0 0.0
        %1712 = vmatpush1.msra.mxu0 0.0
        %1713 = vmatprep.subr.mxu0 0.0
        %1714 = vmatpush1.msra.mxu0 0.0
        %1715 = vmatprep.subr.mxu0 0.0
        %1716 = vmatpush1.msra.mxu0 0.0
        %1717 = vmatprep.mubr.f32.mxu0 0.0
        %1718 = vmatmul.mubr.f32.gmra.mrb[0].mxu0 %v1634
        %v1719 = vpop.f32.mrb[0].mxu0
        %v1720 = vadd.f32 0.0, %v1719
        %v1721 = vpop.f32.mrb[0].mxu0
        %1722 = vmatprep.mubr.f32.mxu0 0.0
        %1723 = vmatmul.mubr.f32.gmra.mrb[0].mxu0 %v1635
        %v1724 = vpop.f32.mrb[0].mxu0
        %v1725 = vadd.f32 0.0, %v1724
        %v1726 = vpop.f32.mrb[0].mxu0
        %1727 = vdwg.mxu0
        %v1728 = vadd.f32 %v1621, %v1720
        %v1729 = vadd.f32 %v1622, %v1725
        %vm1730 = vmand %vm1046, %vm1523
        %v1731 = vsel %vm1730, 1, 0
        %vm1732 = vcmp.eq.s32.totalorder %v1731, 1
        %v1737 = vrot.slane %v1512, 1
        %v1738 = vrot.slane %v1513, 1
        %v1739 = vsel %vm1054, %v1737, %v1738
        %v1740 = vrot.slane %v1514, 1
        %v1741 = vrot.slane %v1515, 1
        %v1742 = vsel %vm1054, %v1740, %v1741
        %v1745 = vsel %vm1732, %v1739, 0.0
        %v1746 = vsel %vm1732, %v1742, 0.0
        %s1747 = scalar_lea.vmem %s792, 1024
        %v1748 = vld [vmem:[%s1747] sm:$0xff]
        %v1749 = vld [vmem:[%s1747 + $0x8] sm:$0xff]
        %v1750 = vld [vmem:[%s1747 + $0x10] sm:$0xff]
        %v1751 = vld [vmem:[%s1747 + $0x18] sm:$0xff]
        %v1752 = vld [vmem:[%s1747 + $0x20] sm:$0xff]
        %v1753 = vld [vmem:[%s1747 + $0x28] sm:$0xff]
        %v1754 = vld [vmem:[%s1747 + $0x30] sm:$0xff]
        %v1755 = vld [vmem:[%s1747 + $0x38] sm:$0xff]
        %v1756 = vld [vmem:[%s1747 + $0x40] sm:$0xff]
        %v1757 = vld [vmem:[%s1747 + $0x48] sm:$0xff]
        %v1758 = vld [vmem:[%s1747 + $0x50] sm:$0xff]
        %v1759 = vld [vmem:[%s1747 + $0x58] sm:$0xff]
        %v1760 = vld [vmem:[%s1747 + $0x60] sm:$0xff]
        %v1761 = vld [vmem:[%s1747 + $0x68] sm:$0xff]
        %v1762 = vld [vmem:[%s1747 + $0x70] sm:$0xff]
        %v1763 = vld [vmem:[%s1747 + $0x78] sm:$0xff]
        %1764 = vmatprep.subr.mxu0 0.0
        %1765 = vmatpush1.msra.mxu0 %v1748
        %1766 = vmatprep.subr.mxu0 0.0
        %1767 = vmatpush1.msra.mxu0 %v1749
        %1768 = vmatprep.subr.mxu0 0.0
        %1769 = vmatpush1.msra.mxu0 %v1750
        %1770 = vmatprep.subr.mxu0 0.0
        %1771 = vmatpush1.msra.mxu0 %v1751
        %1772 = vmatprep.subr.mxu0 0.0
        %1773 = vmatpush1.msra.mxu0 %v1752
        %1774 = vmatprep.subr.mxu0 0.0
        %1775 = vmatpush1.msra.mxu0 %v1753
        %1776 = vmatprep.subr.mxu0 0.0
        %1777 = vmatpush1.msra.mxu0 %v1754
        %1778 = vmatprep.subr.mxu0 0.0
        %1779 = vmatpush1.msra.mxu0 %v1755
        %1780 = vmatprep.subr.mxu0 0.0
        %1781 = vmatpush1.msra.mxu0 %v1756
        %1782 = vmatprep.subr.mxu0 0.0
        %1783 = vmatpush1.msra.mxu0 %v1757
        %1784 = vmatprep.subr.mxu0 0.0
        %1785 = vmatpush1.msra.mxu0 %v1758
        %1786 = vmatprep.subr.mxu0 0.0
        %1787 = vmatpush1.msra.mxu0 %v1759
        %1788 = vmatprep.subr.mxu0 0.0
        %1789 = vmatpush1.msra.mxu0 %v1760
        %1790 = vmatprep.subr.mxu0 0.0
        %1791 = vmatpush1.msra.mxu0 %v1761
        %1792 = vmatprep.subr.mxu0 0.0
        %1793 = vmatpush1.msra.mxu0 %v1762
        %1794 = vmatprep.subr.mxu0 0.0
        %1795 = vmatpush1.msra.mxu0 %v1763
        %1796 = vmatprep.subr.mxu0 0.0
        %1797 = vmatpush1.msra.mxu0 0.0
        %1798 = vmatprep.subr.mxu0 0.0
        %1799 = vmatpush1.msra.mxu0 0.0
        %1800 = vmatprep.subr.mxu0 0.0
        %1801 = vmatpush1.msra.mxu0 0.0
        %1802 = vmatprep.subr.mxu0 0.0
        %1803 = vmatpush1.msra.mxu0 0.0
        %1804 = vmatprep.subr.mxu0 0.0
        %1805 = vmatpush1.msra.mxu0 0.0
        %1806 = vmatprep.subr.mxu0 0.0
        %1807 = vmatpush1.msra.mxu0 0.0
        %1808 = vmatprep.subr.mxu0 0.0
        %1809 = vmatpush1.msra.mxu0 0.0
        %1810 = vmatprep.subr.mxu0 0.0
        %1811 = vmatpush1.msra.mxu0 0.0
        %1812 = vmatprep.subr.mxu0 0.0
        %1813 = vmatpush1.msra.mxu0 0.0
        %1814 = vmatprep.subr.mxu0 0.0
        %1815 = vmatpush1.msra.mxu0 0.0
        %1816 = vmatprep.subr.mxu0 0.0
        %1817 = vmatpush1.msra.mxu0 0.0
        %1818 = vmatprep.subr.mxu0 0.0
        %1819 = vmatpush1.msra.mxu0 0.0
        %1820 = vmatprep.subr.mxu0 0.0
        %1821 = vmatpush1.msra.mxu0 0.0
        %1822 = vmatprep.subr.mxu0 0.0
        %1823 = vmatpush1.msra.mxu0 0.0
        %1824 = vmatprep.subr.mxu0 0.0
        %1825 = vmatpush1.msra.mxu0 0.0
        %1826 = vmatprep.subr.mxu0 0.0
        %1827 = vmatpush1.msra.mxu0 0.0
        %1828 = vmatprep.mubr.f32.mxu0 0.0
        %1829 = vmatmul.mubr.f32.gmra.mrb[0].mxu0 %v1745
        %v1830 = vpop.f32.mrb[0].mxu0
        %v1831 = vadd.f32 0.0, %v1830
        %v1832 = vpop.f32.mrb[0].mxu0
        %1833 = vmatprep.mubr.f32.mxu0 0.0
        %1834 = vmatmul.mubr.f32.gmra.mrb[0].mxu0 %v1746
        %v1835 = vpop.f32.mrb[0].mxu0
        %v1836 = vadd.f32 0.0, %v1835
        %v1837 = vpop.f32.mrb[0].mxu0
        %1838 = vdwg.mxu0
        %v1839 = vadd.f32 %v1728, %v1831
        %v1840 = vadd.f32 %v1729, %v1836
        %1841 = vst [vmem:[%s780] sm:$0xff] %v1839
        %1842 = vst [vmem:[%s780 + $0x8] sm:$0xff] %v1840
        %s1843 = sand.u32 %s291, 1
        %s1844 = sand.u32 %s291, 1
        %s1845 = smul.addr %s1844, 16
        %s1846 = scalar_lea.vmem [#allocation8], %s1845
        // Predicated region
        $region285: #{network_block_forward.10} parent=259 // pred_check
          %p1847 = pneg %p301
        $region286: #{network_block_forward.10} parent=259 // pred_check_branch
          %1849 = sbr.rel (%p1847) target = $region288
        $region287: #{network_block_forward.10} parent=259 // pred_region
          %s1850 = smul.u32 2, %s25
          %s1851 = sadd.s32 %s27, %s26
          %s1852 = smul.addr %s1850, 8
          %s1853 = sadd.s32 %s1851, %s1852
          %s1854 = smul.addr %s1853, 8
          %s1855 = scalar_lea.vmem %s9, %s1854
          // Predicated region
          $region289: #{network_block_forward.10} parent=287 // pred_check
            _
          $region290: #{network_block_forward.10} parent=287 // pred_check_branch
            %1857 = sbr.rel (0) target = $region292
          $region291: #{network_block_forward.10} parent=287 // pred_region
            // Predicated region
            $region293: #{network_block_forward.10} parent=291 // pred_check
              _
            $region294: #{network_block_forward.10} parent=291 // pred_check_branch
              %1859 = sbr.rel (0) target = $region296
            $region295: #{network_block_forward.10} parent=291 // pred_region
              // Predicated region
              $region308: #{network_block_forward.10} parent=295 // pred_check
                _
              $region309: #{network_block_forward.10} parent=295 // pred_check_branch
                %1876 = sbr.rel (0) target = $region311
              $region310: #{network_block_forward.10} parent=295 // pred_region
                loop: start=0, step=1, limit=1
                $region312: #{network_block_forward.10} parent=310 // loop_pre_header
                  _
                $region313: #{network_block_forward.10} parent=310 // loop_header
                  %s1878 = sphi 0, %s1882
                  %p1879 = scmp.ge.s32.totalorder %s1878, 1
                  %s1883 = sphi %s1846, %s1846
                  %s1884 = sphi %s1855, %s1855
                $region314: #{network_block_forward.10} parent=310 // loop_header_branch
                  %1881 = sbr.rel (%p1879) target = $region318
                $region315: #{network_block_forward.10} parent=310 // loop_body
                  %v1885 = vld [vmem:[%s1883] sm:$0xff]
                  %1886 = vst [vmem:[%s1884] sm:$0xff] %v1885
                  %v1887 = vld [vmem:[%s1883 + $0x8] sm:$0xff]
                  %1888 = vst [vmem:[%s1884 + $0x40] sm:$0xff] %v1887
                $region316: #{network_block_forward.10} parent=310 // loop_footer
                  %s1882 = sadd.s32 1, %s1878
                $region317: #{network_block_forward.10} parent=310 // loop_footer_branch
                  %1877 = sbr.rel target = $region313
                $region318: #{network_block_forward.10} parent=310 // loop_exit
                  _
              $region311: #{network_block_forward.10} parent=295 // pred_fallthru
                _
              // Predicated region
              $region319: #{network_block_forward.10} parent=295 // pred_check
                _
              $region320: #{network_block_forward.10} parent=295 // pred_check_branch
                %1890 = sbr.rel target = $region322
              $region321: #{network_block_forward.10} parent=295 // pred_region
                _
              $region322: #{network_block_forward.10} parent=295 // pred_fallthru
                _
            $region296: #{network_block_forward.10} parent=291 // pred_fallthru
              _
            // Predicated region
            $region297: #{network_block_forward.10} parent=291 // pred_check
              _
            $region298: #{network_block_forward.10} parent=291 // pred_check_branch
              %1861 = sbr.rel target = $region300
            $region299: #{network_block_forward.10} parent=291 // pred_region
              loop: start=0, step=1, limit=1
              $region301: #{network_block_forward.10} parent=299 // loop_pre_header
                _
              $region302: #{network_block_forward.10} parent=299 // loop_header
                %s1864 = sphi 0, %s1868
                %p1865 = scmp.ge.s32.totalorder %s1864, 1
                %s1869 = sphi %s1846, %s1846
                %s1870 = sphi %s1855, %s1855
              $region303: #{network_block_forward.10} parent=299 // loop_header_branch
                %1867 = sbr.rel (%p1865) target = $region307
              $region304: #{network_block_forward.10} parent=299 // loop_body
                %v1871 = vld [vmem:[%s1869] sm:$0xff]
                %1872 = vst [vmem:[%s1870] sm:$0xff] %v1871
                %v1873 = vld [vmem:[%s1869 + $0x8] sm:$0xff]
                %1874 = vst [vmem:[%s1870 + $0x40] sm:$0xff] %v1873
              $region305: #{network_block_forward.10} parent=299 // loop_footer
                %s1868 = sadd.s32 1, %s1864
              $region306: #{network_block_forward.10} parent=299 // loop_footer_branch
                %1863 = sbr.rel target = $region302
              $region307: #{network_block_forward.10} parent=299 // loop_exit
                _
            $region300: #{network_block_forward.10} parent=291 // pred_fallthru
              _
          $region292: #{network_block_forward.10} parent=287 // pred_fallthru
            _
          %1891 = vnop
        $region288: #{network_block_forward.10} parent=259 // pred_fallthru
          _
      $region260: #{network_block_forward.10} parent=5 // pred_fallthru
        _
      %p1892 = scmp.le.s32.totalorder 2, %s15
      // Predicated region
      $region323: #{network_block_forward.10} parent=5 // pred_check
        %p1893 = pneg %p1892
      $region324: #{network_block_forward.10} parent=5 // pred_check_branch
        %1895 = sbr.rel (%p1893) target = $region326
      $region325: #{network_block_forward.10} parent=5 // pred_region
        %s1896 = ssub.s32 %s15, 2
        // Predicated region
        $region327: #{network_block_forward.10} parent=325 // pred_check
          %p1897 = pneg %p307
        $region328: #{network_block_forward.10} parent=325 // pred_check_branch
          %1899 = sbr.rel (%p1897) target = $region330
        $region329: #{network_block_forward.10} parent=325 // pred_region
          %s1900 = sand.u32 %s292, 1
          %s1901 = sand.u32 %s292, 1
          %s1902 = smul.addr %s1901, 16
          %s1903 = scalar_lea.vmem [#allocation8], %s1902
        $region330: #{network_block_forward.10} parent=325 // pred_fallthru
          _
      $region326: #{network_block_forward.10} parent=5 // pred_fallthru
        _
    $region6: #{network_block_forward.10} parent=1 // loop_footer
      %s19 = sadd.s32 1, %s15
    $region7: #{network_block_forward.10} parent=1 // loop_footer_branch
      %14 = sbr.rel target = $region3
    $region8: #{network_block_forward.10} parent=1 // loop_exit
      _

// kernel: network_block_forward.15
$region0: #{network_block_forward.15}
  #allocation0 [shape = 'u32[]', space=smem, size = 0x4, offset = 0x4, fixed_abs, tag = 'smem constant byte address 0x4 - core index']
  #allocation1 [shape = 'u32[144,128]{1,0:T(1,128)}', space=vmem, size = 0x12000, scoped, tag = 'internal scratch']
  %s0 = inlined_call_operand.vmem [shape: f32[1,128], index: 0, kind: input, shape index: {}]
  %s1 = inlined_call_operand.vmem [shape: f32[1,128], index: 1, kind: input, shape index: {}]
  %s2 = inlined_call_operand.vmem [shape: f32[2,10,10,128], index: 2, kind: input, shape index: {}, may-alias: {2,3,4}]
  %s3 = inlined_call_operand.vmem [shape: f32[2,10,10,128], index: 3, kind: input, shape index: {}, may-alias: {2,3,4}]
  %s4 = inlined_call_operand.vmem [shape: f32[2,10,10,128], index: 4, kind: input, shape index: {}, may-alias: {2,3,4}]
  %s5 = inlined_call_operand.vmem [shape: f32[9,128,128], index: 5, kind: input, shape index: {}]
  %s6 = inlined_call_operand.vmem [shape: f32[2,8,8,128], index: 6, kind: output, shape index: {}]
  %s7 = sld [smem:[#allocation0]]
  $region205: #{network_block_forward.15} parent=0
    _
  %s9 = ssub.s32 1, %s7
  %s10 = scalar_select 0, %s9, %s7
  $region1: #{network_block_forward.15} parent=0
    #allocation2 [shape = 'u8[32768]{0}', space=vmem, size = 0x8000, scoped, tag = 'input window, operand 2']
    #allocation3 [shape = 'u8[32768]{0}', space=vmem, size = 0x8000, scoped, tag = 'input window, operand 3']
    #allocation4 [shape = 'u8[32768]{0}', space=vmem, size = 0x8000, scoped, tag = 'input window, operand 4']
    #allocation5 [shape = 'u8[16384]{0}', space=vmem, size = 0x4000, scoped, tag = 'output window, operand 0']
    loop: start=0, step=1, limit=10
    $region2: #{network_block_forward.15} parent=1 // loop_pre_header
      _
    $region3: #{network_block_forward.15} parent=1 // loop_header
      %s12 = sphi 0, %s16
      %p13 = scmp.ge.s32.totalorder %s12, 10
      %s19 = sphi 0, %s38
      %s20 = sphi 0, %s34
      %s21 = sphi 0, %s30
      %s22 = sphi 0, %s19
      %s23 = sphi 0, %s20
      %s24 = sphi 0, %s21
      %s25 = sphi 0, %s22
      %s26 = sphi 0, %s23
      %s27 = sphi 0, %s24
      %s39 = sphi 0, %s39
      %s41 = sphi 0, %s39
      %s42 = sphi 0, %s41
      %s56 = sphi 0, %s42
      %s60 = sphi 0, %s60
      %s62 = sphi 0, %s60
      %s63 = sphi 0, %s62
      %s77 = sphi 0, %s63
      %s85 = sphi 0, %s87
      %s88 = sphi 0, %s85
      %s89 = sphi 0, %s88
      %s105 = sphi 0, %s89
      %s115 = sphi 0, %s117
      %s118 = sphi 0, %s115
      %s119 = sphi 0, %s118
      %s135 = sphi 0, %s119
      %s145 = sphi 0, %s147
      %s148 = sphi 0, %s145
      %s149 = sphi 0, %s148
      %s165 = sphi 0, %s149
      %s171 = sphi 0, %s173
      %s174 = sphi 0, %s171
      %s175 = sphi 0, %s174
      %s191 = sphi 0, %s175
      %s201 = sphi 0, %s203
      %s204 = sphi 0, %s201
      %s205 = sphi 0, %s204
      %s221 = sphi 0, %s205
    $region4: #{network_block_forward.15} parent=1 // loop_header_branch
      %15 = sbr.rel (%p13) target = $region8
    $region5: #{network_block_forward.15} parent=1 // loop_body
      %s17 = ssub.s32 %s12, 1
      %s18 = ssub.s32 %s12, 2
      %s28 = sadd.s32 1, %s21
      %p29 = scmp.ge.s32.totalorder %s28, 1
      %s30 = scalar_select %p29, 0, %s28
      %s31 = sadd.s32 1, %s20
      %s32 = scalar_select %p29, %s31, %s20
      %p33 = scmp.ge.s32.totalorder %s32, 8
      %s34 = scalar_select %p33, 0, %s32
      %s35 = sadd.s32 1, %s19
      %s36 = scalar_select %p33, %s35, %s19
      %p37 = scmp.ge.s32.totalorder %s36, 1
      %s38 = scalar_select %p37, 0, %s36
      %s40 = sadd.s32 %s39, 1
      %p43 = scmp.eq.s32.totalorder %s12, 7
      %p44 = scmp.ne.s32.totalorder %s39, %s41
      %p45 = scmp.eq.s32.totalorder %s12, 0
      %p46 = por %p44, %p45
      %p47 = scmp.ne.s32.totalorder %s39, %s41
      %p48 = scmp.eq.s32.totalorder %s17, 7
      %p49 = por %p47, %p48
      %p50 = scmp.ne.s32.totalorder %s41, %s42
      %p51 = scmp.eq.s32.totalorder %s17, 0
      %p52 = por %p50, %p51
      %p53 = scmp.ne.s32.totalorder %s41, %s42
      %p54 = scmp.eq.s32.totalorder %s18, 7
      %p55 = por %p53, %p54
      %p57 = scmp.ne.s32.totalorder %s42, %s56
      %p58 = scmp.eq.s32.totalorder %s18, 0
      %p59 = por %p57, %p58
      %s61 = sadd.s32 %s60, 1
      %p64 = scmp.eq.s32.totalorder %s12, 7
      %p65 = scmp.ne.s32.totalorder %s60, %s62
      %p66 = scmp.eq.s32.totalorder %s12, 0
      %p67 = por %p65, %p66
      %p68 = scmp.ne.s32.totalorder %s60, %s62
      %p69 = scmp.eq.s32.totalorder %s17, 7
      %p70 = por %p68, %p69
      %p71 = scmp.ne.s32.totalorder %s62, %s63
      %p72 = scmp.eq.s32.totalorder %s17, 0
      %p73 = por %p71, %p72
      %p74 = scmp.ne.s32.totalorder %s62, %s63
      %p75 = scmp.eq.s32.totalorder %s18, 7
      %p76 = por %p74, %p75
      %p78 = scmp.ne.s32.totalorder %s63, %s77
      %p79 = scmp.eq.s32.totalorder %s18, 0
      %p80 = por %p78, %p79
      %s81 = ssub.s32 %s19, %s38
      %s82 = ssub.s32 %s20, %s34
      %s83 = sor.u32 %s81, %s82
      %p84 = scmp.eq.s32.totalorder %s83, 0
      %s86 = sadd.s32 %s85, 1
      %s87 = scalar_select %p84, %s85, %s86
      %p90 = pneg %p84
      %p91 = scmp.eq.s32.totalorder %s12, 7
      %p92 = por %p90, %p91
      %p93 = scmp.ne.s32.totalorder %s85, %s88
      %p94 = scmp.eq.s32.totalorder %s12, 0
      %p95 = por %p93, %p94
      %p96 = scmp.ne.s32.totalorder %s85, %s88
      %p97 = scmp.eq.s32.totalorder %s17, 7
      %p98 = por %p96, %p97
      %p99 = scmp.ne.s32.totalorder %s88, %s89
      %p100 = scmp.eq.s32.totalorder %s17, 0
      %p101 = por %p99, %p100
      %p102 = scmp.ne.s32.totalorder %s88, %s89
      %p103 = scmp.eq.s32.totalorder %s18, 7
      %p104 = por %p102, %p103
      %p106 = scmp.ne.s32.totalorder %s89, %s105
      %p107 = scmp.eq.s32.totalorder %s18, 0
      %p108 = por %p106, %p107
      %s109 = sadd.s32 %s20, 1
      %s110 = sadd.s32 %s34, 1
      %s111 = ssub.s32 %s19, %s38
      %s112 = ssub.s32 %s109, %s110
      %s113 = sor.u32 %s111, %s112
      %p114 = scmp.eq.s32.totalorder %s113, 0
      %s116 = sadd.s32 %s115, 1
      %s117 = scalar_select %p114, %s115, %s116
      %p120 = pneg %p114
      %p121 = scmp.eq.s32.totalorder %s12, 7
      %p122 = por %p120, %p121
      %p123 = scmp.ne.s32.totalorder %s115, %s118
      %p124 = scmp.eq.s32.totalorder %s12, 0
      %p125 = por %p123, %p124
      %p126 = scmp.ne.s32.totalorder %s115, %s118
      %p127 = scmp.eq.s32.totalorder %s17, 7
      %p128 = por %p126, %p127
      %p129 = scmp.ne.s32.totalorder %s118, %s119
      %p130 = scmp.eq.s32.totalorder %s17, 0
      %p131 = por %p129, %p130
      %p132 = scmp.ne.s32.totalorder %s118, %s119
      %p133 = scmp.eq.s32.totalorder %s18, 7
      %p134 = por %p132, %p133
      %p136 = scmp.ne.s32.totalorder %s119, %s135
      %p137 = scmp.eq.s32.totalorder %s18, 0
      %p138 = por %p136, %p137
      %s139 = sadd.s32 %s20, 2
      %s140 = sadd.s32 %s34, 2
      %s141 = ssub.s32 %s19, %s38
      %s142 = ssub.s32 %s139, %s140
      %s143 = sor.u32 %s141, %s142
      %p144 = scmp.eq.s32.totalorder %s143, 0
      %s146 = sadd.s32 %s145, 1
      %s147 = scalar_select %p144, %s145, %s146
      %p150 = pneg %p144
      %p151 = scmp.eq.s32.totalorder %s12, 7
      %p152 = por %p150, %p151
      %p153 = scmp.ne.s32.totalorder %s145, %s148
      %p154 = scmp.eq.s32.totalorder %s12, 0
      %p155 = por %p153, %p154
      %p156 = scmp.ne.s32.totalorder %s145, %s148
      %p157 = scmp.eq.s32.totalorder %s17, 7
      %p158 = por %p156, %p157
      %p159 = scmp.ne.s32.totalorder %s148, %s149
      %p160 = scmp.eq.s32.totalorder %s17, 0
      %p161 = por %p159, %p160
      %p162 = scmp.ne.s32.totalorder %s148, %s149
      %p163 = scmp.eq.s32.totalorder %s18, 7
      %p164 = por %p162, %p163
      %p166 = scmp.ne.s32.totalorder %s149, %s165
      %p167 = scmp.eq.s32.totalorder %s18, 0
      %p168 = por %p166, %p167
      %s169 = ssub.s32 %s21, %s30
      %p170 = scmp.eq.s32.totalorder %s169, 0
      %s172 = sadd.s32 %s171, 1
      %s173 = scalar_select %p170, %s171, %s172
      %p176 = pneg %p170
      %p177 = scmp.eq.s32.totalorder %s12, 7
      %p178 = por %p176, %p177
      %p179 = scmp.ne.s32.totalorder %s171, %s174
      %p180 = scmp.eq.s32.totalorder %s12, 0
      %p181 = por %p179, %p180
      %p182 = scmp.ne.s32.totalorder %s171, %s174
      %p183 = scmp.eq.s32.totalorder %s17, 7
      %p184 = por %p182, %p183
      %p185 = scmp.ne.s32.totalorder %s174, %s175
      %p186 = scmp.eq.s32.totalorder %s17, 0
      %p187 = por %p185, %p186
      %p188 = scmp.ne.s32.totalorder %s174, %s175
      %p189 = scmp.eq.s32.totalorder %s18, 7
      %p190 = por %p188, %p189
      %p192 = scmp.ne.s32.totalorder %s175, %s191
      %p193 = scmp.eq.s32.totalorder %s18, 0
      %p194 = por %p192, %p193
      %s195 = ssub.s32 %s19, %s38
      %s196 = ssub.s32 %s20, %s34
      %s197 = sor.u32 %s195, %s196
      %s198 = ssub.s32 %s21, %s30
      %s199 = sor.u32 %s197, %s198
      %p200 = scmp.eq.s32.totalorder %s199, 0
      %s202 = sadd.s32 %s201, 1
      %s203 = scalar_select %p200, %s201, %s202
      %p206 = pneg %p200
      %p207 = scmp.eq.s32.totalorder %s12, 7
      %p208 = por %p206, %p207
      %p209 = scmp.ne.s32.totalorder %s201, %s204
      %p210 = scmp.eq.s32.totalorder %s12, 0
      %p211 = por %p209, %p210
      %p212 = scmp.ne.s32.totalorder %s201, %s204
      %p213 = scmp.eq.s32.totalorder %s17, 7
      %p214 = por %p212, %p213
      %p215 = scmp.ne.s32.totalorder %s204, %s205
      %p216 = scmp.eq.s32.totalorder %s17, 0
      %p217 = por %p215, %p216
      %p218 = scmp.ne.s32.totalorder %s204, %s205
      %p219 = scmp.eq.s32.totalorder %s18, 7
      %p220 = por %p218, %p219
      %p222 = scmp.ne.s32.totalorder %s205, %s221
      %p223 = scmp.eq.s32.totalorder %s18, 0
      %p224 = por %p222, %p223
      %p225 = scmp.le.s32.totalorder 1, %s12
      %p226 = scmp.lt.s32.totalorder %s12, 9
      %p227 = pnand %p225, %p226
      %p228 = pneg %p227
      // Predicated region
      $region9: #{network_block_forward.15} parent=5 // pred_check
        _
      $region10: #{network_block_forward.15} parent=5 // pred_check_branch
        %230 = sbr.rel (%p227) target = $region12
      $region11: #{network_block_forward.15} parent=5 // pred_region
        %s231 = ssub.s32 %s12, 1
        // Predicated region
        $region13: #{network_block_forward.15} parent=11 // pred_check
          %p232 = pneg %p52
        $region14: #{network_block_forward.15} parent=11 // pred_check_branch
          %234 = sbr.rel (%p232) target = $region16
        $region15: #{network_block_forward.15} parent=11 // pred_region
          _
        $region16: #{network_block_forward.15} parent=11 // pred_fallthru
          _
        // Predicated region
        $region17: #{network_block_forward.15} parent=11 // pred_check
          %p235 = pneg %p73
        $region18: #{network_block_forward.15} parent=11 // pred_check_branch
          %237 = sbr.rel (%p235) target = $region20
        $region19: #{network_block_forward.15} parent=11 // pred_region
          _
        $region20: #{network_block_forward.15} parent=11 // pred_fallthru
          _
        // Predicated region
        $region21: #{network_block_forward.15} parent=11 // pred_check
          %p238 = pneg %p187
        $region22: #{network_block_forward.15} parent=11 // pred_check_branch
          %240 = sbr.rel (%p238) target = $region24
        $region23: #{network_block_forward.15} parent=11 // pred_region
          %p241 = scmp.lt.s32.totalorder %s24, 0
          %s242 = scalar_select %p241, %s24, 0
          %s243 = smul.addr %s242, 8
          %s244 = scalar_lea.vmem %s5, %s243
        $region24: #{network_block_forward.15} parent=11 // pred_fallthru
          _
      $region12: #{network_block_forward.15} parent=5 // pred_fallthru
        _
      %p245 = scmp.lt.s32.totalorder %s12, 8
      // Predicated region
      $region25: #{network_block_forward.15} parent=5 // pred_check
        %p246 = pneg %p245
      $region26: #{network_block_forward.15} parent=5 // pred_check_branch
        %248 = sbr.rel (%p246) target = $region28
      $region27: #{network_block_forward.15} parent=5 // pred_region
        // Predicated region
        $region29: #{network_block_forward.15} parent=27 // pred_check
          %p249 = pneg %p95
        $region30: #{network_block_forward.15} parent=27 // pred_check_branch
          %251 = sbr.rel (%p249) target = $region32
        $region31: #{network_block_forward.15} parent=27 // pred_region
          %s252 = sand.u32 %s85, 1
          %s253 = sand.u32 %s85, 1
          %s254 = smul.addr %s253, 32
          %s255 = scalar_lea.vmem [#allocation2], %s254
          %s256 = smul.u32 2, %s19
          %s257 = smul.addr %s20, 2
          %s258 = smul.addr %s256, 20
          %s259 = sadd.s32 %s257, %s258
          %s260 = smul.addr %s259, 8
          %s261 = scalar_lea.vmem %s2, %s260
          // Predicated region
          $region33: #{network_block_forward.15} parent=31 // pred_check
            _
          $region34: #{network_block_forward.15} parent=31 // pred_check_branch
            %263 = sbr.rel (0) target = $region36
          $region35: #{network_block_forward.15} parent=31 // pred_region
            // Predicated region
            $region37: #{network_block_forward.15} parent=35 // pred_check
              _
            $region38: #{network_block_forward.15} parent=35 // pred_check_branch
              %265 = sbr.rel (0) target = $region40
            $region39: #{network_block_forward.15} parent=35 // pred_region
              // Predicated region
              $region52: #{network_block_forward.15} parent=39 // pred_check
                _
              $region53: #{network_block_forward.15} parent=39 // pred_check_branch
                %286 = sbr.rel (0) target = $region55
              $region54: #{network_block_forward.15} parent=39 // pred_region
                loop: start=0, step=1, limit=1
                $region56: #{network_block_forward.15} parent=54 // loop_pre_header
                  _
                $region57: #{network_block_forward.15} parent=54 // loop_header
                  %s288 = sphi 0, %s292
                  %p289 = scmp.ge.s32.totalorder %s288, 1
                  %s293 = sphi %s261, %s261
                  %s294 = sphi %s255, %s255
                $region58: #{network_block_forward.15} parent=54 // loop_header_branch
                  %291 = sbr.rel (%p289) target = $region62
                $region59: #{network_block_forward.15} parent=54 // loop_body
                  %v295 = vld [vmem:[%s293] sm:$0xff]
                  %296 = vst [vmem:[%s294] sm:$0xff] %v295
                  %v297 = vld [vmem:[%s293 + $0x8] sm:$0xff]
                  %298 = vst [vmem:[%s294 + $0x8] sm:$0xff] %v297
                  %v299 = vld [vmem:[%s293 + $0xa0] sm:$0xff]
                  %300 = vst [vmem:[%s294 + $0x10] sm:$0xff] %v299
                  %v301 = vld [vmem:[%s293 + $0xa8] sm:$0xff]
                  %302 = vst [vmem:[%s294 + $0x18] sm:$0xff] %v301
                $region60: #{network_block_forward.15} parent=54 // loop_footer
                  %s292 = sadd.s32 1, %s288
                $region61: #{network_block_forward.15} parent=54 // loop_footer_branch
                  %287 = sbr.rel target = $region57
                $region62: #{network_block_forward.15} parent=54 // loop_exit
                  _
              $region55: #{network_block_forward.15} parent=39 // pred_fallthru
                _
              // Predicated region
              $region63: #{network_block_forward.15} parent=39 // pred_check
                _
              $region64: #{network_block_forward.15} parent=39 // pred_check_branch
                %304 = sbr.rel target = $region66
              $region65: #{network_block_forward.15} parent=39 // pred_region
                _
              $region66: #{network_block_forward.15} parent=39 // pred_fallthru
                _
            $region40: #{network_block_forward.15} parent=35 // pred_fallthru
              _
            // Predicated region
            $region41: #{network_block_forward.15} parent=35 // pred_check
              _
            $region42: #{network_block_forward.15} parent=35 // pred_check_branch
              %267 = sbr.rel target = $region44
            $region43: #{network_block_forward.15} parent=35 // pred_region
              loop: start=0, step=1, limit=1
              $region45: #{network_block_forward.15} parent=43 // loop_pre_header
                _
              $region46: #{network_block_forward.15} parent=43 // loop_header
                %s270 = sphi 0, %s274
                %p271 = scmp.ge.s32.totalorder %s270, 1
                %s275 = sphi %s261, %s261
                %s276 = sphi %s255, %s255
              $region47: #{network_block_forward.15} parent=43 // loop_header_branch
                %273 = sbr.rel (%p271) target = $region51
              $region48: #{network_block_forward.15} parent=43 // loop_body
                %v277 = vld [vmem:[%s275] sm:$0xff]
                %278 = vst [vmem:[%s276] sm:$0xff] %v277
                %v279 = vld [vmem:[%s275 + $0x8] sm:$0xff]
                %280 = vst [vmem:[%s276 + $0x8] sm:$0xff] %v279
                %v281 = vld [vmem:[%s275 + $0xa0] sm:$0xff]
                %282 = vst [vmem:[%s276 + $0x10] sm:$0xff] %v281
                %v283 = vld [vmem:[%s275 + $0xa8] sm:$0xff]
                %284 = vst [vmem:[%s276 + $0x18] sm:$0xff] %v283
              $region49: #{network_block_forward.15} parent=43 // loop_footer
                %s274 = sadd.s32 1, %s270
              $region50: #{network_block_forward.15} parent=43 // loop_footer_branch
                %269 = sbr.rel target = $region46
              $region51: #{network_block_forward.15} parent=43 // loop_exit
                _
            $region44: #{network_block_forward.15} parent=35 // pred_fallthru
              _
          $region36: #{network_block_forward.15} parent=31 // pred_fallthru
            _
          %305 = vnop
        $region32: #{network_block_forward.15} parent=27 // pred_fallthru
          _
        // Predicated region
        $region67: #{network_block_forward.15} parent=27 // pred_check
          %p306 = pneg %p125
        $region68: #{network_block_forward.15} parent=27 // pred_check_branch
          %308 = sbr.rel (%p306) target = $region70
        $region69: #{network_block_forward.15} parent=27 // pred_region
          %s309 = sand.u32 %s115, 1
          %s310 = sand.u32 %s115, 1
          %s311 = smul.addr %s310, 32
          %s312 = scalar_lea.vmem [#allocation3], %s311
          %s313 = sadd.s32 %s20, 1
          %s314 = smul.u32 2, %s19
          %s315 = smul.addr %s313, 2
          %s316 = smul.addr %s314, 20
          %s317 = sadd.s32 %s315, %s316
          %s318 = smul.addr %s317, 8
          %s319 = scalar_lea.vmem %s3, %s318
          // Predicated region
          $region71: #{network_block_forward.15} parent=69 // pred_check
            _
          $region72: #{network_block_forward.15} parent=69 // pred_check_branch
            %321 = sbr.rel (0) target = $region74
          $region73: #{network_block_forward.15} parent=69 // pred_region
            // Predicated region
            $region75: #{network_block_forward.15} parent=73 // pred_check
              _
            $region76: #{network_block_forward.15} parent=73 // pred_check_branch
              %323 = sbr.rel (0) target = $region78
            $region77: #{network_block_forward.15} parent=73 // pred_region
              // Predicated region
              $region90: #{network_block_forward.15} parent=77 // pred_check
                _
              $region91: #{network_block_forward.15} parent=77 // pred_check_branch
                %344 = sbr.rel (0) target = $region93
              $region92: #{network_block_forward.15} parent=77 // pred_region
                loop: start=0, step=1, limit=1
                $region94: #{network_block_forward.15} parent=92 // loop_pre_header
                  _
                $region95: #{network_block_forward.15} parent=92 // loop_header
                  %s346 = sphi 0, %s350
                  %p347 = scmp.ge.s32.totalorder %s346, 1
                  %s351 = sphi %s319, %s319
                  %s352 = sphi %s312, %s312
                $region96: #{network_block_forward.15} parent=92 // loop_header_branch
                  %349 = sbr.rel (%p347) target = $region100
                $region97: #{network_block_forward.15} parent=92 // loop_body
                  %v353 = vld [vmem:[%s351] sm:$0xff]
                  %354 = vst [vmem:[%s352] sm:$0xff] %v353
                  %v355 = vld [vmem:[%s351 + $0x8] sm:$0xff]
                  %356 = vst [vmem:[%s352 + $0x8] sm:$0xff] %v355
                  %v357 = vld [vmem:[%s351 + $0xa0] sm:$0xff]
                  %358 = vst [vmem:[%s352 + $0x10] sm:$0xff] %v357
                  %v359 = vld [vmem:[%s351 + $0xa8] sm:$0xff]
                  %360 = vst [vmem:[%s352 + $0x18] sm:$0xff] %v359
                $region98: #{network_block_forward.15} parent=92 // loop_footer
                  %s350 = sadd.s32 1, %s346
                $region99: #{network_block_forward.15} parent=92 // loop_footer_branch
                  %345 = sbr.rel target = $region95
                $region100: #{network_block_forward.15} parent=92 // loop_exit
                  _
              $region93: #{network_block_forward.15} parent=77 // pred_fallthru
                _
              // Predicated region
              $region101: #{network_block_forward.15} parent=77 // pred_check
                _
              $region102: #{network_block_forward.15} parent=77 // pred_check_branch
                %362 = sbr.rel target = $region104
              $region103: #{network_block_forward.15} parent=77 // pred_region
                _
              $region104: #{network_block_forward.15} parent=77 // pred_fallthru
                _
            $region78: #{network_block_forward.15} parent=73 // pred_fallthru
              _
            // Predicated region
            $region79: #{network_block_forward.15} parent=73 // pred_check
              _
            $region80: #{network_block_forward.15} parent=73 // pred_check_branch
              %325 = sbr.rel target = $region82
            $region81: #{network_block_forward.15} parent=73 // pred_region
              loop: start=0, step=1, limit=1
              $region83: #{network_block_forward.15} parent=81 // loop_pre_header
                _
              $region84: #{network_block_forward.15} parent=81 // loop_header
                %s328 = sphi 0, %s332
                %p329 = scmp.ge.s32.totalorder %s328, 1
                %s333 = sphi %s319, %s319
                %s334 = sphi %s312, %s312
              $region85: #{network_block_forward.15} parent=81 // loop_header_branch
                %331 = sbr.rel (%p329) target = $region89
              $region86: #{network_block_forward.15} parent=81 // loop_body
                %v335 = vld [vmem:[%s333] sm:$0xff]
                %336 = vst [vmem:[%s334] sm:$0xff] %v335
                %v337 = vld [vmem:[%s333 + $0x8] sm:$0xff]
                %338 = vst [vmem:[%s334 + $0x8] sm:$0xff] %v337
                %v339 = vld [vmem:[%s333 + $0xa0] sm:$0xff]
                %340 = vst [vmem:[%s334 + $0x10] sm:$0xff] %v339
                %v341 = vld [vmem:[%s333 + $0xa8] sm:$0xff]
                %342 = vst [vmem:[%s334 + $0x18] sm:$0xff] %v341
              $region87: #{network_block_forward.15} parent=81 // loop_footer
                %s332 = sadd.s32 1, %s328
              $region88: #{network_block_forward.15} parent=81 // loop_footer_branch
                %327 = sbr.rel target = $region84
              $region89: #{network_block_forward.15} parent=81 // loop_exit
                _
            $region82: #{network_block_forward.15} parent=73 // pred_fallthru
              _
          $region74: #{network_block_forward.15} parent=69 // pred_fallthru
            _
          %363 = vnop
        $region70: #{network_block_forward.15} parent=27 // pred_fallthru
          _
        // Predicated region
        $region105: #{network_block_forward.15} parent=27 // pred_check
          %p364 = pneg %p155
        $region106: #{network_block_forward.15} parent=27 // pred_check_branch
          %366 = sbr.rel (%p364) target = $region108
        $region107: #{network_block_forward.15} parent=27 // pred_region
          %s367 = sand.u32 %s145, 1
          %s368 = sand.u32 %s145, 1
          %s369 = smul.addr %s368, 32
          %s370 = scalar_lea.vmem [#allocation4], %s369
          %s371 = sadd.s32 %s20, 2
          %s372 = smul.u32 2, %s19
          %s373 = smul.addr %s371, 2
          %s374 = smul.addr %s372, 20
          %s375 = sadd.s32 %s373, %s374
          %s376 = smul.addr %s375, 8
          %s377 = scalar_lea.vmem %s4, %s376
          // Predicated region
          $region109: #{network_block_forward.15} parent=107 // pred_check
            _
          $region110: #{network_block_forward.15} parent=107 // pred_check_branch
            %379 = sbr.rel (0) target = $region112
          $region111: #{network_block_forward.15} parent=107 // pred_region
            // Predicated region
            $region113: #{network_block_forward.15} parent=111 // pred_check
              _
            $region114: #{network_block_forward.15} parent=111 // pred_check_branch
              %381 = sbr.rel (0) target = $region116
            $region115: #{network_block_forward.15} parent=111 // pred_region
              // Predicated region
              $region128: #{network_block_forward.15} parent=115 // pred_check
                _
              $region129: #{network_block_forward.15} parent=115 // pred_check_branch
                %402 = sbr.rel (0) target = $region131
              $region130: #{network_block_forward.15} parent=115 // pred_region
                loop: start=0, step=1, limit=1
                $region132: #{network_block_forward.15} parent=130 // loop_pre_header
                  _
                $region133: #{network_block_forward.15} parent=130 // loop_header
                  %s404 = sphi 0, %s408
                  %p405 = scmp.ge.s32.totalorder %s404, 1
                  %s409 = sphi %s377, %s377
                  %s410 = sphi %s370, %s370
                $region134: #{network_block_forward.15} parent=130 // loop_header_branch
                  %407 = sbr.rel (%p405) target = $region138
                $region135: #{network_block_forward.15} parent=130 // loop_body
                  %v411 = vld [vmem:[%s409] sm:$0xff]
                  %412 = vst [vmem:[%s410] sm:$0xff] %v411
                  %v413 = vld [vmem:[%s409 + $0x8] sm:$0xff]
                  %414 = vst [vmem:[%s410 + $0x8] sm:$0xff] %v413
                  %v415 = vld [vmem:[%s409 + $0xa0] sm:$0xff]
                  %416 = vst [vmem:[%s410 + $0x10] sm:$0xff] %v415
                  %v417 = vld [vmem:[%s409 + $0xa8] sm:$0xff]
                  %418 = vst [vmem:[%s410 + $0x18] sm:$0xff] %v417
                $region136: #{network_block_forward.15} parent=130 // loop_footer
                  %s408 = sadd.s32 1, %s404
                $region137: #{network_block_forward.15} parent=130 // loop_footer_branch
                  %403 = sbr.rel target = $region133
                $region138: #{network_block_forward.15} parent=130 // loop_exit
                  _
              $region131: #{network_block_forward.15} parent=115 // pred_fallthru
                _
              // Predicated region
              $region139: #{network_block_forward.15} parent=115 // pred_check
                _
              $region140: #{network_block_forward.15} parent=115 // pred_check_branch
                %420 = sbr.rel target = $region142
              $region141: #{network_block_forward.15} parent=115 // pred_region
                _
              $region142: #{network_block_forward.15} parent=115 // pred_fallthru
                _
            $region116: #{network_block_forward.15} parent=111 // pred_fallthru
              _
            // Predicated region
            $region117: #{network_block_forward.15} parent=111 // pred_check
              _
            $region118: #{network_block_forward.15} parent=111 // pred_check_branch
              %383 = sbr.rel target = $region120
            $region119: #{network_block_forward.15} parent=111 // pred_region
              loop: start=0, step=1, limit=1
              $region121: #{network_block_forward.15} parent=119 // loop_pre_header
                _
              $region122: #{network_block_forward.15} parent=119 // loop_header
                %s386 = sphi 0, %s390
                %p387 = scmp.ge.s32.totalorder %s386, 1
                %s391 = sphi %s377, %s377
                %s392 = sphi %s370, %s370
              $region123: #{network_block_forward.15} parent=119 // loop_header_branch
                %389 = sbr.rel (%p387) target = $region127
              $region124: #{network_block_forward.15} parent=119 // loop_body
                %v393 = vld [vmem:[%s391] sm:$0xff]
                %394 = vst [vmem:[%s392] sm:$0xff] %v393
                %v395 = vld [vmem:[%s391 + $0x8] sm:$0xff]
                %396 = vst [vmem:[%s392 + $0x8] sm:$0xff] %v395
                %v397 = vld [vmem:[%s391 + $0xa0] sm:$0xff]
                %398 = vst [vmem:[%s392 + $0x10] sm:$0xff] %v397
                %v399 = vld [vmem:[%s391 + $0xa8] sm:$0xff]
                %400 = vst [vmem:[%s392 + $0x18] sm:$0xff] %v399
              $region125: #{network_block_forward.15} parent=119 // loop_footer
                %s390 = sadd.s32 1, %s386
              $region126: #{network_block_forward.15} parent=119 // loop_footer_branch
                %385 = sbr.rel target = $region122
              $region127: #{network_block_forward.15} parent=119 // loop_exit
                _
            $region120: #{network_block_forward.15} parent=111 // pred_fallthru
              _
          $region112: #{network_block_forward.15} parent=107 // pred_fallthru
            _
          %421 = vnop
        $region108: #{network_block_forward.15} parent=27 // pred_fallthru
          _
      $region28: #{network_block_forward.15} parent=5 // pred_fallthru
        _
      %p422 = scmp.le.s32.totalorder 1, %s12
      %p423 = scmp.lt.s32.totalorder %s12, 9
      %p424 = pnand %p422, %p423
      %p425 = pneg %p424
      // Predicated region
      $region143: #{network_block_forward.15} parent=5 // pred_check
        _
      $region144: #{network_block_forward.15} parent=5 // pred_check_branch
        %427 = sbr.rel (%p424) target = $region146
      $region145: #{network_block_forward.15} parent=5 // pred_region
        %s428 = ssub.s32 %s12, 1
        %s429 = sand.u32 %s88, 1
        %s430 = sand.u32 %s88, 1
        %s431 = smul.addr %s430, 32
        %s432 = scalar_lea.vmem [#allocation2], %s431
        // Predicated region
        $region147: #{network_block_forward.15} parent=145 // pred_check
          %p433 = pneg %p101
        $region148: #{network_block_forward.15} parent=145 // pred_check_branch
          %435 = sbr.rel (%p433) target = $region150
        $region149: #{network_block_forward.15} parent=145 // pred_region
          _
        $region150: #{network_block_forward.15} parent=145 // pred_fallthru
          _
        %s436 = sand.u32 %s118, 1
        %s437 = sand.u32 %s118, 1
        %s438 = smul.addr %s437, 32
        %s439 = scalar_lea.vmem [#allocation3], %s438
        // Predicated region
        $region151: #{network_block_forward.15} parent=145 // pred_check
          %p440 = pneg %p131
        $region152: #{network_block_forward.15} parent=145 // pred_check_branch
          %442 = sbr.rel (%p440) target = $region154
        $region153: #{network_block_forward.15} parent=145 // pred_region
          _
        $region154: #{network_block_forward.15} parent=145 // pred_fallthru
          _
        %s443 = sand.u32 %s148, 1
        %s444 = sand.u32 %s148, 1
        %s445 = smul.addr %s444, 32
        %s446 = scalar_lea.vmem [#allocation4], %s445
        // Predicated region
        $region155: #{network_block_forward.15} parent=145 // pred_check
          %p447 = pneg %p161
        $region156: #{network_block_forward.15} parent=145 // pred_check_branch
          %449 = sbr.rel (%p447) target = $region158
        $region157: #{network_block_forward.15} parent=145 // pred_region
          _
        $region158: #{network_block_forward.15} parent=145 // pred_fallthru
          _
        %p450 = pneg %p52
        %p451 = pneg %p49
        %p452 = pneg %p73
        %p453 = pneg %p70
        %s454 = sand.u32 %s88, 1
        %s455 = sand.u32 %s88, 1
        %s456 = smul.addr %s455, 32
        %s457 = scalar_lea.vmem [#allocation2], %s456
        %p458 = pneg %p101
        %p459 = pneg %p98
        %s460 = sand.u32 %s118, 1
        %s461 = sand.u32 %s118, 1
        %s462 = smul.addr %s461, 32
        %s463 = scalar_lea.vmem [#allocation3], %s462
        %p464 = pneg %p131
        %p465 = pneg %p128
        %s466 = sand.u32 %s148, 1
        %s467 = sand.u32 %s148, 1
        %s468 = smul.addr %s467, 32
        %s469 = scalar_lea.vmem [#allocation4], %s468
        %p470 = pneg %p161
        %p471 = pneg %p158
        %p472 = scmp.lt.s32.totalorder %s24, 0
        %s473 = scalar_select %p472, %s24, 0
        %s474 = smul.addr %s473, 8
        %s475 = scalar_lea.vmem %s5, %s474
        %p476 = pneg %p187
        %p477 = pneg %p184
        %p478 = pneg %p217
        %p479 = pneg %p214
        %s480 = sand.u32 %s204, 1
        %s481 = sand.u32 %s204, 1
        %s482 = smul.addr %s481, 16
        %s483 = scalar_lea.vmem [#allocation5], %s482
        %s484 = smul.u32 2, %s22
        %s485 = sadd.s32 %s23, 1
        %s486 = smul.u32 2, %s22
        %s487 = sadd.s32 %s23, 2
        %s488 = smul.u32 2, %s22
        %p489 = scmp.lt.s32.totalorder %s24, 0
        %s490 = scalar_select %p489, %s24, 0
        %s491 = smul.addr %s490, 8
        %s492 = scalar_lea.vmem %s5, %s491
        %s493 = smul.u32 2, %s22
        %v494 = vld [vmem:[%s0] sm:$0x1]
        %v495 = vld [vmem:[%s1] sm:$0x1]
        %v496 = vlaneseq
        %v497 = vshrl.u32 %v496, 7
        %v498 = vld [vmem:[%s432] sm:$0xff]
        %v499 = vld [vmem:[%s432 + $0x8] sm:$0x3]
        %v500 = vld [vmem:[%s432 + $0x10] sm:$0xff]
        %v501 = vld [vmem:[%s432 + $0x18] sm:$0x3]
        %v503 = vlaneseq
        %v504 = vshrl.u32 %v503, 7
        %v505 = vsub.s32 0, %v504
        %v506 = vrot.slane %v494, %v505
        %v508 = vmul.f32 %v498, %v506
        %v509 = vmul.f32 %v499, %v506
        %v510 = vmul.f32 %v500, %v506
        %v511 = vmul.f32 %v501, %v506
        %v513 = vlaneseq
        %v514 = vshrl.u32 %v513, 7
        %v515 = vsub.s32 0, %v514
        %v516 = vrot.slane %v495, %v515
        %v518 = vadd.f32 %v508, %v516
        %v519 = vadd.f32 %v509, %v516
        %v520 = vadd.f32 %v510, %v516
        %v521 = vadd.f32 %v511, %v516
        %v522 = vmax.f32 %v518, 0.0
        %v523 = vmax.f32 %v519, 0.0
        %v524 = vmax.f32 %v520, 0.0
        %v525 = vmax.f32 %v521, 0.0
        %p526 = scmp.ne.s32.totalorder %s23, 0
        %p527 = scmp.ne.s32.totalorder %s23, 9
        %p528 = pnand %p526, %p527
        %p529 = pneg %p528
        %vm530 = vcmp.ne.s32.totalorder %v497, 0
        %vm531 = vcmp.ne.s32.totalorder %v497, 9
        %vm532 = vmand %vm530, %vm531
        %s533 = scalar_select %p529, 1, 0
        %v534 = vstv %s533
        %vm535 = vcmp.eq.s32.totalorder %v534, 1
        %vm536 = vmand %vm532, %vm535
        %v537 = vsel %vm536, 1, 0
        %vm538 = vcmp.eq.s32.totalorder %v537, 1
        %v539 = vsel %vm538, %v522, 0.0
        %v540 = vsel %vm538, %v524, 0.0
        %v541 = vld [vmem:[%s492] sm:$0xff]
        %v542 = vld [vmem:[%s492 + $0x8] sm:$0xff]
        %v543 = vld [vmem:[%s492 + $0x10] sm:$0xff]
        %v544 = vld [vmem:[%s492 + $0x18] sm:$0xff]
        %v545 = vld [vmem:[%s492 + $0x20] sm:$0xff]
        %v546 = vld [vmem:[%s492 + $0x28] sm:$0xff]
        %v547 = vld [vmem:[%s492 + $0x30] sm:$0xff]
        %v548 = vld [vmem:[%s492 + $0x38] sm:$0xff]
        %v549 = vld [vmem:[%s492 + $0x40] sm:$0xff]
        %v550 = vld [vmem:[%s492 + $0x48] sm:$0xff]
        %v551 = vld [vmem:[%s492 + $0x50] sm:$0xff]
        %v552 = vld [vmem:[%s492 + $0x58] sm:$0xff]
        %v553 = vld [vmem:[%s492 + $0x60] sm:$0xff]
        %v554 = vld [vmem:[%s492 + $0x68] sm:$0xff]
        %v555 = vld [vmem:[%s492 + $0x70] sm:$0xff]
        %v556 = vld [vmem:[%s492 + $0x78] sm:$0xff]
        %v557 = vadd.s32 %v497, 1
        %vm558 = vcmp.ne.s32.totalorder %v557, 0
        %vm559 = vcmp.ne.s32.totalorder %v557, 9
        %vm560 = vmand %vm558, %vm559
        %vm561 = vmand %vm560, %vm535
        %v562 = vsel %vm561, 1, 0
        %vm563 = vcmp.eq.s32.totalorder %v562, 1
        %vm568 = vcmask 1046528
        %v569 = vrot.slane %v522, 1
        %v570 = vrot.slane %v523, 1
        %v571 = vsel %vm568, %v569, %v570
        %v572 = vrot.slane %v524, 1
        %v573 = vrot.slane %v525, 1
        %v574 = vsel %vm568, %v572, %v573
        %v577 = vsel %vm563, %v571, 0.0
        %v578 = vsel %vm563, %v574, 0.0
        %s579 = scalar_lea.vmem %s492, 128
        %v580 = vld [vmem:[%s579] sm:$0xff]
        %v581 = vld [vmem:[%s579 + $0x8] sm:$0xff]
        %v582 = vld [vmem:[%s579 + $0x10] sm:$0xff]
        %v583 = vld [vmem:[%s579 + $0x18] sm:$0xff]
        %v584 = vld [vmem:[%s579 + $0x20] sm:$0xff]
        %v585 = vld [vmem:[%s579 + $0x28] sm:$0xff]
        %v586 = vld [vmem:[%s579 + $0x30] sm:$0xff]
        %v587 = vld [vmem:[%s579 + $0x38] sm:$0xff]
        %v588 = vld [vmem:[%s579 + $0x40] sm:$0xff]
        %v589 = vld [vmem:[%s579 + $0x48] sm:$0xff]
        %v590 = vld [vmem:[%s579 + $0x50] sm:$0xff]
        %v591 = vld [vmem:[%s579 + $0x58] sm:$0xff]
        %v592 = vld [vmem:[%s579 + $0x60] sm:$0xff]
        %v593 = vld [vmem:[%s579 + $0x68] sm:$0xff]
        %v594 = vld [vmem:[%s579 + $0x70] sm:$0xff]
        %v595 = vld [vmem:[%s579 + $0x78] sm:$0xff]
        %596 = vmatprep.subr.mxu0 0.0
        %597 = vmatpush1.msra.mxu0 %v580
        %598 = vmatprep.subr.mxu0 0.0
        %599 = vmatpush1.msra.mxu0 %v581
        %600 = vmatprep.subr.mxu0 0.0
        %601 = vmatpush1.msra.mxu0 %v582
        %602 = vmatprep.subr.mxu0 0.0
        %603 = vmatpush1.msra.mxu0 %v583
        %604 = vmatprep.subr.mxu0 0.0
        %605 = vmatpush1.msra.mxu0 %v584
        %606 = vmatprep.subr.mxu0 0.0
        %607 = vmatpush1.msra.mxu0 %v585
        %608 = vmatprep.subr.mxu0 0.0
        %609 = vmatpush1.msra.mxu0 %v586
        %610 = vmatprep.subr.mxu0 0.0
        %611 = vmatpush1.msra.mxu0 %v587
        %612 = vmatprep.subr.mxu0 0.0
        %613 = vmatpush1.msra.mxu0 %v588
        %614 = vmatprep.subr.mxu0 0.0
        %615 = vmatpush1.msra.mxu0 %v589
        %616 = vmatprep.subr.mxu0 0.0
        %617 = vmatpush1.msra.mxu0 %v590
        %618 = vmatprep.subr.mxu0 0.0
        %619 = vmatpush1.msra.mxu0 %v591
        %620 = vmatprep.subr.mxu0 0.0
        %621 = vmatpush1.msra.mxu0 %v592
        %622 = vmatprep.subr.mxu0 0.0
        %623 = vmatpush1.msra.mxu0 %v593
        %624 = vmatprep.subr.mxu0 0.0
        %625 = vmatpush1.msra.mxu0 %v594
        %626 = vmatprep.subr.mxu0 0.0
        %627 = vmatpush1.msra.mxu0 %v595
        %628 = vmatprep.subr.mxu0 0.0
        %629 = vmatpush1.msra.mxu0 0.0
        %630 = vmatprep.subr.mxu0 0.0
        %631 = vmatpush1.msra.mxu0 0.0
        %632 = vmatprep.subr.mxu0 0.0
        %633 = vmatpush1.msra.mxu0 0.0
        %634 = vmatprep.subr.mxu0 0.0
        %635 = vmatpush1.msra.mxu0 0.0
        %636 = vmatprep.subr.mxu0 0.0
        %637 = vmatpush1.msra.mxu0 0.0
        %638 = vmatprep.subr.mxu0 0.0
        %639 = vmatpush1.msra.mxu0 0.0
        %640 = vmatprep.subr.mxu0 0.0
        %641 = vmatpush1.msra.mxu0 0.0
        %642 = vmatprep.subr.mxu0 0.0
        %643 = vmatpush1.msra.mxu0 0.0
        %644 = vmatprep.subr.mxu0 0.0
        %645 = vmatpush1.msra.mxu0 0.0
        %646 = vmatprep.subr.mxu0 0.0
        %647 = vmatpush1.msra.mxu0 0.0
        %648 = vmatprep.subr.mxu0 0.0
        %649 = vmatpush1.msra.mxu0 0.0
        %650 = vmatprep.subr.mxu0 0.0
        %651 = vmatpush1.msra.mxu0 0.0
        %652 = vmatprep.subr.mxu0 0.0
        %653 = vmatpush1.msra.mxu0 0.0
        %654 = vmatprep.subr.mxu0 0.0
        %655 = vmatpush1.msra.mxu0 0.0
        %656 = vmatprep.subr.mxu0 0.0
        %657 = vmatpush1.msra.mxu0 0.0
        %658 = vmatprep.subr.mxu0 0.0
        %659 = vmatpush1.msra.mxu0 0.0
        %660 = vmatprep.mubr.f32.mxu0 0.0
        %661 = vmatmul.mubr.f32.gmra.mrb[0].mxu0 %v577
        %v662 = vpop.f32.mrb[0].mxu0
        %v663 = vadd.f32 0.0, %v662
        %v664 = vpop.f32.mrb[0].mxu0
        %665 = vmatprep.mubr.f32.mxu0 0.0
        %666 = vmatmul.mubr.f32.gmra.mrb[0].mxu0 %v578
        %v667 = vpop.f32.mrb[0].mxu0
        %v668 = vadd.f32 0.0, %v667
        %v669 = vpop.f32.mrb[0].mxu0
        %670 = vdwg.mxu0
        %671 = vmatprep.subr.mxu0 0.0
        %672 = vmatpush1.msra.mxu0 %v541
        %673 = vmatprep.subr.mxu0 0.0
        %674 = vmatpush1.msra.mxu0 %v542
        %675 = vmatprep.subr.mxu0 0.0
        %676 = vmatpush1.msra.mxu0 %v543
        %677 = vmatprep.subr.mxu0 0.0
        %678 = vmatpush1.msra.mxu0 %v544
        %679 = vmatprep.subr.mxu0 0.0
        %680 = vmatpush1.msra.mxu0 %v545
        %681 = vmatprep.subr.mxu0 0.0
        %682 = vmatpush1.msra.mxu0 %v546
        %683 = vmatprep.subr.mxu0 0.0
        %684 = vmatpush1.msra.mxu0 %v547
        %685 = vmatprep.subr.mxu0 0.0
        %686 = vmatpush1.msra.mxu0 %v548
        %687 = vmatprep.subr.mxu0 0.0
        %688 = vmatpush1.msra.mxu0 %v549
        %689 = vmatprep.subr.mxu0 0.0
        %690 = vmatpush1.msra.mxu0 %v550
        %691 = vmatprep.subr.mxu0 0.0
        %692 = vmatpush1.msra.mxu0 %v551
        %693 = vmatprep.subr.mxu0 0.0
        %694 = vmatpush1.msra.mxu0 %v552
        %695 = vmatprep.subr.mxu0 0.0
        %696 = vmatpush1.msra.mxu0 %v553
        %697 = vmatprep.subr.mxu0 0.0
        %698 = vmatpush1.msra.mxu0 %v554
        %699 = vmatprep.subr.mxu0 0.0
        %700 = vmatpush1.msra.mxu0 %v555
        %701 = vmatprep.subr.mxu0 0.0
        %702 = vmatpush1.msra.mxu0 %v556
        %703 = vmatprep.subr.mxu0 0.0
        %704 = vmatpush1.msra.mxu0 0.0
        %705 = vmatprep.subr.mxu0 0.0
        %706 = vmatpush1.msra.mxu0 0.0
        %707 = vmatprep.subr.mxu0 0.0
        %708 = vmatpush1.msra.mxu0 0.0
        %709 = vmatprep.subr.mxu0 0.0
        %710 = vmatpush1.msra.mxu0 0.0
        %711 = vmatprep.subr.mxu0 0.0
        %712 = vmatpush1.msra.mxu0 0.0
        %713 = vmatprep.subr.mxu0 0.0
        %714 = vmatpush1.msra.mxu0 0.0
        %715 = vmatprep.subr.mxu0 0.0
        %716 = vmatpush1.msra.mxu0 0.0
        %717 = vmatprep.subr.mxu0 0.0
        %718 = vmatpush1.msra.mxu0 0.0
        %719 = vmatprep.subr.mxu0 0.0
        %720 = vmatpush1.msra.mxu0 0.0
        %721 = vmatprep.subr.mxu0 0.0
        %722 = vmatpush1.msra.mxu0 0.0
        %723 = vmatprep.subr.mxu0 0.0
        %724 = vmatpush1.msra.mxu0 0.0
        %725 = vmatprep.subr.mxu0 0.0
        %726 = vmatpush1.msra.mxu0 0.0
        %727 = vmatprep.subr.mxu0 0.0
        %728 = vmatpush1.msra.mxu0 0.0
        %729 = vmatprep.subr.mxu0 0.0
        %730 = vmatpush1.msra.mxu0 0.0
        %731 = vmatprep.subr.mxu0 0.0
        %732 = vmatpush1.msra.mxu0 0.0
        %733 = vmatprep.subr.mxu0 0.0
        %734 = vmatpush1.msra.mxu0 0.0
        %735 = vmatprep.mubr.f32.mxu0 0.0
        %736 = vmatmul.mubr.f32.gmra.mrb[0].mxu0 %v539
        %v737 = vpop.f32.mrb[0].mxu0
        %v738 = vadd.f32 %v663, %v737
        %v739 = vpop.f32.mrb[0].mxu0
        %740 = vmatprep.mubr.f32.mxu0 0.0
        %741 = vmatmul.mubr.f32.gmra.mrb[0].mxu0 %v540
        %v742 = vpop.f32.mrb[0].mxu0
        %v743 = vadd.f32 %v668, %v742
        %v744 = vpop.f32.mrb[0].mxu0
        %745 = vdwg.mxu0
        %v746 = vadd.s32 %v497, 2
        %vm747 = vcmp.ne.s32.totalorder %v746, 0
        %vm748 = vcmp.ne.s32.totalorder %v746, 9
        %vm749 = vmand %vm747, %vm748
        %vm750 = vmand %vm749, %vm535
        %v751 = vsel %vm750, 1, 0
        %vm752 = vcmp.eq.s32.totalorder %v751, 1
        %vm753 = vcmask 1045504
        %v754 = vrot.slane %v522, 2
        %v755 = vrot.slane %v523, 2
        %v756 = vsel %vm753, %v754, %v755
        %v757 = vrot.slane %v524, 2
        %v758 = vrot.slane %v525, 2
        %v759 = vsel %vm753, %v757, %v758
        %v762 = vsel %vm752, %v756, 0.0
        %v763 = vsel %vm752, %v759, 0.0
        %s764 = scalar_lea.vmem %s492, 256
        %v765 = vld [vmem:[%s764] sm:$0xff]
        %v766 = vld [vmem:[%s764 + $0x8] sm:$0xff]
        %v767 = vld [vmem:[%s764 + $0x10] sm:$0xff]
        %v768 = vld [vmem:[%s764 + $0x18] sm:$0xff]
        %v769 = vld [vmem:[%s764 + $0x20] sm:$0xff]
        %v770 = vld [vmem:[%s764 + $0x28] sm:$0xff]
        %v771 = vld [vmem:[%s764 + $0x30] sm:$0xff]
        %v772 = vld [vmem:[%s764 + $0x38] sm:$0xff]
        %v773 = vld [vmem:[%s764 + $0x40] sm:$0xff]
        %v774 = vld [vmem:[%s764 + $0x48] sm:$0xff]
        %v775 = vld [vmem:[%s764 + $0x50] sm:$0xff]
        %v776 = vld [vmem:[%s764 + $0x58] sm:$0xff]
        %v777 = vld [vmem:[%s764 + $0x60] sm:$0xff]
        %v778 = vld [vmem:[%s764 + $0x68] sm:$0xff]
        %v779 = vld [vmem:[%s764 + $0x70] sm:$0xff]
        %v780 = vld [vmem:[%s764 + $0x78] sm:$0xff]
        %781 = vmatprep.subr.mxu0 0.0
        %782 = vmatpush1.msra.mxu0 %v765
        %783 = vmatprep.subr.mxu0 0.0
        %784 = vmatpush1.msra.mxu0 %v766
        %785 = vmatprep.subr.mxu0 0.0
        %786 = vmatpush1.msra.mxu0 %v767
        %787 = vmatprep.subr.mxu0 0.0
        %788 = vmatpush1.msra.mxu0 %v768
        %789 = vmatprep.subr.mxu0 0.0
        %790 = vmatpush1.msra.mxu0 %v769
        %791 = vmatprep.subr.mxu0 0.0
        %792 = vmatpush1.msra.mxu0 %v770
        %793 = vmatprep.subr.mxu0 0.0
        %794 = vmatpush1.msra.mxu0 %v771
        %795 = vmatprep.subr.mxu0 0.0
        %796 = vmatpush1.msra.mxu0 %v772
        %797 = vmatprep.subr.mxu0 0.0
        %798 = vmatpush1.msra.mxu0 %v773
        %799 = vmatprep.subr.mxu0 0.0
        %800 = vmatpush1.msra.mxu0 %v774
        %801 = vmatprep.subr.mxu0 0.0
        %802 = vmatpush1.msra.mxu0 %v775
        %803 = vmatprep.subr.mxu0 0.0
        %804 = vmatpush1.msra.mxu0 %v776
        %805 = vmatprep.subr.mxu0 0.0
        %806 = vmatpush1.msra.mxu0 %v777
        %807 = vmatprep.subr.mxu0 0.0
        %808 = vmatpush1.msra.mxu0 %v778
        %809 = vmatprep.subr.mxu0 0.0
        %810 = vmatpush1.msra.mxu0 %v779
        %811 = vmatprep.subr.mxu0 0.0
        %812 = vmatpush1.msra.mxu0 %v780
        %813 = vmatprep.subr.mxu0 0.0
        %814 = vmatpush1.msra.mxu0 0.0
        %815 = vmatprep.subr.mxu0 0.0
        %816 = vmatpush1.msra.mxu0 0.0
        %817 = vmatprep.subr.mxu0 0.0
        %818 = vmatpush1.msra.mxu0 0.0
        %819 = vmatprep.subr.mxu0 0.0
        %820 = vmatpush1.msra.mxu0 0.0
        %821 = vmatprep.subr.mxu0 0.0
        %822 = vmatpush1.msra.mxu0 0.0
        %823 = vmatprep.subr.mxu0 0.0
        %824 = vmatpush1.msra.mxu0 0.0
        %825 = vmatprep.subr.mxu0 0.0
        %826 = vmatpush1.msra.mxu0 0.0
        %827 = vmatprep.subr.mxu0 0.0
        %828 = vmatpush1.msra.mxu0 0.0
        %829 = vmatprep.subr.mxu0 0.0
        %830 = vmatpush1.msra.mxu0 0.0
        %831 = vmatprep.subr.mxu0 0.0
        %832 = vmatpush1.msra.mxu0 0.0
        %833 = vmatprep.subr.mxu0 0.0
        %834 = vmatpush1.msra.mxu0 0.0
        %835 = vmatprep.subr.mxu0 0.0
        %836 = vmatpush1.msra.mxu0 0.0
        %837 = vmatprep.subr.mxu0 0.0
        %838 = vmatpush1.msra.mxu0 0.0
        %839 = vmatprep.subr.mxu0 0.0
        %840 = vmatpush1.msra.mxu0 0.0
        %841 = vmatprep.subr.mxu0 0.0
        %842 = vmatpush1.msra.mxu0 0.0
        %843 = vmatprep.subr.mxu0 0.0
        %844 = vmatpush1.msra.mxu0 0.0
        %845 = vmatprep.mubr.f32.mxu0 0.0
        %846 = vmatmul.mubr.f32.gmra.mrb[0].mxu0 %v762
        %v847 = vpop.f32.mrb[0].mxu0
        %v848 = vadd.f32 0.0, %v847
        %v849 = vpop.f32.mrb[0].mxu0
        %850 = vmatprep.mubr.f32.mxu0 0.0
        %851 = vmatmul.mubr.f32.gmra.mrb[0].mxu0 %v763
        %v852 = vpop.f32.mrb[0].mxu0
        %v853 = vadd.f32 0.0, %v852
        %v854 = vpop.f32.mrb[0].mxu0
        %855 = vdwg.mxu0
        %v856 = vadd.f32 %v738, %v848
        %v857 = vadd.f32 %v743, %v853
        %v858 = vld [vmem:[%s439] sm:$0xff]
        %v859 = vld [vmem:[%s439 + $0x8] sm:$0x3]
        %v860 = vld [vmem:[%s439 + $0x10] sm:$0xff]
        %v861 = vld [vmem:[%s439 + $0x18] sm:$0x3]
        %v862 = vmul.f32 %v858, %v506
        %v863 = vmul.f32 %v859, %v506
        %v864 = vmul.f32 %v860, %v506
        %v865 = vmul.f32 %v861, %v506
        %v866 = vadd.f32 %v862, %v516
        %v867 = vadd.f32 %v863, %v516
        %v868 = vadd.f32 %v864, %v516
        %v869 = vadd.f32 %v865, %v516
        %v870 = vmax.f32 %v866, 0.0
        %v871 = vmax.f32 %v867, 0.0
        %v872 = vmax.f32 %v868, 0.0
        %v873 = vmax.f32 %v869, 0.0
        %s874 = sadd.s32 %s23, 1
        %p875 = scmp.ne.s32.totalorder %s874, 0
        %p876 = scmp.ne.s32.totalorder %s874, 9
        %p877 = pnand %p875, %p876
        %p878 = pneg %p877
        %s879 = scalar_select %p878, 1, 0
        %v880 = vstv %s879
        %vm881 = vcmp.eq.s32.totalorder %v880, 1
        %vm882 = vmand %vm532, %vm881
        %v883 = vsel %vm882, 1, 0
        %vm884 = vcmp.eq.s32.totalorder %v883, 1
        %v885 = vsel %vm884, %v870, 0.0
        %v886 = vsel %vm884, %v872, 0.0
        %s887 = scalar_lea.vmem %s492, 384
        %v888 = vld [vmem:[%s887] sm:$0xff]
        %v889 = vld [vmem:[%s887 + $0x8] sm:$0xff]
        %v890 = vld [vmem:[%s887 + $0x10] sm:$0xff]
        %v891 = vld [vmem:[%s887 + $0x18] sm:$0xff]
        %v892 = vld [vmem:[%s887 + $0x20] sm:$0xff]
        %v893 = vld [vmem:[%s887 + $0x28] sm:$0xff]
        %v894 = vld [vmem:[%s887 + $0x30] sm:$0xff]
        %v895 = vld [vmem:[%s887 + $0x38] sm:$0xff]
        %v896 = vld [vmem:[%s887 + $0x40] sm:$0xff]
        %v897 = vld [vmem:[%s887 + $0x48] sm:$0xff]
        %v898 = vld [vmem:[%s887 + $0x50] sm:$0xff]
        %v899 = vld [vmem:[%s887 + $0x58] sm:$0xff]
        %v900 = vld [vmem:[%s887 + $0x60] sm:$0xff]
        %v901 = vld [vmem:[%s887 + $0x68] sm:$0xff]
        %v902 = vld [vmem:[%s887 + $0x70] sm:$0xff]
        %v903 = vld [vmem:[%s887 + $0x78] sm:$0xff]
        %904 = vmatprep.subr.mxu0 0.0
        %905 = vmatpush1.msra.mxu0 %v888
        %906 = vmatprep.subr.mxu0 0.0
        %907 = vmatpush1.msra.mxu0 %v889
        %908 = vmatprep.subr.mxu0 0.0
        %909 = vmatpush1.msra.mxu0 %v890
        %910 = vmatprep.subr.mxu0 0.0
        %911 = vmatpush1.msra.mxu0 %v891
        %912 = vmatprep.subr.mxu0 0.0
        %913 = vmatpush1.msra.mxu0 %v892
        %914 = vmatprep.subr.mxu0 0.0
        %915 = vmatpush1.msra.mxu0 %v893
        %916 = vmatprep.subr.mxu0 0.0
        %917 = vmatpush1.msra.mxu0 %v894
        %918 = vmatprep.subr.mxu0 0.0
        %919 = vmatpush1.msra.mxu0 %v895
        %920 = vmatprep.subr.mxu0 0.0
        %921 = vmatpush1.msra.mxu0 %v896
        %922 = vmatprep.subr.mxu0 0.0
        %923 = vmatpush1.msra.mxu0 %v897
        %924 = vmatprep.subr.mxu0 0.0
        %925 = vmatpush1.msra.mxu0 %v898
        %926 = vmatprep.subr.mxu0 0.0
        %927 = vmatpush1.msra.mxu0 %v899
        %928 = vmatprep.subr.mxu0 0.0
        %929 = vmatpush1.msra.mxu0 %v900
        %930 = vmatprep.subr.mxu0 0.0
        %931 = vmatpush1.msra.mxu0 %v901
        %932 = vmatprep.subr.mxu0 0.0
        %933 = vmatpush1.msra.mxu0 %v902
        %934 = vmatprep.subr.mxu0 0.0
        %935 = vmatpush1.msra.mxu0 %v903
        %936 = vmatprep.subr.mxu0 0.0
        %937 = vmatpush1.msra.mxu0 0.0
        %938 = vmatprep.subr.mxu0 0.0
        %939 = vmatpush1.msra.mxu0 0.0
        %940 = vmatprep.subr.mxu0 0.0
        %941 = vmatpush1.msra.mxu0 0.0
        %942 = vmatprep.subr.mxu0 0.0
        %943 = vmatpush1.msra.mxu0 0.0
        %944 = vmatprep.subr.mxu0 0.0
        %945 = vmatpush1.msra.mxu0 0.0
        %946 = vmatprep.subr.mxu0 0.0
        %947 = vmatpush1.msra.mxu0 0.0
        %948 = vmatprep.subr.mxu0 0.0
        %949 = vmatpush1.msra.mxu0 0.0
        %950 = vmatprep.subr.mxu0 0.0
        %951 = vmatpush1.msra.mxu0 0.0
        %952 = vmatprep.subr.mxu0 0.0
        %953 = vmatpush1.msra.mxu0 0.0
        %954 = vmatprep.subr.mxu0 0.0
        %955 = vmatpush1.msra.mxu0 0.0
        %956 = vmatprep.subr.mxu0 0.0
        %957 = vmatpush1.msra.mxu0 0.0
        %958 = vmatprep.subr.mxu0 0.0
        %959 = vmatpush1.msra.mxu0 0.0
        %960 = vmatprep.subr.mxu0 0.0
        %961 = vmatpush1.msra.mxu0 0.0
        %962 = vmatprep.subr.mxu0 0.0
        %963 = vmatpush1.msra.mxu0 0.0
        %964 = vmatprep.subr.mxu0 0.0
        %965 = vmatpush1.msra.mxu0 0.0
        %966 = vmatprep.subr.mxu0 0.0
        %967 = vmatpush1.msra.mxu0 0.0
        %968 = vmatprep.mubr.f32.mxu0 0.0
        %969 = vmatmul.mubr.f32.gmra.mrb[0].mxu0 %v885
        %v970 = vpop.f32.mrb[0].mxu0
        %v971 = vadd.f32 0.0, %v970
        %v972 = vpop.f32.mrb[0].mxu0
        %973 = vmatprep.mubr.f32.mxu0 0.0
        %974 = vmatmul.mubr.f32.gmra.mrb[0].mxu0 %v886
        %v975 = vpop.f32.mrb[0].mxu0
        %v976 = vadd.f32 0.0, %v975
        %v977 = vpop.f32.mrb[0].mxu0
        %978 = vdwg.mxu0
        %v979 = vadd.f32 %v856, %v971
        %v980 = vadd.f32 %v857, %v976
        %vm981 = vmand %vm560, %vm881
        %v982 = vsel %vm981, 1, 0
        %vm983 = vcmp.eq.s32.totalorder %v982, 1
        %v988 = vrot.slane %v870, 1
        %v989 = vrot.slane %v871, 1
        %v990 = vsel %vm568, %v988, %v989
        %v991 = vrot.slane %v872, 1
        %v992 = vrot.slane %v873, 1
        %v993 = vsel %vm568, %v991, %v992
        %v996 = vsel %vm983, %v990, 0.0
        %v997 = vsel %vm983, %v993, 0.0
        %s998 = scalar_lea.vmem %s492, 512
        %v999 = vld [vmem:[%s998] sm:$0xff]
        %v1000 = vld [vmem:[%s998 + $0x8] sm:$0xff]
        %v1001 = vld [vmem:[%s998 + $0x10] sm:$0xff]
        %v1002 = vld [vmem:[%s998 + $0x18] sm:$0xff]
        %v1003 = vld [vmem:[%s998 + $0x20] sm:$0xff]
        %v1004 = vld [vmem:[%s998 + $0x28] sm:$0xff]
        %v1005 = vld [vmem:[%s998 + $0x30] sm:$0xff]
        %v1006 = vld [vmem:[%s998 + $0x38] sm:$0xff]
        %v1007 = vld [vmem:[%s998 + $0x40] sm:$0xff]
        %v1008 = vld [vmem:[%s998 + $0x48] sm:$0xff]
        %v1009 = vld [vmem:[%s998 + $0x50] sm:$0xff]
        %v1010 = vld [vmem:[%s998 + $0x58] sm:$0xff]
        %v1011 = vld [vmem:[%s998 + $0x60] sm:$0xff]
        %v1012 = vld [vmem:[%s998 + $0x68] sm:$0xff]
        %v1013 = vld [vmem:[%s998 + $0x70] sm:$0xff]
        %v1014 = vld [vmem:[%s998 + $0x78] sm:$0xff]
        %1015 = vmatprep.subr.mxu0 0.0
        %1016 = vmatpush1.msra.mxu0 %v999
        %1017 = vmatprep.subr.mxu0 0.0
        %1018 = vmatpush1.msra.mxu0 %v1000
        %1019 = vmatprep.subr.mxu0 0.0
        %1020 = vmatpush1.msra.mxu0 %v1001
        %1021 = vmatprep.subr.mxu0 0.0
        %1022 = vmatpush1.msra.mxu0 %v1002
        %1023 = vmatprep.subr.mxu0 0.0
        %1024 = vmatpush1.msra.mxu0 %v1003
        %1025 = vmatprep.subr.mxu0 0.0
        %1026 = vmatpush1.msra.mxu0 %v1004
        %1027 = vmatprep.subr.mxu0 0.0
        %1028 = vmatpush1.msra.mxu0 %v1005
        %1029 = vmatprep.subr.mxu0 0.0
        %1030 = vmatpush1.msra.mxu0 %v1006
        %1031 = vmatprep.subr.mxu0 0.0
        %1032 = vmatpush1.msra.mxu0 %v1007
        %1033 = vmatprep.subr.mxu0 0.0
        %1034 = vmatpush1.msra.mxu0 %v1008
        %1035 = vmatprep.subr.mxu0 0.0
        %1036 = vmatpush1.msra.mxu0 %v1009
        %1037 = vmatprep.subr.mxu0 0.0
        %1038 = vmatpush1.msra.mxu0 %v1010
        %1039 = vmatprep.subr.mxu0 0.0
        %1040 = vmatpush1.msra.mxu0 %v1011
        %1041 = vmatprep.subr.mxu0 0.0
        %1042 = vmatpush1.msra.mxu0 %v1012
        %1043 = vmatprep.subr.mxu0 0.0
        %1044 = vmatpush1.msra.mxu0 %v1013
        %1045 = vmatprep.subr.mxu0 0.0
        %1046 = vmatpush1.msra.mxu0 %v1014
        %1047 = vmatprep.subr.mxu0 0.0
        %1048 = vmatpush1.msra.mxu0 0.0
        %1049 = vmatprep.subr.mxu0 0.0
        %1050 = vmatpush1.msra.mxu0 0.0
        %1051 = vmatprep.subr.mxu0 0.0
        %1052 = vmatpush1.msra.mxu0 0.0
        %1053 = vmatprep.subr.mxu0 0.0
        %1054 = vmatpush1.msra.mxu0 0.0
        %1055 = vmatprep.subr.mxu0 0.0
        %1056 = vmatpush1.msra.mxu0 0.0
        %1057 = vmatprep.subr.mxu0 0.0
        %1058 = vmatpush1.msra.mxu0 0.0
        %1059 = vmatprep.subr.mxu0 0.0
        %1060 = vmatpush1.msra.mxu0 0.0
        %1061 = vmatprep.subr.mxu0 0.0
        %1062 = vmatpush1.msra.mxu0 0.0
        %1063 = vmatprep.subr.mxu0 0.0
        %1064 = vmatpush1.msra.mxu0 0.0
        %1065 = vmatprep.subr.mxu0 0.0
        %1066 = vmatpush1.msra.mxu0 0.0
        %1067 = vmatprep.subr.mxu0 0.0
        %1068 = vmatpush1.msra.mxu0 0.0
        %1069 = vmatprep.subr.mxu0 0.0
        %1070 = vmatpush1.msra.mxu0 0.0
        %1071 = vmatprep.subr.mxu0 0.0
        %1072 = vmatpush1.msra.mxu0 0.0
        %1073 = vmatprep.subr.mxu0 0.0
        %1074 = vmatpush1.msra.mxu0 0.0
        %1075 = vmatprep.subr.mxu0 0.0
        %1076 = vmatpush1.msra.mxu0 0.0
        %1077 = vmatprep.subr.mxu0 0.0
        %1078 = vmatpush1.msra.mxu0 0.0
        %1079 = vmatprep.mubr.f32.mxu0 0.0
        %1080 = vmatmul.mubr.f32.gmra.mrb[0].mxu0 %v996
        %v1081 = vpop.f32.mrb[0].mxu0
        %v1082 = vadd.f32 0.0, %v1081
        %v1083 = vpop.f32.mrb[0].mxu0
        %1084 = vmatprep.mubr.f32.mxu0 0.0
        %1085 = vmatmul.mubr.f32.gmra.mrb[0].mxu0 %v997
        %v1086 = vpop.f32.mrb[0].mxu0
        %v1087 = vadd.f32 0.0, %v1086
        %v1088 = vpop.f32.mrb[0].mxu0
        %1089 = vdwg.mxu0
        %v1090 = vadd.f32 %v979, %v1082
        %v1091 = vadd.f32 %v980, %v1087
        %vm1092 = vmand %vm749, %vm881
        %v1093 = vsel %vm1092, 1, 0
        %vm1094 = vcmp.eq.s32.totalorder %v1093, 1
        %v1095 = vrot.slane %v870, 2
        %v1096 = vrot.slane %v871, 2
        %v1097 = vsel %vm753, %v1095, %v1096
        %v1098 = vrot.slane %v872, 2
        %v1099 = vrot.slane %v873, 2
        %v1100 = vsel %vm753, %v1098, %v1099
        %v1103 = vsel %vm1094, %v1097, 0.0
        %v1104 = vsel %vm1094, %v1100, 0.0
        %s1105 = scalar_lea.vmem %s492, 640
        %v1106 = vld [vmem:[%s1105] sm:$0xff]
        %v1107 = vld [vmem:[%s1105 + $0x8] sm:$0xff]
        %v1108 = vld [vmem:[%s1105 + $0x10] sm:$0xff]
        %v1109 = vld [vmem:[%s1105 + $0x18] sm:$0xff]
        %v1110 = vld [vmem:[%s1105 + $0x20] sm:$0xff]
        %v1111 = vld [vmem:[%s1105 + $0x28] sm:$0xff]
        %v1112 = vld [vmem:[%s1105 + $0x30] sm:$0xff]
        %v1113 = vld [vmem:[%s1105 + $0x38] sm:$0xff]
        %v1114 = vld [vmem:[%s1105 + $0x40] sm:$0xff]
        %v1115 = vld [vmem:[%s1105 + $0x48] sm:$0xff]
        %v1116 = vld [vmem:[%s1105 + $0x50] sm:$0xff]
        %v1117 = vld [vmem:[%s1105 + $0x58] sm:$0xff]
        %v1118 = vld [vmem:[%s1105 + $0x60] sm:$0xff]
        %v1119 = vld [vmem:[%s1105 + $0x68] sm:$0xff]
        %v1120 = vld [vmem:[%s1105 + $0x70] sm:$0xff]
        %v1121 = vld [vmem:[%s1105 + $0x78] sm:$0xff]
        %1122 = vmatprep.subr.mxu0 0.0
        %1123 = vmatpush1.msra.mxu0 %v1106
        %1124 = vmatprep.subr.mxu0 0.0
        %1125 = vmatpush1.msra.mxu0 %v1107
        %1126 = vmatprep.subr.mxu0 0.0
        %1127 = vmatpush1.msra.mxu0 %v1108
        %1128 = vmatprep.subr.mxu0 0.0
        %1129 = vmatpush1.msra.mxu0 %v1109
        %1130 = vmatprep.subr.mxu0 0.0
        %1131 = vmatpush1.msra.mxu0 %v1110
        %1132 = vmatprep.subr.mxu0 0.0
        %1133 = vmatpush1.msra.mxu0 %v1111
        %1134 = vmatprep.subr.mxu0 0.0
        %1135 = vmatpush1.msra.mxu0 %v1112
        %1136 = vmatprep.subr.mxu0 0.0
        %1137 = vmatpush1.msra.mxu0 %v1113
        %1138 = vmatprep.subr.mxu0 0.0
        %1139 = vmatpush1.msra.mxu0 %v1114
        %1140 = vmatprep.subr.mxu0 0.0
        %1141 = vmatpush1.msra.mxu0 %v1115
        %1142 = vmatprep.subr.mxu0 0.0
        %1143 = vmatpush1.msra.mxu0 %v1116
        %1144 = vmatprep.subr.mxu0 0.0
        %1145 = vmatpush1.msra.mxu0 %v1117
        %1146 = vmatprep.subr.mxu0 0.0
        %1147 = vmatpush1.msra.mxu0 %v1118
        %1148 = vmatprep.subr.mxu0 0.0
        %1149 = vmatpush1.msra.mxu0 %v1119
        %1150 = vmatprep.subr.mxu0 0.0
        %1151 = vmatpush1.msra.mxu0 %v1120
        %1152 = vmatprep.subr.mxu0 0.0
        %1153 = vmatpush1.msra.mxu0 %v1121
        %1154 = vmatprep.subr.mxu0 0.0
        %1155 = vmatpush1.msra.mxu0 0.0
        %1156 = vmatprep.subr.mxu0 0.0
        %1157 = vmatpush1.msra.mxu0 0.0
        %1158 = vmatprep.subr.mxu0 0.0
        %1159 = vmatpush1.msra.mxu0 0.0
        %1160 = vmatprep.subr.mxu0 0.0
        %1161 = vmatpush1.msra.mxu0 0.0
        %1162 = vmatprep.subr.mxu0 0.0
        %1163 = vmatpush1.msra.mxu0 0.0
        %1164 = vmatprep.subr.mxu0 0.0
        %1165 = vmatpush1.msra.mxu0 0.0
        %1166 = vmatprep.subr.mxu0 0.0
        %1167 = vmatpush1.msra.mxu0 0.0
        %1168 = vmatprep.subr.mxu0 0.0
        %1169 = vmatpush1.msra.mxu0 0.0
        %1170 = vmatprep.subr.mxu0 0.0
        %1171 = vmatpush1.msra.mxu0 0.0
        %1172 = vmatprep.subr.mxu0 0.0
        %1173 = vmatpush1.msra.mxu0 0.0
        %1174 = vmatprep.subr.mxu0 0.0
        %1175 = vmatpush1.msra.mxu0 0.0
        %1176 = vmatprep.subr.mxu0 0.0
        %1177 = vmatpush1.msra.mxu0 0.0
        %1178 = vmatprep.subr.mxu0 0.0
        %1179 = vmatpush1.msra.mxu0 0.0
        %1180 = vmatprep.subr.mxu0 0.0
        %1181 = vmatpush1.msra.mxu0 0.0
        %1182 = vmatprep.subr.mxu0 0.0
        %1183 = vmatpush1.msra.mxu0 0.0
        %1184 = vmatprep.subr.mxu0 0.0
        %1185 = vmatpush1.msra.mxu0 0.0
        %1186 = vmatprep.mubr.f32.mxu0 0.0
        %1187 = vmatmul.mubr.f32.gmra.mrb[0].mxu0 %v1103
        %v1188 = vpop.f32.mrb[0].mxu0
        %v1189 = vadd.f32 0.0, %v1188
        %v1190 = vpop.f32.mrb[0].mxu0
        %1191 = vmatprep.mubr.f32.mxu0 0.0
        %1192 = vmatmul.mubr.f32.gmra.mrb[0].mxu0 %v1104
        %v1193 = vpop.f32.mrb[0].mxu0
        %v1194 = vadd.f32 0.0, %v1193
        %v1195 = vpop.f32.mrb[0].mxu0
        %1196 = vdwg.mxu0
        %v1197 = vadd.f32 %v1090, %v1189
        %v1198 = vadd.f32 %v1091, %v1194
        %v1199 = vld [vmem:[%s446] sm:$0xff]
        %v1200 = vld [vmem:[%s446 + $0x8] sm:$0x3]
        %v1201 = vld [vmem:[%s446 + $0x10] sm:$0xff]
        %v1202 = vld [vmem:[%s446 + $0x18] sm:$0x3]
        %v1203 = vmul.f32 %v1199, %v506
        %v1204 = vmul.f32 %v1200, %v506
        %v1205 = vmul.f32 %v1201, %v506
        %v1206 = vmul.f32 %v1202, %v506
        %v1207 = vadd.f32 %v1203, %v516
        %v1208 = vadd.f32 %v1204, %v516
        %v1209 = vadd.f32 %v1205, %v516
        %v1210 = vadd.f32 %v1206, %v516
        %v1211 = vmax.f32 %v1207, 0.0
        %v1212 = vmax.f32 %v1208, 0.0
        %v1213 = vmax.f32 %v1209, 0.0
        %v1214 = vmax.f32 %v1210, 0.0
        %s1215 = sadd.s32 %s23, 2
        %p1216 = scmp.ne.s32.totalorder %s1215, 0
        %p1217 = scmp.ne.s32.totalorder %s1215, 9
        %p1218 = pnand %p1216, %p1217
        %p1219 = pneg %p1218
        %s1220 = scalar_select %p1219, 1, 0
        %v1221 = vstv %s1220
        %vm1222 = vcmp.eq.s32.totalorder %v1221, 1
        %vm1223 = vmand %vm532, %vm1222
        %v1224 = vsel %vm1223, 1, 0
        %vm1225 = vcmp.eq.s32.totalorder %v1224, 1
        %v1226 = vsel %vm1225, %v1211, 0.0
        %v1227 = vsel %vm1225, %v1213, 0.0
        %s1228 = scalar_lea.vmem %s492, 768
        %v1229 = vld [vmem:[%s1228] sm:$0xff]
        %v1230 = vld [vmem:[%s1228 + $0x8] sm:$0xff]
        %v1231 = vld [vmem:[%s1228 + $0x10] sm:$0xff]
        %v1232 = vld [vmem:[%s1228 + $0x18] sm:$0xff]
        %v1233 = vld [vmem:[%s1228 + $0x20] sm:$0xff]
        %v1234 = vld [vmem:[%s1228 + $0x28] sm:$0xff]
        %v1235 = vld [vmem:[%s1228 + $0x30] sm:$0xff]
        %v1236 = vld [vmem:[%s1228 + $0x38] sm:$0xff]
        %v1237 = vld [vmem:[%s1228 + $0x40] sm:$0xff]
        %v1238 = vld [vmem:[%s1228 + $0x48] sm:$0xff]
        %v1239 = vld [vmem:[%s1228 + $0x50] sm:$0xff]
        %v1240 = vld [vmem:[%s1228 + $0x58] sm:$0xff]
        %v1241 = vld [vmem:[%s1228 + $0x60] sm:$0xff]
        %v1242 = vld [vmem:[%s1228 + $0x68] sm:$0xff]
        %v1243 = vld [vmem:[%s1228 + $0x70] sm:$0xff]
        %v1244 = vld [vmem:[%s1228 + $0x78] sm:$0xff]
        %1245 = vmatprep.subr.mxu0 0.0
        %1246 = vmatpush1.msra.mxu0 %v1229
        %1247 = vmatprep.subr.mxu0 0.0
        %1248 = vmatpush1.msra.mxu0 %v1230
        %1249 = vmatprep.subr.mxu0 0.0
        %1250 = vmatpush1.msra.mxu0 %v1231
        %1251 = vmatprep.subr.mxu0 0.0
        %1252 = vmatpush1.msra.mxu0 %v1232
        %1253 = vmatprep.subr.mxu0 0.0
        %1254 = vmatpush1.msra.mxu0 %v1233
        %1255 = vmatprep.subr.mxu0 0.0
        %1256 = vmatpush1.msra.mxu0 %v1234
        %1257 = vmatprep.subr.mxu0 0.0
        %1258 = vmatpush1.msra.mxu0 %v1235
        %1259 = vmatprep.subr.mxu0 0.0
        %1260 = vmatpush1.msra.mxu0 %v1236
        %1261 = vmatprep.subr.mxu0 0.0
        %1262 = vmatpush1.msra.mxu0 %v1237
        %1263 = vmatprep.subr.mxu0 0.0
        %1264 = vmatpush1.msra.mxu0 %v1238
        %1265 = vmatprep.subr.mxu0 0.0
        %1266 = vmatpush1.msra.mxu0 %v1239
        %1267 = vmatprep.subr.mxu0 0.0
        %1268 = vmatpush1.msra.mxu0 %v1240
        %1269 = vmatprep.subr.mxu0 0.0
        %1270 = vmatpush1.msra.mxu0 %v1241
        %1271 = vmatprep.subr.mxu0 0.0
        %1272 = vmatpush1.msra.mxu0 %v1242
        %1273 = vmatprep.subr.mxu0 0.0
        %1274 = vmatpush1.msra.mxu0 %v1243
        %1275 = vmatprep.subr.mxu0 0.0
        %1276 = vmatpush1.msra.mxu0 %v1244
        %1277 = vmatprep.subr.mxu0 0.0
        %1278 = vmatpush1.msra.mxu0 0.0
        %1279 = vmatprep.subr.mxu0 0.0
        %1280 = vmatpush1.msra.mxu0 0.0
        %1281 = vmatprep.subr.mxu0 0.0
        %1282 = vmatpush1.msra.mxu0 0.0
        %1283 = vmatprep.subr.mxu0 0.0
        %1284 = vmatpush1.msra.mxu0 0.0
        %1285 = vmatprep.subr.mxu0 0.0
        %1286 = vmatpush1.msra.mxu0 0.0
        %1287 = vmatprep.subr.mxu0 0.0
        %1288 = vmatpush1.msra.mxu0 0.0
        %1289 = vmatprep.subr.mxu0 0.0
        %1290 = vmatpush1.msra.mxu0 0.0
        %1291 = vmatprep.subr.mxu0 0.0
        %1292 = vmatpush1.msra.mxu0 0.0
        %1293 = vmatprep.subr.mxu0 0.0
        %1294 = vmatpush1.msra.mxu0 0.0
        %1295 = vmatprep.subr.mxu0 0.0
        %1296 = vmatpush1.msra.mxu0 0.0
        %1297 = vmatprep.subr.mxu0 0.0
        %1298 = vmatpush1.msra.mxu0 0.0
        %1299 = vmatprep.subr.mxu0 0.0
        %1300 = vmatpush1.msra.mxu0 0.0
        %1301 = vmatprep.subr.mxu0 0.0
        %1302 = vmatpush1.msra.mxu0 0.0
        %1303 = vmatprep.subr.mxu0 0.0
        %1304 = vmatpush1.msra.mxu0 0.0
        %1305 = vmatprep.subr.mxu0 0.0
        %1306 = vmatpush1.msra.mxu0 0.0
        %1307 = vmatprep.subr.mxu0 0.0
        %1308 = vmatpush1.msra.mxu0 0.0
        %1309 = vmatprep.mubr.f32.mxu0 0.0
        %1310 = vmatmul.mubr.f32.gmra.mrb[0].mxu0 %v1226
        %v1311 = vpop.f32.mrb[0].mxu0
        %v1312 = vadd.f32 0.0, %v1311
        %v1313 = vpop.f32.mrb[0].mxu0
        %1314 = vmatprep.mubr.f32.mxu0 0.0
        %1315 = vmatmul.mubr.f32.gmra.mrb[0].mxu0 %v1227
        %v1316 = vpop.f32.mrb[0].mxu0
        %v1317 = vadd.f32 0.0, %v1316
        %v1318 = vpop.f32.mrb[0].mxu0
        %1319 = vdwg.mxu0
        %v1320 = vadd.f32 %v1197, %v1312
        %v1321 = vadd.f32 %v1198, %v1317
        %vm1322 = vmand %vm560, %vm1222
        %v1323 = vsel %vm1322, 1, 0
        %vm1324 = vcmp.eq.s32.totalorder %v1323, 1
        %v1329 = vrot.slane %v1211, 1
        %v1330 = vrot.slane %v1212, 1
        %v1331 = vsel %vm568, %v1329, %v1330
        %v1332 = vrot.slane %v1213, 1
        %v1333 = vrot.slane %v1214, 1
        %v1334 = vsel %vm568, %v1332, %v1333
        %v1337 = vsel %vm1324, %v1331, 0.0
        %v1338 = vsel %vm1324, %v1334, 0.0
        %s1339 = scalar_lea.vmem %s492, 896
        %v1340 = vld [vmem:[%s1339] sm:$0xff]
        %v1341 = vld [vmem:[%s1339 + $0x8] sm:$0xff]
        %v1342 = vld [vmem:[%s1339 + $0x10] sm:$0xff]
        %v1343 = vld [vmem:[%s1339 + $0x18] sm:$0xff]
        %v1344 = vld [vmem:[%s1339 + $0x20] sm:$0xff]
        %v1345 = vld [vmem:[%s1339 + $0x28] sm:$0xff]
        %v1346 = vld [vmem:[%s1339 + $0x30] sm:$0xff]
        %v1347 = vld [vmem:[%s1339 + $0x38] sm:$0xff]
        %v1348 = vld [vmem:[%s1339 + $0x40] sm:$0xff]
        %v1349 = vld [vmem:[%s1339 + $0x48] sm:$0xff]
        %v1350 = vld [vmem:[%s1339 + $0x50] sm:$0xff]
        %v1351 = vld [vmem:[%s1339 + $0x58] sm:$0xff]
        %v1352 = vld [vmem:[%s1339 + $0x60] sm:$0xff]
        %v1353 = vld [vmem:[%s1339 + $0x68] sm:$0xff]
        %v1354 = vld [vmem:[%s1339 + $0x70] sm:$0xff]
        %v1355 = vld [vmem:[%s1339 + $0x78] sm:$0xff]
        %1356 = vmatprep.subr.mxu0 0.0
        %1357 = vmatpush1.msra.mxu0 %v1340
        %1358 = vmatprep.subr.mxu0 0.0
        %1359 = vmatpush1.msra.mxu0 %v1341
        %1360 = vmatprep.subr.mxu0 0.0
        %1361 = vmatpush1.msra.mxu0 %v1342
        %1362 = vmatprep.subr.mxu0 0.0
        %1363 = vmatpush1.msra.mxu0 %v1343
        %1364 = vmatprep.subr.mxu0 0.0
        %1365 = vmatpush1.msra.mxu0 %v1344
        %1366 = vmatprep.subr.mxu0 0.0
        %1367 = vmatpush1.msra.mxu0 %v1345
        %1368 = vmatprep.subr.mxu0 0.0
        %1369 = vmatpush1.msra.mxu0 %v1346
        %1370 = vmatprep.subr.mxu0 0.0
        %1371 = vmatpush1.msra.mxu0 %v1347
        %1372 = vmatprep.subr.mxu0 0.0
        %1373 = vmatpush1.msra.mxu0 %v1348
        %1374 = vmatprep.subr.mxu0 0.0
        %1375 = vmatpush1.msra.mxu0 %v1349
        %1376 = vmatprep.subr.mxu0 0.0
        %1377 = vmatpush1.msra.mxu0 %v1350
        %1378 = vmatprep.subr.mxu0 0.0
        %1379 = vmatpush1.msra.mxu0 %v1351
        %1380 = vmatprep.subr.mxu0 0.0
        %1381 = vmatpush1.msra.mxu0 %v1352
        %1382 = vmatprep.subr.mxu0 0.0
        %1383 = vmatpush1.msra.mxu0 %v1353
        %1384 = vmatprep.subr.mxu0 0.0
        %1385 = vmatpush1.msra.mxu0 %v1354
        %1386 = vmatprep.subr.mxu0 0.0
        %1387 = vmatpush1.msra.mxu0 %v1355
        %1388 = vmatprep.subr.mxu0 0.0
        %1389 = vmatpush1.msra.mxu0 0.0
        %1390 = vmatprep.subr.mxu0 0.0
        %1391 = vmatpush1.msra.mxu0 0.0
        %1392 = vmatprep.subr.mxu0 0.0
        %1393 = vmatpush1.msra.mxu0 0.0
        %1394 = vmatprep.subr.mxu0 0.0
        %1395 = vmatpush1.msra.mxu0 0.0
        %1396 = vmatprep.subr.mxu0 0.0
        %1397 = vmatpush1.msra.mxu0 0.0
        %1398 = vmatprep.subr.mxu0 0.0
        %1399 = vmatpush1.msra.mxu0 0.0
        %1400 = vmatprep.subr.mxu0 0.0
        %1401 = vmatpush1.msra.mxu0 0.0
        %1402 = vmatprep.subr.mxu0 0.0
        %1403 = vmatpush1.msra.mxu0 0.0
        %1404 = vmatprep.subr.mxu0 0.0
        %1405 = vmatpush1.msra.mxu0 0.0
        %1406 = vmatprep.subr.mxu0 0.0
        %1407 = vmatpush1.msra.mxu0 0.0
        %1408 = vmatprep.subr.mxu0 0.0
        %1409 = vmatpush1.msra.mxu0 0.0
        %1410 = vmatprep.subr.mxu0 0.0
        %1411 = vmatpush1.msra.mxu0 0.0
        %1412 = vmatprep.subr.mxu0 0.0
        %1413 = vmatpush1.msra.mxu0 0.0
        %1414 = vmatprep.subr.mxu0 0.0
        %1415 = vmatpush1.msra.mxu0 0.0
        %1416 = vmatprep.subr.mxu0 0.0
        %1417 = vmatpush1.msra.mxu0 0.0
        %1418 = vmatprep.subr.mxu0 0.0
        %1419 = vmatpush1.msra.mxu0 0.0
        %1420 = vmatprep.mubr.f32.mxu0 0.0
        %1421 = vmatmul.mubr.f32.gmra.mrb[0].mxu0 %v1337
        %v1422 = vpop.f32.mrb[0].mxu0
        %v1423 = vadd.f32 0.0, %v1422
        %v1424 = vpop.f32.mrb[0].mxu0
        %1425 = vmatprep.mubr.f32.mxu0 0.0
        %1426 = vmatmul.mubr.f32.gmra.mrb[0].mxu0 %v1338
        %v1427 = vpop.f32.mrb[0].mxu0
        %v1428 = vadd.f32 0.0, %v1427
        %v1429 = vpop.f32.mrb[0].mxu0
        %1430 = vdwg.mxu0
        %v1431 = vadd.f32 %v1320, %v1423
        %v1432 = vadd.f32 %v1321, %v1428
        %vm1433 = vmand %vm749, %vm1222
        %v1434 = vsel %vm1433, 1, 0
        %vm1435 = vcmp.eq.s32.totalorder %v1434, 1
        %v1436 = vrot.slane %v1211, 2
        %v1437 = vrot.slane %v1212, 2
        %v1438 = vsel %vm753, %v1436, %v1437
        %v1439 = vrot.slane %v1213, 2
        %v1440 = vrot.slane %v1214, 2
        %v1441 = vsel %vm753, %v1439, %v1440
        %v1444 = vsel %vm1435, %v1438, 0.0
        %v1445 = vsel %vm1435, %v1441, 0.0
        %s1446 = scalar_lea.vmem %s492, 1024
        %v1447 = vld [vmem:[%s1446] sm:$0xff]
        %v1448 = vld [vmem:[%s1446 + $0x8] sm:$0xff]
        %v1449 = vld [vmem:[%s1446 + $0x10] sm:$0xff]
        %v1450 = vld [vmem:[%s1446 + $0x18] sm:$0xff]
        %v1451 = vld [vmem:[%s1446 + $0x20] sm:$0xff]
        %v1452 = vld [vmem:[%s1446 + $0x28] sm:$0xff]
        %v1453 = vld [vmem:[%s1446 + $0x30] sm:$0xff]
        %v1454 = vld [vmem:[%s1446 + $0x38] sm:$0xff]
        %v1455 = vld [vmem:[%s1446 + $0x40] sm:$0xff]
        %v1456 = vld [vmem:[%s1446 + $0x48] sm:$0xff]
        %v1457 = vld [vmem:[%s1446 + $0x50] sm:$0xff]
        %v1458 = vld [vmem:[%s1446 + $0x58] sm:$0xff]
        %v1459 = vld [vmem:[%s1446 + $0x60] sm:$0xff]
        %v1460 = vld [vmem:[%s1446 + $0x68] sm:$0xff]
        %v1461 = vld [vmem:[%s1446 + $0x70] sm:$0xff]
        %v1462 = vld [vmem:[%s1446 + $0x78] sm:$0xff]
        %1463 = vmatprep.subr.mxu0 0.0
        %1464 = vmatpush1.msra.mxu0 %v1447
        %1465 = vmatprep.subr.mxu0 0.0
        %1466 = vmatpush1.msra.mxu0 %v1448
        %1467 = vmatprep.subr.mxu0 0.0
        %1468 = vmatpush1.msra.mxu0 %v1449
        %1469 = vmatprep.subr.mxu0 0.0
        %1470 = vmatpush1.msra.mxu0 %v1450
        %1471 = vmatprep.subr.mxu0 0.0
        %1472 = vmatpush1.msra.mxu0 %v1451
        %1473 = vmatprep.subr.mxu0 0.0
        %1474 = vmatpush1.msra.mxu0 %v1452
        %1475 = vmatprep.subr.mxu0 0.0
        %1476 = vmatpush1.msra.mxu0 %v1453
        %1477 = vmatprep.subr.mxu0 0.0
        %1478 = vmatpush1.msra.mxu0 %v1454
        %1479 = vmatprep.subr.mxu0 0.0
        %1480 = vmatpush1.msra.mxu0 %v1455
        %1481 = vmatprep.subr.mxu0 0.0
        %1482 = vmatpush1.msra.mxu0 %v1456
        %1483 = vmatprep.subr.mxu0 0.0
        %1484 = vmatpush1.msra.mxu0 %v1457
        %1485 = vmatprep.subr.mxu0 0.0
        %1486 = vmatpush1.msra.mxu0 %v1458
        %1487 = vmatprep.subr.mxu0 0.0
        %1488 = vmatpush1.msra.mxu0 %v1459
        %1489 = vmatprep.subr.mxu0 0.0
        %1490 = vmatpush1.msra.mxu0 %v1460
        %1491 = vmatprep.subr.mxu0 0.0
        %1492 = vmatpush1.msra.mxu0 %v1461
        %1493 = vmatprep.subr.mxu0 0.0
        %1494 = vmatpush1.msra.mxu0 %v1462
        %1495 = vmatprep.subr.mxu0 0.0
        %1496 = vmatpush1.msra.mxu0 0.0
        %1497 = vmatprep.subr.mxu0 0.0
        %1498 = vmatpush1.msra.mxu0 0.0
        %1499 = vmatprep.subr.mxu0 0.0
        %1500 = vmatpush1.msra.mxu0 0.0
        %1501 = vmatprep.subr.mxu0 0.0
        %1502 = vmatpush1.msra.mxu0 0.0
        %1503 = vmatprep.subr.mxu0 0.0
        %1504 = vmatpush1.msra.mxu0 0.0
        %1505 = vmatprep.subr.mxu0 0.0
        %1506 = vmatpush1.msra.mxu0 0.0
        %1507 = vmatprep.subr.mxu0 0.0
        %1508 = vmatpush1.msra.mxu0 0.0
        %1509 = vmatprep.subr.mxu0 0.0
        %1510 = vmatpush1.msra.mxu0 0.0
        %1511 = vmatprep.subr.mxu0 0.0
        %1512 = vmatpush1.msra.mxu0 0.0
        %1513 = vmatprep.subr.mxu0 0.0
        %1514 = vmatpush1.msra.mxu0 0.0
        %1515 = vmatprep.subr.mxu0 0.0
        %1516 = vmatpush1.msra.mxu0 0.0
        %1517 = vmatprep.subr.mxu0 0.0
        %1518 = vmatpush1.msra.mxu0 0.0
        %1519 = vmatprep.subr.mxu0 0.0
        %1520 = vmatpush1.msra.mxu0 0.0
        %1521 = vmatprep.subr.mxu0 0.0
        %1522 = vmatpush1.msra.mxu0 0.0
        %1523 = vmatprep.subr.mxu0 0.0
        %1524 = vmatpush1.msra.mxu0 0.0
        %1525 = vmatprep.subr.mxu0 0.0
        %1526 = vmatpush1.msra.mxu0 0.0
        %1527 = vmatprep.mubr.f32.mxu0 0.0
        %1528 = vmatmul.mubr.f32.gmra.mrb[0].mxu0 %v1444
        %v1529 = vpop.f32.mrb[0].mxu0
        %v1530 = vadd.f32 0.0, %v1529
        %v1531 = vpop.f32.mrb[0].mxu0
        %1532 = vmatprep.mubr.f32.mxu0 0.0
        %1533 = vmatmul.mubr.f32.gmra.mrb[0].mxu0 %v1445
        %v1534 = vpop.f32.mrb[0].mxu0
        %v1535 = vadd.f32 0.0, %v1534
        %v1536 = vpop.f32.mrb[0].mxu0
        %1537 = vdwg.mxu0
        %v1538 = vadd.f32 %v1431, %v1530
        %v1539 = vadd.f32 %v1432, %v1535
        %1540 = vst [vmem:[%s483] sm:$0xff] %v1538
        %1541 = vst [vmem:[%s483 + $0x8] sm:$0xff] %v1539
        %s1542 = sand.u32 %s204, 1
        %s1543 = sand.u32 %s204, 1
        %s1544 = smul.addr %s1543, 16
        %s1545 = scalar_lea.vmem [#allocation5], %s1544
        // Predicated region
        $region159: #{network_block_forward.15} parent=145 // pred_check
          %p1546 = pneg %p214
        $region160: #{network_block_forward.15} parent=145 // pred_check_branch
          %1548 = sbr.rel (%p1546) target = $region162
        $region161: #{network_block_forward.15} parent=145 // pred_region
          %s1549 = smul.u32 2, %s22
          %s1550 = sadd.s32 %s24, %s23
          %s1551 = smul.addr %s1549, 8
          %s1552 = sadd.s32 %s1550, %s1551
          %s1553 = smul.addr %s1552, 8
          %s1554 = scalar_lea.vmem %s6, %s1553
          // Predicated region
          $region163: #{network_block_forward.15} parent=161 // pred_check
            _
          $region164: #{network_block_forward.15} parent=161 // pred_check_branch
            %1556 = sbr.rel (0) target = $region166
          $region165: #{network_block_forward.15} parent=161 // pred_region
            // Predicated region
            $region167: #{network_block_forward.15} parent=165 // pred_check
              _
            $region168: #{network_block_forward.15} parent=165 // pred_check_branch
              %1558 = sbr.rel (0) target = $region170
            $region169: #{network_block_forward.15} parent=165 // pred_region
              // Predicated region
              $region182: #{network_block_forward.15} parent=169 // pred_check
                _
              $region183: #{network_block_forward.15} parent=169 // pred_check_branch
                %1575 = sbr.rel (0) target = $region185
              $region184: #{network_block_forward.15} parent=169 // pred_region
                loop: start=0, step=1, limit=1
                $region186: #{network_block_forward.15} parent=184 // loop_pre_header
                  _
                $region187: #{network_block_forward.15} parent=184 // loop_header
                  %s1577 = sphi 0, %s1581
                  %p1578 = scmp.ge.s32.totalorder %s1577, 1
                  %s1582 = sphi %s1545, %s1545
                  %s1583 = sphi %s1554, %s1554
                $region188: #{network_block_forward.15} parent=184 // loop_header_branch
                  %1580 = sbr.rel (%p1578) target = $region192
                $region189: #{network_block_forward.15} parent=184 // loop_body
                  %v1584 = vld [vmem:[%s1582] sm:$0xff]
                  %1585 = vst [vmem:[%s1583] sm:$0xff] %v1584
                  %v1586 = vld [vmem:[%s1582 + $0x8] sm:$0xff]
                  %1587 = vst [vmem:[%s1583 + $0x40] sm:$0xff] %v1586
                $region190: #{network_block_forward.15} parent=184 // loop_footer
                  %s1581 = sadd.s32 1, %s1577
                $region191: #{network_block_forward.15} parent=184 // loop_footer_branch
                  %1576 = sbr.rel target = $region187
                $region192: #{network_block_forward.15} parent=184 // loop_exit
                  _
              $region185: #{network_block_forward.15} parent=169 // pred_fallthru
                _
              // Predicated region
              $region193: #{network_block_forward.15} parent=169 // pred_check
                _
              $region194: #{network_block_forward.15} parent=169 // pred_check_branch
                %1589 = sbr.rel target = $region196
              $region195: #{network_block_forward.15} parent=169 // pred_region
                _
              $region196: #{network_block_forward.15} parent=169 // pred_fallthru
                _
            $region170: #{network_block_forward.15} parent=165 // pred_fallthru
              _
            // Predicated region
            $region171: #{network_block_forward.15} parent=165 // pred_check
              _
            $region172: #{network_block_forward.15} parent=165 // pred_check_branch
              %1560 = sbr.rel target = $region174
            $region173: #{network_block_forward.15} parent=165 // pred_region
              loop: start=0, step=1, limit=1
              $region175: #{network_block_forward.15} parent=173 // loop_pre_header
                _
              $region176: #{network_block_forward.15} parent=173 // loop_header
                %s1563 = sphi 0, %s1567
                %p1564 = scmp.ge.s32.totalorder %s1563, 1
                %s1568 = sphi %s1545, %s1545
                %s1569 = sphi %s1554, %s1554
              $region177: #{network_block_forward.15} parent=173 // loop_header_branch
                %1566 = sbr.rel (%p1564) target = $region181
              $region178: #{network_block_forward.15} parent=173 // loop_body
                %v1570 = vld [vmem:[%s1568] sm:$0xff]
                %1571 = vst [vmem:[%s1569] sm:$0xff] %v1570
                %v1572 = vld [vmem:[%s1568 + $0x8] sm:$0xff]
                %1573 = vst [vmem:[%s1569 + $0x40] sm:$0xff] %v1572
              $region179: #{network_block_forward.15} parent=173 // loop_footer
                %s1567 = sadd.s32 1, %s1563
              $region180: #{network_block_forward.15} parent=173 // loop_footer_branch
                %1562 = sbr.rel target = $region176
              $region181: #{network_block_forward.15} parent=173 // loop_exit
                _
            $region174: #{network_block_forward.15} parent=165 // pred_fallthru
              _
          $region166: #{network_block_forward.15} parent=161 // pred_fallthru
            _
          %1590 = vnop
        $region162: #{network_block_forward.15} parent=145 // pred_fallthru
          _
      $region146: #{network_block_forward.15} parent=5 // pred_fallthru
        _
      %p1591 = scmp.le.s32.totalorder 2, %s12
      // Predicated region
      $region197: #{network_block_forward.15} parent=5 // pred_check
        %p1592 = pneg %p1591
      $region198: #{network_block_forward.15} parent=5 // pred_check_branch
        %1594 = sbr.rel (%p1592) target = $region200
      $region199: #{network_block_forward.15} parent=5 // pred_region
        %s1595 = ssub.s32 %s12, 2
        // Predicated region
        $region201: #{network_block_forward.15} parent=199 // pred_check
          %p1596 = pneg %p220
        $region202: #{network_block_forward.15} parent=199 // pred_check_branch
          %1598 = sbr.rel (%p1596) target = $region204
        $region203: #{network_block_forward.15} parent=199 // pred_region
          %s1599 = sand.u32 %s205, 1
          %s1600 = sand.u32 %s205, 1
          %s1601 = smul.addr %s1600, 16
          %s1602 = scalar_lea.vmem [#allocation5], %s1601
        $region204: #{network_block_forward.15} parent=199 // pred_fallthru
          _
      $region200: #{network_block_forward.15} parent=5 // pred_fallthru
        _
    $region6: #{network_block_forward.15} parent=1 // loop_footer
      %s16 = sadd.s32 1, %s12
    $region7: #{network_block_forward.15} parent=1 // loop_footer_branch
      %11 = sbr.rel target = $region3
    $region8: #{network_block_forward.15} parent=1 // loop_exit
      _

</llo_original>
